<compile_context>
chip_gen: v5e
topology: v5e:2x2
jax: 0.10.0
libtpu: 0.0.40
codegen_flags: <defaults>
</compile_context>

<pallas_src>
import functools

import jax
import jax.numpy as jnp
from jax.experimental import pallas as pl
from jax.experimental.pallas import tpu as pltpu

EPS = 1e-5  # nn.BatchNorm1d default eps


def _round_up(a, m):
    return ((a + m - 1) // m) * m


# --------------------------------------------------------------------------------------
# Fused kernel: conv1(VPU)/relu -> conv2(MXU)/relu -> conv3(MXU)(/relu) -> chunked running
# max into a (Cout, 128) VMEM accumulator; lane-reduce + lane-dense store on the last tile.
# --------------------------------------------------------------------------------------
def _chunk_max(h, n_valid):
    """(Cout, tile_n) -> (Cout, 128) elementwise max over 128-lane chunks (VPU only).

    Only the first `n_valid` columns (static) are valid.  Fully padded chunks are skipped
    entirely; the single partial chunk (if any) is lane-masked to -inf."""
    full = n_valid // 128
    rem = n_valid % 128
    cm = None
    for k in range(full):                                   # static, vreg-aligned slices
        piece = h[:, k * 128:(k + 1) * 128]
        cm = piece if cm is None else jnp.maximum(cm, piece)
    if rem:
        piece = h[:, full * 128:(full + 1) * 128]
        lane = jax.lax.broadcasted_iota(jnp.int32, (1, 128), 1)
        piece = jnp.where(lane < rem, piece, -jnp.inf)
        cm = piece if cm is None else jnp.maximum(cm, piece)
    return cm


def _trunk_max_kernel(x_ref, w1_ref, b1_ref, w2_ref, b2_ref, w3_ref, b3_ref,
                      out_ref, acc_ref, *, last_relu, n_points, tile_n, num_tiles, cout):
    n_idx = pl.program_id(1)                                # point-tile index
    last = num_tiles - 1                                    # static

    # ---- conv1 (+BN scale, +3x3 transform already folded): K=3 contraction on the VPU, f32
    x = x_ref[0]                                            # (Cin, tile_n) f32
    w1 = w1_ref[0]                                          # (64, Cin)     f32
    cin = x.shape[0]
    h = w1[:, 0:1] * x[0:1, :]
    for c in range(1, cin):
        h = h + w1[:, c:c + 1] * x[c:c + 1, :]
    h = jnp.maximum(h + b1_ref[...], 0.0)                   # (64, tile_n)

    # ---- conv2 (+BN) -> relu   (MXU, bf16 operands, f32 accumulate) ----
    h = jnp.dot(w2_ref[...], h.astype(jnp.bfloat16),
                preferred_element_type=jnp.float32)         # (128, tile_n)
    h = jnp.maximum(h + b2_ref[...], 0.0)

    # ---- conv3 (+BN) (-> relu only for the STN trunk) ----
    h = jnp.dot(w3_ref[...], h.astype(jnp.bfloat16),
                preferred_element_type=jnp.float32)         # (Cout, tile_n)
    h = h + b3_ref[...]
    if last_relu:
        h = jnp.maximum(h, 0.0)

    # ---- per-tile partial max into the persistent (Cout, 128) scratch accumulator ----
    @pl.when(n_idx == 0)
    def _():
        acc_ref[...] = jnp.full((cout, 128), -jnp.inf, dtype=jnp.float32)

    valid_last = n_points - last * tile_n                   # static; columns in the last tile
    if valid_last == tile_n:                                # every tile is dense
        acc_ref[...] = jnp.maximum(acc_ref[...], _chunk_max(h, tile_n))
    else:                                                   # only the last tile is ragged
        @pl.when(n_idx < last)
        def _():
            acc_ref[...] = jnp.maximum(acc_ref[...], _chunk_max(h, tile_n))

        @pl.when(n_idx == last)
        def _():
            acc_ref[...] = jnp.maximum(acc_ref[...], _chunk_max(h, valid_last))

    # ---- final cross-lane reduce (XLU, once per batch elem) + lane-dense store ----
    @pl.when(n_idx == last)
    def _():
        acc = acc_ref[...]                                   # (Cout, 128)
        # (Cout,128) -> (Cout//128,128,128) is a pure leading-dim split (no relayout).
        out_ref[0] = jnp.max(acc.reshape(cout // 128, 128, 128), axis=-1)


def conv_trunk_max(x_bcn, w1_b, b1, w2, b2, w3, b3, *, last_relu, tile_n=None):
    """x_bcn: (B, Cin, N) f32 NCW.  w1_b: (1 or B, 64, Cin) f32.  Returns (B, Cout) f32."""
    B, Cin, N = x_bcn.shape
    Cout = w3.shape[0]
    assert Cout % 128 == 0

    # v7x-safe default (64 MiB physical / 32 MiB scoped VMEM); v5e/v6e could use 2048.
    if tile_n is None:
        tile_n = 1024
    tile_n = _round_up(max(int(tile_n), 128), 128)           # always a multiple of 128
    tile_n = min(tile_n, _round_up(N, 128))
    num_tiles = pl.cdiv(N, tile_n)

    w1_map = (lambda b, n: (0, 0, 0)) if w1_b.shape[0] == 1 else (lambda b, n: (b, 0, 0))
    kern = functools.partial(_trunk_max_kernel, last_relu=last_relu, n_points=N,
                             tile_n=tile_n, num_tiles=num_tiles, cout=Cout)

    flops = 2 * B * N * (64 * Cin + 128 * 64 + Cout * 128)
    bytes_accessed = (x_bcn.size * 4 + w1_b.size * 4 + w2.size * 2 + w3.size * 2
                      + (b1.size + b2.size + b3.size) * 4 + B * Cout * 4)

    out = pl.pallas_call(
        kern,
        out_shape=jax.ShapeDtypeStruct((B, Cout // 128, 128), jnp.float32),
        grid_spec=pltpu.PrefetchScalarGridSpec(
            num_scalar_prefetch=0,
            grid=(B, num_tiles),
            in_specs=[
                pl.BlockSpec((1, Cin, tile_n), lambda b, n: (b, 0, n)),
                pl.BlockSpec((1,) + w1_b.shape[1:], w1_map),
                pl.BlockSpec(b1.shape, lambda b, n: (0, 0)),
                pl.BlockSpec(w2.shape, lambda b, n: (0, 0)),
                pl.BlockSpec(b2.shape, lambda b, n: (0, 0)),
                pl.BlockSpec(w3.shape, lambda b, n: (0, 0)),
                pl.BlockSpec(b3.shape, lambda b, n: (0, 0)),
            ],
            out_specs=pl.BlockSpec((1, Cout // 128, 128), lambda b, n: (b, 0, 0)),
            scratch_shapes=[pltpu.VMEM((Cout, 128), jnp.float32)],
        ),
        compiler_params=pltpu.CompilerParams(
            dimension_semantics=("parallel", "arbitrary"),
            vmem_limit_bytes=32 * 1024 * 1024),
        cost_estimate=pl.CostEstimate(flops=flops, transcendentals=0,
                                      bytes_accessed=bytes_accessed),
    )(x_bcn, w1_b, b1, w2, b2, w3, b3)
    return out.reshape(B, Cout)                              # lane-dense pooled features


# --------------------------------------------------------------------------------------
# Parameter setup (deterministic, synthetic) with eval-mode BN folded into weights/biases.
# --------------------------------------------------------------------------------------
def _conv_bn_layer(key, cin, cout, scale=0.1):
    k1, k2, k3, k4, k5, k6 = jax.random.split(key, 6)
    w = jax.random.normal(k1, (cout, cin)) * scale            # torch Conv1d (Cout,Cin,1)
    b = jax.random.normal(k2, (cout,)) * scale
    gamma = 1.0 + 0.1 * jax.random.normal(k3, (cout,))
    beta = 0.1 * jax.random.normal(k4, (cout,))
    mean = 0.1 * jax.random.normal(k5, (cout,))
    var = 0.5 + jnp.abs(jax.random.normal(k6, (cout,)))
    s = gamma / jnp.sqrt(var + EPS)
    w_eff = w * s[:, None]                                    # BN scale folded into rows
    b_eff = (beta - mean * s + b * s)[:, None]                # (Cout, 1)
    return w_eff.astype(jnp.float32), b_eff.astype(jnp.float32)


def _linear_bn_layer(key, cin, cout, scale=0.1):
    k1, k2, k3, k4, k5, k6 = jax.random.split(key, 6)
    w = jax.random.normal(k1, (cout, cin)) * scale            # torch Linear (Cout,Cin)
    b = jax.random.normal(k2, (cout,)) * scale
    gamma = 1.0 + 0.1 * jax.random.normal(k3, (cout,))
    beta = 0.1 * jax.random.normal(k4, (cout,))
    mean = 0.1 * jax.random.normal(k5, (cout,))
    var = 0.5 + jnp.abs(jax.random.normal(k6, (cout,)))
    s = gamma / jnp.sqrt(var + EPS)
    w_eff = (w * s[:, None]).T                                # stored (Cin, Cout)
    b_eff = beta - mean * s + b * s
    return w_eff.astype(jnp.float32), b_eff.astype(jnp.float32)


def make_params(key):
    keys = jax.random.split(key, 12)
    p = {}
    # STN3d conv trunk: 3 -> 64 -> 128 -> 1024 (conv1 stays f32: VPU FMAs; conv2/3 bf16: MXU)
    w, b = _conv_bn_layer(keys[0], 3, 64)
    p['stn_w1'], p['stn_b1'] = w[None], b                    # (1,64,3) f32
    w, b = _conv_bn_layer(keys[1], 64, 128)
    p['stn_w2'], p['stn_b2'] = w.astype(jnp.bfloat16), b
    w, b = _conv_bn_layer(keys[2], 128, 1024)
    p['stn_w3'], p['stn_b3'] = w.astype(jnp.bfloat16), b
    # STN3d FC head: 1024 -> 512 -> 256 -> 9 (plain JAX, f32)
    p['stn_fw1'], p['stn_fb1'] = _linear_bn_layer(keys[3], 1024, 512)
    p['stn_fw2'], p['stn_fb2'] = _linear_bn_layer(keys[4], 512, 256)
    k1, k2 = jax.random.split(keys[5])
    p['stn_fw3'] = (jax.random.normal(k1, (9, 256)) * 0.1).astype(jnp.float32).T  # (256,9)
    p['stn_fb3'] = (jax.random.normal(k2, (9,)) * 0.1).astype(jnp.float32)
    # PointNetfeat conv trunk: 3 -> 64 -> 128 -> 1024
    w, b = _conv_bn_layer(keys[6], 3, 64)
    p['w1'], p['b1'] = w, b                                   # (64,3) f32; folded with trans
    w, b = _conv_bn_layer(keys[7], 64, 128)
    p['w2'], p['b2'] = w.astype(jnp.bfloat16), b
    w, b = _conv_bn_layer(keys[8], 128, 1024)
    p['w3'], p['b3'] = w.astype(jnp.bfloat16), b
    return p


# --------------------------------------------------------------------------------------
# PointNetfeat forward (global_feat=True, feature_transform=False), eval-mode BN.
# --------------------------------------------------------------------------------------
def pointnetfeat_forward(x_bcn, params, *, tile_n=None):
    B = x_bcn.shape[0]

    # ---- STN3d conv trunk + max pool (identity transform -> no fold needed) ----
    pooled = conv_trunk_max(x_bcn,
                            params['stn_w1'], params['stn_b1'],
                            params['stn_w2'], params['stn_b2'],
                            params['stn_w3'], params['stn_b3'],
                            last_relu=True, tile_n=tile_n)                # (B, 1024)

    # ---- STN3d FC head in plain JAX (tiny GEMMs; not worth a pallas_call) ----
    h = jax.nn.relu(pooled @ params['stn_fw1'] + params['stn_fb1'])
    h = jax.nn.relu(h @ params['stn_fw2'] + params['stn_fb2'])
    trans9 = h @ params['stn_fw3'] + params['stn_fb3'] \
        + jnp.eye(3, dtype=jnp.float32).reshape(1, 9)
    trans = trans9.reshape(B, 3, 3)

    # ---- fold the 3x3 input transform into conv1: h1 = (W1 @ trans^T) @ X_ncw ----
    w1_eff = jnp.einsum('oc,bdc->bod', params['w1'], trans)               # (B,64,3) f32

    # ---- main feature trunk + global max pool ----
    globalfeat = conv_trunk_max(x_bcn,
                                w1_eff, params['b1'],
                                params['w2'], params['b2'],
                                params['w3'], params['b3'],
                                last_relu=False, tile_n=tile_n)           # (B, 1024)
    trans_feat = None                                                     # feature_transform=False
    return globalfeat, trans, trans_feat


# --------------------------------------------------------------------------------------
# Pure-JAX reference (same folded params, same f32-conv1 / bf16-conv2/3 discipline).
# --------------------------------------------------------------------------------------
def _ref_trunk(x_bcn, w1_b, b1, w2, b2, w3, b3, last_relu):
    B = x_bcn.shape[0]
    w1 = jnp.broadcast_to(w1_b, (B,) + w1_b.shape[1:])
    h = jnp.einsum('boc,bcn->bon', w1, x_bcn,
                   precision=jax.lax.Precision.HIGHEST) + b1[None]
    h = jax.nn.relu(h)
    h = jnp.einsum('oc,bcn->bon', w2, h.astype(jnp.bfloat16),
                   preferred_element_type=jnp.float32) + b2[None]
    h = jax.nn.relu(h)
    h = jnp.einsum('oc,bcn->bon', w3, h.astype(jnp.bfloat16),
                   preferred_element_type=jnp.float32) + b3[None]
    if last_relu:
        h = jax.nn.relu(h)
    return jnp.max(h, axis=2)                                             # (B, Cout)


def ref_forward(x_bcn, p):
    B = x_bcn.shape[0]
    pooled = _ref_trunk(x_bcn, p['stn_w1'], p['stn_b1'], p['stn_w2'], p['stn_b2'],
                        p['stn_w3'], p['stn_b3'], True)
    h = jax.nn.relu(pooled @ p['stn_fw1'] + p['stn_fb1'])
    h = jax.nn.relu(h @ p['stn_fw2'] + p['stn_fb2'])
    trans = (h @ p['stn_fw3'] + p['stn_fb3']
             + jnp.eye(3, dtype=jnp.float32).reshape(1, 9)).reshape(B, 3, 3)
    w1_eff = jnp.einsum('oc,bdc->bod', p['w1'], trans)
    gf = _ref_trunk(x_bcn, w1_eff, p['b1'], p['w2'], p['b2'], p['w3'], p['b3'], False)
    return gf, trans


if __name__ == "__main__":
    B, C, N = 2, 3, 320          # (batch, xyz, n_points) — PyTorch NCW input
    TILE_N = 128                 # forces 3 point tiles per cloud; ragged (masked) last tile

    key = jax.random.PRNGKey(0)
    kx, kp = jax.random.split(key)
    x = jax.random.normal(kx, (B, C, N), dtype=jnp.float32)
    params = make_params(kp)

    # Multi-tile (ragged last tile) path.
    fwd = jax.jit(functools.partial(pointnetfeat_forward, tile_n=TILE_N))
    globalfeat, trans, trans_feat = fwd(x, params)
    jax.block_until_ready((globalfeat, trans))

    # Default-tile path (single rounded-up tile; exercises the lane-masked partial chunk).
    fwd_default = jax.jit(pointnetfeat_forward)
    gf2, tr2, _ = fwd_default(x, params)
    jax.block_until_ready((gf2, tr2))

    gf_ref, tr_ref = ref_forward(x, params)
    assert globalfeat.shape == (B, 1024) and trans.shape == (B, 3, 3)
    assert trans_feat is None
    assert jnp.allclose(trans, tr_ref, rtol=1e-2, atol=1e-2)
    assert jnp.allclose(globalfeat, gf_ref, rtol=2e-2, atol=2e-2)
    assert jnp.allclose(tr2, tr_ref, rtol=1e-2, atol=1e-2)
    assert jnp.allclose(gf2, gf_ref, rtol=2e-2, atol=2e-2)

    print("KERNEL_OK")
</pallas_src>

<mosaic_0001>
module attributes {stable_mosaic.version = 11 : i64} {
  func.func @_trunk_max_kernel(%arg0: i32, %arg1: i32, %arg2: memref<1x3x128xf32, #tpu.memory_space<vmem>>, %arg3: memref<1x64x3xf32, #tpu.memory_space<vmem>>, %arg4: memref<64x1xf32, #tpu.memory_space<vmem>>, %arg5: memref<128x64xbf16, #tpu.memory_space<vmem>>, %arg6: memref<128x1xf32, #tpu.memory_space<vmem>>, %arg7: memref<1024x128xbf16, #tpu.memory_space<vmem>>, %arg8: memref<1024x1xf32, #tpu.memory_space<vmem>>, %arg9: memref<1x8x128xf32, #tpu.memory_space<vmem>>, %arg10: memref<1024x128xf32, #tpu.memory_space<vmem>>) attributes {dimension_semantics = [#tpu.dimension_semantics<parallel>, #tpu.dimension_semantics<arbitrary>], iteration_bounds = array<i64: 2, 3>, scalar_prefetch = 0 : i64, scratch_operands = 1 : i64, tpu.core_type = #tpu.core_type<tc>, window_params = [{transform_indices = @transform_0, window_bounds = array<i64: 1, 3, 128>}, {pipeline_mode = #tpu.pipeline_mode<synchronous>, transform_indices = @transform_1, window_bounds = array<i64: 1, 64, 3>}, {pipeline_mode = #tpu.pipeline_mode<synchronous>, transform_indices = @transform_2, window_bounds = array<i64: 64, 1>}, {pipeline_mode = #tpu.pipeline_mode<synchronous>, transform_indices = @transform_3, window_bounds = array<i64: 128, 64>}, {pipeline_mode = #tpu.pipeline_mode<synchronous>, transform_indices = @transform_4, window_bounds = array<i64: 128, 1>}, {pipeline_mode = #tpu.pipeline_mode<synchronous>, transform_indices = @transform_5, window_bounds = array<i64: 1024, 128>}, {pipeline_mode = #tpu.pipeline_mode<synchronous>, transform_indices = @transform_6, window_bounds = array<i64: 1024, 1>}, {transform_indices = @transform_7, window_bounds = array<i64: 1, 8, 128>}]} {
    %c0 = arith.constant 0 : index
    %c0_0 = arith.constant 0 : index
    %c0_1 = arith.constant 0 : index
    %0 = vector.load %arg2[%c0, %c0_0, %c0_1] : memref<1x3x128xf32, #tpu.memory_space<vmem>>, vector<1x3x128xf32>
    %1 = vector.shape_cast %0 : vector<1x3x128xf32> to vector<3x128xf32>
    %c0_2 = arith.constant 0 : index
    %c0_3 = arith.constant 0 : index
    %c0_4 = arith.constant 0 : index
    %2 = vector.load %arg3[%c0_2, %c0_3, %c0_4] : memref<1x64x3xf32, #tpu.memory_space<vmem>>, vector<1x64x3xf32>
    %3 = vector.shape_cast %2 : vector<1x64x3xf32> to vector<64x3xf32>
    %4 = vector.extract_strided_slice %3 {offsets = [0, 0], sizes = [64, 1], strides = [1, 1]} : vector<64x3xf32> to vector<64x1xf32>
    %5 = vector.extract_strided_slice %1 {offsets = [0, 0], sizes = [1, 128], strides = [1, 1]} : vector<3x128xf32> to vector<1x128xf32>
    %6 = vector.broadcast %4 : vector<64x1xf32> to vector<64x128xf32>
    %7 = vector.broadcast %5 : vector<1x128xf32> to vector<64x128xf32>
    %8 = arith.mulf %6, %7 : vector<64x128xf32>
    %9 = vector.extract_strided_slice %3 {offsets = [0, 1], sizes = [64, 1], strides = [1, 1]} : vector<64x3xf32> to vector<64x1xf32>
    %10 = vector.extract_strided_slice %1 {offsets = [1, 0], sizes = [1, 128], strides = [1, 1]} : vector<3x128xf32> to vector<1x128xf32>
    %11 = vector.broadcast %9 : vector<64x1xf32> to vector<64x128xf32>
    %12 = vector.broadcast %10 : vector<1x128xf32> to vector<64x128xf32>
    %13 = arith.mulf %11, %12 : vector<64x128xf32>
    %14 = arith.addf %8, %13 : vector<64x128xf32>
    %15 = vector.extract_strided_slice %3 {offsets = [0, 2], sizes = [64, 1], strides = [1, 1]} : vector<64x3xf32> to vector<64x1xf32>
    %16 = vector.extract_strided_slice %1 {offsets = [2, 0], sizes = [1, 128], strides = [1, 1]} : vector<3x128xf32> to vector<1x128xf32>
    %17 = vector.broadcast %15 : vector<64x1xf32> to vector<64x128xf32>
    %18 = vector.broadcast %16 : vector<1x128xf32> to vector<64x128xf32>
    %19 = arith.mulf %17, %18 : vector<64x128xf32>
    %20 = arith.addf %14, %19 : vector<64x128xf32>
    %c0_5 = arith.constant 0 : index
    %c0_6 = arith.constant 0 : index
    %21 = vector.load %arg4[%c0_5, %c0_6] : memref<64x1xf32, #tpu.memory_space<vmem>>, vector<64x1xf32>
    %22 = vector.broadcast %21 : vector<64x1xf32> to vector<64x128xf32>
    %23 = arith.addf %20, %22 : vector<64x128xf32>
    %cst = arith.constant 0.000000e+00 : f32
    %24 = vector.broadcast %cst : f32 to vector<64x128xf32>
    %25 = arith.maximumf %23, %24 : vector<64x128xf32>
    %c0_7 = arith.constant 0 : index
    %c0_8 = arith.constant 0 : index
    %26 = vector.load %arg5[%c0_7, %c0_8] : memref<128x64xbf16, #tpu.memory_space<vmem>>, vector<128x64xbf16>
    %27 = arith.truncf %25 : vector<64x128xf32> to vector<64x128xbf16>
    %cst_9 = arith.constant dense<0.000000e+00> : vector<128x128xf32>
    %28 = tpu.matmul %26, %27, %cst_9 {dimension_numbers = #tpu.dot_dimension_numbers<[1], [0], [0], [1], [0, 0, 1, 1], [], []>} : vector<128x64xbf16>, vector<64x128xbf16>, vector<128x128xf32> -> vector<128x128xf32>
    %c0_10 = arith.constant 0 : index
    %c0_11 = arith.constant 0 : index
    %29 = vector.load %arg6[%c0_10, %c0_11] : memref<128x1xf32, #tpu.memory_space<vmem>>, vector<128x1xf32>
    %30 = vector.broadcast %29 : vector<128x1xf32> to vector<128x128xf32>
    %31 = arith.addf %28, %30 : vector<128x128xf32>
    %cst_12 = arith.constant 0.000000e+00 : f32
    %32 = vector.broadcast %cst_12 : f32 to vector<128x128xf32>
    %33 = arith.maximumf %31, %32 : vector<128x128xf32>
    %c0_13 = arith.constant 0 : index
    %c0_14 = arith.constant 0 : index
    %34 = vector.load %arg7[%c0_13, %c0_14] : memref<1024x128xbf16, #tpu.memory_space<vmem>>, vector<1024x128xbf16>
    %35 = arith.truncf %33 : vector<128x128xf32> to vector<128x128xbf16>
    %cst_15 = arith.constant dense<0.000000e+00> : vector<1024x128xf32>
    %36 = tpu.matmul %34, %35, %cst_15 {dimension_numbers = #tpu.dot_dimension_numbers<[1], [0], [0], [1], [0, 0, 1, 1], [], []>} : vector<1024x128xbf16>, vector<128x128xbf16>, vector<1024x128xf32> -> vector<1024x128xf32>
    %c0_16 = arith.constant 0 : index
    %c0_17 = arith.constant 0 : index
    %37 = vector.load %arg8[%c0_16, %c0_17] : memref<1024x1xf32, #tpu.memory_space<vmem>>, vector<1024x1xf32>
    %38 = vector.broadcast %37 : vector<1024x1xf32> to vector<1024x128xf32>
    %39 = arith.addf %36, %38 : vector<1024x128xf32>
    %cst_18 = arith.constant 0.000000e+00 : f32
    %40 = vector.broadcast %cst_18 : f32 to vector<1024x128xf32>
    %41 = arith.maximumf %39, %40 : vector<1024x128xf32>
    %c0_i32 = arith.constant 0 : i32
    %42 = arith.cmpi eq, %arg1, %c0_i32 : i32
    %43 = arith.extui %42 : i1 to i32
    %c0_i32_19 = arith.constant 0 : i32
    %44 = arith.cmpi ne, %43, %c0_i32_19 : i32
    scf.if %44 {
      %cst_25 = arith.constant 0xFF800000 : f32
      %54 = vector.broadcast %cst_25 : f32 to vector<1024x128xf32>
      %c0_26 = arith.constant 0 : index
      %c0_27 = arith.constant 0 : index
      %55 = vector.load %arg10[%c0_26, %c0_27] : memref<1024x128xf32, #tpu.memory_space<vmem>>, vector<1024x128xf32>
      tpu.vector_store %arg10[%c0_26, %c0_27], %54 {strides = array<i32>} : memref<1024x128xf32, #tpu.memory_space<vmem>>, vector<1024x128xf32>,
    } else {
    }
    %c2_i32 = arith.constant 2 : i32
    %45 = arith.cmpi slt, %arg1, %c2_i32 : i32
    %46 = arith.extui %45 : i1 to i32
    %c0_i32_20 = arith.constant 0 : i32
    %47 = arith.cmpi ne, %46, %c0_i32_20 : i32
    scf.if %47 {
      %c0_25 = arith.constant 0 : index
      %c0_26 = arith.constant 0 : index
      %54 = vector.load %arg10[%c0_25, %c0_26] : memref<1024x128xf32, #tpu.memory_space<vmem>>, vector<1024x128xf32>
      %55 = arith.maximumf %54, %41 : vector<1024x128xf32>
      %c0_27 = arith.constant 0 : index
      %c0_28 = arith.constant 0 : index
      %56 = vector.load %arg10[%c0_27, %c0_28] : memref<1024x128xf32, #tpu.memory_space<vmem>>, vector<1024x128xf32>
      tpu.vector_store %arg10[%c0_27, %c0_28], %55 {strides = array<i32>} : memref<1024x128xf32, #tpu.memory_space<vmem>>, vector<1024x128xf32>,
    } else {
    }
    %c2_i32_21 = arith.constant 2 : i32
    %48 = arith.cmpi eq, %arg1, %c2_i32_21 : i32
    %49 = arith.extui %48 : i1 to i32
    %c0_i32_22 = arith.constant 0 : i32
    %50 = arith.cmpi ne, %49, %c0_i32_22 : i32
    scf.if %50 {
      %c0_25 = arith.constant 0 : index
      %c0_26 = arith.constant 0 : index
      %54 = vector.load %arg10[%c0_25, %c0_26] : memref<1024x128xf32, #tpu.memory_space<vmem>>, vector<1024x128xf32>
      %55 = tpu.iota {dimensions = array<i32: 1>} : vector<1x128xi32>
      %c64_i32 = arith.constant 64 : i32
      %56 = vector.broadcast %c64_i32 : i32 to vector<1x128xi32>
      %57 = arith.cmpi slt, %55, %56 : vector<1x128xi32>
      %cst_27 = arith.constant 0xFF800000 : f32
      %58 = vector.shape_cast %57 : vector<1x128xi1> to vector<1x128xi1>
      %59 = vector.broadcast %58 : vector<1x128xi1> to vector<1024x128xi1>
      %60 = vector.broadcast %cst_27 : f32 to vector<1024x128xf32>
      %61 = arith.select %59, %41, %60 : vector<1024x128xi1>, vector<1024x128xf32>
      %62 = arith.maximumf %54, %61 : vector<1024x128xf32>
      %c0_28 = arith.constant 0 : index
      %c0_29 = arith.constant 0 : index
      %63 = vector.load %arg10[%c0_28, %c0_29] : memref<1024x128xf32, #tpu.memory_space<vmem>>, vector<1024x128xf32>
      tpu.vector_store %arg10[%c0_28, %c0_29], %62 {strides = array<i32>} : memref<1024x128xf32, #tpu.memory_space<vmem>>, vector<1024x128xf32>,
    } else {
    }
    %c2_i32_23 = arith.constant 2 : i32
    %51 = arith.cmpi eq, %arg1, %c2_i32_23 : i32
    %52 = arith.extui %51 : i1 to i32
    %c0_i32_24 = arith.constant 0 : i32
    %53 = arith.cmpi ne, %52, %c0_i32_24 : i32
    scf.if %53 {
      %c0_25 = arith.constant 0 : index
      %c0_26 = arith.constant 0 : index
      %54 = vector.load %arg10[%c0_25, %c0_26] : memref<1024x128xf32, #tpu.memory_space<vmem>>, vector<1024x128xf32>
      %55 = vector.shape_cast %54 : vector<1024x128xf32> to vector<8x128x128xf32>
      %cst_27 = arith.constant dense<0xFF800000> : vector<8x128xf32>
      %56 = vector.multi_reduction <maximumf>, %55, %cst_27 [2] : vector<8x128x128xf32> to vector<8x128xf32>
      %c0_28 = arith.constant 0 : index
      %c0_29 = arith.constant 0 : index
      %c0_30 = arith.constant 0 : index
      %57 = vector.load %arg9[%c0_28, %c0_29, %c0_30] : memref<1x8x128xf32, #tpu.memory_space<vmem>>, vector<1x8x128xf32>
      %58 = vector.shape_cast %57 : vector<1x8x128xf32> to vector<8x128xf32>
      %59 = vector.shape_cast %56 : vector<8x128xf32> to vector<1x8x128xf32>
      tpu.vector_store %arg9[%c0_28, %c0_29, %c0_30], %59 {strides = array<i32>} : memref<1x8x128xf32, #tpu.memory_space<vmem>>, vector<1x8x128xf32>,
    } else {
    }
    return
  }
  func.func @transform_0(%arg0: i32, %arg1: i32) -> (i32, i32, i32) {
    %c0_i32 = arith.constant 0 : i32
    %c0_i32_0 = arith.constant 0 : i32
    return %arg0, %c0_i32, %arg1 : i32, i32, i32
  }
  func.func @transform_1(%arg0: i32, %arg1: i32) -> (i32, i32, i32) {
    %c0_i32 = arith.constant 0 : i32
    %c0_i32_0 = arith.constant 0 : i32
    %c0_i32_1 = arith.constant 0 : i32
    %c0_i32_2 = arith.constant 0 : i32
    return %c0_i32, %c0_i32_0, %c0_i32_1 : i32, i32, i32
  }
  func.func @transform_2(%arg0: i32, %arg1: i32) -> (i32, i32) {
    %c0_i32 = arith.constant 0 : i32
    %c0_i32_0 = arith.constant 0 : i32
    %c0_i32_1 = arith.constant 0 : i32
    return %c0_i32, %c0_i32_0 : i32, i32
  }
  func.func @transform_3(%arg0: i32, %arg1: i32) -> (i32, i32) {
    %c0_i32 = arith.constant 0 : i32
    %c0_i32_0 = arith.constant 0 : i32
    %c0_i32_1 = arith.constant 0 : i32
    return %c0_i32, %c0_i32_0 : i32, i32
  }
  func.func @transform_4(%arg0: i32, %arg1: i32) -> (i32, i32) {
    %c0_i32 = arith.constant 0 : i32
    %c0_i32_0 = arith.constant 0 : i32
    %c0_i32_1 = arith.constant 0 : i32
    return %c0_i32, %c0_i32_0 : i32, i32
  }
  func.func @transform_5(%arg0: i32, %arg1: i32) -> (i32, i32) {
    %c0_i32 = arith.constant 0 : i32
    %c0_i32_0 = arith.constant 0 : i32
    %c0_i32_1 = arith.constant 0 : i32
    return %c0_i32, %c0_i32_0 : i32, i32
  }
  func.func @transform_6(%arg0: i32, %arg1: i32) -> (i32, i32) {
    %c0_i32 = arith.constant 0 : i32
    %c0_i32_0 = arith.constant 0 : i32
    %c0_i32_1 = arith.constant 0 : i32
    return %c0_i32, %c0_i32_0 : i32, i32
  }
  func.func @transform_7(%arg0: i32, %arg1: i32) -> (i32, i32, i32) {
    %c0_i32 = arith.constant 0 : i32
    %c0_i32_0 = arith.constant 0 : i32
    %c0_i32_1 = arith.constant 0 : i32
    return %arg0, %c0_i32, %c0_i32_0 : i32, i32, i32
  }
}

module attributes {stable_mosaic.version = 11 : i64} {
  func.func @_trunk_max_kernel(%arg0: i32, %arg1: i32, %arg2: memref<1x3x128xf32, #tpu.memory_space<vmem>>, %arg3: memref<1x64x3xf32, #tpu.memory_space<vmem>>, %arg4: memref<64x1xf32, #tpu.memory_space<vmem>>, %arg5: memref<128x64xbf16, #tpu.memory_space<vmem>>, %arg6: memref<128x1xf32, #tpu.memory_space<vmem>>, %arg7: memref<1024x128xbf16, #tpu.memory_space<vmem>>, %arg8: memref<1024x1xf32, #tpu.memory_space<vmem>>, %arg9: memref<1x8x128xf32, #tpu.memory_space<vmem>>, %arg10: memref<1024x128xf32, #tpu.memory_space<vmem>>) attributes {dimension_semantics = [#tpu.dimension_semantics<parallel>, #tpu.dimension_semantics<arbitrary>], iteration_bounds = array<i64: 2, 3>, scalar_prefetch = 0 : i64, scratch_operands = 1 : i64, tpu.core_type = #tpu.core_type<tc>, window_params = [{transform_indices = @transform_0, window_bounds = array<i64: 1, 3, 128>}, {transform_indices = @transform_1, window_bounds = array<i64: 1, 64, 3>}, {pipeline_mode = #tpu.pipeline_mode<synchronous>, transform_indices = @transform_2, window_bounds = array<i64: 64, 1>}, {pipeline_mode = #tpu.pipeline_mode<synchronous>, transform_indices = @transform_3, window_bounds = array<i64: 128, 64>}, {pipeline_mode = #tpu.pipeline_mode<synchronous>, transform_indices = @transform_4, window_bounds = array<i64: 128, 1>}, {pipeline_mode = #tpu.pipeline_mode<synchronous>, transform_indices = @transform_5, window_bounds = array<i64: 1024, 128>}, {pipeline_mode = #tpu.pipeline_mode<synchronous>, transform_indices = @transform_6, window_bounds = array<i64: 1024, 1>}, {transform_indices = @transform_7, window_bounds = array<i64: 1, 8, 128>}]} {
    %c0 = arith.constant 0 : index
    %c0_0 = arith.constant 0 : index
    %c0_1 = arith.constant 0 : index
    %0 = vector.load %arg2[%c0, %c0_0, %c0_1] : memref<1x3x128xf32, #tpu.memory_space<vmem>>, vector<1x3x128xf32>
    %1 = vector.shape_cast %0 : vector<1x3x128xf32> to vector<3x128xf32>
    %c0_2 = arith.constant 0 : index
    %c0_3 = arith.constant 0 : index
    %c0_4 = arith.constant 0 : index
    %2 = vector.load %arg3[%c0_2, %c0_3, %c0_4] : memref<1x64x3xf32, #tpu.memory_space<vmem>>, vector<1x64x3xf32>
    %3 = vector.shape_cast %2 : vector<1x64x3xf32> to vector<64x3xf32>
    %4 = vector.extract_strided_slice %3 {offsets = [0, 0], sizes = [64, 1], strides = [1, 1]} : vector<64x3xf32> to vector<64x1xf32>
    %5 = vector.extract_strided_slice %1 {offsets = [0, 0], sizes = [1, 128], strides = [1, 1]} : vector<3x128xf32> to vector<1x128xf32>
    %6 = vector.broadcast %4 : vector<64x1xf32> to vector<64x128xf32>
    %7 = vector.broadcast %5 : vector<1x128xf32> to vector<64x128xf32>
    %8 = arith.mulf %6, %7 : vector<64x128xf32>
    %9 = vector.extract_strided_slice %3 {offsets = [0, 1], sizes = [64, 1], strides = [1, 1]} : vector<64x3xf32> to vector<64x1xf32>
    %10 = vector.extract_strided_slice %1 {offsets = [1, 0], sizes = [1, 128], strides = [1, 1]} : vector<3x128xf32> to vector<1x128xf32>
    %11 = vector.broadcast %9 : vector<64x1xf32> to vector<64x128xf32>
    %12 = vector.broadcast %10 : vector<1x128xf32> to vector<64x128xf32>
    %13 = arith.mulf %11, %12 : vector<64x128xf32>
    %14 = arith.addf %8, %13 : vector<64x128xf32>
    %15 = vector.extract_strided_slice %3 {offsets = [0, 2], sizes = [64, 1], strides = [1, 1]} : vector<64x3xf32> to vector<64x1xf32>
    %16 = vector.extract_strided_slice %1 {offsets = [2, 0], sizes = [1, 128], strides = [1, 1]} : vector<3x128xf32> to vector<1x128xf32>
    %17 = vector.broadcast %15 : vector<64x1xf32> to vector<64x128xf32>
    %18 = vector.broadcast %16 : vector<1x128xf32> to vector<64x128xf32>
    %19 = arith.mulf %17, %18 : vector<64x128xf32>
    %20 = arith.addf %14, %19 : vector<64x128xf32>
    %c0_5 = arith.constant 0 : index
    %c0_6 = arith.constant 0 : index
    %21 = vector.load %arg4[%c0_5, %c0_6] : memref<64x1xf32, #tpu.memory_space<vmem>>, vector<64x1xf32>
    %22 = vector.broadcast %21 : vector<64x1xf32> to vector<64x128xf32>
    %23 = arith.addf %20, %22 : vector<64x128xf32>
    %cst = arith.constant 0.000000e+00 : f32
    %24 = vector.broadcast %cst : f32 to vector<64x128xf32>
    %25 = arith.maximumf %23, %24 : vector<64x128xf32>
    %c0_7 = arith.constant 0 : index
    %c0_8 = arith.constant 0 : index
    %26 = vector.load %arg5[%c0_7, %c0_8] : memref<128x64xbf16, #tpu.memory_space<vmem>>, vector<128x64xbf16>
    %27 = arith.truncf %25 : vector<64x128xf32> to vector<64x128xbf16>
    %cst_9 = arith.constant dense<0.000000e+00> : vector<128x128xf32>
    %28 = tpu.matmul %26, %27, %cst_9 {dimension_numbers = #tpu.dot_dimension_numbers<[1], [0], [0], [1], [0, 0, 1, 1], [], []>} : vector<128x64xbf16>, vector<64x128xbf16>, vector<128x128xf32> -> vector<128x128xf32>
    %c0_10 = arith.constant 0 : index
    %c0_11 = arith.constant 0 : index
    %29 = vector.load %arg6[%c0_10, %c0_11] : memref<128x1xf32, #tpu.memory_space<vmem>>, vector<128x1xf32>
    %30 = vector.broadcast %29 : vector<128x1xf32> to vector<128x128xf32>
    %31 = arith.addf %28, %30 : vector<128x128xf32>
    %cst_12 = arith.constant 0.000000e+00 : f32
    %32 = vector.broadcast %cst_12 : f32 to vector<128x128xf32>
    %33 = arith.maximumf %31, %32 : vector<128x128xf32>
    %c0_13 = arith.constant 0 : index
    %c0_14 = arith.constant 0 : index
    %34 = vector.load %arg7[%c0_13, %c0_14] : memref<1024x128xbf16, #tpu.memory_space<vmem>>, vector<1024x128xbf16>
    %35 = arith.truncf %33 : vector<128x128xf32> to vector<128x128xbf16>
    %cst_15 = arith.constant dense<0.000000e+00> : vector<1024x128xf32>
    %36 = tpu.matmul %34, %35, %cst_15 {dimension_numbers = #tpu.dot_dimension_numbers<[1], [0], [0], [1], [0, 0, 1, 1], [], []>} : vector<1024x128xbf16>, vector<128x128xbf16>, vector<1024x128xf32> -> vector<1024x128xf32>
    %c0_16 = arith.constant 0 : index
    %c0_17 = arith.constant 0 : index
    %37 = vector.load %arg8[%c0_16, %c0_17] : memref<1024x1xf32, #tpu.memory_space<vmem>>, vector<1024x1xf32>
    %38 = vector.broadcast %37 : vector<1024x1xf32> to vector<1024x128xf32>
    %39 = arith.addf %36, %38 : vector<1024x128xf32>
    %c0_i32 = arith.constant 0 : i32
    %40 = arith.cmpi eq, %arg1, %c0_i32 : i32
    %41 = arith.extui %40 : i1 to i32
    %c0_i32_18 = arith.constant 0 : i32
    %42 = arith.cmpi ne, %41, %c0_i32_18 : i32
    scf.if %42 {
      %cst_24 = arith.constant 0xFF800000 : f32
      %52 = vector.broadcast %cst_24 : f32 to vector<1024x128xf32>
      %c0_25 = arith.constant 0 : index
      %c0_26 = arith.constant 0 : index
      %53 = vector.load %arg10[%c0_25, %c0_26] : memref<1024x128xf32, #tpu.memory_space<vmem>>, vector<1024x128xf32>
      tpu.vector_store %arg10[%c0_25, %c0_26], %52 {strides = array<i32>} : memref<1024x128xf32, #tpu.memory_space<vmem>>, vector<1024x128xf32>,
    } else {
    }
    %c2_i32 = arith.constant 2 : i32
    %43 = arith.cmpi slt, %arg1, %c2_i32 : i32
    %44 = arith.extui %43 : i1 to i32
    %c0_i32_19 = arith.constant 0 : i32
    %45 = arith.cmpi ne, %44, %c0_i32_19 : i32
    scf.if %45 {
      %c0_24 = arith.constant 0 : index
      %c0_25 = arith.constant 0 : index
      %52 = vector.load %arg10[%c0_24, %c0_25] : memref<1024x128xf32, #tpu.memory_space<vmem>>, vector<1024x128xf32>
      %53 = arith.maximumf %52, %39 : vector<1024x128xf32>
      %c0_26 = arith.constant 0 : index
      %c0_27 = arith.constant 0 : index
      %54 = vector.load %arg10[%c0_26, %c0_27] : memref<1024x128xf32, #tpu.memory_space<vmem>>, vector<1024x128xf32>
      tpu.vector_store %arg10[%c0_26, %c0_27], %53 {strides = array<i32>} : memref<1024x128xf32, #tpu.memory_space<vmem>>, vector<1024x128xf32>,
    } else {
    }
    %c2_i32_20 = arith.constant 2 : i32
    %46 = arith.cmpi eq, %arg1, %c2_i32_20 : i32
    %47 = arith.extui %46 : i1 to i32
    %c0_i32_21 = arith.constant 0 : i32
    %48 = arith.cmpi ne, %47, %c0_i32_21 : i32
    scf.if %48 {
      %c0_24 = arith.constant 0 : index
      %c0_25 = arith.constant 0 : index
      %52 = vector.load %arg10[%c0_24, %c0_25] : memref<1024x128xf32, #tpu.memory_space<vmem>>, vector<1024x128xf32>
      %53 = tpu.iota {dimensions = array<i32: 1>} : vector<1x128xi32>
      %c64_i32 = arith.constant 64 : i32
      %54 = vector.broadcast %c64_i32 : i32 to vector<1x128xi32>
      %55 = arith.cmpi slt, %53, %54 : vector<1x128xi32>
      %cst_26 = arith.constant 0xFF800000 : f32
      %56 = vector.shape_cast %55 : vector<1x128xi1> to vector<1x128xi1>
      %57 = vector.broadcast %56 : vector<1x128xi1> to vector<1024x128xi1>
      %58 = vector.broadcast %cst_26 : f32 to vector<1024x128xf32>
      %59 = arith.select %57, %39, %58 : vector<1024x128xi1>, vector<1024x128xf32>
      %60 = arith.maximumf %52, %59 : vector<1024x128xf32>
      %c0_27 = arith.constant 0 : index
      %c0_28 = arith.constant 0 : index
      %61 = vector.load %arg10[%c0_27, %c0_28] : memref<1024x128xf32, #tpu.memory_space<vmem>>, vector<1024x128xf32>
      tpu.vector_store %arg10[%c0_27, %c0_28], %60 {strides = array<i32>} : memref<1024x128xf32, #tpu.memory_space<vmem>>, vector<1024x128xf32>,
    } else {
    }
    %c2_i32_22 = arith.constant 2 : i32
    %49 = arith.cmpi eq, %arg1, %c2_i32_22 : i32
    %50 = arith.extui %49 : i1 to i32
    %c0_i32_23 = arith.constant 0 : i32
    %51 = arith.cmpi ne, %50, %c0_i32_23 : i32
    scf.if %51 {
      %c0_24 = arith.constant 0 : index
      %c0_25 = arith.constant 0 : index
      %52 = vector.load %arg10[%c0_24, %c0_25] : memref<1024x128xf32, #tpu.memory_space<vmem>>, vector<1024x128xf32>
      %53 = vector.shape_cast %52 : vector<1024x128xf32> to vector<8x128x128xf32>
      %cst_26 = arith.constant dense<0xFF800000> : vector<8x128xf32>
      %54 = vector.multi_reduction <maximumf>, %53, %cst_26 [2] : vector<8x128x128xf32> to vector<8x128xf32>
      %c0_27 = arith.constant 0 : index
      %c0_28 = arith.constant 0 : index
      %c0_29 = arith.constant 0 : index
      %55 = vector.load %arg9[%c0_27, %c0_28, %c0_29] : memref<1x8x128xf32, #tpu.memory_space<vmem>>, vector<1x8x128xf32>
      %56 = vector.shape_cast %55 : vector<1x8x128xf32> to vector<8x128xf32>
      %57 = vector.shape_cast %54 : vector<8x128xf32> to vector<1x8x128xf32>
      tpu.vector_store %arg9[%c0_27, %c0_28, %c0_29], %57 {strides = array<i32>} : memref<1x8x128xf32, #tpu.memory_space<vmem>>, vector<1x8x128xf32>,
    } else {
    }
    return
  }
  func.func @transform_0(%arg0: i32, %arg1: i32) -> (i32, i32, i32) {
    %c0_i32 = arith.constant 0 : i32
    %c0_i32_0 = arith.constant 0 : i32
    return %arg0, %c0_i32, %arg1 : i32, i32, i32
  }
  func.func @transform_1(%arg0: i32, %arg1: i32) -> (i32, i32, i32) {
    %c0_i32 = arith.constant 0 : i32
    %c0_i32_0 = arith.constant 0 : i32
    %c0_i32_1 = arith.constant 0 : i32
    return %arg0, %c0_i32, %c0_i32_0 : i32, i32, i32
  }
  func.func @transform_2(%arg0: i32, %arg1: i32) -> (i32, i32) {
    %c0_i32 = arith.constant 0 : i32
    %c0_i32_0 = arith.constant 0 : i32
    %c0_i32_1 = arith.constant 0 : i32
    return %c0_i32, %c0_i32_0 : i32, i32
  }
  func.func @transform_3(%arg0: i32, %arg1: i32) -> (i32, i32) {
    %c0_i32 = arith.constant 0 : i32
    %c0_i32_0 = arith.constant 0 : i32
    %c0_i32_1 = arith.constant 0 : i32
    return %c0_i32, %c0_i32_0 : i32, i32
  }
  func.func @transform_4(%arg0: i32, %arg1: i32) -> (i32, i32) {
    %c0_i32 = arith.constant 0 : i32
    %c0_i32_0 = arith.constant 0 : i32
    %c0_i32_1 = arith.constant 0 : i32
    return %c0_i32, %c0_i32_0 : i32, i32
  }
  func.func @transform_5(%arg0: i32, %arg1: i32) -> (i32, i32) {
    %c0_i32 = arith.constant 0 : i32
    %c0_i32_0 = arith.constant 0 : i32
    %c0_i32_1 = arith.constant 0 : i32
    return %c0_i32, %c0_i32_0 : i32, i32
  }
  func.func @transform_6(%arg0: i32, %arg1: i32) -> (i32, i32) {
    %c0_i32 = arith.constant 0 : i32
    %c0_i32_0 = arith.constant 0 : i32
    %c0_i32_1 = arith.constant 0 : i32
    return %c0_i32, %c0_i32_0 : i32, i32
  }
  func.func @transform_7(%arg0: i32, %arg1: i32) -> (i32, i32, i32) {
    %c0_i32 = arith.constant 0 : i32
    %c0_i32_0 = arith.constant 0 : i32
    %c0_i32_1 = arith.constant 0 : i32
    return %arg0, %c0_i32, %c0_i32_0 : i32, i32, i32
  }
}

</mosaic_0001>

<llo_original>
// kernel: pointnetfeat_forward.3
$region0: #{pointnetfeat_forward.3}
  #allocation0 [shape = 'u32[]', space=smem, size = 0x4, offset = 0x4, fixed_abs, tag = 'smem constant byte address 0x4 - core index']
  #allocation1 [shape = 'u32[72,128]{1,0:T(1,128)}', space=vmem, size = 0x9000, scoped, tag = 'internal scratch']
  #allocation2 [shape = 'f32[1024,128]{1,0:T(8,128)}', space=vmem, size = 0x80000, scoped, tag = 'scratch operand']
  %s0 = inlined_call_operand.vmem [shape: f32[2,3,320], index: 0, kind: input, shape index: {}]
  %s1 = inlined_call_operand.vmem [shape: f32[2,64,3], index: 1, kind: input, shape index: {}]
  %s2 = inlined_call_operand.vmem [shape: f32[64,1], index: 2, kind: input, shape index: {}]
  %s3 = inlined_call_operand.vmem [shape: bf16[128,64], index: 3, kind: input, shape index: {}]
  %s4 = inlined_call_operand.vmem [shape: f32[128,1], index: 4, kind: input, shape index: {}]
  %s5 = inlined_call_operand.vmem [shape: bf16[1024,128], index: 5, kind: input, shape index: {}]
  %s6 = inlined_call_operand.vmem [shape: f32[1024,1], index: 6, kind: input, shape index: {}]
  %s7 = inlined_call_operand.vmem [shape: f32[2,8,128], index: 7, kind: output, shape index: {}]
  %s8 = sld [smem:[#allocation0]]
  $region73: #{pointnetfeat_forward.3} parent=0
    _
  %s10 = ssub.s32 1, %s8
  %s11 = scalar_select 0, %s10, %s8
  loop: start=0, step=1, limit=8
  $region2: #{pointnetfeat_forward.3} parent=0 // loop_pre_header
    _
  $region3: #{pointnetfeat_forward.3} parent=0 // loop_header
    %s13 = sphi 0, %s17
    %p14 = scmp.ge.s32.totalorder %s13, 8
    %s20 = sphi 0, %s32
    %s21 = sphi 0, %s28
    %s22 = sphi 0, %s20
    %s23 = sphi 0, %s21
    %s24 = sphi 0, %s22
    %s25 = sphi 0, %s23
    %s37 = sphi 0, %s39
    %s40 = sphi 0, %s37
    %s41 = sphi 0, %s40
    %s57 = sphi 0, %s41
    %s63 = sphi 0, %s65
    %s66 = sphi 0, %s63
    %s67 = sphi 0, %s66
    %s83 = sphi 0, %s67
    %s87 = sphi 0, %s87
    %s89 = sphi 0, %s87
    %s90 = sphi 0, %s89
    %s104 = sphi 0, %s90
    %s108 = sphi 0, %s108
    %s110 = sphi 0, %s108
    %s111 = sphi 0, %s110
    %s125 = sphi 0, %s111
    %s129 = sphi 0, %s129
    %s131 = sphi 0, %s129
    %s132 = sphi 0, %s131
    %s146 = sphi 0, %s132
    %s150 = sphi 0, %s150
    %s152 = sphi 0, %s150
    %s153 = sphi 0, %s152
    %s167 = sphi 0, %s153
    %s171 = sphi 0, %s171
    %s173 = sphi 0, %s171
    %s174 = sphi 0, %s173
    %s188 = sphi 0, %s174
    %s194 = sphi 0, %s196
    %s197 = sphi 0, %s194
    %s198 = sphi 0, %s197
    %s214 = sphi 0, %s198
  $region4: #{pointnetfeat_forward.3} parent=0 // loop_header_branch
    %16 = sbr.rel (%p14) target = $region8
  $region5: #{pointnetfeat_forward.3} parent=0 // loop_body
    %s18 = ssub.s32 %s13, 1
    %s19 = ssub.s32 %s13, 2
    %s26 = sadd.s32 1, %s21
    %p27 = scmp.ge.s32.totalorder %s26, 3
    %s28 = scalar_select %p27, 0, %s26
    %s29 = sadd.s32 1, %s20
    %s30 = scalar_select %p27, %s29, %s20
    %p31 = scmp.ge.s32.totalorder %s30, 2
    %s32 = scalar_select %p31, 0, %s30
    %s33 = ssub.s32 %s20, %s32
    %s34 = ssub.s32 %s21, %s28
    %s35 = sor.u32 %s33, %s34
    %p36 = scmp.eq.s32.totalorder %s35, 0
    %s38 = sadd.s32 %s37, 1
    %s39 = scalar_select %p36, %s37, %s38
    %p42 = pneg %p36
    %p43 = scmp.eq.s32.totalorder %s13, 5
    %p44 = por %p42, %p43
    %p45 = scmp.ne.s32.totalorder %s37, %s40
    %p46 = scmp.eq.s32.totalorder %s13, 0
    %p47 = por %p45, %p46
    %p48 = scmp.ne.s32.totalorder %s37, %s40
    %p49 = scmp.eq.s32.totalorder %s18, 5
    %p50 = por %p48, %p49
    %p51 = scmp.ne.s32.totalorder %s40, %s41
    %p52 = scmp.eq.s32.totalorder %s18, 0
    %p53 = por %p51, %p52
    %p54 = scmp.ne.s32.totalorder %s40, %s41
    %p55 = scmp.eq.s32.totalorder %s19, 5
    %p56 = por %p54, %p55
    %p58 = scmp.ne.s32.totalorder %s41, %s57
    %p59 = scmp.eq.s32.totalorder %s19, 0
    %p60 = por %p58, %p59
    %s61 = ssub.s32 %s20, %s32
    %p62 = scmp.eq.s32.totalorder %s61, 0
    %s64 = sadd.s32 %s63, 1
    %s65 = scalar_select %p62, %s63, %s64
    %p68 = pneg %p62
    %p69 = scmp.eq.s32.totalorder %s13, 5
    %p70 = por %p68, %p69
    %p71 = scmp.ne.s32.totalorder %s63, %s66
    %p72 = scmp.eq.s32.totalorder %s13, 0
    %p73 = por %p71, %p72
    %p74 = scmp.ne.s32.totalorder %s63, %s66
    %p75 = scmp.eq.s32.totalorder %s18, 5
    %p76 = por %p74, %p75
    %p77 = scmp.ne.s32.totalorder %s66, %s67
    %p78 = scmp.eq.s32.totalorder %s18, 0
    %p79 = por %p77, %p78
    %p80 = scmp.ne.s32.totalorder %s66, %s67
    %p81 = scmp.eq.s32.totalorder %s19, 5
    %p82 = por %p80, %p81
    %p84 = scmp.ne.s32.totalorder %s67, %s83
    %p85 = scmp.eq.s32.totalorder %s19, 0
    %p86 = por %p84, %p85
    %s88 = sadd.s32 %s87, 1
    %p91 = scmp.eq.s32.totalorder %s13, 5
    %p92 = scmp.ne.s32.totalorder %s87, %s89
    %p93 = scmp.eq.s32.totalorder %s13, 0
    %p94 = por %p92, %p93
    %p95 = scmp.ne.s32.totalorder %s87, %s89
    %p96 = scmp.eq.s32.totalorder %s18, 5
    %p97 = por %p95, %p96
    %p98 = scmp.ne.s32.totalorder %s89, %s90
    %p99 = scmp.eq.s32.totalorder %s18, 0
    %p100 = por %p98, %p99
    %p101 = scmp.ne.s32.totalorder %s89, %s90
    %p102 = scmp.eq.s32.totalorder %s19, 5
    %p103 = por %p101, %p102
    %p105 = scmp.ne.s32.totalorder %s90, %s104
    %p106 = scmp.eq.s32.totalorder %s19, 0
    %p107 = por %p105, %p106
    %s109 = sadd.s32 %s108, 1
    %p112 = scmp.eq.s32.totalorder %s13, 5
    %p113 = scmp.ne.s32.totalorder %s108, %s110
    %p114 = scmp.eq.s32.totalorder %s13, 0
    %p115 = por %p113, %p114
    %p116 = scmp.ne.s32.totalorder %s108, %s110
    %p117 = scmp.eq.s32.totalorder %s18, 5
    %p118 = por %p116, %p117
    %p119 = scmp.ne.s32.totalorder %s110, %s111
    %p120 = scmp.eq.s32.totalorder %s18, 0
    %p121 = por %p119, %p120
    %p122 = scmp.ne.s32.totalorder %s110, %s111
    %p123 = scmp.eq.s32.totalorder %s19, 5
    %p124 = por %p122, %p123
    %p126 = scmp.ne.s32.totalorder %s111, %s125
    %p127 = scmp.eq.s32.totalorder %s19, 0
    %p128 = por %p126, %p127
    %s130 = sadd.s32 %s129, 1
    %p133 = scmp.eq.s32.totalorder %s13, 5
    %p134 = scmp.ne.s32.totalorder %s129, %s131
    %p135 = scmp.eq.s32.totalorder %s13, 0
    %p136 = por %p134, %p135
    %p137 = scmp.ne.s32.totalorder %s129, %s131
    %p138 = scmp.eq.s32.totalorder %s18, 5
    %p139 = por %p137, %p138
    %p140 = scmp.ne.s32.totalorder %s131, %s132
    %p141 = scmp.eq.s32.totalorder %s18, 0
    %p142 = por %p140, %p141
    %p143 = scmp.ne.s32.totalorder %s131, %s132
    %p144 = scmp.eq.s32.totalorder %s19, 5
    %p145 = por %p143, %p144
    %p147 = scmp.ne.s32.totalorder %s132, %s146
    %p148 = scmp.eq.s32.totalorder %s19, 0
    %p149 = por %p147, %p148
    %s151 = sadd.s32 %s150, 1
    %p154 = scmp.eq.s32.totalorder %s13, 5
    %p155 = scmp.ne.s32.totalorder %s150, %s152
    %p156 = scmp.eq.s32.totalorder %s13, 0
    %p157 = por %p155, %p156
    %p158 = scmp.ne.s32.totalorder %s150, %s152
    %p159 = scmp.eq.s32.totalorder %s18, 5
    %p160 = por %p158, %p159
    %p161 = scmp.ne.s32.totalorder %s152, %s153
    %p162 = scmp.eq.s32.totalorder %s18, 0
    %p163 = por %p161, %p162
    %p164 = scmp.ne.s32.totalorder %s152, %s153
    %p165 = scmp.eq.s32.totalorder %s19, 5
    %p166 = por %p164, %p165
    %p168 = scmp.ne.s32.totalorder %s153, %s167
    %p169 = scmp.eq.s32.totalorder %s19, 0
    %p170 = por %p168, %p169
    %s172 = sadd.s32 %s171, 1
    %p175 = scmp.eq.s32.totalorder %s13, 5
    %p176 = scmp.ne.s32.totalorder %s171, %s173
    %p177 = scmp.eq.s32.totalorder %s13, 0
    %p178 = por %p176, %p177
    %p179 = scmp.ne.s32.totalorder %s171, %s173
    %p180 = scmp.eq.s32.totalorder %s18, 5
    %p181 = por %p179, %p180
    %p182 = scmp.ne.s32.totalorder %s173, %s174
    %p183 = scmp.eq.s32.totalorder %s18, 0
    %p184 = por %p182, %p183
    %p185 = scmp.ne.s32.totalorder %s173, %s174
    %p186 = scmp.eq.s32.totalorder %s19, 5
    %p187 = por %p185, %p186
    %p189 = scmp.ne.s32.totalorder %s174, %s188
    %p190 = scmp.eq.s32.totalorder %s19, 0
    %p191 = por %p189, %p190
    %s192 = ssub.s32 %s20, %s32
    %p193 = scmp.eq.s32.totalorder %s192, 0
    %s195 = sadd.s32 %s194, 1
    %s196 = scalar_select %p193, %s194, %s195
    %p199 = pneg %p193
    %p200 = scmp.eq.s32.totalorder %s13, 5
    %p201 = por %p199, %p200
    %p202 = scmp.ne.s32.totalorder %s194, %s197
    %p203 = scmp.eq.s32.totalorder %s13, 0
    %p204 = por %p202, %p203
    %p205 = scmp.ne.s32.totalorder %s194, %s197
    %p206 = scmp.eq.s32.totalorder %s18, 5
    %p207 = por %p205, %p206
    %p208 = scmp.ne.s32.totalorder %s197, %s198
    %p209 = scmp.eq.s32.totalorder %s18, 0
    %p210 = por %p208, %p209
    %p211 = scmp.ne.s32.totalorder %s197, %s198
    %p212 = scmp.eq.s32.totalorder %s19, 5
    %p213 = por %p211, %p212
    %p215 = scmp.ne.s32.totalorder %s198, %s214
    %p216 = scmp.eq.s32.totalorder %s19, 0
    %p217 = por %p215, %p216
    %p218 = scmp.le.s32.totalorder 1, %s13
    %p219 = scmp.lt.s32.totalorder %s13, 7
    %p220 = pnand %p218, %p219
    %p221 = pneg %p220
    // Predicated region
    $region9: #{pointnetfeat_forward.3} parent=5 // pred_check
      _
    $region10: #{pointnetfeat_forward.3} parent=5 // pred_check_branch
      %223 = sbr.rel (%p220) target = $region12
    $region11: #{pointnetfeat_forward.3} parent=5 // pred_region
      %s224 = ssub.s32 %s13, 1
      // Predicated region
      $region13: #{pointnetfeat_forward.3} parent=11 // pred_check
        %p225 = pneg %p100
      $region14: #{pointnetfeat_forward.3} parent=11 // pred_check_branch
        %227 = sbr.rel (%p225) target = $region16
      $region15: #{pointnetfeat_forward.3} parent=11 // pred_region
        _
      $region16: #{pointnetfeat_forward.3} parent=11 // pred_fallthru
        _
      // Predicated region
      $region17: #{pointnetfeat_forward.3} parent=11 // pred_check
        %p228 = pneg %p121
      $region18: #{pointnetfeat_forward.3} parent=11 // pred_check_branch
        %230 = sbr.rel (%p228) target = $region20
      $region19: #{pointnetfeat_forward.3} parent=11 // pred_region
        _
      $region20: #{pointnetfeat_forward.3} parent=11 // pred_fallthru
        _
      // Predicated region
      $region21: #{pointnetfeat_forward.3} parent=11 // pred_check
        %p231 = pneg %p142
      $region22: #{pointnetfeat_forward.3} parent=11 // pred_check_branch
        %233 = sbr.rel (%p231) target = $region24
      $region23: #{pointnetfeat_forward.3} parent=11 // pred_region
        _
      $region24: #{pointnetfeat_forward.3} parent=11 // pred_fallthru
        _
      // Predicated region
      $region25: #{pointnetfeat_forward.3} parent=11 // pred_check
        %p234 = pneg %p163
      $region26: #{pointnetfeat_forward.3} parent=11 // pred_check_branch
        %236 = sbr.rel (%p234) target = $region28
      $region27: #{pointnetfeat_forward.3} parent=11 // pred_region
        _
      $region28: #{pointnetfeat_forward.3} parent=11 // pred_fallthru
        _
      // Predicated region
      $region29: #{pointnetfeat_forward.3} parent=11 // pred_check
        %p237 = pneg %p184
      $region30: #{pointnetfeat_forward.3} parent=11 // pred_check_branch
        %239 = sbr.rel (%p237) target = $region32
      $region31: #{pointnetfeat_forward.3} parent=11 // pred_region
        _
      $region32: #{pointnetfeat_forward.3} parent=11 // pred_fallthru
        _
    $region12: #{pointnetfeat_forward.3} parent=5 // pred_fallthru
      _
    %p240 = scmp.lt.s32.totalorder %s13, 6
    // Predicated region
    $region33: #{pointnetfeat_forward.3} parent=5 // pred_check
      %p241 = pneg %p240
    $region34: #{pointnetfeat_forward.3} parent=5 // pred_check_branch
      %243 = sbr.rel (%p241) target = $region36
    $region35: #{pointnetfeat_forward.3} parent=5 // pred_region
      // Predicated region
      $region37: #{pointnetfeat_forward.3} parent=35 // pred_check
        %p244 = pneg %p47
      $region38: #{pointnetfeat_forward.3} parent=35 // pred_check_branch
        %246 = sbr.rel (%p244) target = $region40
      $region39: #{pointnetfeat_forward.3} parent=35 // pred_region
        %p247 = scmp.lt.s32.totalorder %s20, 1
        %s248 = scalar_select %p247, %s20, 1
        %p249 = scmp.lt.s32.totalorder %s21, 2
        %s250 = scalar_select %p249, %s21, 2
        %s251 = smul.addr %s248, 3
        %s252 = sadd.s32 %s250, %s251
        %s253 = smul.addr %s252, 4
        %s254 = scalar_lea.vmem %s0, %s253
      $region40: #{pointnetfeat_forward.3} parent=35 // pred_fallthru
        _
      // Predicated region
      $region41: #{pointnetfeat_forward.3} parent=35 // pred_check
        %p255 = pneg %p73
      $region42: #{pointnetfeat_forward.3} parent=35 // pred_check_branch
        %257 = sbr.rel (%p255) target = $region44
      $region43: #{pointnetfeat_forward.3} parent=35 // pred_region
        %p258 = scmp.lt.s32.totalorder %s20, 1
        %s259 = scalar_select %p258, %s20, 1
        %s260 = smul.addr %s259, 8
        %s261 = smul.addr %s260, 8
        %s262 = scalar_lea.vmem %s1, %s261
      $region44: #{pointnetfeat_forward.3} parent=35 // pred_fallthru
        _
    $region36: #{pointnetfeat_forward.3} parent=5 // pred_fallthru
      _
    %p263 = scmp.le.s32.totalorder 1, %s13
    %p264 = scmp.lt.s32.totalorder %s13, 7
    %p265 = pnand %p263, %p264
    %p266 = pneg %p265
    // Predicated region
    $region45: #{pointnetfeat_forward.3} parent=5 // pred_check
      _
    $region46: #{pointnetfeat_forward.3} parent=5 // pred_check_branch
      %268 = sbr.rel (%p265) target = $region48
    $region47: #{pointnetfeat_forward.3} parent=5 // pred_region
      %s269 = ssub.s32 %s13, 1
      %p270 = scmp.lt.s32.totalorder %s22, 1
      %s271 = scalar_select %p270, %s22, 1
      %p272 = scmp.lt.s32.totalorder %s23, 2
      %s273 = scalar_select %p272, %s23, 2
      %s274 = smul.addr %s271, 3
      %s275 = sadd.s32 %s273, %s274
      %s276 = smul.addr %s275, 4
      %s277 = scalar_lea.vmem %s0, %s276
      %p278 = pneg %p53
      %p279 = pneg %p50
      %p280 = scmp.lt.s32.totalorder %s22, 1
      %s281 = scalar_select %p280, %s22, 1
      %s282 = smul.addr %s281, 8
      %s283 = smul.addr %s282, 8
      %s284 = scalar_lea.vmem %s1, %s283
      %p285 = pneg %p79
      %p286 = pneg %p76
      %p287 = pneg %p100
      %p288 = pneg %p97
      %p289 = pneg %p121
      %p290 = pneg %p118
      %p291 = pneg %p142
      %p292 = pneg %p139
      %p293 = pneg %p163
      %p294 = pneg %p160
      %p295 = pneg %p184
      %p296 = pneg %p181
      %p297 = pneg %p210
      %p298 = pneg %p207
      %p299 = scmp.lt.s32.totalorder %s22, 1
      %s300 = scalar_select %p299, %s22, 1
      %s301 = smul.addr %s300, 8
      %s302 = scalar_lea.vmem %s7, %s301
      %p303 = scmp.lt.s32.totalorder %s22, 1
      %s304 = scalar_select %p303, %s22, 1
      %p305 = scmp.lt.s32.totalorder %s23, 2
      %s306 = scalar_select %p305, %s23, 2
      %s307 = smul.addr %s304, 3
      %s308 = sadd.s32 %s306, %s307
      %s309 = smul.addr %s308, 4
      %s310 = scalar_lea.vmem %s0, %s309
      %p311 = scmp.lt.s32.totalorder %s22, 1
      %s312 = scalar_select %p311, %s22, 1
      %s313 = smul.addr %s312, 8
      %s314 = smul.addr %s313, 8
      %s315 = scalar_lea.vmem %s1, %s314
      %p316 = scmp.lt.s32.totalorder %s22, 1
      %s317 = scalar_select %p316, %s22, 1
      %s318 = smul.addr %s317, 8
      %s319 = scalar_lea.vmem %s7, %s318
      %v321 = vld [vmem:[%s310] sm:$0x7]
      %v322 = vld [vmem:[%s315] sm:$0xff]
      %v323 = vld [vmem:[%s315 + $0x8] sm:$0xff]
      %v324 = vld [vmem:[%s315 + $0x10] sm:$0xff]
      %v325 = vld [vmem:[%s315 + $0x18] sm:$0xff]
      %v326 = vld [vmem:[%s315 + $0x20] sm:$0xff]
      %v327 = vld [vmem:[%s315 + $0x28] sm:$0xff]
      %v328 = vld [vmem:[%s315 + $0x30] sm:$0xff]
      %v329 = vld [vmem:[%s315 + $0x38] sm:$0xff]
      %331 = vset.pattern.permute.xlu0 0
      %332 = vperm.xlu0 %331, %v322
      %v333 = vpop.permute.xlu0 %332
      %336 = vset.pattern.permute.xlu0 0
      %337 = vperm.xlu0 %336, %v323
      %v338 = vpop.permute.xlu0 %337
      %341 = vset.pattern.permute.xlu0 0
      %342 = vperm.xlu0 %341, %v324
      %v343 = vpop.permute.xlu0 %342
      %346 = vset.pattern.permute.xlu0 0
      %347 = vperm.xlu0 %346, %v325
      %v348 = vpop.permute.xlu0 %347
      %351 = vset.pattern.permute.xlu0 0
      %352 = vperm.xlu0 %351, %v326
      %v353 = vpop.permute.xlu0 %352
      %356 = vset.pattern.permute.xlu0 0
      %357 = vperm.xlu0 %356, %v327
      %v358 = vpop.permute.xlu0 %357
      %361 = vset.pattern.permute.xlu0 0
      %362 = vperm.xlu0 %361, %v328
      %v363 = vpop.permute.xlu0 %362
      %366 = vset.pattern.permute.xlu0 0
      %367 = vperm.xlu0 %366, %v329
      %v368 = vpop.permute.xlu0 %367
      %v370 = vperm.slane %v321, 0
      %v371 = vmul.f32 %v333, %v370
      %v372 = vmul.f32 %v338, %v370
      %v373 = vmul.f32 %v343, %v370
      %v374 = vmul.f32 %v348, %v370
      %v375 = vmul.f32 %v353, %v370
      %v376 = vmul.f32 %v358, %v370
      %v377 = vmul.f32 %v363, %v370
      %v378 = vmul.f32 %v368, %v370
      %379 = vset.pattern.permute.xlu0 1
      %380 = vperm.xlu0 %379, %v322
      %v381 = vpop.permute.xlu0 %380
      %383 = vset.pattern.permute.xlu0 1
      %384 = vperm.xlu0 %383, %v323
      %v385 = vpop.permute.xlu0 %384
      %387 = vset.pattern.permute.xlu0 1
      %388 = vperm.xlu0 %387, %v324
      %v389 = vpop.permute.xlu0 %388
      %391 = vset.pattern.permute.xlu0 1
      %392 = vperm.xlu0 %391, %v325
      %v393 = vpop.permute.xlu0 %392
      %395 = vset.pattern.permute.xlu0 1
      %396 = vperm.xlu0 %395, %v326
      %v397 = vpop.permute.xlu0 %396
      %399 = vset.pattern.permute.xlu0 1
      %400 = vperm.xlu0 %399, %v327
      %v401 = vpop.permute.xlu0 %400
      %403 = vset.pattern.permute.xlu0 1
      %404 = vperm.xlu0 %403, %v328
      %v405 = vpop.permute.xlu0 %404
      %407 = vset.pattern.permute.xlu0 1
      %408 = vperm.xlu0 %407, %v329
      %v409 = vpop.permute.xlu0 %408
      %v411 = vperm.slane %v321, 1
      %v412 = vmul.f32 %v381, %v411
      %v413 = vmul.f32 %v385, %v411
      %v414 = vmul.f32 %v389, %v411
      %v415 = vmul.f32 %v393, %v411
      %v416 = vmul.f32 %v397, %v411
      %v417 = vmul.f32 %v401, %v411
      %v418 = vmul.f32 %v405, %v411
      %v419 = vmul.f32 %v409, %v411
      %v420 = vadd.f32 %v371, %v412
      %v421 = vadd.f32 %v372, %v413
      %v422 = vadd.f32 %v373, %v414
      %v423 = vadd.f32 %v374, %v415
      %v424 = vadd.f32 %v375, %v416
      %v425 = vadd.f32 %v376, %v417
      %v426 = vadd.f32 %v377, %v418
      %v427 = vadd.f32 %v378, %v419
      %428 = vset.pattern.permute.xlu0 2
      %429 = vperm.xlu0 %428, %v322
      %v430 = vpop.permute.xlu0 %429
      %432 = vset.pattern.permute.xlu0 2
      %433 = vperm.xlu0 %432, %v323
      %v434 = vpop.permute.xlu0 %433
      %436 = vset.pattern.permute.xlu0 2
      %437 = vperm.xlu0 %436, %v324
      %v438 = vpop.permute.xlu0 %437
      %440 = vset.pattern.permute.xlu0 2
      %441 = vperm.xlu0 %440, %v325
      %v442 = vpop.permute.xlu0 %441
      %444 = vset.pattern.permute.xlu0 2
      %445 = vperm.xlu0 %444, %v326
      %v446 = vpop.permute.xlu0 %445
      %448 = vset.pattern.permute.xlu0 2
      %449 = vperm.xlu0 %448, %v327
      %v450 = vpop.permute.xlu0 %449
      %452 = vset.pattern.permute.xlu0 2
      %453 = vperm.xlu0 %452, %v328
      %v454 = vpop.permute.xlu0 %453
      %456 = vset.pattern.permute.xlu0 2
      %457 = vperm.xlu0 %456, %v329
      %v458 = vpop.permute.xlu0 %457
      %v460 = vperm.slane %v321, 2
      %v461 = vmul.f32 %v430, %v460
      %v462 = vmul.f32 %v434, %v460
      %v463 = vmul.f32 %v438, %v460
      %v464 = vmul.f32 %v442, %v460
      %v465 = vmul.f32 %v446, %v460
      %v466 = vmul.f32 %v450, %v460
      %v467 = vmul.f32 %v454, %v460
      %v468 = vmul.f32 %v458, %v460
      %v469 = vadd.f32 %v420, %v461
      %v470 = vadd.f32 %v421, %v462
      %v471 = vadd.f32 %v422, %v463
      %v472 = vadd.f32 %v423, %v464
      %v473 = vadd.f32 %v424, %v465
      %v474 = vadd.f32 %v425, %v466
      %v475 = vadd.f32 %v426, %v467
      %v476 = vadd.f32 %v427, %v468
      %v477 = vld [vmem:[%s2] sm:$0xff]
      %v478 = vld [vmem:[%s2 + $0x8] sm:$0xff]
      %v479 = vld [vmem:[%s2 + $0x10] sm:$0xff]
      %v480 = vld [vmem:[%s2 + $0x18] sm:$0xff]
      %v481 = vld [vmem:[%s2 + $0x20] sm:$0xff]
      %v482 = vld [vmem:[%s2 + $0x28] sm:$0xff]
      %v483 = vld [vmem:[%s2 + $0x30] sm:$0xff]
      %v484 = vld [vmem:[%s2 + $0x38] sm:$0xff]
      %486 = vset.pattern.permute.xlu0 0
      %487 = vperm.xlu0 %486, %v477
      %v488 = vpop.permute.xlu0 %487
      %491 = vset.pattern.permute.xlu0 0
      %492 = vperm.xlu0 %491, %v478
      %v493 = vpop.permute.xlu0 %492
      %496 = vset.pattern.permute.xlu0 0
      %497 = vperm.xlu0 %496, %v479
      %v498 = vpop.permute.xlu0 %497
      %501 = vset.pattern.permute.xlu0 0
      %502 = vperm.xlu0 %501, %v480
      %v503 = vpop.permute.xlu0 %502
      %506 = vset.pattern.permute.xlu0 0
      %507 = vperm.xlu0 %506, %v481
      %v508 = vpop.permute.xlu0 %507
      %511 = vset.pattern.permute.xlu0 0
      %512 = vperm.xlu0 %511, %v482
      %v513 = vpop.permute.xlu0 %512
      %516 = vset.pattern.permute.xlu0 0
      %517 = vperm.xlu0 %516, %v483
      %v518 = vpop.permute.xlu0 %517
      %521 = vset.pattern.permute.xlu0 0
      %522 = vperm.xlu0 %521, %v484
      %v523 = vpop.permute.xlu0 %522
      %v525 = vadd.f32 %v469, %v488
      %v526 = vadd.f32 %v470, %v493
      %v527 = vadd.f32 %v471, %v498
      %v528 = vadd.f32 %v472, %v503
      %v529 = vadd.f32 %v473, %v508
      %v530 = vadd.f32 %v474, %v513
      %v531 = vadd.f32 %v475, %v518
      %v532 = vadd.f32 %v476, %v523
      %v533 = vmax.f32 %v525, 0.0
      %v534 = vmax.f32 %v526, 0.0
      %v535 = vmax.f32 %v527, 0.0
      %v536 = vmax.f32 %v528, 0.0
      %v537 = vmax.f32 %v529, 0.0
      %v538 = vmax.f32 %v530, 0.0
      %v539 = vmax.f32 %v531, 0.0
      %v540 = vmax.f32 %v532, 0.0
      %v541 = vld [vmem:[%s3] sm:$0xf]
      %v542 = vld [vmem:[%s3 + $0x4] sm:$0xf]
      %v543 = vld [vmem:[%s3 + $0x8] sm:$0xf]
      %v544 = vld [vmem:[%s3 + $0xc] sm:$0xf]
      %v545 = vld [vmem:[%s3 + $0x10] sm:$0xf]
      %v546 = vld [vmem:[%s3 + $0x14] sm:$0xf]
      %v547 = vld [vmem:[%s3 + $0x18] sm:$0xf]
      %v548 = vld [vmem:[%s3 + $0x1c] sm:$0xf]
      %v549 = vld [vmem:[%s3 + $0x20] sm:$0xf]
      %v550 = vld [vmem:[%s3 + $0x24] sm:$0xf]
      %v551 = vld [vmem:[%s3 + $0x28] sm:$0xf]
      %v552 = vld [vmem:[%s3 + $0x2c] sm:$0xf]
      %v553 = vld [vmem:[%s3 + $0x30] sm:$0xf]
      %v554 = vld [vmem:[%s3 + $0x34] sm:$0xf]
      %v555 = vld [vmem:[%s3 + $0x38] sm:$0xf]
      %v556 = vld [vmem:[%s3 + $0x3c] sm:$0xf]
      %v557 = vpack.c.bf16 %v534, %v533
      %v558 = vpack.c.bf16 %v536, %v535
      %v559 = vpack.c.bf16 %v538, %v537
      %v560 = vpack.c.bf16 %v540, %v539
      %v561 = vld [vmem:[%s4] sm:$0xff]
      %v562 = vld [vmem:[%s4 + $0x8] sm:$0xff]
      %v563 = vld [vmem:[%s4 + $0x10] sm:$0xff]
      %v564 = vld [vmem:[%s4 + $0x18] sm:$0xff]
      %v565 = vld [vmem:[%s4 + $0x20] sm:$0xff]
      %v566 = vld [vmem:[%s4 + $0x28] sm:$0xff]
      %v567 = vld [vmem:[%s4 + $0x30] sm:$0xff]
      %v568 = vld [vmem:[%s4 + $0x38] sm:$0xff]
      %v569 = vld [vmem:[%s4 + $0x40] sm:$0xff]
      %v570 = vld [vmem:[%s4 + $0x48] sm:$0xff]
      %v571 = vld [vmem:[%s4 + $0x50] sm:$0xff]
      %v572 = vld [vmem:[%s4 + $0x58] sm:$0xff]
      %v573 = vld [vmem:[%s4 + $0x60] sm:$0xff]
      %v574 = vld [vmem:[%s4 + $0x68] sm:$0xff]
      %v575 = vld [vmem:[%s4 + $0x70] sm:$0xff]
      %v576 = vld [vmem:[%s4 + $0x78] sm:$0xff]
      %578 = vset.pattern.permute.xlu0 0
      %579 = vperm.xlu0 %578, %v561
      %v580 = vpop.permute.xlu0 %579
      %583 = vset.pattern.permute.xlu0 0
      %584 = vperm.xlu0 %583, %v562
      %v585 = vpop.permute.xlu0 %584
      %588 = vset.pattern.permute.xlu0 0
      %589 = vperm.xlu0 %588, %v563
      %v590 = vpop.permute.xlu0 %589
      %593 = vset.pattern.permute.xlu0 0
      %594 = vperm.xlu0 %593, %v564
      %v595 = vpop.permute.xlu0 %594
      %598 = vset.pattern.permute.xlu0 0
      %599 = vperm.xlu0 %598, %v565
      %v600 = vpop.permute.xlu0 %599
      %603 = vset.pattern.permute.xlu0 0
      %604 = vperm.xlu0 %603, %v566
      %v605 = vpop.permute.xlu0 %604
      %608 = vset.pattern.permute.xlu0 0
      %609 = vperm.xlu0 %608, %v567
      %v610 = vpop.permute.xlu0 %609
      %613 = vset.pattern.permute.xlu0 0
      %614 = vperm.xlu0 %613, %v568
      %v615 = vpop.permute.xlu0 %614
      %618 = vset.pattern.permute.xlu0 0
      %619 = vperm.xlu0 %618, %v569
      %v620 = vpop.permute.xlu0 %619
      %623 = vset.pattern.permute.xlu0 0
      %624 = vperm.xlu0 %623, %v570
      %v625 = vpop.permute.xlu0 %624
      %628 = vset.pattern.permute.xlu0 0
      %629 = vperm.xlu0 %628, %v571
      %v630 = vpop.permute.xlu0 %629
      %633 = vset.pattern.permute.xlu0 0
      %634 = vperm.xlu0 %633, %v572
      %v635 = vpop.permute.xlu0 %634
      %638 = vset.pattern.permute.xlu0 0
      %639 = vperm.xlu0 %638, %v573
      %v640 = vpop.permute.xlu0 %639
      %643 = vset.pattern.permute.xlu0 0
      %644 = vperm.xlu0 %643, %v574
      %v645 = vpop.permute.xlu0 %644
      %648 = vset.pattern.permute.xlu0 0
      %649 = vperm.xlu0 %648, %v575
      %v650 = vpop.permute.xlu0 %649
      %653 = vset.pattern.permute.xlu0 0
      %654 = vperm.xlu0 %653, %v576
      %v655 = vpop.permute.xlu0 %654
      %v673 = vunpack.c.l.b16 %v541
      %v674 = vunpack.c.l.b16 %v542
      %v675 = vunpack.c.l.b16 %v543
      %v676 = vunpack.c.l.b16 %v544
      %v677 = vunpack.c.l.b16 %v545
      %v678 = vunpack.c.l.b16 %v546
      %v679 = vunpack.c.l.b16 %v547
      %v680 = vunpack.c.l.b16 %v548
      %v681 = vunpack.c.l.b16 %v549
      %v682 = vunpack.c.l.b16 %v550
      %v683 = vunpack.c.l.b16 %v551
      %v684 = vunpack.c.l.b16 %v552
      %v685 = vunpack.c.l.b16 %v553
      %v686 = vunpack.c.l.b16 %v554
      %v687 = vunpack.c.l.b16 %v555
      %v688 = vunpack.c.l.b16 %v556
      %v689 = vpack.c.b16 %v674, %v673
      %v690 = vpack.c.b16 %v676, %v675
      %v691 = vpack.c.b16 %v678, %v677
      %v692 = vpack.c.b16 %v680, %v679
      %v693 = vpack.c.b16 %v682, %v681
      %v694 = vpack.c.b16 %v684, %v683
      %v695 = vpack.c.b16 %v686, %v685
      %v696 = vpack.c.b16 %v688, %v687
      %vm697 = vcmask 523264
      %v699 = vsel %vm697, %v689, 0
      %v702 = vsel %vm697, %v690, 0
      %v705 = vsel %vm697, %v691, 0
      %v708 = vsel %vm697, %v692, 0
      %v711 = vsel %vm697, %v693, 0
      %v714 = vsel %vm697, %v694, 0
      %v717 = vsel %vm697, %v695, 0
      %v720 = vsel %vm697, %v696, 0
      %722 = vmatpush.bf16.msra.mxu0 0
      %723 = vmatpush.bf16.msra.mxu0 0
      %724 = vmatpush.bf16.msra.mxu0 0
      %725 = vmatpush.bf16.msra.mxu0 0
      %726 = vmatpush.bf16.msra.mxu0 %v560
      %727 = vmatpush.bf16.msra.mxu0 %v559
      %728 = vmatpush.bf16.msra.mxu0 %v558
      %729 = vmatpush.bf16.msra.mxu0 %v557
      %730 = vmatmul.bf16.gmra.mxu0 %v699
      %v731 = vpop.f32.mrf.mxu0
      %v732 = vadd.f32 %v580, %v731
      %v733 = vpop.f32.mrf.mxu0
      %v734 = vadd.f32 %v585, %v733
      %735 = vmatmul.bf16.gmra.mxu0 %v702
      %v736 = vpop.f32.mrf.mxu0
      %v737 = vadd.f32 %v590, %v736
      %v738 = vpop.f32.mrf.mxu0
      %v739 = vadd.f32 %v595, %v738
      %740 = vmatmul.bf16.gmra.mxu0 %v705
      %v741 = vpop.f32.mrf.mxu0
      %v742 = vadd.f32 %v600, %v741
      %v743 = vpop.f32.mrf.mxu0
      %v744 = vadd.f32 %v605, %v743
      %745 = vmatmul.bf16.gmra.mxu0 %v708
      %v746 = vpop.f32.mrf.mxu0
      %v747 = vadd.f32 %v610, %v746
      %v748 = vpop.f32.mrf.mxu0
      %v749 = vadd.f32 %v615, %v748
      %750 = vmatmul.bf16.gmra.mxu0 %v711
      %v751 = vpop.f32.mrf.mxu0
      %v752 = vadd.f32 %v620, %v751
      %v753 = vpop.f32.mrf.mxu0
      %v754 = vadd.f32 %v625, %v753
      %755 = vmatmul.bf16.gmra.mxu0 %v714
      %v756 = vpop.f32.mrf.mxu0
      %v757 = vadd.f32 %v630, %v756
      %v758 = vpop.f32.mrf.mxu0
      %v759 = vadd.f32 %v635, %v758
      %760 = vmatmul.bf16.gmra.mxu0 %v717
      %v761 = vpop.f32.mrf.mxu0
      %v762 = vadd.f32 %v640, %v761
      %v763 = vpop.f32.mrf.mxu0
      %v764 = vadd.f32 %v645, %v763
      %765 = vmatmul.bf16.gmra.mxu0 %v720
      %v766 = vpop.f32.mrf.mxu0
      %v767 = vadd.f32 %v650, %v766
      %v768 = vpop.f32.mrf.mxu0
      %v769 = vadd.f32 %v655, %v768
      %770 = vdwg.mxu0
      %v771 = vmax.f32 %v732, 0.0
      %v772 = vmax.f32 %v734, 0.0
      %v773 = vmax.f32 %v737, 0.0
      %v774 = vmax.f32 %v739, 0.0
      %v775 = vmax.f32 %v742, 0.0
      %v776 = vmax.f32 %v744, 0.0
      %v777 = vmax.f32 %v747, 0.0
      %v778 = vmax.f32 %v749, 0.0
      %v779 = vmax.f32 %v752, 0.0
      %v780 = vmax.f32 %v754, 0.0
      %v781 = vmax.f32 %v757, 0.0
      %v782 = vmax.f32 %v759, 0.0
      %v783 = vmax.f32 %v762, 0.0
      %v784 = vmax.f32 %v764, 0.0
      %v785 = vmax.f32 %v767, 0.0
      %v786 = vmax.f32 %v769, 0.0
      %v787 = vld [vmem:[%s5] sm:$0xf]
      %v788 = vld [vmem:[%s5 + $0x4] sm:$0xf]
      %v789 = vld [vmem:[%s5 + $0x8] sm:$0xf]
      %v790 = vld [vmem:[%s5 + $0xc] sm:$0xf]
      %v791 = vld [vmem:[%s5 + $0x10] sm:$0xf]
      %v792 = vld [vmem:[%s5 + $0x14] sm:$0xf]
      %v793 = vld [vmem:[%s5 + $0x18] sm:$0xf]
      %v794 = vld [vmem:[%s5 + $0x1c] sm:$0xf]
      %v795 = vld [vmem:[%s5 + $0x20] sm:$0xf]
      %v796 = vld [vmem:[%s5 + $0x24] sm:$0xf]
      %v797 = vld [vmem:[%s5 + $0x28] sm:$0xf]
      %v798 = vld [vmem:[%s5 + $0x2c] sm:$0xf]
      %v799 = vld [vmem:[%s5 + $0x30] sm:$0xf]
      %v800 = vld [vmem:[%s5 + $0x34] sm:$0xf]
      %v801 = vld [vmem:[%s5 + $0x38] sm:$0xf]
      %v802 = vld [vmem:[%s5 + $0x3c] sm:$0xf]
      %v803 = vld [vmem:[%s5 + $0x40] sm:$0xf]
      %v804 = vld [vmem:[%s5 + $0x44] sm:$0xf]
      %v805 = vld [vmem:[%s5 + $0x48] sm:$0xf]
      %v806 = vld [vmem:[%s5 + $0x4c] sm:$0xf]
      %v807 = vld [vmem:[%s5 + $0x50] sm:$0xf]
      %v808 = vld [vmem:[%s5 + $0x54] sm:$0xf]
      %v809 = vld [vmem:[%s5 + $0x58] sm:$0xf]
      %v810 = vld [vmem:[%s5 + $0x5c] sm:$0xf]
      %v811 = vld [vmem:[%s5 + $0x60] sm:$0xf]
      %v812 = vld [vmem:[%s5 + $0x64] sm:$0xf]
      %v813 = vld [vmem:[%s5 + $0x68] sm:$0xf]
      %v814 = vld [vmem:[%s5 + $0x6c] sm:$0xf]
      %v815 = vld [vmem:[%s5 + $0x70] sm:$0xf]
      %v816 = vld [vmem:[%s5 + $0x74] sm:$0xf]
      %v817 = vld [vmem:[%s5 + $0x78] sm:$0xf]
      %v818 = vld [vmem:[%s5 + $0x7c] sm:$0xf]
      %v819 = vld [vmem:[%s5 + $0x80] sm:$0xf]
      %v820 = vld [vmem:[%s5 + $0x84] sm:$0xf]
      %v821 = vld [vmem:[%s5 + $0x88] sm:$0xf]
      %v822 = vld [vmem:[%s5 + $0x8c] sm:$0xf]
      %v823 = vld [vmem:[%s5 + $0x90] sm:$0xf]
      %v824 = vld [vmem:[%s5 + $0x94] sm:$0xf]
      %v825 = vld [vmem:[%s5 + $0x98] sm:$0xf]
      %v826 = vld [vmem:[%s5 + $0x9c] sm:$0xf]
      %v827 = vld [vmem:[%s5 + $0xa0] sm:$0xf]
      %v828 = vld [vmem:[%s5 + $0xa4] sm:$0xf]
      %v829 = vld [vmem:[%s5 + $0xa8] sm:$0xf]
      %v830 = vld [vmem:[%s5 + $0xac] sm:$0xf]
      %v831 = vld [vmem:[%s5 + $0xb0] sm:$0xf]
      %v832 = vld [vmem:[%s5 + $0xb4] sm:$0xf]
      %v833 = vld [vmem:[%s5 + $0xb8] sm:$0xf]
      %v834 = vld [vmem:[%s5 + $0xbc] sm:$0xf]
      %v835 = vld [vmem:[%s5 + $0xc0] sm:$0xf]
      %v836 = vld [vmem:[%s5 + $0xc4] sm:$0xf]
      %v837 = vld [vmem:[%s5 + $0xc8] sm:$0xf]
      %v838 = vld [vmem:[%s5 + $0xcc] sm:$0xf]
      %v839 = vld [vmem:[%s5 + $0xd0] sm:$0xf]
      %v840 = vld [vmem:[%s5 + $0xd4] sm:$0xf]
      %v841 = vld [vmem:[%s5 + $0xd8] sm:$0xf]
      %v842 = vld [vmem:[%s5 + $0xdc] sm:$0xf]
      %v843 = vld [vmem:[%s5 + $0xe0] sm:$0xf]
      %v844 = vld [vmem:[%s5 + $0xe4] sm:$0xf]
      %v845 = vld [vmem:[%s5 + $0xe8] sm:$0xf]
      %v846 = vld [vmem:[%s5 + $0xec] sm:$0xf]
      %v847 = vld [vmem:[%s5 + $0xf0] sm:$0xf]
      %v848 = vld [vmem:[%s5 + $0xf4] sm:$0xf]
      %v849 = vld [vmem:[%s5 + $0xf8] sm:$0xf]
      %v850 = vld [vmem:[%s5 + $0xfc] sm:$0xf]
      %v851 = vld [vmem:[%s5 + $0x100] sm:$0xf]
      %v852 = vld [vmem:[%s5 + $0x104] sm:$0xf]
      %v853 = vld [vmem:[%s5 + $0x108] sm:$0xf]
      %v854 = vld [vmem:[%s5 + $0x10c] sm:$0xf]
      %v855 = vld [vmem:[%s5 + $0x110] sm:$0xf]
      %v856 = vld [vmem:[%s5 + $0x114] sm:$0xf]
      %v857 = vld [vmem:[%s5 + $0x118] sm:$0xf]
      %v858 = vld [vmem:[%s5 + $0x11c] sm:$0xf]
      %v859 = vld [vmem:[%s5 + $0x120] sm:$0xf]
      %v860 = vld [vmem:[%s5 + $0x124] sm:$0xf]
      %v861 = vld [vmem:[%s5 + $0x128] sm:$0xf]
      %v862 = vld [vmem:[%s5 + $0x12c] sm:$0xf]
      %v863 = vld [vmem:[%s5 + $0x130] sm:$0xf]
      %v864 = vld [vmem:[%s5 + $0x134] sm:$0xf]
      %v865 = vld [vmem:[%s5 + $0x138] sm:$0xf]
      %v866 = vld [vmem:[%s5 + $0x13c] sm:$0xf]
      %v867 = vld [vmem:[%s5 + $0x140] sm:$0xf]
      %v868 = vld [vmem:[%s5 + $0x144] sm:$0xf]
      %v869 = vld [vmem:[%s5 + $0x148] sm:$0xf]
      %v870 = vld [vmem:[%s5 + $0x14c] sm:$0xf]
      %v871 = vld [vmem:[%s5 + $0x150] sm:$0xf]
      %v872 = vld [vmem:[%s5 + $0x154] sm:$0xf]
      %v873 = vld [vmem:[%s5 + $0x158] sm:$0xf]
      %v874 = vld [vmem:[%s5 + $0x15c] sm:$0xf]
      %v875 = vld [vmem:[%s5 + $0x160] sm:$0xf]
      %v876 = vld [vmem:[%s5 + $0x164] sm:$0xf]
      %v877 = vld [vmem:[%s5 + $0x168] sm:$0xf]
      %v878 = vld [vmem:[%s5 + $0x16c] sm:$0xf]
      %v879 = vld [vmem:[%s5 + $0x170] sm:$0xf]
      %v880 = vld [vmem:[%s5 + $0x174] sm:$0xf]
      %v881 = vld [vmem:[%s5 + $0x178] sm:$0xf]
      %v882 = vld [vmem:[%s5 + $0x17c] sm:$0xf]
      %v883 = vld [vmem:[%s5 + $0x180] sm:$0xf]
      %v884 = vld [vmem:[%s5 + $0x184] sm:$0xf]
      %v885 = vld [vmem:[%s5 + $0x188] sm:$0xf]
      %v886 = vld [vmem:[%s5 + $0x18c] sm:$0xf]
      %v887 = vld [vmem:[%s5 + $0x190] sm:$0xf]
      %v888 = vld [vmem:[%s5 + $0x194] sm:$0xf]
      %v889 = vld [vmem:[%s5 + $0x198] sm:$0xf]
      %v890 = vld [vmem:[%s5 + $0x19c] sm:$0xf]
      %v891 = vld [vmem:[%s5 + $0x1a0] sm:$0xf]
      %v892 = vld [vmem:[%s5 + $0x1a4] sm:$0xf]
      %v893 = vld [vmem:[%s5 + $0x1a8] sm:$0xf]
      %v894 = vld [vmem:[%s5 + $0x1ac] sm:$0xf]
      %v895 = vld [vmem:[%s5 + $0x1b0] sm:$0xf]
      %v896 = vld [vmem:[%s5 + $0x1b4] sm:$0xf]
      %v897 = vld [vmem:[%s5 + $0x1b8] sm:$0xf]
      %v898 = vld [vmem:[%s5 + $0x1bc] sm:$0xf]
      %v899 = vld [vmem:[%s5 + $0x1c0] sm:$0xf]
      %v900 = vld [vmem:[%s5 + $0x1c4] sm:$0xf]
      %v901 = vld [vmem:[%s5 + $0x1c8] sm:$0xf]
      %v902 = vld [vmem:[%s5 + $0x1cc] sm:$0xf]
      %v903 = vld [vmem:[%s5 + $0x1d0] sm:$0xf]
      %v904 = vld [vmem:[%s5 + $0x1d4] sm:$0xf]
      %v905 = vld [vmem:[%s5 + $0x1d8] sm:$0xf]
      %v906 = vld [vmem:[%s5 + $0x1dc] sm:$0xf]
      %v907 = vld [vmem:[%s5 + $0x1e0] sm:$0xf]
      %v908 = vld [vmem:[%s5 + $0x1e4] sm:$0xf]
      %v909 = vld [vmem:[%s5 + $0x1e8] sm:$0xf]
      %v910 = vld [vmem:[%s5 + $0x1ec] sm:$0xf]
      %v911 = vld [vmem:[%s5 + $0x1f0] sm:$0xf]
      %v912 = vld [vmem:[%s5 + $0x1f4] sm:$0xf]
      %v913 = vld [vmem:[%s5 + $0x1f8] sm:$0xf]
      %v914 = vld [vmem:[%s5 + $0x1fc] sm:$0xf]
      %v915 = vpack.c.bf16 %v772, %v771
      %v916 = vpack.c.bf16 %v774, %v773
      %v917 = vpack.c.bf16 %v776, %v775
      %v918 = vpack.c.bf16 %v778, %v777
      %v919 = vpack.c.bf16 %v780, %v779
      %v920 = vpack.c.bf16 %v782, %v781
      %v921 = vpack.c.bf16 %v784, %v783
      %v922 = vpack.c.bf16 %v786, %v785
      %v923 = vld [vmem:[%s6] sm:$0xff]
      %v924 = vld [vmem:[%s6 + $0x8] sm:$0xff]
      %v925 = vld [vmem:[%s6 + $0x10] sm:$0xff]
      %v926 = vld [vmem:[%s6 + $0x18] sm:$0xff]
      %v927 = vld [vmem:[%s6 + $0x20] sm:$0xff]
      %v928 = vld [vmem:[%s6 + $0x28] sm:$0xff]
      %v929 = vld [vmem:[%s6 + $0x30] sm:$0xff]
      %v930 = vld [vmem:[%s6 + $0x38] sm:$0xff]
      %v931 = vld [vmem:[%s6 + $0x40] sm:$0xff]
      %v932 = vld [vmem:[%s6 + $0x48] sm:$0xff]
      %v933 = vld [vmem:[%s6 + $0x50] sm:$0xff]
      %v934 = vld [vmem:[%s6 + $0x58] sm:$0xff]
      %v935 = vld [vmem:[%s6 + $0x60] sm:$0xff]
      %v936 = vld [vmem:[%s6 + $0x68] sm:$0xff]
      %v937 = vld [vmem:[%s6 + $0x70] sm:$0xff]
      %v938 = vld [vmem:[%s6 + $0x78] sm:$0xff]
      %v939 = vld [vmem:[%s6 + $0x80] sm:$0xff]
      %v940 = vld [vmem:[%s6 + $0x88] sm:$0xff]
      %v941 = vld [vmem:[%s6 + $0x90] sm:$0xff]
      %v942 = vld [vmem:[%s6 + $0x98] sm:$0xff]
      %v943 = vld [vmem:[%s6 + $0xa0] sm:$0xff]
      %v944 = vld [vmem:[%s6 + $0xa8] sm:$0xff]
      %v945 = vld [vmem:[%s6 + $0xb0] sm:$0xff]
      %v946 = vld [vmem:[%s6 + $0xb8] sm:$0xff]
      %v947 = vld [vmem:[%s6 + $0xc0] sm:$0xff]
      %v948 = vld [vmem:[%s6 + $0xc8] sm:$0xff]
      %v949 = vld [vmem:[%s6 + $0xd0] sm:$0xff]
      %v950 = vld [vmem:[%s6 + $0xd8] sm:$0xff]
      %v951 = vld [vmem:[%s6 + $0xe0] sm:$0xff]
      %v952 = vld [vmem:[%s6 + $0xe8] sm:$0xff]
      %v953 = vld [vmem:[%s6 + $0xf0] sm:$0xff]
      %v954 = vld [vmem:[%s6 + $0xf8] sm:$0xff]
      %v955 = vld [vmem:[%s6 + $0x100] sm:$0xff]
      %v956 = vld [vmem:[%s6 + $0x108] sm:$0xff]
      %v957 = vld [vmem:[%s6 + $0x110] sm:$0xff]
      %v958 = vld [vmem:[%s6 + $0x118] sm:$0xff]
      %v959 = vld [vmem:[%s6 + $0x120] sm:$0xff]
      %v960 = vld [vmem:[%s6 + $0x128] sm:$0xff]
      %v961 = vld [vmem:[%s6 + $0x130] sm:$0xff]
      %v962 = vld [vmem:[%s6 + $0x138] sm:$0xff]
      %v963 = vld [vmem:[%s6 + $0x140] sm:$0xff]
      %v964 = vld [vmem:[%s6 + $0x148] sm:$0xff]
      %v965 = vld [vmem:[%s6 + $0x150] sm:$0xff]
      %v966 = vld [vmem:[%s6 + $0x158] sm:$0xff]
      %v967 = vld [vmem:[%s6 + $0x160] sm:$0xff]
      %v968 = vld [vmem:[%s6 + $0x168] sm:$0xff]
      %v969 = vld [vmem:[%s6 + $0x170] sm:$0xff]
      %v970 = vld [vmem:[%s6 + $0x178] sm:$0xff]
      %v971 = vld [vmem:[%s6 + $0x180] sm:$0xff]
      %v972 = vld [vmem:[%s6 + $0x188] sm:$0xff]
      %v973 = vld [vmem:[%s6 + $0x190] sm:$0xff]
      %v974 = vld [vmem:[%s6 + $0x198] sm:$0xff]
      %v975 = vld [vmem:[%s6 + $0x1a0] sm:$0xff]
      %v976 = vld [vmem:[%s6 + $0x1a8] sm:$0xff]
      %v977 = vld [vmem:[%s6 + $0x1b0] sm:$0xff]
      %v978 = vld [vmem:[%s6 + $0x1b8] sm:$0xff]
      %v979 = vld [vmem:[%s6 + $0x1c0] sm:$0xff]
      %v980 = vld [vmem:[%s6 + $0x1c8] sm:$0xff]
      %v981 = vld [vmem:[%s6 + $0x1d0] sm:$0xff]
      %v982 = vld [vmem:[%s6 + $0x1d8] sm:$0xff]
      %v983 = vld [vmem:[%s6 + $0x1e0] sm:$0xff]
      %v984 = vld [vmem:[%s6 + $0x1e8] sm:$0xff]
      %v985 = vld [vmem:[%s6 + $0x1f0] sm:$0xff]
      %v986 = vld [vmem:[%s6 + $0x1f8] sm:$0xff]
      %v987 = vld [vmem:[%s6 + $0x200] sm:$0xff]
      %v988 = vld [vmem:[%s6 + $0x208] sm:$0xff]
      %v989 = vld [vmem:[%s6 + $0x210] sm:$0xff]
      %v990 = vld [vmem:[%s6 + $0x218] sm:$0xff]
      %v991 = vld [vmem:[%s6 + $0x220] sm:$0xff]
      %v992 = vld [vmem:[%s6 + $0x228] sm:$0xff]
      %v993 = vld [vmem:[%s6 + $0x230] sm:$0xff]
      %v994 = vld [vmem:[%s6 + $0x238] sm:$0xff]
      %v995 = vld [vmem:[%s6 + $0x240] sm:$0xff]
      %v996 = vld [vmem:[%s6 + $0x248] sm:$0xff]
      %v997 = vld [vmem:[%s6 + $0x250] sm:$0xff]
      %v998 = vld [vmem:[%s6 + $0x258] sm:$0xff]
      %v999 = vld [vmem:[%s6 + $0x260] sm:$0xff]
      %v1000 = vld [vmem:[%s6 + $0x268] sm:$0xff]
      %v1001 = vld [vmem:[%s6 + $0x270] sm:$0xff]
      %v1002 = vld [vmem:[%s6 + $0x278] sm:$0xff]
      %v1003 = vld [vmem:[%s6 + $0x280] sm:$0xff]
      %v1004 = vld [vmem:[%s6 + $0x288] sm:$0xff]
      %v1005 = vld [vmem:[%s6 + $0x290] sm:$0xff]
      %v1006 = vld [vmem:[%s6 + $0x298] sm:$0xff]
      %v1007 = vld [vmem:[%s6 + $0x2a0] sm:$0xff]
      %v1008 = vld [vmem:[%s6 + $0x2a8] sm:$0xff]
      %v1009 = vld [vmem:[%s6 + $0x2b0] sm:$0xff]
      %v1010 = vld [vmem:[%s6 + $0x2b8] sm:$0xff]
      %v1011 = vld [vmem:[%s6 + $0x2c0] sm:$0xff]
      %v1012 = vld [vmem:[%s6 + $0x2c8] sm:$0xff]
      %v1013 = vld [vmem:[%s6 + $0x2d0] sm:$0xff]
      %v1014 = vld [vmem:[%s6 + $0x2d8] sm:$0xff]
      %v1015 = vld [vmem:[%s6 + $0x2e0] sm:$0xff]
      %v1016 = vld [vmem:[%s6 + $0x2e8] sm:$0xff]
      %v1017 = vld [vmem:[%s6 + $0x2f0] sm:$0xff]
      %v1018 = vld [vmem:[%s6 + $0x2f8] sm:$0xff]
      %v1019 = vld [vmem:[%s6 + $0x300] sm:$0xff]
      %v1020 = vld [vmem:[%s6 + $0x308] sm:$0xff]
      %v1021 = vld [vmem:[%s6 + $0x310] sm:$0xff]
      %v1022 = vld [vmem:[%s6 + $0x318] sm:$0xff]
      %v1023 = vld [vmem:[%s6 + $0x320] sm:$0xff]
      %v1024 = vld [vmem:[%s6 + $0x328] sm:$0xff]
      %v1025 = vld [vmem:[%s6 + $0x330] sm:$0xff]
      %v1026 = vld [vmem:[%s6 + $0x338] sm:$0xff]
      %v1027 = vld [vmem:[%s6 + $0x340] sm:$0xff]
      %v1028 = vld [vmem:[%s6 + $0x348] sm:$0xff]
      %v1029 = vld [vmem:[%s6 + $0x350] sm:$0xff]
      %v1030 = vld [vmem:[%s6 + $0x358] sm:$0xff]
      %v1031 = vld [vmem:[%s6 + $0x360] sm:$0xff]
      %v1032 = vld [vmem:[%s6 + $0x368] sm:$0xff]
      %v1033 = vld [vmem:[%s6 + $0x370] sm:$0xff]
      %v1034 = vld [vmem:[%s6 + $0x378] sm:$0xff]
      %v1035 = vld [vmem:[%s6 + $0x380] sm:$0xff]
      %v1036 = vld [vmem:[%s6 + $0x388] sm:$0xff]
      %v1037 = vld [vmem:[%s6 + $0x390] sm:$0xff]
      %v1038 = vld [vmem:[%s6 + $0x398] sm:$0xff]
      %v1039 = vld [vmem:[%s6 + $0x3a0] sm:$0xff]
      %v1040 = vld [vmem:[%s6 + $0x3a8] sm:$0xff]
      %v1041 = vld [vmem:[%s6 + $0x3b0] sm:$0xff]
      %v1042 = vld [vmem:[%s6 + $0x3b8] sm:$0xff]
      %v1043 = vld [vmem:[%s6 + $0x3c0] sm:$0xff]
      %v1044 = vld [vmem:[%s6 + $0x3c8] sm:$0xff]
      %v1045 = vld [vmem:[%s6 + $0x3d0] sm:$0xff]
      %v1046 = vld [vmem:[%s6 + $0x3d8] sm:$0xff]
      %v1047 = vld [vmem:[%s6 + $0x3e0] sm:$0xff]
      %v1048 = vld [vmem:[%s6 + $0x3e8] sm:$0xff]
      %v1049 = vld [vmem:[%s6 + $0x3f0] sm:$0xff]
      %v1050 = vld [vmem:[%s6 + $0x3f8] sm:$0xff]
      %1052 = vset.pattern.permute.xlu0 0
      %1053 = vperm.xlu0 %1052, %v923
      %v1054 = vpop.permute.xlu0 %1053
      %1057 = vset.pattern.permute.xlu0 0
      %1058 = vperm.xlu0 %1057, %v924
      %v1059 = vpop.permute.xlu0 %1058
      %1062 = vset.pattern.permute.xlu0 0
      %1063 = vperm.xlu0 %1062, %v925
      %v1064 = vpop.permute.xlu0 %1063
      %1067 = vset.pattern.permute.xlu0 0
      %1068 = vperm.xlu0 %1067, %v926
      %v1069 = vpop.permute.xlu0 %1068
      %1072 = vset.pattern.permute.xlu0 0
      %1073 = vperm.xlu0 %1072, %v927
      %v1074 = vpop.permute.xlu0 %1073
      %1077 = vset.pattern.permute.xlu0 0
      %1078 = vperm.xlu0 %1077, %v928
      %v1079 = vpop.permute.xlu0 %1078
      %1082 = vset.pattern.permute.xlu0 0
      %1083 = vperm.xlu0 %1082, %v929
      %v1084 = vpop.permute.xlu0 %1083
      %1087 = vset.pattern.permute.xlu0 0
      %1088 = vperm.xlu0 %1087, %v930
      %v1089 = vpop.permute.xlu0 %1088
      %1092 = vset.pattern.permute.xlu0 0
      %1093 = vperm.xlu0 %1092, %v931
      %v1094 = vpop.permute.xlu0 %1093
      %1097 = vset.pattern.permute.xlu0 0
      %1098 = vperm.xlu0 %1097, %v932
      %v1099 = vpop.permute.xlu0 %1098
      %1102 = vset.pattern.permute.xlu0 0
      %1103 = vperm.xlu0 %1102, %v933
      %v1104 = vpop.permute.xlu0 %1103
      %1107 = vset.pattern.permute.xlu0 0
      %1108 = vperm.xlu0 %1107, %v934
      %v1109 = vpop.permute.xlu0 %1108
      %1112 = vset.pattern.permute.xlu0 0
      %1113 = vperm.xlu0 %1112, %v935
      %v1114 = vpop.permute.xlu0 %1113
      %1117 = vset.pattern.permute.xlu0 0
      %1118 = vperm.xlu0 %1117, %v936
      %v1119 = vpop.permute.xlu0 %1118
      %1122 = vset.pattern.permute.xlu0 0
      %1123 = vperm.xlu0 %1122, %v937
      %v1124 = vpop.permute.xlu0 %1123
      %1127 = vset.pattern.permute.xlu0 0
      %1128 = vperm.xlu0 %1127, %v938
      %v1129 = vpop.permute.xlu0 %1128
      %1132 = vset.pattern.permute.xlu0 0
      %1133 = vperm.xlu0 %1132, %v939
      %v1134 = vpop.permute.xlu0 %1133
      %1137 = vset.pattern.permute.xlu0 0
      %1138 = vperm.xlu0 %1137, %v940
      %v1139 = vpop.permute.xlu0 %1138
      %1142 = vset.pattern.permute.xlu0 0
      %1143 = vperm.xlu0 %1142, %v941
      %v1144 = vpop.permute.xlu0 %1143
      %1147 = vset.pattern.permute.xlu0 0
      %1148 = vperm.xlu0 %1147, %v942
      %v1149 = vpop.permute.xlu0 %1148
      %1152 = vset.pattern.permute.xlu0 0
      %1153 = vperm.xlu0 %1152, %v943
      %v1154 = vpop.permute.xlu0 %1153
      %1157 = vset.pattern.permute.xlu0 0
      %1158 = vperm.xlu0 %1157, %v944
      %v1159 = vpop.permute.xlu0 %1158
      %1162 = vset.pattern.permute.xlu0 0
      %1163 = vperm.xlu0 %1162, %v945
      %v1164 = vpop.permute.xlu0 %1163
      %1167 = vset.pattern.permute.xlu0 0
      %1168 = vperm.xlu0 %1167, %v946
      %v1169 = vpop.permute.xlu0 %1168
      %1172 = vset.pattern.permute.xlu0 0
      %1173 = vperm.xlu0 %1172, %v947
      %v1174 = vpop.permute.xlu0 %1173
      %1177 = vset.pattern.permute.xlu0 0
      %1178 = vperm.xlu0 %1177, %v948
      %v1179 = vpop.permute.xlu0 %1178
      %1182 = vset.pattern.permute.xlu0 0
      %1183 = vperm.xlu0 %1182, %v949
      %v1184 = vpop.permute.xlu0 %1183
      %1187 = vset.pattern.permute.xlu0 0
      %1188 = vperm.xlu0 %1187, %v950
      %v1189 = vpop.permute.xlu0 %1188
      %1192 = vset.pattern.permute.xlu0 0
      %1193 = vperm.xlu0 %1192, %v951
      %v1194 = vpop.permute.xlu0 %1193
      %1197 = vset.pattern.permute.xlu0 0
      %1198 = vperm.xlu0 %1197, %v952
      %v1199 = vpop.permute.xlu0 %1198
      %1202 = vset.pattern.permute.xlu0 0
      %1203 = vperm.xlu0 %1202, %v953
      %v1204 = vpop.permute.xlu0 %1203
      %1207 = vset.pattern.permute.xlu0 0
      %1208 = vperm.xlu0 %1207, %v954
      %v1209 = vpop.permute.xlu0 %1208
      %1212 = vset.pattern.permute.xlu0 0
      %1213 = vperm.xlu0 %1212, %v955
      %v1214 = vpop.permute.xlu0 %1213
      %1217 = vset.pattern.permute.xlu0 0
      %1218 = vperm.xlu0 %1217, %v956
      %v1219 = vpop.permute.xlu0 %1218
      %1222 = vset.pattern.permute.xlu0 0
      %1223 = vperm.xlu0 %1222, %v957
      %v1224 = vpop.permute.xlu0 %1223
      %1227 = vset.pattern.permute.xlu0 0
      %1228 = vperm.xlu0 %1227, %v958
      %v1229 = vpop.permute.xlu0 %1228
      %1232 = vset.pattern.permute.xlu0 0
      %1233 = vperm.xlu0 %1232, %v959
      %v1234 = vpop.permute.xlu0 %1233
      %1237 = vset.pattern.permute.xlu0 0
      %1238 = vperm.xlu0 %1237, %v960
      %v1239 = vpop.permute.xlu0 %1238
      %1242 = vset.pattern.permute.xlu0 0
      %1243 = vperm.xlu0 %1242, %v961
      %v1244 = vpop.permute.xlu0 %1243
      %1247 = vset.pattern.permute.xlu0 0
      %1248 = vperm.xlu0 %1247, %v962
      %v1249 = vpop.permute.xlu0 %1248
      %1252 = vset.pattern.permute.xlu0 0
      %1253 = vperm.xlu0 %1252, %v963
      %v1254 = vpop.permute.xlu0 %1253
      %1257 = vset.pattern.permute.xlu0 0
      %1258 = vperm.xlu0 %1257, %v964
      %v1259 = vpop.permute.xlu0 %1258
      %1262 = vset.pattern.permute.xlu0 0
      %1263 = vperm.xlu0 %1262, %v965
      %v1264 = vpop.permute.xlu0 %1263
      %1267 = vset.pattern.permute.xlu0 0
      %1268 = vperm.xlu0 %1267, %v966
      %v1269 = vpop.permute.xlu0 %1268
      %1272 = vset.pattern.permute.xlu0 0
      %1273 = vperm.xlu0 %1272, %v967
      %v1274 = vpop.permute.xlu0 %1273
      %1277 = vset.pattern.permute.xlu0 0
      %1278 = vperm.xlu0 %1277, %v968
      %v1279 = vpop.permute.xlu0 %1278
      %1282 = vset.pattern.permute.xlu0 0
      %1283 = vperm.xlu0 %1282, %v969
      %v1284 = vpop.permute.xlu0 %1283
      %1287 = vset.pattern.permute.xlu0 0
      %1288 = vperm.xlu0 %1287, %v970
      %v1289 = vpop.permute.xlu0 %1288
      %1292 = vset.pattern.permute.xlu0 0
      %1293 = vperm.xlu0 %1292, %v971
      %v1294 = vpop.permute.xlu0 %1293
      %1297 = vset.pattern.permute.xlu0 0
      %1298 = vperm.xlu0 %1297, %v972
      %v1299 = vpop.permute.xlu0 %1298
      %1302 = vset.pattern.permute.xlu0 0
      %1303 = vperm.xlu0 %1302, %v973
      %v1304 = vpop.permute.xlu0 %1303
      %1307 = vset.pattern.permute.xlu0 0
      %1308 = vperm.xlu0 %1307, %v974
      %v1309 = vpop.permute.xlu0 %1308
      %1312 = vset.pattern.permute.xlu0 0
      %1313 = vperm.xlu0 %1312, %v975
      %v1314 = vpop.permute.xlu0 %1313
      %1317 = vset.pattern.permute.xlu0 0
      %1318 = vperm.xlu0 %1317, %v976
      %v1319 = vpop.permute.xlu0 %1318
      %1322 = vset.pattern.permute.xlu0 0
      %1323 = vperm.xlu0 %1322, %v977
      %v1324 = vpop.permute.xlu0 %1323
      %1327 = vset.pattern.permute.xlu0 0
      %1328 = vperm.xlu0 %1327, %v978
      %v1329 = vpop.permute.xlu0 %1328
      %1332 = vset.pattern.permute.xlu0 0
      %1333 = vperm.xlu0 %1332, %v979
      %v1334 = vpop.permute.xlu0 %1333
      %1337 = vset.pattern.permute.xlu0 0
      %1338 = vperm.xlu0 %1337, %v980
      %v1339 = vpop.permute.xlu0 %1338
      %1342 = vset.pattern.permute.xlu0 0
      %1343 = vperm.xlu0 %1342, %v981
      %v1344 = vpop.permute.xlu0 %1343
      %1347 = vset.pattern.permute.xlu0 0
      %1348 = vperm.xlu0 %1347, %v982
      %v1349 = vpop.permute.xlu0 %1348
      %1352 = vset.pattern.permute.xlu0 0
      %1353 = vperm.xlu0 %1352, %v983
      %v1354 = vpop.permute.xlu0 %1353
      %1357 = vset.pattern.permute.xlu0 0
      %1358 = vperm.xlu0 %1357, %v984
      %v1359 = vpop.permute.xlu0 %1358
      %1362 = vset.pattern.permute.xlu0 0
      %1363 = vperm.xlu0 %1362, %v985
      %v1364 = vpop.permute.xlu0 %1363
      %1367 = vset.pattern.permute.xlu0 0
      %1368 = vperm.xlu0 %1367, %v986
      %v1369 = vpop.permute.xlu0 %1368
      %1372 = vset.pattern.permute.xlu0 0
      %1373 = vperm.xlu0 %1372, %v987
      %v1374 = vpop.permute.xlu0 %1373
      %1377 = vset.pattern.permute.xlu0 0
      %1378 = vperm.xlu0 %1377, %v988
      %v1379 = vpop.permute.xlu0 %1378
      %1382 = vset.pattern.permute.xlu0 0
      %1383 = vperm.xlu0 %1382, %v989
      %v1384 = vpop.permute.xlu0 %1383
      %1387 = vset.pattern.permute.xlu0 0
      %1388 = vperm.xlu0 %1387, %v990
      %v1389 = vpop.permute.xlu0 %1388
      %1392 = vset.pattern.permute.xlu0 0
      %1393 = vperm.xlu0 %1392, %v991
      %v1394 = vpop.permute.xlu0 %1393
      %1397 = vset.pattern.permute.xlu0 0
      %1398 = vperm.xlu0 %1397, %v992
      %v1399 = vpop.permute.xlu0 %1398
      %1402 = vset.pattern.permute.xlu0 0
      %1403 = vperm.xlu0 %1402, %v993
      %v1404 = vpop.permute.xlu0 %1403
      %1407 = vset.pattern.permute.xlu0 0
      %1408 = vperm.xlu0 %1407, %v994
      %v1409 = vpop.permute.xlu0 %1408
      %1412 = vset.pattern.permute.xlu0 0
      %1413 = vperm.xlu0 %1412, %v995
      %v1414 = vpop.permute.xlu0 %1413
      %1417 = vset.pattern.permute.xlu0 0
      %1418 = vperm.xlu0 %1417, %v996
      %v1419 = vpop.permute.xlu0 %1418
      %1422 = vset.pattern.permute.xlu0 0
      %1423 = vperm.xlu0 %1422, %v997
      %v1424 = vpop.permute.xlu0 %1423
      %1427 = vset.pattern.permute.xlu0 0
      %1428 = vperm.xlu0 %1427, %v998
      %v1429 = vpop.permute.xlu0 %1428
      %1432 = vset.pattern.permute.xlu0 0
      %1433 = vperm.xlu0 %1432, %v999
      %v1434 = vpop.permute.xlu0 %1433
      %1437 = vset.pattern.permute.xlu0 0
      %1438 = vperm.xlu0 %1437, %v1000
      %v1439 = vpop.permute.xlu0 %1438
      %1442 = vset.pattern.permute.xlu0 0
      %1443 = vperm.xlu0 %1442, %v1001
      %v1444 = vpop.permute.xlu0 %1443
      %1447 = vset.pattern.permute.xlu0 0
      %1448 = vperm.xlu0 %1447, %v1002
      %v1449 = vpop.permute.xlu0 %1448
      %1452 = vset.pattern.permute.xlu0 0
      %1453 = vperm.xlu0 %1452, %v1003
      %v1454 = vpop.permute.xlu0 %1453
      %1457 = vset.pattern.permute.xlu0 0
      %1458 = vperm.xlu0 %1457, %v1004
      %v1459 = vpop.permute.xlu0 %1458
      %1462 = vset.pattern.permute.xlu0 0
      %1463 = vperm.xlu0 %1462, %v1005
      %v1464 = vpop.permute.xlu0 %1463
      %1467 = vset.pattern.permute.xlu0 0
      %1468 = vperm.xlu0 %1467, %v1006
      %v1469 = vpop.permute.xlu0 %1468
      %1472 = vset.pattern.permute.xlu0 0
      %1473 = vperm.xlu0 %1472, %v1007
      %v1474 = vpop.permute.xlu0 %1473
      %1477 = vset.pattern.permute.xlu0 0
      %1478 = vperm.xlu0 %1477, %v1008
      %v1479 = vpop.permute.xlu0 %1478
      %1482 = vset.pattern.permute.xlu0 0
      %1483 = vperm.xlu0 %1482, %v1009
      %v1484 = vpop.permute.xlu0 %1483
      %1487 = vset.pattern.permute.xlu0 0
      %1488 = vperm.xlu0 %1487, %v1010
      %v1489 = vpop.permute.xlu0 %1488
      %1492 = vset.pattern.permute.xlu0 0
      %1493 = vperm.xlu0 %1492, %v1011
      %v1494 = vpop.permute.xlu0 %1493
      %1497 = vset.pattern.permute.xlu0 0
      %1498 = vperm.xlu0 %1497, %v1012
      %v1499 = vpop.permute.xlu0 %1498
      %1502 = vset.pattern.permute.xlu0 0
      %1503 = vperm.xlu0 %1502, %v1013
      %v1504 = vpop.permute.xlu0 %1503
      %1507 = vset.pattern.permute.xlu0 0
      %1508 = vperm.xlu0 %1507, %v1014
      %v1509 = vpop.permute.xlu0 %1508
      %1512 = vset.pattern.permute.xlu0 0
      %1513 = vperm.xlu0 %1512, %v1015
      %v1514 = vpop.permute.xlu0 %1513
      %1517 = vset.pattern.permute.xlu0 0
      %1518 = vperm.xlu0 %1517, %v1016
      %v1519 = vpop.permute.xlu0 %1518
      %1522 = vset.pattern.permute.xlu0 0
      %1523 = vperm.xlu0 %1522, %v1017
      %v1524 = vpop.permute.xlu0 %1523
      %1527 = vset.pattern.permute.xlu0 0
      %1528 = vperm.xlu0 %1527, %v1018
      %v1529 = vpop.permute.xlu0 %1528
      %1532 = vset.pattern.permute.xlu0 0
      %1533 = vperm.xlu0 %1532, %v1019
      %v1534 = vpop.permute.xlu0 %1533
      %1537 = vset.pattern.permute.xlu0 0
      %1538 = vperm.xlu0 %1537, %v1020
      %v1539 = vpop.permute.xlu0 %1538
      %1542 = vset.pattern.permute.xlu0 0
      %1543 = vperm.xlu0 %1542, %v1021
      %v1544 = vpop.permute.xlu0 %1543
      %1547 = vset.pattern.permute.xlu0 0
      %1548 = vperm.xlu0 %1547, %v1022
      %v1549 = vpop.permute.xlu0 %1548
      %1552 = vset.pattern.permute.xlu0 0
      %1553 = vperm.xlu0 %1552, %v1023
      %v1554 = vpop.permute.xlu0 %1553
      %1557 = vset.pattern.permute.xlu0 0
      %1558 = vperm.xlu0 %1557, %v1024
      %v1559 = vpop.permute.xlu0 %1558
      %1562 = vset.pattern.permute.xlu0 0
      %1563 = vperm.xlu0 %1562, %v1025
      %v1564 = vpop.permute.xlu0 %1563
      %1567 = vset.pattern.permute.xlu0 0
      %1568 = vperm.xlu0 %1567, %v1026
      %v1569 = vpop.permute.xlu0 %1568
      %1572 = vset.pattern.permute.xlu0 0
      %1573 = vperm.xlu0 %1572, %v1027
      %v1574 = vpop.permute.xlu0 %1573
      %1577 = vset.pattern.permute.xlu0 0
      %1578 = vperm.xlu0 %1577, %v1028
      %v1579 = vpop.permute.xlu0 %1578
      %1582 = vset.pattern.permute.xlu0 0
      %1583 = vperm.xlu0 %1582, %v1029
      %v1584 = vpop.permute.xlu0 %1583
      %1587 = vset.pattern.permute.xlu0 0
      %1588 = vperm.xlu0 %1587, %v1030
      %v1589 = vpop.permute.xlu0 %1588
      %1592 = vset.pattern.permute.xlu0 0
      %1593 = vperm.xlu0 %1592, %v1031
      %v1594 = vpop.permute.xlu0 %1593
      %1597 = vset.pattern.permute.xlu0 0
      %1598 = vperm.xlu0 %1597, %v1032
      %v1599 = vpop.permute.xlu0 %1598
      %1602 = vset.pattern.permute.xlu0 0
      %1603 = vperm.xlu0 %1602, %v1033
      %v1604 = vpop.permute.xlu0 %1603
      %1607 = vset.pattern.permute.xlu0 0
      %1608 = vperm.xlu0 %1607, %v1034
      %v1609 = vpop.permute.xlu0 %1608
      %1612 = vset.pattern.permute.xlu0 0
      %1613 = vperm.xlu0 %1612, %v1035
      %v1614 = vpop.permute.xlu0 %1613
      %1617 = vset.pattern.permute.xlu0 0
      %1618 = vperm.xlu0 %1617, %v1036
      %v1619 = vpop.permute.xlu0 %1618
      %1622 = vset.pattern.permute.xlu0 0
      %1623 = vperm.xlu0 %1622, %v1037
      %v1624 = vpop.permute.xlu0 %1623
      %1627 = vset.pattern.permute.xlu0 0
      %1628 = vperm.xlu0 %1627, %v1038
      %v1629 = vpop.permute.xlu0 %1628
      %1632 = vset.pattern.permute.xlu0 0
      %1633 = vperm.xlu0 %1632, %v1039
      %v1634 = vpop.permute.xlu0 %1633
      %1637 = vset.pattern.permute.xlu0 0
      %1638 = vperm.xlu0 %1637, %v1040
      %v1639 = vpop.permute.xlu0 %1638
      %1642 = vset.pattern.permute.xlu0 0
      %1643 = vperm.xlu0 %1642, %v1041
      %v1644 = vpop.permute.xlu0 %1643
      %1647 = vset.pattern.permute.xlu0 0
      %1648 = vperm.xlu0 %1647, %v1042
      %v1649 = vpop.permute.xlu0 %1648
      %1652 = vset.pattern.permute.xlu0 0
      %1653 = vperm.xlu0 %1652, %v1043
      %v1654 = vpop.permute.xlu0 %1653
      %1657 = vset.pattern.permute.xlu0 0
      %1658 = vperm.xlu0 %1657, %v1044
      %v1659 = vpop.permute.xlu0 %1658
      %1662 = vset.pattern.permute.xlu0 0
      %1663 = vperm.xlu0 %1662, %v1045
      %v1664 = vpop.permute.xlu0 %1663
      %1667 = vset.pattern.permute.xlu0 0
      %1668 = vperm.xlu0 %1667, %v1046
      %v1669 = vpop.permute.xlu0 %1668
      %1672 = vset.pattern.permute.xlu0 0
      %1673 = vperm.xlu0 %1672, %v1047
      %v1674 = vpop.permute.xlu0 %1673
      %1677 = vset.pattern.permute.xlu0 0
      %1678 = vperm.xlu0 %1677, %v1048
      %v1679 = vpop.permute.xlu0 %1678
      %1682 = vset.pattern.permute.xlu0 0
      %1683 = vperm.xlu0 %1682, %v1049
      %v1684 = vpop.permute.xlu0 %1683
      %1687 = vset.pattern.permute.xlu0 0
      %1688 = vperm.xlu0 %1687, %v1050
      %v1689 = vpop.permute.xlu0 %1688
      %v1819 = vunpack.c.l.b16 %v787
      %v1820 = vunpack.c.l.b16 %v788
      %v1821 = vunpack.c.l.b16 %v789
      %v1822 = vunpack.c.l.b16 %v790
      %v1823 = vunpack.c.l.b16 %v791
      %v1824 = vunpack.c.l.b16 %v792
      %v1825 = vunpack.c.l.b16 %v793
      %v1826 = vunpack.c.l.b16 %v794
      %v1827 = vunpack.c.l.b16 %v795
      %v1828 = vunpack.c.l.b16 %v796
      %v1829 = vunpack.c.l.b16 %v797
      %v1830 = vunpack.c.l.b16 %v798
      %v1831 = vunpack.c.l.b16 %v799
      %v1832 = vunpack.c.l.b16 %v800
      %v1833 = vunpack.c.l.b16 %v801
      %v1834 = vunpack.c.l.b16 %v802
      %v1835 = vunpack.c.l.b16 %v803
      %v1836 = vunpack.c.l.b16 %v804
      %v1837 = vunpack.c.l.b16 %v805
      %v1838 = vunpack.c.l.b16 %v806
      %v1839 = vunpack.c.l.b16 %v807
      %v1840 = vunpack.c.l.b16 %v808
      %v1841 = vunpack.c.l.b16 %v809
      %v1842 = vunpack.c.l.b16 %v810
      %v1843 = vunpack.c.l.b16 %v811
      %v1844 = vunpack.c.l.b16 %v812
      %v1845 = vunpack.c.l.b16 %v813
      %v1846 = vunpack.c.l.b16 %v814
      %v1847 = vunpack.c.l.b16 %v815
      %v1848 = vunpack.c.l.b16 %v816
      %v1849 = vunpack.c.l.b16 %v817
      %v1850 = vunpack.c.l.b16 %v818
      %v1851 = vunpack.c.l.b16 %v819
      %v1852 = vunpack.c.l.b16 %v820
      %v1853 = vunpack.c.l.b16 %v821
      %v1854 = vunpack.c.l.b16 %v822
      %v1855 = vunpack.c.l.b16 %v823
      %v1856 = vunpack.c.l.b16 %v824
      %v1857 = vunpack.c.l.b16 %v825
      %v1858 = vunpack.c.l.b16 %v826
      %v1859 = vunpack.c.l.b16 %v827
      %v1860 = vunpack.c.l.b16 %v828
      %v1861 = vunpack.c.l.b16 %v829
      %v1862 = vunpack.c.l.b16 %v830
      %v1863 = vunpack.c.l.b16 %v831
      %v1864 = vunpack.c.l.b16 %v832
      %v1865 = vunpack.c.l.b16 %v833
      %v1866 = vunpack.c.l.b16 %v834
      %v1867 = vunpack.c.l.b16 %v835
      %v1868 = vunpack.c.l.b16 %v836
      %v1869 = vunpack.c.l.b16 %v837
      %v1870 = vunpack.c.l.b16 %v838
      %v1871 = vunpack.c.l.b16 %v839
      %v1872 = vunpack.c.l.b16 %v840
      %v1873 = vunpack.c.l.b16 %v841
      %v1874 = vunpack.c.l.b16 %v842
      %v1875 = vunpack.c.l.b16 %v843
      %v1876 = vunpack.c.l.b16 %v844
      %v1877 = vunpack.c.l.b16 %v845
      %v1878 = vunpack.c.l.b16 %v846
      %v1879 = vunpack.c.l.b16 %v847
      %v1880 = vunpack.c.l.b16 %v848
      %v1881 = vunpack.c.l.b16 %v849
      %v1882 = vunpack.c.l.b16 %v850
      %v1883 = vunpack.c.l.b16 %v851
      %v1884 = vunpack.c.l.b16 %v852
      %v1885 = vunpack.c.l.b16 %v853
      %v1886 = vunpack.c.l.b16 %v854
      %v1887 = vunpack.c.l.b16 %v855
      %v1888 = vunpack.c.l.b16 %v856
      %v1889 = vunpack.c.l.b16 %v857
      %v1890 = vunpack.c.l.b16 %v858
      %v1891 = vunpack.c.l.b16 %v859
      %v1892 = vunpack.c.l.b16 %v860
      %v1893 = vunpack.c.l.b16 %v861
      %v1894 = vunpack.c.l.b16 %v862
      %v1895 = vunpack.c.l.b16 %v863
      %v1896 = vunpack.c.l.b16 %v864
      %v1897 = vunpack.c.l.b16 %v865
      %v1898 = vunpack.c.l.b16 %v866
      %v1899 = vunpack.c.l.b16 %v867
      %v1900 = vunpack.c.l.b16 %v868
      %v1901 = vunpack.c.l.b16 %v869
      %v1902 = vunpack.c.l.b16 %v870
      %v1903 = vunpack.c.l.b16 %v871
      %v1904 = vunpack.c.l.b16 %v872
      %v1905 = vunpack.c.l.b16 %v873
      %v1906 = vunpack.c.l.b16 %v874
      %v1907 = vunpack.c.l.b16 %v875
      %v1908 = vunpack.c.l.b16 %v876
      %v1909 = vunpack.c.l.b16 %v877
      %v1910 = vunpack.c.l.b16 %v878
      %v1911 = vunpack.c.l.b16 %v879
      %v1912 = vunpack.c.l.b16 %v880
      %v1913 = vunpack.c.l.b16 %v881
      %v1914 = vunpack.c.l.b16 %v882
      %v1915 = vunpack.c.l.b16 %v883
      %v1916 = vunpack.c.l.b16 %v884
      %v1917 = vunpack.c.l.b16 %v885
      %v1918 = vunpack.c.l.b16 %v886
      %v1919 = vunpack.c.l.b16 %v887
      %v1920 = vunpack.c.l.b16 %v888
      %v1921 = vunpack.c.l.b16 %v889
      %v1922 = vunpack.c.l.b16 %v890
      %v1923 = vunpack.c.l.b16 %v891
      %v1924 = vunpack.c.l.b16 %v892
      %v1925 = vunpack.c.l.b16 %v893
      %v1926 = vunpack.c.l.b16 %v894
      %v1927 = vunpack.c.l.b16 %v895
      %v1928 = vunpack.c.l.b16 %v896
      %v1929 = vunpack.c.l.b16 %v897
      %v1930 = vunpack.c.l.b16 %v898
      %v1931 = vunpack.c.l.b16 %v899
      %v1932 = vunpack.c.l.b16 %v900
      %v1933 = vunpack.c.l.b16 %v901
      %v1934 = vunpack.c.l.b16 %v902
      %v1935 = vunpack.c.l.b16 %v903
      %v1936 = vunpack.c.l.b16 %v904
      %v1937 = vunpack.c.l.b16 %v905
      %v1938 = vunpack.c.l.b16 %v906
      %v1939 = vunpack.c.l.b16 %v907
      %v1940 = vunpack.c.l.b16 %v908
      %v1941 = vunpack.c.l.b16 %v909
      %v1942 = vunpack.c.l.b16 %v910
      %v1943 = vunpack.c.l.b16 %v911
      %v1944 = vunpack.c.l.b16 %v912
      %v1945 = vunpack.c.l.b16 %v913
      %v1946 = vunpack.c.l.b16 %v914
      %v1947 = vpack.c.b16 %v1820, %v1819
      %v1948 = vpack.c.b16 %v1822, %v1821
      %v1949 = vpack.c.b16 %v1824, %v1823
      %v1950 = vpack.c.b16 %v1826, %v1825
      %v1951 = vpack.c.b16 %v1828, %v1827
      %v1952 = vpack.c.b16 %v1830, %v1829
      %v1953 = vpack.c.b16 %v1832, %v1831
      %v1954 = vpack.c.b16 %v1834, %v1833
      %v1955 = vpack.c.b16 %v1836, %v1835
      %v1956 = vpack.c.b16 %v1838, %v1837
      %v1957 = vpack.c.b16 %v1840, %v1839
      %v1958 = vpack.c.b16 %v1842, %v1841
      %v1959 = vpack.c.b16 %v1844, %v1843
      %v1960 = vpack.c.b16 %v1846, %v1845
      %v1961 = vpack.c.b16 %v1848, %v1847
      %v1962 = vpack.c.b16 %v1850, %v1849
      %v1963 = vpack.c.b16 %v1852, %v1851
      %v1964 = vpack.c.b16 %v1854, %v1853
      %v1965 = vpack.c.b16 %v1856, %v1855
      %v1966 = vpack.c.b16 %v1858, %v1857
      %v1967 = vpack.c.b16 %v1860, %v1859
      %v1968 = vpack.c.b16 %v1862, %v1861
      %v1969 = vpack.c.b16 %v1864, %v1863
      %v1970 = vpack.c.b16 %v1866, %v1865
      %v1971 = vpack.c.b16 %v1868, %v1867
      %v1972 = vpack.c.b16 %v1870, %v1869
      %v1973 = vpack.c.b16 %v1872, %v1871
      %v1974 = vpack.c.b16 %v1874, %v1873
      %v1975 = vpack.c.b16 %v1876, %v1875
      %v1976 = vpack.c.b16 %v1878, %v1877
      %v1977 = vpack.c.b16 %v1880, %v1879
      %v1978 = vpack.c.b16 %v1882, %v1881
      %v1979 = vpack.c.b16 %v1884, %v1883
      %v1980 = vpack.c.b16 %v1886, %v1885
      %v1981 = vpack.c.b16 %v1888, %v1887
      %v1982 = vpack.c.b16 %v1890, %v1889
      %v1983 = vpack.c.b16 %v1892, %v1891
      %v1984 = vpack.c.b16 %v1894, %v1893
      %v1985 = vpack.c.b16 %v1896, %v1895
      %v1986 = vpack.c.b16 %v1898, %v1897
      %v1987 = vpack.c.b16 %v1900, %v1899
      %v1988 = vpack.c.b16 %v1902, %v1901
      %v1989 = vpack.c.b16 %v1904, %v1903
      %v1990 = vpack.c.b16 %v1906, %v1905
      %v1991 = vpack.c.b16 %v1908, %v1907
      %v1992 = vpack.c.b16 %v1910, %v1909
      %v1993 = vpack.c.b16 %v1912, %v1911
      %v1994 = vpack.c.b16 %v1914, %v1913
      %v1995 = vpack.c.b16 %v1916, %v1915
      %v1996 = vpack.c.b16 %v1918, %v1917
      %v1997 = vpack.c.b16 %v1920, %v1919
      %v1998 = vpack.c.b16 %v1922, %v1921
      %v1999 = vpack.c.b16 %v1924, %v1923
      %v2000 = vpack.c.b16 %v1926, %v1925
      %v2001 = vpack.c.b16 %v1928, %v1927
      %v2002 = vpack.c.b16 %v1930, %v1929
      %v2003 = vpack.c.b16 %v1932, %v1931
      %v2004 = vpack.c.b16 %v1934, %v1933
      %v2005 = vpack.c.b16 %v1936, %v1935
      %v2006 = vpack.c.b16 %v1938, %v1937
      %v2007 = vpack.c.b16 %v1940, %v1939
      %v2008 = vpack.c.b16 %v1942, %v1941
      %v2009 = vpack.c.b16 %v1944, %v1943
      %v2010 = vpack.c.b16 %v1946, %v1945
      %2075 = vmatpush.bf16.msra.mxu0 %v922
      %2076 = vmatpush.bf16.msra.mxu0 %v921
      %2077 = vmatpush.bf16.msra.mxu0 %v920
      %2078 = vmatpush.bf16.msra.mxu0 %v919
      %2079 = vmatpush.bf16.msra.mxu0 %v918
      %2080 = vmatpush.bf16.msra.mxu0 %v917
      %2081 = vmatpush.bf16.msra.mxu0 %v916
      %2082 = vmatpush.bf16.msra.mxu0 %v915
      %2083 = vmatmul.bf16.gmra.mxu0 %v1947
      %v2084 = vpop.f32.mrf.mxu0
      %v2085 = vadd.f32 %v1054, %v2084
      %v2086 = vpop.f32.mrf.mxu0
      %v2087 = vadd.f32 %v1059, %v2086
      %2088 = vmatmul.bf16.gmra.mxu0 %v1948
      %v2089 = vpop.f32.mrf.mxu0
      %v2090 = vadd.f32 %v1064, %v2089
      %v2091 = vpop.f32.mrf.mxu0
      %v2092 = vadd.f32 %v1069, %v2091
      %2093 = vmatmul.bf16.gmra.mxu0 %v1949
      %v2094 = vpop.f32.mrf.mxu0
      %v2095 = vadd.f32 %v1074, %v2094
      %v2096 = vpop.f32.mrf.mxu0
      %v2097 = vadd.f32 %v1079, %v2096
      %2098 = vmatmul.bf16.gmra.mxu0 %v1950
      %v2099 = vpop.f32.mrf.mxu0
      %v2100 = vadd.f32 %v1084, %v2099
      %v2101 = vpop.f32.mrf.mxu0
      %v2102 = vadd.f32 %v1089, %v2101
      %2103 = vmatmul.bf16.gmra.mxu0 %v1951
      %v2104 = vpop.f32.mrf.mxu0
      %v2105 = vadd.f32 %v1094, %v2104
      %v2106 = vpop.f32.mrf.mxu0
      %v2107 = vadd.f32 %v1099, %v2106
      %2108 = vmatmul.bf16.gmra.mxu0 %v1952
      %v2109 = vpop.f32.mrf.mxu0
      %v2110 = vadd.f32 %v1104, %v2109
      %v2111 = vpop.f32.mrf.mxu0
      %v2112 = vadd.f32 %v1109, %v2111
      %2113 = vmatmul.bf16.gmra.mxu0 %v1953
      %v2114 = vpop.f32.mrf.mxu0
      %v2115 = vadd.f32 %v1114, %v2114
      %v2116 = vpop.f32.mrf.mxu0
      %v2117 = vadd.f32 %v1119, %v2116
      %2118 = vmatmul.bf16.gmra.mxu0 %v1954
      %v2119 = vpop.f32.mrf.mxu0
      %v2120 = vadd.f32 %v1124, %v2119
      %v2121 = vpop.f32.mrf.mxu0
      %v2122 = vadd.f32 %v1129, %v2121
      %2123 = vmatmul.bf16.gmra.mxu0 %v1955
      %v2124 = vpop.f32.mrf.mxu0
      %v2125 = vadd.f32 %v1134, %v2124
      %v2126 = vpop.f32.mrf.mxu0
      %v2127 = vadd.f32 %v1139, %v2126
      %2128 = vmatmul.bf16.gmra.mxu0 %v1956
      %v2129 = vpop.f32.mrf.mxu0
      %v2130 = vadd.f32 %v1144, %v2129
      %v2131 = vpop.f32.mrf.mxu0
      %v2132 = vadd.f32 %v1149, %v2131
      %2133 = vmatmul.bf16.gmra.mxu0 %v1957
      %v2134 = vpop.f32.mrf.mxu0
      %v2135 = vadd.f32 %v1154, %v2134
      %v2136 = vpop.f32.mrf.mxu0
      %v2137 = vadd.f32 %v1159, %v2136
      %2138 = vmatmul.bf16.gmra.mxu0 %v1958
      %v2139 = vpop.f32.mrf.mxu0
      %v2140 = vadd.f32 %v1164, %v2139
      %v2141 = vpop.f32.mrf.mxu0
      %v2142 = vadd.f32 %v1169, %v2141
      %2143 = vmatmul.bf16.gmra.mxu0 %v1959
      %v2144 = vpop.f32.mrf.mxu0
      %v2145 = vadd.f32 %v1174, %v2144
      %v2146 = vpop.f32.mrf.mxu0
      %v2147 = vadd.f32 %v1179, %v2146
      %2148 = vmatmul.bf16.gmra.mxu0 %v1960
      %v2149 = vpop.f32.mrf.mxu0
      %v2150 = vadd.f32 %v1184, %v2149
      %v2151 = vpop.f32.mrf.mxu0
      %v2152 = vadd.f32 %v1189, %v2151
      %2153 = vmatmul.bf16.gmra.mxu0 %v1961
      %v2154 = vpop.f32.mrf.mxu0
      %v2155 = vadd.f32 %v1194, %v2154
      %v2156 = vpop.f32.mrf.mxu0
      %v2157 = vadd.f32 %v1199, %v2156
      %2158 = vmatmul.bf16.gmra.mxu0 %v1962
      %v2159 = vpop.f32.mrf.mxu0
      %v2160 = vadd.f32 %v1204, %v2159
      %v2161 = vpop.f32.mrf.mxu0
      %v2162 = vadd.f32 %v1209, %v2161
      %2163 = vmatmul.bf16.gmra.mxu0 %v1963
      %v2164 = vpop.f32.mrf.mxu0
      %v2165 = vadd.f32 %v1214, %v2164
      %v2166 = vpop.f32.mrf.mxu0
      %v2167 = vadd.f32 %v1219, %v2166
      %2168 = vmatmul.bf16.gmra.mxu0 %v1964
      %v2169 = vpop.f32.mrf.mxu0
      %v2170 = vadd.f32 %v1224, %v2169
      %v2171 = vpop.f32.mrf.mxu0
      %v2172 = vadd.f32 %v1229, %v2171
      %2173 = vmatmul.bf16.gmra.mxu0 %v1965
      %v2174 = vpop.f32.mrf.mxu0
      %v2175 = vadd.f32 %v1234, %v2174
      %v2176 = vpop.f32.mrf.mxu0
      %v2177 = vadd.f32 %v1239, %v2176
      %2178 = vmatmul.bf16.gmra.mxu0 %v1966
      %v2179 = vpop.f32.mrf.mxu0
      %v2180 = vadd.f32 %v1244, %v2179
      %v2181 = vpop.f32.mrf.mxu0
      %v2182 = vadd.f32 %v1249, %v2181
      %2183 = vmatmul.bf16.gmra.mxu0 %v1967
      %v2184 = vpop.f32.mrf.mxu0
      %v2185 = vadd.f32 %v1254, %v2184
      %v2186 = vpop.f32.mrf.mxu0
      %v2187 = vadd.f32 %v1259, %v2186
      %2188 = vmatmul.bf16.gmra.mxu0 %v1968
      %v2189 = vpop.f32.mrf.mxu0
      %v2190 = vadd.f32 %v1264, %v2189
      %v2191 = vpop.f32.mrf.mxu0
      %v2192 = vadd.f32 %v1269, %v2191
      %2193 = vmatmul.bf16.gmra.mxu0 %v1969
      %v2194 = vpop.f32.mrf.mxu0
      %v2195 = vadd.f32 %v1274, %v2194
      %v2196 = vpop.f32.mrf.mxu0
      %v2197 = vadd.f32 %v1279, %v2196
      %2198 = vmatmul.bf16.gmra.mxu0 %v1970
      %v2199 = vpop.f32.mrf.mxu0
      %v2200 = vadd.f32 %v1284, %v2199
      %v2201 = vpop.f32.mrf.mxu0
      %v2202 = vadd.f32 %v1289, %v2201
      %2203 = vmatmul.bf16.gmra.mxu0 %v1971
      %v2204 = vpop.f32.mrf.mxu0
      %v2205 = vadd.f32 %v1294, %v2204
      %v2206 = vpop.f32.mrf.mxu0
      %v2207 = vadd.f32 %v1299, %v2206
      %2208 = vmatmul.bf16.gmra.mxu0 %v1972
      %v2209 = vpop.f32.mrf.mxu0
      %v2210 = vadd.f32 %v1304, %v2209
      %v2211 = vpop.f32.mrf.mxu0
      %v2212 = vadd.f32 %v1309, %v2211
      %2213 = vmatmul.bf16.gmra.mxu0 %v1973
      %v2214 = vpop.f32.mrf.mxu0
      %v2215 = vadd.f32 %v1314, %v2214
      %v2216 = vpop.f32.mrf.mxu0
      %v2217 = vadd.f32 %v1319, %v2216
      %2218 = vmatmul.bf16.gmra.mxu0 %v1974
      %v2219 = vpop.f32.mrf.mxu0
      %v2220 = vadd.f32 %v1324, %v2219
      %v2221 = vpop.f32.mrf.mxu0
      %v2222 = vadd.f32 %v1329, %v2221
      %2223 = vmatmul.bf16.gmra.mxu0 %v1975
      %v2224 = vpop.f32.mrf.mxu0
      %v2225 = vadd.f32 %v1334, %v2224
      %v2226 = vpop.f32.mrf.mxu0
      %v2227 = vadd.f32 %v1339, %v2226
      %2228 = vmatmul.bf16.gmra.mxu0 %v1976
      %v2229 = vpop.f32.mrf.mxu0
      %v2230 = vadd.f32 %v1344, %v2229
      %v2231 = vpop.f32.mrf.mxu0
      %v2232 = vadd.f32 %v1349, %v2231
      %2233 = vmatmul.bf16.gmra.mxu0 %v1977
      %v2234 = vpop.f32.mrf.mxu0
      %v2235 = vadd.f32 %v1354, %v2234
      %v2236 = vpop.f32.mrf.mxu0
      %v2237 = vadd.f32 %v1359, %v2236
      %2238 = vmatmul.bf16.gmra.mxu0 %v1978
      %v2239 = vpop.f32.mrf.mxu0
      %v2240 = vadd.f32 %v1364, %v2239
      %v2241 = vpop.f32.mrf.mxu0
      %v2242 = vadd.f32 %v1369, %v2241
      %2243 = vmatmul.bf16.gmra.mxu0 %v1979
      %v2244 = vpop.f32.mrf.mxu0
      %v2245 = vadd.f32 %v1374, %v2244
      %v2246 = vpop.f32.mrf.mxu0
      %v2247 = vadd.f32 %v1379, %v2246
      %2248 = vmatmul.bf16.gmra.mxu0 %v1980
      %v2249 = vpop.f32.mrf.mxu0
      %v2250 = vadd.f32 %v1384, %v2249
      %v2251 = vpop.f32.mrf.mxu0
      %v2252 = vadd.f32 %v1389, %v2251
      %2253 = vmatmul.bf16.gmra.mxu0 %v1981
      %v2254 = vpop.f32.mrf.mxu0
      %v2255 = vadd.f32 %v1394, %v2254
      %v2256 = vpop.f32.mrf.mxu0
      %v2257 = vadd.f32 %v1399, %v2256
      %2258 = vmatmul.bf16.gmra.mxu0 %v1982
      %v2259 = vpop.f32.mrf.mxu0
      %v2260 = vadd.f32 %v1404, %v2259
      %v2261 = vpop.f32.mrf.mxu0
      %v2262 = vadd.f32 %v1409, %v2261
      %2263 = vmatmul.bf16.gmra.mxu0 %v1983
      %v2264 = vpop.f32.mrf.mxu0
      %v2265 = vadd.f32 %v1414, %v2264
      %v2266 = vpop.f32.mrf.mxu0
      %v2267 = vadd.f32 %v1419, %v2266
      %2268 = vmatmul.bf16.gmra.mxu0 %v1984
      %v2269 = vpop.f32.mrf.mxu0
      %v2270 = vadd.f32 %v1424, %v2269
      %v2271 = vpop.f32.mrf.mxu0
      %v2272 = vadd.f32 %v1429, %v2271
      %2273 = vmatmul.bf16.gmra.mxu0 %v1985
      %v2274 = vpop.f32.mrf.mxu0
      %v2275 = vadd.f32 %v1434, %v2274
      %v2276 = vpop.f32.mrf.mxu0
      %v2277 = vadd.f32 %v1439, %v2276
      %2278 = vmatmul.bf16.gmra.mxu0 %v1986
      %v2279 = vpop.f32.mrf.mxu0
      %v2280 = vadd.f32 %v1444, %v2279
      %v2281 = vpop.f32.mrf.mxu0
      %v2282 = vadd.f32 %v1449, %v2281
      %2283 = vmatmul.bf16.gmra.mxu0 %v1987
      %v2284 = vpop.f32.mrf.mxu0
      %v2285 = vadd.f32 %v1454, %v2284
      %v2286 = vpop.f32.mrf.mxu0
      %v2287 = vadd.f32 %v1459, %v2286
      %2288 = vmatmul.bf16.gmra.mxu0 %v1988
      %v2289 = vpop.f32.mrf.mxu0
      %v2290 = vadd.f32 %v1464, %v2289
      %v2291 = vpop.f32.mrf.mxu0
      %v2292 = vadd.f32 %v1469, %v2291
      %2293 = vmatmul.bf16.gmra.mxu0 %v1989
      %v2294 = vpop.f32.mrf.mxu0
      %v2295 = vadd.f32 %v1474, %v2294
      %v2296 = vpop.f32.mrf.mxu0
      %v2297 = vadd.f32 %v1479, %v2296
      %2298 = vmatmul.bf16.gmra.mxu0 %v1990
      %v2299 = vpop.f32.mrf.mxu0
      %v2300 = vadd.f32 %v1484, %v2299
      %v2301 = vpop.f32.mrf.mxu0
      %v2302 = vadd.f32 %v1489, %v2301
      %2303 = vmatmul.bf16.gmra.mxu0 %v1991
      %v2304 = vpop.f32.mrf.mxu0
      %v2305 = vadd.f32 %v1494, %v2304
      %v2306 = vpop.f32.mrf.mxu0
      %v2307 = vadd.f32 %v1499, %v2306
      %2308 = vmatmul.bf16.gmra.mxu0 %v1992
      %v2309 = vpop.f32.mrf.mxu0
      %v2310 = vadd.f32 %v1504, %v2309
      %v2311 = vpop.f32.mrf.mxu0
      %v2312 = vadd.f32 %v1509, %v2311
      %2313 = vmatmul.bf16.gmra.mxu0 %v1993
      %v2314 = vpop.f32.mrf.mxu0
      %v2315 = vadd.f32 %v1514, %v2314
      %v2316 = vpop.f32.mrf.mxu0
      %v2317 = vadd.f32 %v1519, %v2316
      %2318 = vmatmul.bf16.gmra.mxu0 %v1994
      %v2319 = vpop.f32.mrf.mxu0
      %v2320 = vadd.f32 %v1524, %v2319
      %v2321 = vpop.f32.mrf.mxu0
      %v2322 = vadd.f32 %v1529, %v2321
      %2323 = vmatmul.bf16.gmra.mxu0 %v1995
      %v2324 = vpop.f32.mrf.mxu0
      %v2325 = vadd.f32 %v1534, %v2324
      %v2326 = vpop.f32.mrf.mxu0
      %v2327 = vadd.f32 %v1539, %v2326
      %2328 = vmatmul.bf16.gmra.mxu0 %v1996
      %v2329 = vpop.f32.mrf.mxu0
      %v2330 = vadd.f32 %v1544, %v2329
      %v2331 = vpop.f32.mrf.mxu0
      %v2332 = vadd.f32 %v1549, %v2331
      %2333 = vmatmul.bf16.gmra.mxu0 %v1997
      %v2334 = vpop.f32.mrf.mxu0
      %v2335 = vadd.f32 %v1554, %v2334
      %v2336 = vpop.f32.mrf.mxu0
      %v2337 = vadd.f32 %v1559, %v2336
      %2338 = vmatmul.bf16.gmra.mxu0 %v1998
      %v2339 = vpop.f32.mrf.mxu0
      %v2340 = vadd.f32 %v1564, %v2339
      %v2341 = vpop.f32.mrf.mxu0
      %v2342 = vadd.f32 %v1569, %v2341
      %2343 = vmatmul.bf16.gmra.mxu0 %v1999
      %v2344 = vpop.f32.mrf.mxu0
      %v2345 = vadd.f32 %v1574, %v2344
      %v2346 = vpop.f32.mrf.mxu0
      %v2347 = vadd.f32 %v1579, %v2346
      %2348 = vmatmul.bf16.gmra.mxu0 %v2000
      %v2349 = vpop.f32.mrf.mxu0
      %v2350 = vadd.f32 %v1584, %v2349
      %v2351 = vpop.f32.mrf.mxu0
      %v2352 = vadd.f32 %v1589, %v2351
      %2353 = vmatmul.bf16.gmra.mxu0 %v2001
      %v2354 = vpop.f32.mrf.mxu0
      %v2355 = vadd.f32 %v1594, %v2354
      %v2356 = vpop.f32.mrf.mxu0
      %v2357 = vadd.f32 %v1599, %v2356
      %2358 = vmatmul.bf16.gmra.mxu0 %v2002
      %v2359 = vpop.f32.mrf.mxu0
      %v2360 = vadd.f32 %v1604, %v2359
      %v2361 = vpop.f32.mrf.mxu0
      %v2362 = vadd.f32 %v1609, %v2361
      %2363 = vmatmul.bf16.gmra.mxu0 %v2003
      %v2364 = vpop.f32.mrf.mxu0
      %v2365 = vadd.f32 %v1614, %v2364
      %v2366 = vpop.f32.mrf.mxu0
      %v2367 = vadd.f32 %v1619, %v2366
      %2368 = vmatmul.bf16.gmra.mxu0 %v2004
      %v2369 = vpop.f32.mrf.mxu0
      %v2370 = vadd.f32 %v1624, %v2369
      %v2371 = vpop.f32.mrf.mxu0
      %v2372 = vadd.f32 %v1629, %v2371
      %2373 = vmatmul.bf16.gmra.mxu0 %v2005
      %v2374 = vpop.f32.mrf.mxu0
      %v2375 = vadd.f32 %v1634, %v2374
      %v2376 = vpop.f32.mrf.mxu0
      %v2377 = vadd.f32 %v1639, %v2376
      %2378 = vmatmul.bf16.gmra.mxu0 %v2006
      %v2379 = vpop.f32.mrf.mxu0
      %v2380 = vadd.f32 %v1644, %v2379
      %v2381 = vpop.f32.mrf.mxu0
      %v2382 = vadd.f32 %v1649, %v2381
      %2383 = vmatmul.bf16.gmra.mxu0 %v2007
      %v2384 = vpop.f32.mrf.mxu0
      %v2385 = vadd.f32 %v1654, %v2384
      %v2386 = vpop.f32.mrf.mxu0
      %v2387 = vadd.f32 %v1659, %v2386
      %2388 = vmatmul.bf16.gmra.mxu0 %v2008
      %v2389 = vpop.f32.mrf.mxu0
      %v2390 = vadd.f32 %v1664, %v2389
      %v2391 = vpop.f32.mrf.mxu0
      %v2392 = vadd.f32 %v1669, %v2391
      %2393 = vmatmul.bf16.gmra.mxu0 %v2009
      %v2394 = vpop.f32.mrf.mxu0
      %v2395 = vadd.f32 %v1674, %v2394
      %v2396 = vpop.f32.mrf.mxu0
      %v2397 = vadd.f32 %v1679, %v2396
      %2398 = vmatmul.bf16.gmra.mxu0 %v2010
      %v2399 = vpop.f32.mrf.mxu0
      %v2400 = vadd.f32 %v1684, %v2399
      %v2401 = vpop.f32.mrf.mxu0
      %v2402 = vadd.f32 %v1689, %v2401
      %2403 = vdwg.mxu0
      %p2404 = scmp.eq.s32.totalorder %s23, 0
      // Predicated region
      $region49: #{pointnetfeat_forward.3} parent=47 // pred_check
        %p2405 = pneg %p2404
      $region50: #{pointnetfeat_forward.3} parent=47 // pred_check_branch
        %2407 = sbr.rel (%p2405) target = $region52
      $region51: #{pointnetfeat_forward.3} parent=47 // pred_region
        %2408 = vst [vmem:[#allocation2] sm:$0xff] -inf
        %2409 = vst [vmem:[#allocation2 + $0x8] sm:$0xff] -inf
        %2410 = vst [vmem:[#allocation2 + $0x10] sm:$0xff] -inf
        %2411 = vst [vmem:[#allocation2 + $0x18] sm:$0xff] -inf
        %2412 = vst [vmem:[#allocation2 + $0x20] sm:$0xff] -inf
        %2413 = vst [vmem:[#allocation2 + $0x28] sm:$0xff] -inf
        %2414 = vst [vmem:[#allocation2 + $0x30] sm:$0xff] -inf
        %2415 = vst [vmem:[#allocation2 + $0x38] sm:$0xff] -inf
        %2416 = vst [vmem:[#allocation2 + $0x40] sm:$0xff] -inf
        %2417 = vst [vmem:[#allocation2 + $0x48] sm:$0xff] -inf
        %2418 = vst [vmem:[#allocation2 + $0x50] sm:$0xff] -inf
        %2419 = vst [vmem:[#allocation2 + $0x58] sm:$0xff] -inf
        %2420 = vst [vmem:[#allocation2 + $0x60] sm:$0xff] -inf
        %2421 = vst [vmem:[#allocation2 + $0x68] sm:$0xff] -inf
        %2422 = vst [vmem:[#allocation2 + $0x70] sm:$0xff] -inf
        %2423 = vst [vmem:[#allocation2 + $0x78] sm:$0xff] -inf
        %2424 = vst [vmem:[#allocation2 + $0x80] sm:$0xff] -inf
        %2425 = vst [vmem:[#allocation2 + $0x88] sm:$0xff] -inf
        %2426 = vst [vmem:[#allocation2 + $0x90] sm:$0xff] -inf
        %2427 = vst [vmem:[#allocation2 + $0x98] sm:$0xff] -inf
        %2428 = vst [vmem:[#allocation2 + $0xa0] sm:$0xff] -inf
        %2429 = vst [vmem:[#allocation2 + $0xa8] sm:$0xff] -inf
        %2430 = vst [vmem:[#allocation2 + $0xb0] sm:$0xff] -inf
        %2431 = vst [vmem:[#allocation2 + $0xb8] sm:$0xff] -inf
        %2432 = vst [vmem:[#allocation2 + $0xc0] sm:$0xff] -inf
        %2433 = vst [vmem:[#allocation2 + $0xc8] sm:$0xff] -inf
        %2434 = vst [vmem:[#allocation2 + $0xd0] sm:$0xff] -inf
        %2435 = vst [vmem:[#allocation2 + $0xd8] sm:$0xff] -inf
        %2436 = vst [vmem:[#allocation2 + $0xe0] sm:$0xff] -inf
        %2437 = vst [vmem:[#allocation2 + $0xe8] sm:$0xff] -inf
        %2438 = vst [vmem:[#allocation2 + $0xf0] sm:$0xff] -inf
        %2439 = vst [vmem:[#allocation2 + $0xf8] sm:$0xff] -inf
        %2440 = vst [vmem:[#allocation2 + $0x100] sm:$0xff] -inf
        %2441 = vst [vmem:[#allocation2 + $0x108] sm:$0xff] -inf
        %2442 = vst [vmem:[#allocation2 + $0x110] sm:$0xff] -inf
        %2443 = vst [vmem:[#allocation2 + $0x118] sm:$0xff] -inf
        %2444 = vst [vmem:[#allocation2 + $0x120] sm:$0xff] -inf
        %2445 = vst [vmem:[#allocation2 + $0x128] sm:$0xff] -inf
        %2446 = vst [vmem:[#allocation2 + $0x130] sm:$0xff] -inf
        %2447 = vst [vmem:[#allocation2 + $0x138] sm:$0xff] -inf
        %2448 = vst [vmem:[#allocation2 + $0x140] sm:$0xff] -inf
        %2449 = vst [vmem:[#allocation2 + $0x148] sm:$0xff] -inf
        %2450 = vst [vmem:[#allocation2 + $0x150] sm:$0xff] -inf
        %2451 = vst [vmem:[#allocation2 + $0x158] sm:$0xff] -inf
        %2452 = vst [vmem:[#allocation2 + $0x160] sm:$0xff] -inf
        %2453 = vst [vmem:[#allocation2 + $0x168] sm:$0xff] -inf
        %2454 = vst [vmem:[#allocation2 + $0x170] sm:$0xff] -inf
        %2455 = vst [vmem:[#allocation2 + $0x178] sm:$0xff] -inf
        %2456 = vst [vmem:[#allocation2 + $0x180] sm:$0xff] -inf
        %2457 = vst [vmem:[#allocation2 + $0x188] sm:$0xff] -inf
        %2458 = vst [vmem:[#allocation2 + $0x190] sm:$0xff] -inf
        %2459 = vst [vmem:[#allocation2 + $0x198] sm:$0xff] -inf
        %2460 = vst [vmem:[#allocation2 + $0x1a0] sm:$0xff] -inf
        %2461 = vst [vmem:[#allocation2 + $0x1a8] sm:$0xff] -inf
        %2462 = vst [vmem:[#allocation2 + $0x1b0] sm:$0xff] -inf
        %2463 = vst [vmem:[#allocation2 + $0x1b8] sm:$0xff] -inf
        %2464 = vst [vmem:[#allocation2 + $0x1c0] sm:$0xff] -inf
        %2465 = vst [vmem:[#allocation2 + $0x1c8] sm:$0xff] -inf
        %2466 = vst [vmem:[#allocation2 + $0x1d0] sm:$0xff] -inf
        %2467 = vst [vmem:[#allocation2 + $0x1d8] sm:$0xff] -inf
        %2468 = vst [vmem:[#allocation2 + $0x1e0] sm:$0xff] -inf
        %2469 = vst [vmem:[#allocation2 + $0x1e8] sm:$0xff] -inf
        %2470 = vst [vmem:[#allocation2 + $0x1f0] sm:$0xff] -inf
        %2471 = vst [vmem:[#allocation2 + $0x1f8] sm:$0xff] -inf
        %2472 = vst [vmem:[#allocation2 + $0x200] sm:$0xff] -inf
        %2473 = vst [vmem:[#allocation2 + $0x208] sm:$0xff] -inf
        %2474 = vst [vmem:[#allocation2 + $0x210] sm:$0xff] -inf
        %2475 = vst [vmem:[#allocation2 + $0x218] sm:$0xff] -inf
        %2476 = vst [vmem:[#allocation2 + $0x220] sm:$0xff] -inf
        %2477 = vst [vmem:[#allocation2 + $0x228] sm:$0xff] -inf
        %2478 = vst [vmem:[#allocation2 + $0x230] sm:$0xff] -inf
        %2479 = vst [vmem:[#allocation2 + $0x238] sm:$0xff] -inf
        %2480 = vst [vmem:[#allocation2 + $0x240] sm:$0xff] -inf
        %2481 = vst [vmem:[#allocation2 + $0x248] sm:$0xff] -inf
        %2482 = vst [vmem:[#allocation2 + $0x250] sm:$0xff] -inf
        %2483 = vst [vmem:[#allocation2 + $0x258] sm:$0xff] -inf
        %2484 = vst [vmem:[#allocation2 + $0x260] sm:$0xff] -inf
        %2485 = vst [vmem:[#allocation2 + $0x268] sm:$0xff] -inf
        %2486 = vst [vmem:[#allocation2 + $0x270] sm:$0xff] -inf
        %2487 = vst [vmem:[#allocation2 + $0x278] sm:$0xff] -inf
        %2488 = vst [vmem:[#allocation2 + $0x280] sm:$0xff] -inf
        %2489 = vst [vmem:[#allocation2 + $0x288] sm:$0xff] -inf
        %2490 = vst [vmem:[#allocation2 + $0x290] sm:$0xff] -inf
        %2491 = vst [vmem:[#allocation2 + $0x298] sm:$0xff] -inf
        %2492 = vst [vmem:[#allocation2 + $0x2a0] sm:$0xff] -inf
        %2493 = vst [vmem:[#allocation2 + $0x2a8] sm:$0xff] -inf
        %2494 = vst [vmem:[#allocation2 + $0x2b0] sm:$0xff] -inf
        %2495 = vst [vmem:[#allocation2 + $0x2b8] sm:$0xff] -inf
        %2496 = vst [vmem:[#allocation2 + $0x2c0] sm:$0xff] -inf
        %2497 = vst [vmem:[#allocation2 + $0x2c8] sm:$0xff] -inf
        %2498 = vst [vmem:[#allocation2 + $0x2d0] sm:$0xff] -inf
        %2499 = vst [vmem:[#allocation2 + $0x2d8] sm:$0xff] -inf
        %2500 = vst [vmem:[#allocation2 + $0x2e0] sm:$0xff] -inf
        %2501 = vst [vmem:[#allocation2 + $0x2e8] sm:$0xff] -inf
        %2502 = vst [vmem:[#allocation2 + $0x2f0] sm:$0xff] -inf
        %2503 = vst [vmem:[#allocation2 + $0x2f8] sm:$0xff] -inf
        %2504 = vst [vmem:[#allocation2 + $0x300] sm:$0xff] -inf
        %2505 = vst [vmem:[#allocation2 + $0x308] sm:$0xff] -inf
        %2506 = vst [vmem:[#allocation2 + $0x310] sm:$0xff] -inf
        %2507 = vst [vmem:[#allocation2 + $0x318] sm:$0xff] -inf
        %2508 = vst [vmem:[#allocation2 + $0x320] sm:$0xff] -inf
        %2509 = vst [vmem:[#allocation2 + $0x328] sm:$0xff] -inf
        %2510 = vst [vmem:[#allocation2 + $0x330] sm:$0xff] -inf
        %2511 = vst [vmem:[#allocation2 + $0x338] sm:$0xff] -inf
        %2512 = vst [vmem:[#allocation2 + $0x340] sm:$0xff] -inf
        %2513 = vst [vmem:[#allocation2 + $0x348] sm:$0xff] -inf
        %2514 = vst [vmem:[#allocation2 + $0x350] sm:$0xff] -inf
        %2515 = vst [vmem:[#allocation2 + $0x358] sm:$0xff] -inf
        %2516 = vst [vmem:[#allocation2 + $0x360] sm:$0xff] -inf
        %2517 = vst [vmem:[#allocation2 + $0x368] sm:$0xff] -inf
        %2518 = vst [vmem:[#allocation2 + $0x370] sm:$0xff] -inf
        %2519 = vst [vmem:[#allocation2 + $0x378] sm:$0xff] -inf
        %2520 = vst [vmem:[#allocation2 + $0x380] sm:$0xff] -inf
        %2521 = vst [vmem:[#allocation2 + $0x388] sm:$0xff] -inf
        %2522 = vst [vmem:[#allocation2 + $0x390] sm:$0xff] -inf
        %2523 = vst [vmem:[#allocation2 + $0x398] sm:$0xff] -inf
        %2524 = vst [vmem:[#allocation2 + $0x3a0] sm:$0xff] -inf
        %2525 = vst [vmem:[#allocation2 + $0x3a8] sm:$0xff] -inf
        %2526 = vst [vmem:[#allocation2 + $0x3b0] sm:$0xff] -inf
        %2527 = vst [vmem:[#allocation2 + $0x3b8] sm:$0xff] -inf
        %2528 = vst [vmem:[#allocation2 + $0x3c0] sm:$0xff] -inf
        %2529 = vst [vmem:[#allocation2 + $0x3c8] sm:$0xff] -inf
        %2530 = vst [vmem:[#allocation2 + $0x3d0] sm:$0xff] -inf
        %2531 = vst [vmem:[#allocation2 + $0x3d8] sm:$0xff] -inf
        %2532 = vst [vmem:[#allocation2 + $0x3e0] sm:$0xff] -inf
        %2533 = vst [vmem:[#allocation2 + $0x3e8] sm:$0xff] -inf
        %2534 = vst [vmem:[#allocation2 + $0x3f0] sm:$0xff] -inf
        %2535 = vst [vmem:[#allocation2 + $0x3f8] sm:$0xff] -inf
      $region52: #{pointnetfeat_forward.3} parent=47 // pred_fallthru
        _
      %p2536 = scmp.lt.s32.totalorder %s23, 2
      // Predicated region
      $region53: #{pointnetfeat_forward.3} parent=47 // pred_check
        %p2537 = pneg %p2536
      $region54: #{pointnetfeat_forward.3} parent=47 // pred_check_branch
        %2539 = sbr.rel (%p2537) target = $region56
      $region55: #{pointnetfeat_forward.3} parent=47 // pred_region
        %v2540 = vld [vmem:[#allocation2] sm:$0xff]
        %v2541 = vld [vmem:[#allocation2 + $0x8] sm:$0xff]
        %v2542 = vld [vmem:[#allocation2 + $0x10] sm:$0xff]
        %v2543 = vld [vmem:[#allocation2 + $0x18] sm:$0xff]
        %v2544 = vld [vmem:[#allocation2 + $0x20] sm:$0xff]
        %v2545 = vld [vmem:[#allocation2 + $0x28] sm:$0xff]
        %v2546 = vld [vmem:[#allocation2 + $0x30] sm:$0xff]
        %v2547 = vld [vmem:[#allocation2 + $0x38] sm:$0xff]
        %v2548 = vld [vmem:[#allocation2 + $0x40] sm:$0xff]
        %v2549 = vld [vmem:[#allocation2 + $0x48] sm:$0xff]
        %v2550 = vld [vmem:[#allocation2 + $0x50] sm:$0xff]
        %v2551 = vld [vmem:[#allocation2 + $0x58] sm:$0xff]
        %v2552 = vld [vmem:[#allocation2 + $0x60] sm:$0xff]
        %v2553 = vld [vmem:[#allocation2 + $0x68] sm:$0xff]
        %v2554 = vld [vmem:[#allocation2 + $0x70] sm:$0xff]
        %v2555 = vld [vmem:[#allocation2 + $0x78] sm:$0xff]
        %v2556 = vld [vmem:[#allocation2 + $0x80] sm:$0xff]
        %v2557 = vld [vmem:[#allocation2 + $0x88] sm:$0xff]
        %v2558 = vld [vmem:[#allocation2 + $0x90] sm:$0xff]
        %v2559 = vld [vmem:[#allocation2 + $0x98] sm:$0xff]
        %v2560 = vld [vmem:[#allocation2 + $0xa0] sm:$0xff]
        %v2561 = vld [vmem:[#allocation2 + $0xa8] sm:$0xff]
        %v2562 = vld [vmem:[#allocation2 + $0xb0] sm:$0xff]
        %v2563 = vld [vmem:[#allocation2 + $0xb8] sm:$0xff]
        %v2564 = vld [vmem:[#allocation2 + $0xc0] sm:$0xff]
        %v2565 = vld [vmem:[#allocation2 + $0xc8] sm:$0xff]
        %v2566 = vld [vmem:[#allocation2 + $0xd0] sm:$0xff]
        %v2567 = vld [vmem:[#allocation2 + $0xd8] sm:$0xff]
        %v2568 = vld [vmem:[#allocation2 + $0xe0] sm:$0xff]
        %v2569 = vld [vmem:[#allocation2 + $0xe8] sm:$0xff]
        %v2570 = vld [vmem:[#allocation2 + $0xf0] sm:$0xff]
        %v2571 = vld [vmem:[#allocation2 + $0xf8] sm:$0xff]
        %v2572 = vld [vmem:[#allocation2 + $0x100] sm:$0xff]
        %v2573 = vld [vmem:[#allocation2 + $0x108] sm:$0xff]
        %v2574 = vld [vmem:[#allocation2 + $0x110] sm:$0xff]
        %v2575 = vld [vmem:[#allocation2 + $0x118] sm:$0xff]
        %v2576 = vld [vmem:[#allocation2 + $0x120] sm:$0xff]
        %v2577 = vld [vmem:[#allocation2 + $0x128] sm:$0xff]
        %v2578 = vld [vmem:[#allocation2 + $0x130] sm:$0xff]
        %v2579 = vld [vmem:[#allocation2 + $0x138] sm:$0xff]
        %v2580 = vld [vmem:[#allocation2 + $0x140] sm:$0xff]
        %v2581 = vld [vmem:[#allocation2 + $0x148] sm:$0xff]
        %v2582 = vld [vmem:[#allocation2 + $0x150] sm:$0xff]
        %v2583 = vld [vmem:[#allocation2 + $0x158] sm:$0xff]
        %v2584 = vld [vmem:[#allocation2 + $0x160] sm:$0xff]
        %v2585 = vld [vmem:[#allocation2 + $0x168] sm:$0xff]
        %v2586 = vld [vmem:[#allocation2 + $0x170] sm:$0xff]
        %v2587 = vld [vmem:[#allocation2 + $0x178] sm:$0xff]
        %v2588 = vld [vmem:[#allocation2 + $0x180] sm:$0xff]
        %v2589 = vld [vmem:[#allocation2 + $0x188] sm:$0xff]
        %v2590 = vld [vmem:[#allocation2 + $0x190] sm:$0xff]
        %v2591 = vld [vmem:[#allocation2 + $0x198] sm:$0xff]
        %v2592 = vld [vmem:[#allocation2 + $0x1a0] sm:$0xff]
        %v2593 = vld [vmem:[#allocation2 + $0x1a8] sm:$0xff]
        %v2594 = vld [vmem:[#allocation2 + $0x1b0] sm:$0xff]
        %v2595 = vld [vmem:[#allocation2 + $0x1b8] sm:$0xff]
        %v2596 = vld [vmem:[#allocation2 + $0x1c0] sm:$0xff]
        %v2597 = vld [vmem:[#allocation2 + $0x1c8] sm:$0xff]
        %v2598 = vld [vmem:[#allocation2 + $0x1d0] sm:$0xff]
        %v2599 = vld [vmem:[#allocation2 + $0x1d8] sm:$0xff]
        %v2600 = vld [vmem:[#allocation2 + $0x1e0] sm:$0xff]
        %v2601 = vld [vmem:[#allocation2 + $0x1e8] sm:$0xff]
        %v2602 = vld [vmem:[#allocation2 + $0x1f0] sm:$0xff]
        %v2603 = vld [vmem:[#allocation2 + $0x1f8] sm:$0xff]
        %v2604 = vld [vmem:[#allocation2 + $0x200] sm:$0xff]
        %v2605 = vld [vmem:[#allocation2 + $0x208] sm:$0xff]
        %v2606 = vld [vmem:[#allocation2 + $0x210] sm:$0xff]
        %v2607 = vld [vmem:[#allocation2 + $0x218] sm:$0xff]
        %v2608 = vld [vmem:[#allocation2 + $0x220] sm:$0xff]
        %v2609 = vld [vmem:[#allocation2 + $0x228] sm:$0xff]
        %v2610 = vld [vmem:[#allocation2 + $0x230] sm:$0xff]
        %v2611 = vld [vmem:[#allocation2 + $0x238] sm:$0xff]
        %v2612 = vld [vmem:[#allocation2 + $0x240] sm:$0xff]
        %v2613 = vld [vmem:[#allocation2 + $0x248] sm:$0xff]
        %v2614 = vld [vmem:[#allocation2 + $0x250] sm:$0xff]
        %v2615 = vld [vmem:[#allocation2 + $0x258] sm:$0xff]
        %v2616 = vld [vmem:[#allocation2 + $0x260] sm:$0xff]
        %v2617 = vld [vmem:[#allocation2 + $0x268] sm:$0xff]
        %v2618 = vld [vmem:[#allocation2 + $0x270] sm:$0xff]
        %v2619 = vld [vmem:[#allocation2 + $0x278] sm:$0xff]
        %v2620 = vld [vmem:[#allocation2 + $0x280] sm:$0xff]
        %v2621 = vld [vmem:[#allocation2 + $0x288] sm:$0xff]
        %v2622 = vld [vmem:[#allocation2 + $0x290] sm:$0xff]
        %v2623 = vld [vmem:[#allocation2 + $0x298] sm:$0xff]
        %v2624 = vld [vmem:[#allocation2 + $0x2a0] sm:$0xff]
        %v2625 = vld [vmem:[#allocation2 + $0x2a8] sm:$0xff]
        %v2626 = vld [vmem:[#allocation2 + $0x2b0] sm:$0xff]
        %v2627 = vld [vmem:[#allocation2 + $0x2b8] sm:$0xff]
        %v2628 = vld [vmem:[#allocation2 + $0x2c0] sm:$0xff]
        %v2629 = vld [vmem:[#allocation2 + $0x2c8] sm:$0xff]
        %v2630 = vld [vmem:[#allocation2 + $0x2d0] sm:$0xff]
        %v2631 = vld [vmem:[#allocation2 + $0x2d8] sm:$0xff]
        %v2632 = vld [vmem:[#allocation2 + $0x2e0] sm:$0xff]
        %v2633 = vld [vmem:[#allocation2 + $0x2e8] sm:$0xff]
        %v2634 = vld [vmem:[#allocation2 + $0x2f0] sm:$0xff]
        %v2635 = vld [vmem:[#allocation2 + $0x2f8] sm:$0xff]
        %v2636 = vld [vmem:[#allocation2 + $0x300] sm:$0xff]
        %v2637 = vld [vmem:[#allocation2 + $0x308] sm:$0xff]
        %v2638 = vld [vmem:[#allocation2 + $0x310] sm:$0xff]
        %v2639 = vld [vmem:[#allocation2 + $0x318] sm:$0xff]
        %v2640 = vld [vmem:[#allocation2 + $0x320] sm:$0xff]
        %v2641 = vld [vmem:[#allocation2 + $0x328] sm:$0xff]
        %v2642 = vld [vmem:[#allocation2 + $0x330] sm:$0xff]
        %v2643 = vld [vmem:[#allocation2 + $0x338] sm:$0xff]
        %v2644 = vld [vmem:[#allocation2 + $0x340] sm:$0xff]
        %v2645 = vld [vmem:[#allocation2 + $0x348] sm:$0xff]
        %v2646 = vld [vmem:[#allocation2 + $0x350] sm:$0xff]
        %v2647 = vld [vmem:[#allocation2 + $0x358] sm:$0xff]
        %v2648 = vld [vmem:[#allocation2 + $0x360] sm:$0xff]
        %v2649 = vld [vmem:[#allocation2 + $0x368] sm:$0xff]
        %v2650 = vld [vmem:[#allocation2 + $0x370] sm:$0xff]
        %v2651 = vld [vmem:[#allocation2 + $0x378] sm:$0xff]
        %v2652 = vld [vmem:[#allocation2 + $0x380] sm:$0xff]
        %v2653 = vld [vmem:[#allocation2 + $0x388] sm:$0xff]
        %v2654 = vld [vmem:[#allocation2 + $0x390] sm:$0xff]
        %v2655 = vld [vmem:[#allocation2 + $0x398] sm:$0xff]
        %v2656 = vld [vmem:[#allocation2 + $0x3a0] sm:$0xff]
        %v2657 = vld [vmem:[#allocation2 + $0x3a8] sm:$0xff]
        %v2658 = vld [vmem:[#allocation2 + $0x3b0] sm:$0xff]
        %v2659 = vld [vmem:[#allocation2 + $0x3b8] sm:$0xff]
        %v2660 = vld [vmem:[#allocation2 + $0x3c0] sm:$0xff]
        %v2661 = vld [vmem:[#allocation2 + $0x3c8] sm:$0xff]
        %v2662 = vld [vmem:[#allocation2 + $0x3d0] sm:$0xff]
        %v2663 = vld [vmem:[#allocation2 + $0x3d8] sm:$0xff]
        %v2664 = vld [vmem:[#allocation2 + $0x3e0] sm:$0xff]
        %v2665 = vld [vmem:[#allocation2 + $0x3e8] sm:$0xff]
        %v2666 = vld [vmem:[#allocation2 + $0x3f0] sm:$0xff]
        %v2667 = vld [vmem:[#allocation2 + $0x3f8] sm:$0xff]
        %v2668 = vmax.f32 %v2540, %v2085
        %v2669 = vmax.f32 %v2541, %v2087
        %v2670 = vmax.f32 %v2542, %v2090
        %v2671 = vmax.f32 %v2543, %v2092
        %v2672 = vmax.f32 %v2544, %v2095
        %v2673 = vmax.f32 %v2545, %v2097
        %v2674 = vmax.f32 %v2546, %v2100
        %v2675 = vmax.f32 %v2547, %v2102
        %v2676 = vmax.f32 %v2548, %v2105
        %v2677 = vmax.f32 %v2549, %v2107
        %v2678 = vmax.f32 %v2550, %v2110
        %v2679 = vmax.f32 %v2551, %v2112
        %v2680 = vmax.f32 %v2552, %v2115
        %v2681 = vmax.f32 %v2553, %v2117
        %v2682 = vmax.f32 %v2554, %v2120
        %v2683 = vmax.f32 %v2555, %v2122
        %v2684 = vmax.f32 %v2556, %v2125
        %v2685 = vmax.f32 %v2557, %v2127
        %v2686 = vmax.f32 %v2558, %v2130
        %v2687 = vmax.f32 %v2559, %v2132
        %v2688 = vmax.f32 %v2560, %v2135
        %v2689 = vmax.f32 %v2561, %v2137
        %v2690 = vmax.f32 %v2562, %v2140
        %v2691 = vmax.f32 %v2563, %v2142
        %v2692 = vmax.f32 %v2564, %v2145
        %v2693 = vmax.f32 %v2565, %v2147
        %v2694 = vmax.f32 %v2566, %v2150
        %v2695 = vmax.f32 %v2567, %v2152
        %v2696 = vmax.f32 %v2568, %v2155
        %v2697 = vmax.f32 %v2569, %v2157
        %v2698 = vmax.f32 %v2570, %v2160
        %v2699 = vmax.f32 %v2571, %v2162
        %v2700 = vmax.f32 %v2572, %v2165
        %v2701 = vmax.f32 %v2573, %v2167
        %v2702 = vmax.f32 %v2574, %v2170
        %v2703 = vmax.f32 %v2575, %v2172
        %v2704 = vmax.f32 %v2576, %v2175
        %v2705 = vmax.f32 %v2577, %v2177
        %v2706 = vmax.f32 %v2578, %v2180
        %v2707 = vmax.f32 %v2579, %v2182
        %v2708 = vmax.f32 %v2580, %v2185
        %v2709 = vmax.f32 %v2581, %v2187
        %v2710 = vmax.f32 %v2582, %v2190
        %v2711 = vmax.f32 %v2583, %v2192
        %v2712 = vmax.f32 %v2584, %v2195
        %v2713 = vmax.f32 %v2585, %v2197
        %v2714 = vmax.f32 %v2586, %v2200
        %v2715 = vmax.f32 %v2587, %v2202
        %v2716 = vmax.f32 %v2588, %v2205
        %v2717 = vmax.f32 %v2589, %v2207
        %v2718 = vmax.f32 %v2590, %v2210
        %v2719 = vmax.f32 %v2591, %v2212
        %v2720 = vmax.f32 %v2592, %v2215
        %v2721 = vmax.f32 %v2593, %v2217
        %v2722 = vmax.f32 %v2594, %v2220
        %v2723 = vmax.f32 %v2595, %v2222
        %v2724 = vmax.f32 %v2596, %v2225
        %v2725 = vmax.f32 %v2597, %v2227
        %v2726 = vmax.f32 %v2598, %v2230
        %v2727 = vmax.f32 %v2599, %v2232
        %v2728 = vmax.f32 %v2600, %v2235
        %v2729 = vmax.f32 %v2601, %v2237
        %v2730 = vmax.f32 %v2602, %v2240
        %v2731 = vmax.f32 %v2603, %v2242
        %v2732 = vmax.f32 %v2604, %v2245
        %v2733 = vmax.f32 %v2605, %v2247
        %v2734 = vmax.f32 %v2606, %v2250
        %v2735 = vmax.f32 %v2607, %v2252
        %v2736 = vmax.f32 %v2608, %v2255
        %v2737 = vmax.f32 %v2609, %v2257
        %v2738 = vmax.f32 %v2610, %v2260
        %v2739 = vmax.f32 %v2611, %v2262
        %v2740 = vmax.f32 %v2612, %v2265
        %v2741 = vmax.f32 %v2613, %v2267
        %v2742 = vmax.f32 %v2614, %v2270
        %v2743 = vmax.f32 %v2615, %v2272
        %v2744 = vmax.f32 %v2616, %v2275
        %v2745 = vmax.f32 %v2617, %v2277
        %v2746 = vmax.f32 %v2618, %v2280
        %v2747 = vmax.f32 %v2619, %v2282
        %v2748 = vmax.f32 %v2620, %v2285
        %v2749 = vmax.f32 %v2621, %v2287
        %v2750 = vmax.f32 %v2622, %v2290
        %v2751 = vmax.f32 %v2623, %v2292
        %v2752 = vmax.f32 %v2624, %v2295
        %v2753 = vmax.f32 %v2625, %v2297
        %v2754 = vmax.f32 %v2626, %v2300
        %v2755 = vmax.f32 %v2627, %v2302
        %v2756 = vmax.f32 %v2628, %v2305
        %v2757 = vmax.f32 %v2629, %v2307
        %v2758 = vmax.f32 %v2630, %v2310
        %v2759 = vmax.f32 %v2631, %v2312
        %v2760 = vmax.f32 %v2632, %v2315
        %v2761 = vmax.f32 %v2633, %v2317
        %v2762 = vmax.f32 %v2634, %v2320
        %v2763 = vmax.f32 %v2635, %v2322
        %v2764 = vmax.f32 %v2636, %v2325
        %v2765 = vmax.f32 %v2637, %v2327
        %v2766 = vmax.f32 %v2638, %v2330
        %v2767 = vmax.f32 %v2639, %v2332
        %v2768 = vmax.f32 %v2640, %v2335
        %v2769 = vmax.f32 %v2641, %v2337
        %v2770 = vmax.f32 %v2642, %v2340
        %v2771 = vmax.f32 %v2643, %v2342
        %v2772 = vmax.f32 %v2644, %v2345
        %v2773 = vmax.f32 %v2645, %v2347
        %v2774 = vmax.f32 %v2646, %v2350
        %v2775 = vmax.f32 %v2647, %v2352
        %v2776 = vmax.f32 %v2648, %v2355
        %v2777 = vmax.f32 %v2649, %v2357
        %v2778 = vmax.f32 %v2650, %v2360
        %v2779 = vmax.f32 %v2651, %v2362
        %v2780 = vmax.f32 %v2652, %v2365
        %v2781 = vmax.f32 %v2653, %v2367
        %v2782 = vmax.f32 %v2654, %v2370
        %v2783 = vmax.f32 %v2655, %v2372
        %v2784 = vmax.f32 %v2656, %v2375
        %v2785 = vmax.f32 %v2657, %v2377
        %v2786 = vmax.f32 %v2658, %v2380
        %v2787 = vmax.f32 %v2659, %v2382
        %v2788 = vmax.f32 %v2660, %v2385
        %v2789 = vmax.f32 %v2661, %v2387
        %v2790 = vmax.f32 %v2662, %v2390
        %v2791 = vmax.f32 %v2663, %v2392
        %v2792 = vmax.f32 %v2664, %v2395
        %v2793 = vmax.f32 %v2665, %v2397
        %v2794 = vmax.f32 %v2666, %v2400
        %v2795 = vmax.f32 %v2667, %v2402
        %2796 = vst [vmem:[#allocation2] sm:$0xff] %v2668
        %2797 = vst [vmem:[#allocation2 + $0x8] sm:$0xff] %v2669
        %2798 = vst [vmem:[#allocation2 + $0x10] sm:$0xff] %v2670
        %2799 = vst [vmem:[#allocation2 + $0x18] sm:$0xff] %v2671
        %2800 = vst [vmem:[#allocation2 + $0x20] sm:$0xff] %v2672
        %2801 = vst [vmem:[#allocation2 + $0x28] sm:$0xff] %v2673
        %2802 = vst [vmem:[#allocation2 + $0x30] sm:$0xff] %v2674
        %2803 = vst [vmem:[#allocation2 + $0x38] sm:$0xff] %v2675
        %2804 = vst [vmem:[#allocation2 + $0x40] sm:$0xff] %v2676
        %2805 = vst [vmem:[#allocation2 + $0x48] sm:$0xff] %v2677
        %2806 = vst [vmem:[#allocation2 + $0x50] sm:$0xff] %v2678
        %2807 = vst [vmem:[#allocation2 + $0x58] sm:$0xff] %v2679
        %2808 = vst [vmem:[#allocation2 + $0x60] sm:$0xff] %v2680
        %2809 = vst [vmem:[#allocation2 + $0x68] sm:$0xff] %v2681
        %2810 = vst [vmem:[#allocation2 + $0x70] sm:$0xff] %v2682
        %2811 = vst [vmem:[#allocation2 + $0x78] sm:$0xff] %v2683
        %2812 = vst [vmem:[#allocation2 + $0x80] sm:$0xff] %v2684
        %2813 = vst [vmem:[#allocation2 + $0x88] sm:$0xff] %v2685
        %2814 = vst [vmem:[#allocation2 + $0x90] sm:$0xff] %v2686
        %2815 = vst [vmem:[#allocation2 + $0x98] sm:$0xff] %v2687
        %2816 = vst [vmem:[#allocation2 + $0xa0] sm:$0xff] %v2688
        %2817 = vst [vmem:[#allocation2 + $0xa8] sm:$0xff] %v2689
        %2818 = vst [vmem:[#allocation2 + $0xb0] sm:$0xff] %v2690
        %2819 = vst [vmem:[#allocation2 + $0xb8] sm:$0xff] %v2691
        %2820 = vst [vmem:[#allocation2 + $0xc0] sm:$0xff] %v2692
        %2821 = vst [vmem:[#allocation2 + $0xc8] sm:$0xff] %v2693
        %2822 = vst [vmem:[#allocation2 + $0xd0] sm:$0xff] %v2694
        %2823 = vst [vmem:[#allocation2 + $0xd8] sm:$0xff] %v2695
        %2824 = vst [vmem:[#allocation2 + $0xe0] sm:$0xff] %v2696
        %2825 = vst [vmem:[#allocation2 + $0xe8] sm:$0xff] %v2697
        %2826 = vst [vmem:[#allocation2 + $0xf0] sm:$0xff] %v2698
        %2827 = vst [vmem:[#allocation2 + $0xf8] sm:$0xff] %v2699
        %2828 = vst [vmem:[#allocation2 + $0x100] sm:$0xff] %v2700
        %2829 = vst [vmem:[#allocation2 + $0x108] sm:$0xff] %v2701
        %2830 = vst [vmem:[#allocation2 + $0x110] sm:$0xff] %v2702
        %2831 = vst [vmem:[#allocation2 + $0x118] sm:$0xff] %v2703
        %2832 = vst [vmem:[#allocation2 + $0x120] sm:$0xff] %v2704
        %2833 = vst [vmem:[#allocation2 + $0x128] sm:$0xff] %v2705
        %2834 = vst [vmem:[#allocation2 + $0x130] sm:$0xff] %v2706
        %2835 = vst [vmem:[#allocation2 + $0x138] sm:$0xff] %v2707
        %2836 = vst [vmem:[#allocation2 + $0x140] sm:$0xff] %v2708
        %2837 = vst [vmem:[#allocation2 + $0x148] sm:$0xff] %v2709
        %2838 = vst [vmem:[#allocation2 + $0x150] sm:$0xff] %v2710
        %2839 = vst [vmem:[#allocation2 + $0x158] sm:$0xff] %v2711
        %2840 = vst [vmem:[#allocation2 + $0x160] sm:$0xff] %v2712
        %2841 = vst [vmem:[#allocation2 + $0x168] sm:$0xff] %v2713
        %2842 = vst [vmem:[#allocation2 + $0x170] sm:$0xff] %v2714
        %2843 = vst [vmem:[#allocation2 + $0x178] sm:$0xff] %v2715
        %2844 = vst [vmem:[#allocation2 + $0x180] sm:$0xff] %v2716
        %2845 = vst [vmem:[#allocation2 + $0x188] sm:$0xff] %v2717
        %2846 = vst [vmem:[#allocation2 + $0x190] sm:$0xff] %v2718
        %2847 = vst [vmem:[#allocation2 + $0x198] sm:$0xff] %v2719
        %2848 = vst [vmem:[#allocation2 + $0x1a0] sm:$0xff] %v2720
        %2849 = vst [vmem:[#allocation2 + $0x1a8] sm:$0xff] %v2721
        %2850 = vst [vmem:[#allocation2 + $0x1b0] sm:$0xff] %v2722
        %2851 = vst [vmem:[#allocation2 + $0x1b8] sm:$0xff] %v2723
        %2852 = vst [vmem:[#allocation2 + $0x1c0] sm:$0xff] %v2724
        %2853 = vst [vmem:[#allocation2 + $0x1c8] sm:$0xff] %v2725
        %2854 = vst [vmem:[#allocation2 + $0x1d0] sm:$0xff] %v2726
        %2855 = vst [vmem:[#allocation2 + $0x1d8] sm:$0xff] %v2727
        %2856 = vst [vmem:[#allocation2 + $0x1e0] sm:$0xff] %v2728
        %2857 = vst [vmem:[#allocation2 + $0x1e8] sm:$0xff] %v2729
        %2858 = vst [vmem:[#allocation2 + $0x1f0] sm:$0xff] %v2730
        %2859 = vst [vmem:[#allocation2 + $0x1f8] sm:$0xff] %v2731
        %2860 = vst [vmem:[#allocation2 + $0x200] sm:$0xff] %v2732
        %2861 = vst [vmem:[#allocation2 + $0x208] sm:$0xff] %v2733
        %2862 = vst [vmem:[#allocation2 + $0x210] sm:$0xff] %v2734
        %2863 = vst [vmem:[#allocation2 + $0x218] sm:$0xff] %v2735
        %2864 = vst [vmem:[#allocation2 + $0x220] sm:$0xff] %v2736
        %2865 = vst [vmem:[#allocation2 + $0x228] sm:$0xff] %v2737
        %2866 = vst [vmem:[#allocation2 + $0x230] sm:$0xff] %v2738
        %2867 = vst [vmem:[#allocation2 + $0x238] sm:$0xff] %v2739
        %2868 = vst [vmem:[#allocation2 + $0x240] sm:$0xff] %v2740
        %2869 = vst [vmem:[#allocation2 + $0x248] sm:$0xff] %v2741
        %2870 = vst [vmem:[#allocation2 + $0x250] sm:$0xff] %v2742
        %2871 = vst [vmem:[#allocation2 + $0x258] sm:$0xff] %v2743
        %2872 = vst [vmem:[#allocation2 + $0x260] sm:$0xff] %v2744
        %2873 = vst [vmem:[#allocation2 + $0x268] sm:$0xff] %v2745
        %2874 = vst [vmem:[#allocation2 + $0x270] sm:$0xff] %v2746
        %2875 = vst [vmem:[#allocation2 + $0x278] sm:$0xff] %v2747
        %2876 = vst [vmem:[#allocation2 + $0x280] sm:$0xff] %v2748
        %2877 = vst [vmem:[#allocation2 + $0x288] sm:$0xff] %v2749
        %2878 = vst [vmem:[#allocation2 + $0x290] sm:$0xff] %v2750
        %2879 = vst [vmem:[#allocation2 + $0x298] sm:$0xff] %v2751
        %2880 = vst [vmem:[#allocation2 + $0x2a0] sm:$0xff] %v2752
        %2881 = vst [vmem:[#allocation2 + $0x2a8] sm:$0xff] %v2753
        %2882 = vst [vmem:[#allocation2 + $0x2b0] sm:$0xff] %v2754
        %2883 = vst [vmem:[#allocation2 + $0x2b8] sm:$0xff] %v2755
        %2884 = vst [vmem:[#allocation2 + $0x2c0] sm:$0xff] %v2756
        %2885 = vst [vmem:[#allocation2 + $0x2c8] sm:$0xff] %v2757
        %2886 = vst [vmem:[#allocation2 + $0x2d0] sm:$0xff] %v2758
        %2887 = vst [vmem:[#allocation2 + $0x2d8] sm:$0xff] %v2759
        %2888 = vst [vmem:[#allocation2 + $0x2e0] sm:$0xff] %v2760
        %2889 = vst [vmem:[#allocation2 + $0x2e8] sm:$0xff] %v2761
        %2890 = vst [vmem:[#allocation2 + $0x2f0] sm:$0xff] %v2762
        %2891 = vst [vmem:[#allocation2 + $0x2f8] sm:$0xff] %v2763
        %2892 = vst [vmem:[#allocation2 + $0x300] sm:$0xff] %v2764
        %2893 = vst [vmem:[#allocation2 + $0x308] sm:$0xff] %v2765
        %2894 = vst [vmem:[#allocation2 + $0x310] sm:$0xff] %v2766
        %2895 = vst [vmem:[#allocation2 + $0x318] sm:$0xff] %v2767
        %2896 = vst [vmem:[#allocation2 + $0x320] sm:$0xff] %v2768
        %2897 = vst [vmem:[#allocation2 + $0x328] sm:$0xff] %v2769
        %2898 = vst [vmem:[#allocation2 + $0x330] sm:$0xff] %v2770
        %2899 = vst [vmem:[#allocation2 + $0x338] sm:$0xff] %v2771
        %2900 = vst [vmem:[#allocation2 + $0x340] sm:$0xff] %v2772
        %2901 = vst [vmem:[#allocation2 + $0x348] sm:$0xff] %v2773
        %2902 = vst [vmem:[#allocation2 + $0x350] sm:$0xff] %v2774
        %2903 = vst [vmem:[#allocation2 + $0x358] sm:$0xff] %v2775
        %2904 = vst [vmem:[#allocation2 + $0x360] sm:$0xff] %v2776
        %2905 = vst [vmem:[#allocation2 + $0x368] sm:$0xff] %v2777
        %2906 = vst [vmem:[#allocation2 + $0x370] sm:$0xff] %v2778
        %2907 = vst [vmem:[#allocation2 + $0x378] sm:$0xff] %v2779
        %2908 = vst [vmem:[#allocation2 + $0x380] sm:$0xff] %v2780
        %2909 = vst [vmem:[#allocation2 + $0x388] sm:$0xff] %v2781
        %2910 = vst [vmem:[#allocation2 + $0x390] sm:$0xff] %v2782
        %2911 = vst [vmem:[#allocation2 + $0x398] sm:$0xff] %v2783
        %2912 = vst [vmem:[#allocation2 + $0x3a0] sm:$0xff] %v2784
        %2913 = vst [vmem:[#allocation2 + $0x3a8] sm:$0xff] %v2785
        %2914 = vst [vmem:[#allocation2 + $0x3b0] sm:$0xff] %v2786
        %2915 = vst [vmem:[#allocation2 + $0x3b8] sm:$0xff] %v2787
        %2916 = vst [vmem:[#allocation2 + $0x3c0] sm:$0xff] %v2788
        %2917 = vst [vmem:[#allocation2 + $0x3c8] sm:$0xff] %v2789
        %2918 = vst [vmem:[#allocation2 + $0x3d0] sm:$0xff] %v2790
        %2919 = vst [vmem:[#allocation2 + $0x3d8] sm:$0xff] %v2791
        %2920 = vst [vmem:[#allocation2 + $0x3e0] sm:$0xff] %v2792
        %2921 = vst [vmem:[#allocation2 + $0x3e8] sm:$0xff] %v2793
        %2922 = vst [vmem:[#allocation2 + $0x3f0] sm:$0xff] %v2794
        %2923 = vst [vmem:[#allocation2 + $0x3f8] sm:$0xff] %v2795
      $region56: #{pointnetfeat_forward.3} parent=47 // pred_fallthru
        _
      %p2924 = scmp.eq.s32.totalorder %s23, 2
      // Predicated region
      $region57: #{pointnetfeat_forward.3} parent=47 // pred_check
        %p2925 = pneg %p2924
      $region58: #{pointnetfeat_forward.3} parent=47 // pred_check_branch
        %2927 = sbr.rel (%p2925) target = $region60
      $region59: #{pointnetfeat_forward.3} parent=47 // pred_region
        %v2928 = vld [vmem:[#allocation2] sm:$0xff]
        %v2929 = vld [vmem:[#allocation2 + $0x8] sm:$0xff]
        %v2930 = vld [vmem:[#allocation2 + $0x10] sm:$0xff]
        %v2931 = vld [vmem:[#allocation2 + $0x18] sm:$0xff]
        %v2932 = vld [vmem:[#allocation2 + $0x20] sm:$0xff]
        %v2933 = vld [vmem:[#allocation2 + $0x28] sm:$0xff]
        %v2934 = vld [vmem:[#allocation2 + $0x30] sm:$0xff]
        %v2935 = vld [vmem:[#allocation2 + $0x38] sm:$0xff]
        %v2936 = vld [vmem:[#allocation2 + $0x40] sm:$0xff]
        %v2937 = vld [vmem:[#allocation2 + $0x48] sm:$0xff]
        %v2938 = vld [vmem:[#allocation2 + $0x50] sm:$0xff]
        %v2939 = vld [vmem:[#allocation2 + $0x58] sm:$0xff]
        %v2940 = vld [vmem:[#allocation2 + $0x60] sm:$0xff]
        %v2941 = vld [vmem:[#allocation2 + $0x68] sm:$0xff]
        %v2942 = vld [vmem:[#allocation2 + $0x70] sm:$0xff]
        %v2943 = vld [vmem:[#allocation2 + $0x78] sm:$0xff]
        %v2944 = vld [vmem:[#allocation2 + $0x80] sm:$0xff]
        %v2945 = vld [vmem:[#allocation2 + $0x88] sm:$0xff]
        %v2946 = vld [vmem:[#allocation2 + $0x90] sm:$0xff]
        %v2947 = vld [vmem:[#allocation2 + $0x98] sm:$0xff]
        %v2948 = vld [vmem:[#allocation2 + $0xa0] sm:$0xff]
        %v2949 = vld [vmem:[#allocation2 + $0xa8] sm:$0xff]
        %v2950 = vld [vmem:[#allocation2 + $0xb0] sm:$0xff]
        %v2951 = vld [vmem:[#allocation2 + $0xb8] sm:$0xff]
        %v2952 = vld [vmem:[#allocation2 + $0xc0] sm:$0xff]
        %v2953 = vld [vmem:[#allocation2 + $0xc8] sm:$0xff]
        %v2954 = vld [vmem:[#allocation2 + $0xd0] sm:$0xff]
        %v2955 = vld [vmem:[#allocation2 + $0xd8] sm:$0xff]
        %v2956 = vld [vmem:[#allocation2 + $0xe0] sm:$0xff]
        %v2957 = vld [vmem:[#allocation2 + $0xe8] sm:$0xff]
        %v2958 = vld [vmem:[#allocation2 + $0xf0] sm:$0xff]
        %v2959 = vld [vmem:[#allocation2 + $0xf8] sm:$0xff]
        %v2960 = vld [vmem:[#allocation2 + $0x100] sm:$0xff]
        %v2961 = vld [vmem:[#allocation2 + $0x108] sm:$0xff]
        %v2962 = vld [vmem:[#allocation2 + $0x110] sm:$0xff]
        %v2963 = vld [vmem:[#allocation2 + $0x118] sm:$0xff]
        %v2964 = vld [vmem:[#allocation2 + $0x120] sm:$0xff]
        %v2965 = vld [vmem:[#allocation2 + $0x128] sm:$0xff]
        %v2966 = vld [vmem:[#allocation2 + $0x130] sm:$0xff]
        %v2967 = vld [vmem:[#allocation2 + $0x138] sm:$0xff]
        %v2968 = vld [vmem:[#allocation2 + $0x140] sm:$0xff]
        %v2969 = vld [vmem:[#allocation2 + $0x148] sm:$0xff]
        %v2970 = vld [vmem:[#allocation2 + $0x150] sm:$0xff]
        %v2971 = vld [vmem:[#allocation2 + $0x158] sm:$0xff]
        %v2972 = vld [vmem:[#allocation2 + $0x160] sm:$0xff]
        %v2973 = vld [vmem:[#allocation2 + $0x168] sm:$0xff]
        %v2974 = vld [vmem:[#allocation2 + $0x170] sm:$0xff]
        %v2975 = vld [vmem:[#allocation2 + $0x178] sm:$0xff]
        %v2976 = vld [vmem:[#allocation2 + $0x180] sm:$0xff]
        %v2977 = vld [vmem:[#allocation2 + $0x188] sm:$0xff]
        %v2978 = vld [vmem:[#allocation2 + $0x190] sm:$0xff]
        %v2979 = vld [vmem:[#allocation2 + $0x198] sm:$0xff]
        %v2980 = vld [vmem:[#allocation2 + $0x1a0] sm:$0xff]
        %v2981 = vld [vmem:[#allocation2 + $0x1a8] sm:$0xff]
        %v2982 = vld [vmem:[#allocation2 + $0x1b0] sm:$0xff]
        %v2983 = vld [vmem:[#allocation2 + $0x1b8] sm:$0xff]
        %v2984 = vld [vmem:[#allocation2 + $0x1c0] sm:$0xff]
        %v2985 = vld [vmem:[#allocation2 + $0x1c8] sm:$0xff]
        %v2986 = vld [vmem:[#allocation2 + $0x1d0] sm:$0xff]
        %v2987 = vld [vmem:[#allocation2 + $0x1d8] sm:$0xff]
        %v2988 = vld [vmem:[#allocation2 + $0x1e0] sm:$0xff]
        %v2989 = vld [vmem:[#allocation2 + $0x1e8] sm:$0xff]
        %v2990 = vld [vmem:[#allocation2 + $0x1f0] sm:$0xff]
        %v2991 = vld [vmem:[#allocation2 + $0x1f8] sm:$0xff]
        %v2992 = vld [vmem:[#allocation2 + $0x200] sm:$0xff]
        %v2993 = vld [vmem:[#allocation2 + $0x208] sm:$0xff]
        %v2994 = vld [vmem:[#allocation2 + $0x210] sm:$0xff]
        %v2995 = vld [vmem:[#allocation2 + $0x218] sm:$0xff]
        %v2996 = vld [vmem:[#allocation2 + $0x220] sm:$0xff]
        %v2997 = vld [vmem:[#allocation2 + $0x228] sm:$0xff]
        %v2998 = vld [vmem:[#allocation2 + $0x230] sm:$0xff]
        %v2999 = vld [vmem:[#allocation2 + $0x238] sm:$0xff]
        %v3000 = vld [vmem:[#allocation2 + $0x240] sm:$0xff]
        %v3001 = vld [vmem:[#allocation2 + $0x248] sm:$0xff]
        %v3002 = vld [vmem:[#allocation2 + $0x250] sm:$0xff]
        %v3003 = vld [vmem:[#allocation2 + $0x258] sm:$0xff]
        %v3004 = vld [vmem:[#allocation2 + $0x260] sm:$0xff]
        %v3005 = vld [vmem:[#allocation2 + $0x268] sm:$0xff]
        %v3006 = vld [vmem:[#allocation2 + $0x270] sm:$0xff]
        %v3007 = vld [vmem:[#allocation2 + $0x278] sm:$0xff]
        %v3008 = vld [vmem:[#allocation2 + $0x280] sm:$0xff]
        %v3009 = vld [vmem:[#allocation2 + $0x288] sm:$0xff]
        %v3010 = vld [vmem:[#allocation2 + $0x290] sm:$0xff]
        %v3011 = vld [vmem:[#allocation2 + $0x298] sm:$0xff]
        %v3012 = vld [vmem:[#allocation2 + $0x2a0] sm:$0xff]
        %v3013 = vld [vmem:[#allocation2 + $0x2a8] sm:$0xff]
        %v3014 = vld [vmem:[#allocation2 + $0x2b0] sm:$0xff]
        %v3015 = vld [vmem:[#allocation2 + $0x2b8] sm:$0xff]
        %v3016 = vld [vmem:[#allocation2 + $0x2c0] sm:$0xff]
        %v3017 = vld [vmem:[#allocation2 + $0x2c8] sm:$0xff]
        %v3018 = vld [vmem:[#allocation2 + $0x2d0] sm:$0xff]
        %v3019 = vld [vmem:[#allocation2 + $0x2d8] sm:$0xff]
        %v3020 = vld [vmem:[#allocation2 + $0x2e0] sm:$0xff]
        %v3021 = vld [vmem:[#allocation2 + $0x2e8] sm:$0xff]
        %v3022 = vld [vmem:[#allocation2 + $0x2f0] sm:$0xff]
        %v3023 = vld [vmem:[#allocation2 + $0x2f8] sm:$0xff]
        %v3024 = vld [vmem:[#allocation2 + $0x300] sm:$0xff]
        %v3025 = vld [vmem:[#allocation2 + $0x308] sm:$0xff]
        %v3026 = vld [vmem:[#allocation2 + $0x310] sm:$0xff]
        %v3027 = vld [vmem:[#allocation2 + $0x318] sm:$0xff]
        %v3028 = vld [vmem:[#allocation2 + $0x320] sm:$0xff]
        %v3029 = vld [vmem:[#allocation2 + $0x328] sm:$0xff]
        %v3030 = vld [vmem:[#allocation2 + $0x330] sm:$0xff]
        %v3031 = vld [vmem:[#allocation2 + $0x338] sm:$0xff]
        %v3032 = vld [vmem:[#allocation2 + $0x340] sm:$0xff]
        %v3033 = vld [vmem:[#allocation2 + $0x348] sm:$0xff]
        %v3034 = vld [vmem:[#allocation2 + $0x350] sm:$0xff]
        %v3035 = vld [vmem:[#allocation2 + $0x358] sm:$0xff]
        %v3036 = vld [vmem:[#allocation2 + $0x360] sm:$0xff]
        %v3037 = vld [vmem:[#allocation2 + $0x368] sm:$0xff]
        %v3038 = vld [vmem:[#allocation2 + $0x370] sm:$0xff]
        %v3039 = vld [vmem:[#allocation2 + $0x378] sm:$0xff]
        %v3040 = vld [vmem:[#allocation2 + $0x380] sm:$0xff]
        %v3041 = vld [vmem:[#allocation2 + $0x388] sm:$0xff]
        %v3042 = vld [vmem:[#allocation2 + $0x390] sm:$0xff]
        %v3043 = vld [vmem:[#allocation2 + $0x398] sm:$0xff]
        %v3044 = vld [vmem:[#allocation2 + $0x3a0] sm:$0xff]
        %v3045 = vld [vmem:[#allocation2 + $0x3a8] sm:$0xff]
        %v3046 = vld [vmem:[#allocation2 + $0x3b0] sm:$0xff]
        %v3047 = vld [vmem:[#allocation2 + $0x3b8] sm:$0xff]
        %v3048 = vld [vmem:[#allocation2 + $0x3c0] sm:$0xff]
        %v3049 = vld [vmem:[#allocation2 + $0x3c8] sm:$0xff]
        %v3050 = vld [vmem:[#allocation2 + $0x3d0] sm:$0xff]
        %v3051 = vld [vmem:[#allocation2 + $0x3d8] sm:$0xff]
        %v3052 = vld [vmem:[#allocation2 + $0x3e0] sm:$0xff]
        %v3053 = vld [vmem:[#allocation2 + $0x3e8] sm:$0xff]
        %v3054 = vld [vmem:[#allocation2 + $0x3f0] sm:$0xff]
        %v3055 = vld [vmem:[#allocation2 + $0x3f8] sm:$0xff]
        %v3056 = vlaneseq
        %v3057 = vand.u32 %v3056, 127
        %vm3058 = vcmp.lt.s32.totalorder %v3057, 64
        %v3059 = vsel %vm3058, 1, 0
        %vm3060 = vcmp.eq.s32.totalorder %v3059, 1
        %v3061 = vsel %vm3060, %v2085, -inf
        %v3062 = vsel %vm3060, %v2087, -inf
        %v3063 = vsel %vm3060, %v2090, -inf
        %v3064 = vsel %vm3060, %v2092, -inf
        %v3065 = vsel %vm3060, %v2095, -inf
        %v3066 = vsel %vm3060, %v2097, -inf
        %v3067 = vsel %vm3060, %v2100, -inf
        %v3068 = vsel %vm3060, %v2102, -inf
        %v3069 = vsel %vm3060, %v2105, -inf
        %v3070 = vsel %vm3060, %v2107, -inf
        %v3071 = vsel %vm3060, %v2110, -inf
        %v3072 = vsel %vm3060, %v2112, -inf
        %v3073 = vsel %vm3060, %v2115, -inf
        %v3074 = vsel %vm3060, %v2117, -inf
        %v3075 = vsel %vm3060, %v2120, -inf
        %v3076 = vsel %vm3060, %v2122, -inf
        %v3077 = vsel %vm3060, %v2125, -inf
        %v3078 = vsel %vm3060, %v2127, -inf
        %v3079 = vsel %vm3060, %v2130, -inf
        %v3080 = vsel %vm3060, %v2132, -inf
        %v3081 = vsel %vm3060, %v2135, -inf
        %v3082 = vsel %vm3060, %v2137, -inf
        %v3083 = vsel %vm3060, %v2140, -inf
        %v3084 = vsel %vm3060, %v2142, -inf
        %v3085 = vsel %vm3060, %v2145, -inf
        %v3086 = vsel %vm3060, %v2147, -inf
        %v3087 = vsel %vm3060, %v2150, -inf
        %v3088 = vsel %vm3060, %v2152, -inf
        %v3089 = vsel %vm3060, %v2155, -inf
        %v3090 = vsel %vm3060, %v2157, -inf
        %v3091 = vsel %vm3060, %v2160, -inf
        %v3092 = vsel %vm3060, %v2162, -inf
        %v3093 = vsel %vm3060, %v2165, -inf
        %v3094 = vsel %vm3060, %v2167, -inf
        %v3095 = vsel %vm3060, %v2170, -inf
        %v3096 = vsel %vm3060, %v2172, -inf
        %v3097 = vsel %vm3060, %v2175, -inf
        %v3098 = vsel %vm3060, %v2177, -inf
        %v3099 = vsel %vm3060, %v2180, -inf
        %v3100 = vsel %vm3060, %v2182, -inf
        %v3101 = vsel %vm3060, %v2185, -inf
        %v3102 = vsel %vm3060, %v2187, -inf
        %v3103 = vsel %vm3060, %v2190, -inf
        %v3104 = vsel %vm3060, %v2192, -inf
        %v3105 = vsel %vm3060, %v2195, -inf
        %v3106 = vsel %vm3060, %v2197, -inf
        %v3107 = vsel %vm3060, %v2200, -inf
        %v3108 = vsel %vm3060, %v2202, -inf
        %v3109 = vsel %vm3060, %v2205, -inf
        %v3110 = vsel %vm3060, %v2207, -inf
        %v3111 = vsel %vm3060, %v2210, -inf
        %v3112 = vsel %vm3060, %v2212, -inf
        %v3113 = vsel %vm3060, %v2215, -inf
        %v3114 = vsel %vm3060, %v2217, -inf
        %v3115 = vsel %vm3060, %v2220, -inf
        %v3116 = vsel %vm3060, %v2222, -inf
        %v3117 = vsel %vm3060, %v2225, -inf
        %v3118 = vsel %vm3060, %v2227, -inf
        %v3119 = vsel %vm3060, %v2230, -inf
        %v3120 = vsel %vm3060, %v2232, -inf
        %v3121 = vsel %vm3060, %v2235, -inf
        %v3122 = vsel %vm3060, %v2237, -inf
        %v3123 = vsel %vm3060, %v2240, -inf
        %v3124 = vsel %vm3060, %v2242, -inf
        %v3125 = vsel %vm3060, %v2245, -inf
        %v3126 = vsel %vm3060, %v2247, -inf
        %v3127 = vsel %vm3060, %v2250, -inf
        %v3128 = vsel %vm3060, %v2252, -inf
        %v3129 = vsel %vm3060, %v2255, -inf
        %v3130 = vsel %vm3060, %v2257, -inf
        %v3131 = vsel %vm3060, %v2260, -inf
        %v3132 = vsel %vm3060, %v2262, -inf
        %v3133 = vsel %vm3060, %v2265, -inf
        %v3134 = vsel %vm3060, %v2267, -inf
        %v3135 = vsel %vm3060, %v2270, -inf
        %v3136 = vsel %vm3060, %v2272, -inf
        %v3137 = vsel %vm3060, %v2275, -inf
        %v3138 = vsel %vm3060, %v2277, -inf
        %v3139 = vsel %vm3060, %v2280, -inf
        %v3140 = vsel %vm3060, %v2282, -inf
        %v3141 = vsel %vm3060, %v2285, -inf
        %v3142 = vsel %vm3060, %v2287, -inf
        %v3143 = vsel %vm3060, %v2290, -inf
        %v3144 = vsel %vm3060, %v2292, -inf
        %v3145 = vsel %vm3060, %v2295, -inf
        %v3146 = vsel %vm3060, %v2297, -inf
        %v3147 = vsel %vm3060, %v2300, -inf
        %v3148 = vsel %vm3060, %v2302, -inf
        %v3149 = vsel %vm3060, %v2305, -inf
        %v3150 = vsel %vm3060, %v2307, -inf
        %v3151 = vsel %vm3060, %v2310, -inf
        %v3152 = vsel %vm3060, %v2312, -inf
        %v3153 = vsel %vm3060, %v2315, -inf
        %v3154 = vsel %vm3060, %v2317, -inf
        %v3155 = vsel %vm3060, %v2320, -inf
        %v3156 = vsel %vm3060, %v2322, -inf
        %v3157 = vsel %vm3060, %v2325, -inf
        %v3158 = vsel %vm3060, %v2327, -inf
        %v3159 = vsel %vm3060, %v2330, -inf
        %v3160 = vsel %vm3060, %v2332, -inf
        %v3161 = vsel %vm3060, %v2335, -inf
        %v3162 = vsel %vm3060, %v2337, -inf
        %v3163 = vsel %vm3060, %v2340, -inf
        %v3164 = vsel %vm3060, %v2342, -inf
        %v3165 = vsel %vm3060, %v2345, -inf
        %v3166 = vsel %vm3060, %v2347, -inf
        %v3167 = vsel %vm3060, %v2350, -inf
        %v3168 = vsel %vm3060, %v2352, -inf
        %v3169 = vsel %vm3060, %v2355, -inf
        %v3170 = vsel %vm3060, %v2357, -inf
        %v3171 = vsel %vm3060, %v2360, -inf
        %v3172 = vsel %vm3060, %v2362, -inf
        %v3173 = vsel %vm3060, %v2365, -inf
        %v3174 = vsel %vm3060, %v2367, -inf
        %v3175 = vsel %vm3060, %v2370, -inf
        %v3176 = vsel %vm3060, %v2372, -inf
        %v3177 = vsel %vm3060, %v2375, -inf
        %v3178 = vsel %vm3060, %v2377, -inf
        %v3179 = vsel %vm3060, %v2380, -inf
        %v3180 = vsel %vm3060, %v2382, -inf
        %v3181 = vsel %vm3060, %v2385, -inf
        %v3182 = vsel %vm3060, %v2387, -inf
        %v3183 = vsel %vm3060, %v2390, -inf
        %v3184 = vsel %vm3060, %v2392, -inf
        %v3185 = vsel %vm3060, %v2395, -inf
        %v3186 = vsel %vm3060, %v2397, -inf
        %v3187 = vsel %vm3060, %v2400, -inf
        %v3188 = vsel %vm3060, %v2402, -inf
        %v3189 = vmax.f32 %v2928, %v3061
        %v3190 = vmax.f32 %v2929, %v3062
        %v3191 = vmax.f32 %v2930, %v3063
        %v3192 = vmax.f32 %v2931, %v3064
        %v3193 = vmax.f32 %v2932, %v3065
        %v3194 = vmax.f32 %v2933, %v3066
        %v3195 = vmax.f32 %v2934, %v3067
        %v3196 = vmax.f32 %v2935, %v3068
        %v3197 = vmax.f32 %v2936, %v3069
        %v3198 = vmax.f32 %v2937, %v3070
        %v3199 = vmax.f32 %v2938, %v3071
        %v3200 = vmax.f32 %v2939, %v3072
        %v3201 = vmax.f32 %v2940, %v3073
        %v3202 = vmax.f32 %v2941, %v3074
        %v3203 = vmax.f32 %v2942, %v3075
        %v3204 = vmax.f32 %v2943, %v3076
        %v3205 = vmax.f32 %v2944, %v3077
        %v3206 = vmax.f32 %v2945, %v3078
        %v3207 = vmax.f32 %v2946, %v3079
        %v3208 = vmax.f32 %v2947, %v3080
        %v3209 = vmax.f32 %v2948, %v3081
        %v3210 = vmax.f32 %v2949, %v3082
        %v3211 = vmax.f32 %v2950, %v3083
        %v3212 = vmax.f32 %v2951, %v3084
        %v3213 = vmax.f32 %v2952, %v3085
        %v3214 = vmax.f32 %v2953, %v3086
        %v3215 = vmax.f32 %v2954, %v3087
        %v3216 = vmax.f32 %v2955, %v3088
        %v3217 = vmax.f32 %v2956, %v3089
        %v3218 = vmax.f32 %v2957, %v3090
        %v3219 = vmax.f32 %v2958, %v3091
        %v3220 = vmax.f32 %v2959, %v3092
        %v3221 = vmax.f32 %v2960, %v3093
        %v3222 = vmax.f32 %v2961, %v3094
        %v3223 = vmax.f32 %v2962, %v3095
        %v3224 = vmax.f32 %v2963, %v3096
        %v3225 = vmax.f32 %v2964, %v3097
        %v3226 = vmax.f32 %v2965, %v3098
        %v3227 = vmax.f32 %v2966, %v3099
        %v3228 = vmax.f32 %v2967, %v3100
        %v3229 = vmax.f32 %v2968, %v3101
        %v3230 = vmax.f32 %v2969, %v3102
        %v3231 = vmax.f32 %v2970, %v3103
        %v3232 = vmax.f32 %v2971, %v3104
        %v3233 = vmax.f32 %v2972, %v3105
        %v3234 = vmax.f32 %v2973, %v3106
        %v3235 = vmax.f32 %v2974, %v3107
        %v3236 = vmax.f32 %v2975, %v3108
        %v3237 = vmax.f32 %v2976, %v3109
        %v3238 = vmax.f32 %v2977, %v3110
        %v3239 = vmax.f32 %v2978, %v3111
        %v3240 = vmax.f32 %v2979, %v3112
        %v3241 = vmax.f32 %v2980, %v3113
        %v3242 = vmax.f32 %v2981, %v3114
        %v3243 = vmax.f32 %v2982, %v3115
        %v3244 = vmax.f32 %v2983, %v3116
        %v3245 = vmax.f32 %v2984, %v3117
        %v3246 = vmax.f32 %v2985, %v3118
        %v3247 = vmax.f32 %v2986, %v3119
        %v3248 = vmax.f32 %v2987, %v3120
        %v3249 = vmax.f32 %v2988, %v3121
        %v3250 = vmax.f32 %v2989, %v3122
        %v3251 = vmax.f32 %v2990, %v3123
        %v3252 = vmax.f32 %v2991, %v3124
        %v3253 = vmax.f32 %v2992, %v3125
        %v3254 = vmax.f32 %v2993, %v3126
        %v3255 = vmax.f32 %v2994, %v3127
        %v3256 = vmax.f32 %v2995, %v3128
        %v3257 = vmax.f32 %v2996, %v3129
        %v3258 = vmax.f32 %v2997, %v3130
        %v3259 = vmax.f32 %v2998, %v3131
        %v3260 = vmax.f32 %v2999, %v3132
        %v3261 = vmax.f32 %v3000, %v3133
        %v3262 = vmax.f32 %v3001, %v3134
        %v3263 = vmax.f32 %v3002, %v3135
        %v3264 = vmax.f32 %v3003, %v3136
        %v3265 = vmax.f32 %v3004, %v3137
        %v3266 = vmax.f32 %v3005, %v3138
        %v3267 = vmax.f32 %v3006, %v3139
        %v3268 = vmax.f32 %v3007, %v3140
        %v3269 = vmax.f32 %v3008, %v3141
        %v3270 = vmax.f32 %v3009, %v3142
        %v3271 = vmax.f32 %v3010, %v3143
        %v3272 = vmax.f32 %v3011, %v3144
        %v3273 = vmax.f32 %v3012, %v3145
        %v3274 = vmax.f32 %v3013, %v3146
        %v3275 = vmax.f32 %v3014, %v3147
        %v3276 = vmax.f32 %v3015, %v3148
        %v3277 = vmax.f32 %v3016, %v3149
        %v3278 = vmax.f32 %v3017, %v3150
        %v3279 = vmax.f32 %v3018, %v3151
        %v3280 = vmax.f32 %v3019, %v3152
        %v3281 = vmax.f32 %v3020, %v3153
        %v3282 = vmax.f32 %v3021, %v3154
        %v3283 = vmax.f32 %v3022, %v3155
        %v3284 = vmax.f32 %v3023, %v3156
        %v3285 = vmax.f32 %v3024, %v3157
        %v3286 = vmax.f32 %v3025, %v3158
        %v3287 = vmax.f32 %v3026, %v3159
        %v3288 = vmax.f32 %v3027, %v3160
        %v3289 = vmax.f32 %v3028, %v3161
        %v3290 = vmax.f32 %v3029, %v3162
        %v3291 = vmax.f32 %v3030, %v3163
        %v3292 = vmax.f32 %v3031, %v3164
        %v3293 = vmax.f32 %v3032, %v3165
        %v3294 = vmax.f32 %v3033, %v3166
        %v3295 = vmax.f32 %v3034, %v3167
        %v3296 = vmax.f32 %v3035, %v3168
        %v3297 = vmax.f32 %v3036, %v3169
        %v3298 = vmax.f32 %v3037, %v3170
        %v3299 = vmax.f32 %v3038, %v3171
        %v3300 = vmax.f32 %v3039, %v3172
        %v3301 = vmax.f32 %v3040, %v3173
        %v3302 = vmax.f32 %v3041, %v3174
        %v3303 = vmax.f32 %v3042, %v3175
        %v3304 = vmax.f32 %v3043, %v3176
        %v3305 = vmax.f32 %v3044, %v3177
        %v3306 = vmax.f32 %v3045, %v3178
        %v3307 = vmax.f32 %v3046, %v3179
        %v3308 = vmax.f32 %v3047, %v3180
        %v3309 = vmax.f32 %v3048, %v3181
        %v3310 = vmax.f32 %v3049, %v3182
        %v3311 = vmax.f32 %v3050, %v3183
        %v3312 = vmax.f32 %v3051, %v3184
        %v3313 = vmax.f32 %v3052, %v3185
        %v3314 = vmax.f32 %v3053, %v3186
        %v3315 = vmax.f32 %v3054, %v3187
        %v3316 = vmax.f32 %v3055, %v3188
        %3317 = vst [vmem:[#allocation2] sm:$0xff] %v3189
        %3318 = vst [vmem:[#allocation2 + $0x8] sm:$0xff] %v3190
        %3319 = vst [vmem:[#allocation2 + $0x10] sm:$0xff] %v3191
        %3320 = vst [vmem:[#allocation2 + $0x18] sm:$0xff] %v3192
        %3321 = vst [vmem:[#allocation2 + $0x20] sm:$0xff] %v3193
        %3322 = vst [vmem:[#allocation2 + $0x28] sm:$0xff] %v3194
        %3323 = vst [vmem:[#allocation2 + $0x30] sm:$0xff] %v3195
        %3324 = vst [vmem:[#allocation2 + $0x38] sm:$0xff] %v3196
        %3325 = vst [vmem:[#allocation2 + $0x40] sm:$0xff] %v3197
        %3326 = vst [vmem:[#allocation2 + $0x48] sm:$0xff] %v3198
        %3327 = vst [vmem:[#allocation2 + $0x50] sm:$0xff] %v3199
        %3328 = vst [vmem:[#allocation2 + $0x58] sm:$0xff] %v3200
        %3329 = vst [vmem:[#allocation2 + $0x60] sm:$0xff] %v3201
        %3330 = vst [vmem:[#allocation2 + $0x68] sm:$0xff] %v3202
        %3331 = vst [vmem:[#allocation2 + $0x70] sm:$0xff] %v3203
        %3332 = vst [vmem:[#allocation2 + $0x78] sm:$0xff] %v3204
        %3333 = vst [vmem:[#allocation2 + $0x80] sm:$0xff] %v3205
        %3334 = vst [vmem:[#allocation2 + $0x88] sm:$0xff] %v3206
        %3335 = vst [vmem:[#allocation2 + $0x90] sm:$0xff] %v3207
        %3336 = vst [vmem:[#allocation2 + $0x98] sm:$0xff] %v3208
        %3337 = vst [vmem:[#allocation2 + $0xa0] sm:$0xff] %v3209
        %3338 = vst [vmem:[#allocation2 + $0xa8] sm:$0xff] %v3210
        %3339 = vst [vmem:[#allocation2 + $0xb0] sm:$0xff] %v3211
        %3340 = vst [vmem:[#allocation2 + $0xb8] sm:$0xff] %v3212
        %3341 = vst [vmem:[#allocation2 + $0xc0] sm:$0xff] %v3213
        %3342 = vst [vmem:[#allocation2 + $0xc8] sm:$0xff] %v3214
        %3343 = vst [vmem:[#allocation2 + $0xd0] sm:$0xff] %v3215
        %3344 = vst [vmem:[#allocation2 + $0xd8] sm:$0xff] %v3216
        %3345 = vst [vmem:[#allocation2 + $0xe0] sm:$0xff] %v3217
        %3346 = vst [vmem:[#allocation2 + $0xe8] sm:$0xff] %v3218
        %3347 = vst [vmem:[#allocation2 + $0xf0] sm:$0xff] %v3219
        %3348 = vst [vmem:[#allocation2 + $0xf8] sm:$0xff] %v3220
        %3349 = vst [vmem:[#allocation2 + $0x100] sm:$0xff] %v3221
        %3350 = vst [vmem:[#allocation2 + $0x108] sm:$0xff] %v3222
        %3351 = vst [vmem:[#allocation2 + $0x110] sm:$0xff] %v3223
        %3352 = vst [vmem:[#allocation2 + $0x118] sm:$0xff] %v3224
        %3353 = vst [vmem:[#allocation2 + $0x120] sm:$0xff] %v3225
        %3354 = vst [vmem:[#allocation2 + $0x128] sm:$0xff] %v3226
        %3355 = vst [vmem:[#allocation2 + $0x130] sm:$0xff] %v3227
        %3356 = vst [vmem:[#allocation2 + $0x138] sm:$0xff] %v3228
        %3357 = vst [vmem:[#allocation2 + $0x140] sm:$0xff] %v3229
        %3358 = vst [vmem:[#allocation2 + $0x148] sm:$0xff] %v3230
        %3359 = vst [vmem:[#allocation2 + $0x150] sm:$0xff] %v3231
        %3360 = vst [vmem:[#allocation2 + $0x158] sm:$0xff] %v3232
        %3361 = vst [vmem:[#allocation2 + $0x160] sm:$0xff] %v3233
        %3362 = vst [vmem:[#allocation2 + $0x168] sm:$0xff] %v3234
        %3363 = vst [vmem:[#allocation2 + $0x170] sm:$0xff] %v3235
        %3364 = vst [vmem:[#allocation2 + $0x178] sm:$0xff] %v3236
        %3365 = vst [vmem:[#allocation2 + $0x180] sm:$0xff] %v3237
        %3366 = vst [vmem:[#allocation2 + $0x188] sm:$0xff] %v3238
        %3367 = vst [vmem:[#allocation2 + $0x190] sm:$0xff] %v3239
        %3368 = vst [vmem:[#allocation2 + $0x198] sm:$0xff] %v3240
        %3369 = vst [vmem:[#allocation2 + $0x1a0] sm:$0xff] %v3241
        %3370 = vst [vmem:[#allocation2 + $0x1a8] sm:$0xff] %v3242
        %3371 = vst [vmem:[#allocation2 + $0x1b0] sm:$0xff] %v3243
        %3372 = vst [vmem:[#allocation2 + $0x1b8] sm:$0xff] %v3244
        %3373 = vst [vmem:[#allocation2 + $0x1c0] sm:$0xff] %v3245
        %3374 = vst [vmem:[#allocation2 + $0x1c8] sm:$0xff] %v3246
        %3375 = vst [vmem:[#allocation2 + $0x1d0] sm:$0xff] %v3247
        %3376 = vst [vmem:[#allocation2 + $0x1d8] sm:$0xff] %v3248
        %3377 = vst [vmem:[#allocation2 + $0x1e0] sm:$0xff] %v3249
        %3378 = vst [vmem:[#allocation2 + $0x1e8] sm:$0xff] %v3250
        %3379 = vst [vmem:[#allocation2 + $0x1f0] sm:$0xff] %v3251
        %3380 = vst [vmem:[#allocation2 + $0x1f8] sm:$0xff] %v3252
        %3381 = vst [vmem:[#allocation2 + $0x200] sm:$0xff] %v3253
        %3382 = vst [vmem:[#allocation2 + $0x208] sm:$0xff] %v3254
        %3383 = vst [vmem:[#allocation2 + $0x210] sm:$0xff] %v3255
        %3384 = vst [vmem:[#allocation2 + $0x218] sm:$0xff] %v3256
        %3385 = vst [vmem:[#allocation2 + $0x220] sm:$0xff] %v3257
        %3386 = vst [vmem:[#allocation2 + $0x228] sm:$0xff] %v3258
        %3387 = vst [vmem:[#allocation2 + $0x230] sm:$0xff] %v3259
        %3388 = vst [vmem:[#allocation2 + $0x238] sm:$0xff] %v3260
        %3389 = vst [vmem:[#allocation2 + $0x240] sm:$0xff] %v3261
        %3390 = vst [vmem:[#allocation2 + $0x248] sm:$0xff] %v3262
        %3391 = vst [vmem:[#allocation2 + $0x250] sm:$0xff] %v3263
        %3392 = vst [vmem:[#allocation2 + $0x258] sm:$0xff] %v3264
        %3393 = vst [vmem:[#allocation2 + $0x260] sm:$0xff] %v3265
        %3394 = vst [vmem:[#allocation2 + $0x268] sm:$0xff] %v3266
        %3395 = vst [vmem:[#allocation2 + $0x270] sm:$0xff] %v3267
        %3396 = vst [vmem:[#allocation2 + $0x278] sm:$0xff] %v3268
        %3397 = vst [vmem:[#allocation2 + $0x280] sm:$0xff] %v3269
        %3398 = vst [vmem:[#allocation2 + $0x288] sm:$0xff] %v3270
        %3399 = vst [vmem:[#allocation2 + $0x290] sm:$0xff] %v3271
        %3400 = vst [vmem:[#allocation2 + $0x298] sm:$0xff] %v3272
        %3401 = vst [vmem:[#allocation2 + $0x2a0] sm:$0xff] %v3273
        %3402 = vst [vmem:[#allocation2 + $0x2a8] sm:$0xff] %v3274
        %3403 = vst [vmem:[#allocation2 + $0x2b0] sm:$0xff] %v3275
        %3404 = vst [vmem:[#allocation2 + $0x2b8] sm:$0xff] %v3276
        %3405 = vst [vmem:[#allocation2 + $0x2c0] sm:$0xff] %v3277
        %3406 = vst [vmem:[#allocation2 + $0x2c8] sm:$0xff] %v3278
        %3407 = vst [vmem:[#allocation2 + $0x2d0] sm:$0xff] %v3279
        %3408 = vst [vmem:[#allocation2 + $0x2d8] sm:$0xff] %v3280
        %3409 = vst [vmem:[#allocation2 + $0x2e0] sm:$0xff] %v3281
        %3410 = vst [vmem:[#allocation2 + $0x2e8] sm:$0xff] %v3282
        %3411 = vst [vmem:[#allocation2 + $0x2f0] sm:$0xff] %v3283
        %3412 = vst [vmem:[#allocation2 + $0x2f8] sm:$0xff] %v3284
        %3413 = vst [vmem:[#allocation2 + $0x300] sm:$0xff] %v3285
        %3414 = vst [vmem:[#allocation2 + $0x308] sm:$0xff] %v3286
        %3415 = vst [vmem:[#allocation2 + $0x310] sm:$0xff] %v3287
        %3416 = vst [vmem:[#allocation2 + $0x318] sm:$0xff] %v3288
        %3417 = vst [vmem:[#allocation2 + $0x320] sm:$0xff] %v3289
        %3418 = vst [vmem:[#allocation2 + $0x328] sm:$0xff] %v3290
        %3419 = vst [vmem:[#allocation2 + $0x330] sm:$0xff] %v3291
        %3420 = vst [vmem:[#allocation2 + $0x338] sm:$0xff] %v3292
        %3421 = vst [vmem:[#allocation2 + $0x340] sm:$0xff] %v3293
        %3422 = vst [vmem:[#allocation2 + $0x348] sm:$0xff] %v3294
        %3423 = vst [vmem:[#allocation2 + $0x350] sm:$0xff] %v3295
        %3424 = vst [vmem:[#allocation2 + $0x358] sm:$0xff] %v3296
        %3425 = vst [vmem:[#allocation2 + $0x360] sm:$0xff] %v3297
        %3426 = vst [vmem:[#allocation2 + $0x368] sm:$0xff] %v3298
        %3427 = vst [vmem:[#allocation2 + $0x370] sm:$0xff] %v3299
        %3428 = vst [vmem:[#allocation2 + $0x378] sm:$0xff] %v3300
        %3429 = vst [vmem:[#allocation2 + $0x380] sm:$0xff] %v3301
        %3430 = vst [vmem:[#allocation2 + $0x388] sm:$0xff] %v3302
        %3431 = vst [vmem:[#allocation2 + $0x390] sm:$0xff] %v3303
        %3432 = vst [vmem:[#allocation2 + $0x398] sm:$0xff] %v3304
        %3433 = vst [vmem:[#allocation2 + $0x3a0] sm:$0xff] %v3305
        %3434 = vst [vmem:[#allocation2 + $0x3a8] sm:$0xff] %v3306
        %3435 = vst [vmem:[#allocation2 + $0x3b0] sm:$0xff] %v3307
        %3436 = vst [vmem:[#allocation2 + $0x3b8] sm:$0xff] %v3308
        %3437 = vst [vmem:[#allocation2 + $0x3c0] sm:$0xff] %v3309
        %3438 = vst [vmem:[#allocation2 + $0x3c8] sm:$0xff] %v3310
        %3439 = vst [vmem:[#allocation2 + $0x3d0] sm:$0xff] %v3311
        %3440 = vst [vmem:[#allocation2 + $0x3d8] sm:$0xff] %v3312
        %3441 = vst [vmem:[#allocation2 + $0x3e0] sm:$0xff] %v3313
        %3442 = vst [vmem:[#allocation2 + $0x3e8] sm:$0xff] %v3314
        %3443 = vst [vmem:[#allocation2 + $0x3f0] sm:$0xff] %v3315
        %3444 = vst [vmem:[#allocation2 + $0x3f8] sm:$0xff] %v3316
        %v3445 = vld [vmem:[#allocation2] sm:$0xff]
        %v3446 = vld [vmem:[#allocation2 + $0x8] sm:$0xff]
        %v3447 = vld [vmem:[#allocation2 + $0x10] sm:$0xff]
        %v3448 = vld [vmem:[#allocation2 + $0x18] sm:$0xff]
        %v3449 = vld [vmem:[#allocation2 + $0x20] sm:$0xff]
        %v3450 = vld [vmem:[#allocation2 + $0x28] sm:$0xff]
        %v3451 = vld [vmem:[#allocation2 + $0x30] sm:$0xff]
        %v3452 = vld [vmem:[#allocation2 + $0x38] sm:$0xff]
        %v3453 = vld [vmem:[#allocation2 + $0x40] sm:$0xff]
        %v3454 = vld [vmem:[#allocation2 + $0x48] sm:$0xff]
        %v3455 = vld [vmem:[#allocation2 + $0x50] sm:$0xff]
        %v3456 = vld [vmem:[#allocation2 + $0x58] sm:$0xff]
        %v3457 = vld [vmem:[#allocation2 + $0x60] sm:$0xff]
        %v3458 = vld [vmem:[#allocation2 + $0x68] sm:$0xff]
        %v3459 = vld [vmem:[#allocation2 + $0x70] sm:$0xff]
        %v3460 = vld [vmem:[#allocation2 + $0x78] sm:$0xff]
        %v3461 = vld [vmem:[#allocation2 + $0x80] sm:$0xff]
        %v3462 = vld [vmem:[#allocation2 + $0x88] sm:$0xff]
        %v3463 = vld [vmem:[#allocation2 + $0x90] sm:$0xff]
        %v3464 = vld [vmem:[#allocation2 + $0x98] sm:$0xff]
        %v3465 = vld [vmem:[#allocation2 + $0xa0] sm:$0xff]
        %v3466 = vld [vmem:[#allocation2 + $0xa8] sm:$0xff]
        %v3467 = vld [vmem:[#allocation2 + $0xb0] sm:$0xff]
        %v3468 = vld [vmem:[#allocation2 + $0xb8] sm:$0xff]
        %v3469 = vld [vmem:[#allocation2 + $0xc0] sm:$0xff]
        %v3470 = vld [vmem:[#allocation2 + $0xc8] sm:$0xff]
        %v3471 = vld [vmem:[#allocation2 + $0xd0] sm:$0xff]
        %v3472 = vld [vmem:[#allocation2 + $0xd8] sm:$0xff]
        %v3473 = vld [vmem:[#allocation2 + $0xe0] sm:$0xff]
        %v3474 = vld [vmem:[#allocation2 + $0xe8] sm:$0xff]
        %v3475 = vld [vmem:[#allocation2 + $0xf0] sm:$0xff]
        %v3476 = vld [vmem:[#allocation2 + $0xf8] sm:$0xff]
        %v3477 = vld [vmem:[#allocation2 + $0x100] sm:$0xff]
        %v3478 = vld [vmem:[#allocation2 + $0x108] sm:$0xff]
        %v3479 = vld [vmem:[#allocation2 + $0x110] sm:$0xff]
        %v3480 = vld [vmem:[#allocation2 + $0x118] sm:$0xff]
        %v3481 = vld [vmem:[#allocation2 + $0x120] sm:$0xff]
        %v3482 = vld [vmem:[#allocation2 + $0x128] sm:$0xff]
        %v3483 = vld [vmem:[#allocation2 + $0x130] sm:$0xff]
        %v3484 = vld [vmem:[#allocation2 + $0x138] sm:$0xff]
        %v3485 = vld [vmem:[#allocation2 + $0x140] sm:$0xff]
        %v3486 = vld [vmem:[#allocation2 + $0x148] sm:$0xff]
        %v3487 = vld [vmem:[#allocation2 + $0x150] sm:$0xff]
        %v3488 = vld [vmem:[#allocation2 + $0x158] sm:$0xff]
        %v3489 = vld [vmem:[#allocation2 + $0x160] sm:$0xff]
        %v3490 = vld [vmem:[#allocation2 + $0x168] sm:$0xff]
        %v3491 = vld [vmem:[#allocation2 + $0x170] sm:$0xff]
        %v3492 = vld [vmem:[#allocation2 + $0x178] sm:$0xff]
        %v3493 = vld [vmem:[#allocation2 + $0x180] sm:$0xff]
        %v3494 = vld [vmem:[#allocation2 + $0x188] sm:$0xff]
        %v3495 = vld [vmem:[#allocation2 + $0x190] sm:$0xff]
        %v3496 = vld [vmem:[#allocation2 + $0x198] sm:$0xff]
        %v3497 = vld [vmem:[#allocation2 + $0x1a0] sm:$0xff]
        %v3498 = vld [vmem:[#allocation2 + $0x1a8] sm:$0xff]
        %v3499 = vld [vmem:[#allocation2 + $0x1b0] sm:$0xff]
        %v3500 = vld [vmem:[#allocation2 + $0x1b8] sm:$0xff]
        %v3501 = vld [vmem:[#allocation2 + $0x1c0] sm:$0xff]
        %v3502 = vld [vmem:[#allocation2 + $0x1c8] sm:$0xff]
        %v3503 = vld [vmem:[#allocation2 + $0x1d0] sm:$0xff]
        %v3504 = vld [vmem:[#allocation2 + $0x1d8] sm:$0xff]
        %v3505 = vld [vmem:[#allocation2 + $0x1e0] sm:$0xff]
        %v3506 = vld [vmem:[#allocation2 + $0x1e8] sm:$0xff]
        %v3507 = vld [vmem:[#allocation2 + $0x1f0] sm:$0xff]
        %v3508 = vld [vmem:[#allocation2 + $0x1f8] sm:$0xff]
        %v3509 = vld [vmem:[#allocation2 + $0x200] sm:$0xff]
        %v3510 = vld [vmem:[#allocation2 + $0x208] sm:$0xff]
        %v3511 = vld [vmem:[#allocation2 + $0x210] sm:$0xff]
        %v3512 = vld [vmem:[#allocation2 + $0x218] sm:$0xff]
        %v3513 = vld [vmem:[#allocation2 + $0x220] sm:$0xff]
        %v3514 = vld [vmem:[#allocation2 + $0x228] sm:$0xff]
        %v3515 = vld [vmem:[#allocation2 + $0x230] sm:$0xff]
        %v3516 = vld [vmem:[#allocation2 + $0x238] sm:$0xff]
        %v3517 = vld [vmem:[#allocation2 + $0x240] sm:$0xff]
        %v3518 = vld [vmem:[#allocation2 + $0x248] sm:$0xff]
        %v3519 = vld [vmem:[#allocation2 + $0x250] sm:$0xff]
        %v3520 = vld [vmem:[#allocation2 + $0x258] sm:$0xff]
        %v3521 = vld [vmem:[#allocation2 + $0x260] sm:$0xff]
        %v3522 = vld [vmem:[#allocation2 + $0x268] sm:$0xff]
        %v3523 = vld [vmem:[#allocation2 + $0x270] sm:$0xff]
        %v3524 = vld [vmem:[#allocation2 + $0x278] sm:$0xff]
        %v3525 = vld [vmem:[#allocation2 + $0x280] sm:$0xff]
        %v3526 = vld [vmem:[#allocation2 + $0x288] sm:$0xff]
        %v3527 = vld [vmem:[#allocation2 + $0x290] sm:$0xff]
        %v3528 = vld [vmem:[#allocation2 + $0x298] sm:$0xff]
        %v3529 = vld [vmem:[#allocation2 + $0x2a0] sm:$0xff]
        %v3530 = vld [vmem:[#allocation2 + $0x2a8] sm:$0xff]
        %v3531 = vld [vmem:[#allocation2 + $0x2b0] sm:$0xff]
        %v3532 = vld [vmem:[#allocation2 + $0x2b8] sm:$0xff]
        %v3533 = vld [vmem:[#allocation2 + $0x2c0] sm:$0xff]
        %v3534 = vld [vmem:[#allocation2 + $0x2c8] sm:$0xff]
        %v3535 = vld [vmem:[#allocation2 + $0x2d0] sm:$0xff]
        %v3536 = vld [vmem:[#allocation2 + $0x2d8] sm:$0xff]
        %v3537 = vld [vmem:[#allocation2 + $0x2e0] sm:$0xff]
        %v3538 = vld [vmem:[#allocation2 + $0x2e8] sm:$0xff]
        %v3539 = vld [vmem:[#allocation2 + $0x2f0] sm:$0xff]
        %v3540 = vld [vmem:[#allocation2 + $0x2f8] sm:$0xff]
        %v3541 = vld [vmem:[#allocation2 + $0x300] sm:$0xff]
        %v3542 = vld [vmem:[#allocation2 + $0x308] sm:$0xff]
        %v3543 = vld [vmem:[#allocation2 + $0x310] sm:$0xff]
        %v3544 = vld [vmem:[#allocation2 + $0x318] sm:$0xff]
        %v3545 = vld [vmem:[#allocation2 + $0x320] sm:$0xff]
        %v3546 = vld [vmem:[#allocation2 + $0x328] sm:$0xff]
        %v3547 = vld [vmem:[#allocation2 + $0x330] sm:$0xff]
        %v3548 = vld [vmem:[#allocation2 + $0x338] sm:$0xff]
        %v3549 = vld [vmem:[#allocation2 + $0x340] sm:$0xff]
        %v3550 = vld [vmem:[#allocation2 + $0x348] sm:$0xff]
        %v3551 = vld [vmem:[#allocation2 + $0x350] sm:$0xff]
        %v3552 = vld [vmem:[#allocation2 + $0x358] sm:$0xff]
        %v3553 = vld [vmem:[#allocation2 + $0x360] sm:$0xff]
        %v3554 = vld [vmem:[#allocation2 + $0x368] sm:$0xff]
        %v3555 = vld [vmem:[#allocation2 + $0x370] sm:$0xff]
        %v3556 = vld [vmem:[#allocation2 + $0x378] sm:$0xff]
        %v3557 = vld [vmem:[#allocation2 + $0x380] sm:$0xff]
        %v3558 = vld [vmem:[#allocation2 + $0x388] sm:$0xff]
        %v3559 = vld [vmem:[#allocation2 + $0x390] sm:$0xff]
        %v3560 = vld [vmem:[#allocation2 + $0x398] sm:$0xff]
        %v3561 = vld [vmem:[#allocation2 + $0x3a0] sm:$0xff]
        %v3562 = vld [vmem:[#allocation2 + $0x3a8] sm:$0xff]
        %v3563 = vld [vmem:[#allocation2 + $0x3b0] sm:$0xff]
        %v3564 = vld [vmem:[#allocation2 + $0x3b8] sm:$0xff]
        %v3565 = vld [vmem:[#allocation2 + $0x3c0] sm:$0xff]
        %v3566 = vld [vmem:[#allocation2 + $0x3c8] sm:$0xff]
        %v3567 = vld [vmem:[#allocation2 + $0x3d0] sm:$0xff]
        %v3568 = vld [vmem:[#allocation2 + $0x3d8] sm:$0xff]
        %v3569 = vld [vmem:[#allocation2 + $0x3e0] sm:$0xff]
        %v3570 = vld [vmem:[#allocation2 + $0x3e8] sm:$0xff]
        %v3571 = vld [vmem:[#allocation2 + $0x3f0] sm:$0xff]
        %v3572 = vld [vmem:[#allocation2 + $0x3f8] sm:$0xff]
        %3573 = vmax.xlane.f32.xlu0 %v3445
        %v3574 = vpop.xlane.xlu0 %3573
        %3575 = vmax.xlane.f32.xlu0 %v3446
        %v3576 = vpop.xlane.xlu0 %3575
        %3577 = vmax.xlane.f32.xlu0 %v3447
        %v3578 = vpop.xlane.xlu0 %3577
        %3579 = vmax.xlane.f32.xlu0 %v3448
        %v3580 = vpop.xlane.xlu0 %3579
        %3581 = vmax.xlane.f32.xlu0 %v3449
        %v3582 = vpop.xlane.xlu0 %3581
        %3583 = vmax.xlane.f32.xlu0 %v3450
        %v3584 = vpop.xlane.xlu0 %3583
        %3585 = vmax.xlane.f32.xlu0 %v3451
        %v3586 = vpop.xlane.xlu0 %3585
        %3587 = vmax.xlane.f32.xlu0 %v3452
        %v3588 = vpop.xlane.xlu0 %3587
        %3589 = vmax.xlane.f32.xlu0 %v3453
        %v3590 = vpop.xlane.xlu0 %3589
        %3591 = vmax.xlane.f32.xlu0 %v3454
        %v3592 = vpop.xlane.xlu0 %3591
        %3593 = vmax.xlane.f32.xlu0 %v3455
        %v3594 = vpop.xlane.xlu0 %3593
        %3595 = vmax.xlane.f32.xlu0 %v3456
        %v3596 = vpop.xlane.xlu0 %3595
        %3597 = vmax.xlane.f32.xlu0 %v3457
        %v3598 = vpop.xlane.xlu0 %3597
        %3599 = vmax.xlane.f32.xlu0 %v3458
        %v3600 = vpop.xlane.xlu0 %3599
        %3601 = vmax.xlane.f32.xlu0 %v3459
        %v3602 = vpop.xlane.xlu0 %3601
        %3603 = vmax.xlane.f32.xlu0 %v3460
        %v3604 = vpop.xlane.xlu0 %3603
        %3605 = vmax.xlane.f32.xlu0 %v3461
        %v3606 = vpop.xlane.xlu0 %3605
        %3607 = vmax.xlane.f32.xlu0 %v3462
        %v3608 = vpop.xlane.xlu0 %3607
        %3609 = vmax.xlane.f32.xlu0 %v3463
        %v3610 = vpop.xlane.xlu0 %3609
        %3611 = vmax.xlane.f32.xlu0 %v3464
        %v3612 = vpop.xlane.xlu0 %3611
        %3613 = vmax.xlane.f32.xlu0 %v3465
        %v3614 = vpop.xlane.xlu0 %3613
        %3615 = vmax.xlane.f32.xlu0 %v3466
        %v3616 = vpop.xlane.xlu0 %3615
        %3617 = vmax.xlane.f32.xlu0 %v3467
        %v3618 = vpop.xlane.xlu0 %3617
        %3619 = vmax.xlane.f32.xlu0 %v3468
        %v3620 = vpop.xlane.xlu0 %3619
        %3621 = vmax.xlane.f32.xlu0 %v3469
        %v3622 = vpop.xlane.xlu0 %3621
        %3623 = vmax.xlane.f32.xlu0 %v3470
        %v3624 = vpop.xlane.xlu0 %3623
        %3625 = vmax.xlane.f32.xlu0 %v3471
        %v3626 = vpop.xlane.xlu0 %3625
        %3627 = vmax.xlane.f32.xlu0 %v3472
        %v3628 = vpop.xlane.xlu0 %3627
        %3629 = vmax.xlane.f32.xlu0 %v3473
        %v3630 = vpop.xlane.xlu0 %3629
        %3631 = vmax.xlane.f32.xlu0 %v3474
        %v3632 = vpop.xlane.xlu0 %3631
        %3633 = vmax.xlane.f32.xlu0 %v3475
        %v3634 = vpop.xlane.xlu0 %3633
        %3635 = vmax.xlane.f32.xlu0 %v3476
        %v3636 = vpop.xlane.xlu0 %3635
        %3637 = vmax.xlane.f32.xlu0 %v3477
        %v3638 = vpop.xlane.xlu0 %3637
        %3639 = vmax.xlane.f32.xlu0 %v3478
        %v3640 = vpop.xlane.xlu0 %3639
        %3641 = vmax.xlane.f32.xlu0 %v3479
        %v3642 = vpop.xlane.xlu0 %3641
        %3643 = vmax.xlane.f32.xlu0 %v3480
        %v3644 = vpop.xlane.xlu0 %3643
        %3645 = vmax.xlane.f32.xlu0 %v3481
        %v3646 = vpop.xlane.xlu0 %3645
        %3647 = vmax.xlane.f32.xlu0 %v3482
        %v3648 = vpop.xlane.xlu0 %3647
        %3649 = vmax.xlane.f32.xlu0 %v3483
        %v3650 = vpop.xlane.xlu0 %3649
        %3651 = vmax.xlane.f32.xlu0 %v3484
        %v3652 = vpop.xlane.xlu0 %3651
        %3653 = vmax.xlane.f32.xlu0 %v3485
        %v3654 = vpop.xlane.xlu0 %3653
        %3655 = vmax.xlane.f32.xlu0 %v3486
        %v3656 = vpop.xlane.xlu0 %3655
        %3657 = vmax.xlane.f32.xlu0 %v3487
        %v3658 = vpop.xlane.xlu0 %3657
        %3659 = vmax.xlane.f32.xlu0 %v3488
        %v3660 = vpop.xlane.xlu0 %3659
        %3661 = vmax.xlane.f32.xlu0 %v3489
        %v3662 = vpop.xlane.xlu0 %3661
        %3663 = vmax.xlane.f32.xlu0 %v3490
        %v3664 = vpop.xlane.xlu0 %3663
        %3665 = vmax.xlane.f32.xlu0 %v3491
        %v3666 = vpop.xlane.xlu0 %3665
        %3667 = vmax.xlane.f32.xlu0 %v3492
        %v3668 = vpop.xlane.xlu0 %3667
        %3669 = vmax.xlane.f32.xlu0 %v3493
        %v3670 = vpop.xlane.xlu0 %3669
        %3671 = vmax.xlane.f32.xlu0 %v3494
        %v3672 = vpop.xlane.xlu0 %3671
        %3673 = vmax.xlane.f32.xlu0 %v3495
        %v3674 = vpop.xlane.xlu0 %3673
        %3675 = vmax.xlane.f32.xlu0 %v3496
        %v3676 = vpop.xlane.xlu0 %3675
        %3677 = vmax.xlane.f32.xlu0 %v3497
        %v3678 = vpop.xlane.xlu0 %3677
        %3679 = vmax.xlane.f32.xlu0 %v3498
        %v3680 = vpop.xlane.xlu0 %3679
        %3681 = vmax.xlane.f32.xlu0 %v3499
        %v3682 = vpop.xlane.xlu0 %3681
        %3683 = vmax.xlane.f32.xlu0 %v3500
        %v3684 = vpop.xlane.xlu0 %3683
        %3685 = vmax.xlane.f32.xlu0 %v3501
        %v3686 = vpop.xlane.xlu0 %3685
        %3687 = vmax.xlane.f32.xlu0 %v3502
        %v3688 = vpop.xlane.xlu0 %3687
        %3689 = vmax.xlane.f32.xlu0 %v3503
        %v3690 = vpop.xlane.xlu0 %3689
        %3691 = vmax.xlane.f32.xlu0 %v3504
        %v3692 = vpop.xlane.xlu0 %3691
        %3693 = vmax.xlane.f32.xlu0 %v3505
        %v3694 = vpop.xlane.xlu0 %3693
        %3695 = vmax.xlane.f32.xlu0 %v3506
        %v3696 = vpop.xlane.xlu0 %3695
        %3697 = vmax.xlane.f32.xlu0 %v3507
        %v3698 = vpop.xlane.xlu0 %3697
        %3699 = vmax.xlane.f32.xlu0 %v3508
        %v3700 = vpop.xlane.xlu0 %3699
        %3701 = vmax.xlane.f32.xlu0 %v3509
        %v3702 = vpop.xlane.xlu0 %3701
        %3703 = vmax.xlane.f32.xlu0 %v3510
        %v3704 = vpop.xlane.xlu0 %3703
        %3705 = vmax.xlane.f32.xlu0 %v3511
        %v3706 = vpop.xlane.xlu0 %3705
        %3707 = vmax.xlane.f32.xlu0 %v3512
        %v3708 = vpop.xlane.xlu0 %3707
        %3709 = vmax.xlane.f32.xlu0 %v3513
        %v3710 = vpop.xlane.xlu0 %3709
        %3711 = vmax.xlane.f32.xlu0 %v3514
        %v3712 = vpop.xlane.xlu0 %3711
        %3713 = vmax.xlane.f32.xlu0 %v3515
        %v3714 = vpop.xlane.xlu0 %3713
        %3715 = vmax.xlane.f32.xlu0 %v3516
        %v3716 = vpop.xlane.xlu0 %3715
        %3717 = vmax.xlane.f32.xlu0 %v3517
        %v3718 = vpop.xlane.xlu0 %3717
        %3719 = vmax.xlane.f32.xlu0 %v3518
        %v3720 = vpop.xlane.xlu0 %3719
        %3721 = vmax.xlane.f32.xlu0 %v3519
        %v3722 = vpop.xlane.xlu0 %3721
        %3723 = vmax.xlane.f32.xlu0 %v3520
        %v3724 = vpop.xlane.xlu0 %3723
        %3725 = vmax.xlane.f32.xlu0 %v3521
        %v3726 = vpop.xlane.xlu0 %3725
        %3727 = vmax.xlane.f32.xlu0 %v3522
        %v3728 = vpop.xlane.xlu0 %3727
        %3729 = vmax.xlane.f32.xlu0 %v3523
        %v3730 = vpop.xlane.xlu0 %3729
        %3731 = vmax.xlane.f32.xlu0 %v3524
        %v3732 = vpop.xlane.xlu0 %3731
        %3733 = vmax.xlane.f32.xlu0 %v3525
        %v3734 = vpop.xlane.xlu0 %3733
        %3735 = vmax.xlane.f32.xlu0 %v3526
        %v3736 = vpop.xlane.xlu0 %3735
        %3737 = vmax.xlane.f32.xlu0 %v3527
        %v3738 = vpop.xlane.xlu0 %3737
        %3739 = vmax.xlane.f32.xlu0 %v3528
        %v3740 = vpop.xlane.xlu0 %3739
        %3741 = vmax.xlane.f32.xlu0 %v3529
        %v3742 = vpop.xlane.xlu0 %3741
        %3743 = vmax.xlane.f32.xlu0 %v3530
        %v3744 = vpop.xlane.xlu0 %3743
        %3745 = vmax.xlane.f32.xlu0 %v3531
        %v3746 = vpop.xlane.xlu0 %3745
        %3747 = vmax.xlane.f32.xlu0 %v3532
        %v3748 = vpop.xlane.xlu0 %3747
        %3749 = vmax.xlane.f32.xlu0 %v3533
        %v3750 = vpop.xlane.xlu0 %3749
        %3751 = vmax.xlane.f32.xlu0 %v3534
        %v3752 = vpop.xlane.xlu0 %3751
        %3753 = vmax.xlane.f32.xlu0 %v3535
        %v3754 = vpop.xlane.xlu0 %3753
        %3755 = vmax.xlane.f32.xlu0 %v3536
        %v3756 = vpop.xlane.xlu0 %3755
        %3757 = vmax.xlane.f32.xlu0 %v3537
        %v3758 = vpop.xlane.xlu0 %3757
        %3759 = vmax.xlane.f32.xlu0 %v3538
        %v3760 = vpop.xlane.xlu0 %3759
        %3761 = vmax.xlane.f32.xlu0 %v3539
        %v3762 = vpop.xlane.xlu0 %3761
        %3763 = vmax.xlane.f32.xlu0 %v3540
        %v3764 = vpop.xlane.xlu0 %3763
        %3765 = vmax.xlane.f32.xlu0 %v3541
        %v3766 = vpop.xlane.xlu0 %3765
        %3767 = vmax.xlane.f32.xlu0 %v3542
        %v3768 = vpop.xlane.xlu0 %3767
        %3769 = vmax.xlane.f32.xlu0 %v3543
        %v3770 = vpop.xlane.xlu0 %3769
        %3771 = vmax.xlane.f32.xlu0 %v3544
        %v3772 = vpop.xlane.xlu0 %3771
        %3773 = vmax.xlane.f32.xlu0 %v3545
        %v3774 = vpop.xlane.xlu0 %3773
        %3775 = vmax.xlane.f32.xlu0 %v3546
        %v3776 = vpop.xlane.xlu0 %3775
        %3777 = vmax.xlane.f32.xlu0 %v3547
        %v3778 = vpop.xlane.xlu0 %3777
        %3779 = vmax.xlane.f32.xlu0 %v3548
        %v3780 = vpop.xlane.xlu0 %3779
        %3781 = vmax.xlane.f32.xlu0 %v3549
        %v3782 = vpop.xlane.xlu0 %3781
        %3783 = vmax.xlane.f32.xlu0 %v3550
        %v3784 = vpop.xlane.xlu0 %3783
        %3785 = vmax.xlane.f32.xlu0 %v3551
        %v3786 = vpop.xlane.xlu0 %3785
        %3787 = vmax.xlane.f32.xlu0 %v3552
        %v3788 = vpop.xlane.xlu0 %3787
        %3789 = vmax.xlane.f32.xlu0 %v3553
        %v3790 = vpop.xlane.xlu0 %3789
        %3791 = vmax.xlane.f32.xlu0 %v3554
        %v3792 = vpop.xlane.xlu0 %3791
        %3793 = vmax.xlane.f32.xlu0 %v3555
        %v3794 = vpop.xlane.xlu0 %3793
        %3795 = vmax.xlane.f32.xlu0 %v3556
        %v3796 = vpop.xlane.xlu0 %3795
        %3797 = vmax.xlane.f32.xlu0 %v3557
        %v3798 = vpop.xlane.xlu0 %3797
        %3799 = vmax.xlane.f32.xlu0 %v3558
        %v3800 = vpop.xlane.xlu0 %3799
        %3801 = vmax.xlane.f32.xlu0 %v3559
        %v3802 = vpop.xlane.xlu0 %3801
        %3803 = vmax.xlane.f32.xlu0 %v3560
        %v3804 = vpop.xlane.xlu0 %3803
        %3805 = vmax.xlane.f32.xlu0 %v3561
        %v3806 = vpop.xlane.xlu0 %3805
        %3807 = vmax.xlane.f32.xlu0 %v3562
        %v3808 = vpop.xlane.xlu0 %3807
        %3809 = vmax.xlane.f32.xlu0 %v3563
        %v3810 = vpop.xlane.xlu0 %3809
        %3811 = vmax.xlane.f32.xlu0 %v3564
        %v3812 = vpop.xlane.xlu0 %3811
        %3813 = vmax.xlane.f32.xlu0 %v3565
        %v3814 = vpop.xlane.xlu0 %3813
        %3815 = vmax.xlane.f32.xlu0 %v3566
        %v3816 = vpop.xlane.xlu0 %3815
        %3817 = vmax.xlane.f32.xlu0 %v3567
        %v3818 = vpop.xlane.xlu0 %3817
        %3819 = vmax.xlane.f32.xlu0 %v3568
        %v3820 = vpop.xlane.xlu0 %3819
        %3821 = vmax.xlane.f32.xlu0 %v3569
        %v3822 = vpop.xlane.xlu0 %3821
        %3823 = vmax.xlane.f32.xlu0 %v3570
        %v3824 = vpop.xlane.xlu0 %3823
        %3825 = vmax.xlane.f32.xlu0 %v3571
        %v3826 = vpop.xlane.xlu0 %3825
        %3827 = vmax.xlane.f32.xlu0 %v3572
        %v3828 = vpop.xlane.xlu0 %3827
        %v3957 = vperm.slane %v3574, %v3057
        %v3958 = vadd.s32 %v3057, 4294967288
        %v3959 = vperm.slane %v3576, %v3958
        %vm3960 = vcmask 130112
        %v3961 = vsel %vm3960, %v3959, %v3957
        %v3962 = vadd.s32 %v3057, 4294967280
        %v3963 = vperm.slane %v3578, %v3962
        %vm3964 = vcmask 195712
        %v3965 = vsel %vm3964, %v3963, %v3961
        %v3966 = vadd.s32 %v3057, 4294967272
        %v3967 = vperm.slane %v3580, %v3966
        %vm3968 = vcmask 261312
        %v3969 = vsel %vm3968, %v3967, %v3965
        %v3970 = vadd.s32 %v3057, 4294967264
        %v3971 = vperm.slane %v3582, %v3970
        %vm3972 = vcmask 326912
        %v3973 = vsel %vm3972, %v3971, %v3969
        %v3974 = vadd.s32 %v3057, 4294967256
        %v3975 = vperm.slane %v3584, %v3974
        %vm3976 = vcmask 392512
        %v3977 = vsel %vm3976, %v3975, %v3973
        %v3978 = vadd.s32 %v3057, 4294967248
        %v3979 = vperm.slane %v3586, %v3978
        %vm3980 = vcmask 458112
        %v3981 = vsel %vm3980, %v3979, %v3977
        %v3982 = vadd.s32 %v3057, 4294967240
        %v3983 = vperm.slane %v3588, %v3982
        %vm3984 = vcmask 523712
        %v3985 = vsel %vm3984, %v3983, %v3981
        %v3986 = vadd.s32 %v3057, 4294967232
        %v3987 = vperm.slane %v3590, %v3986
        %vm3988 = vcmask 589312
        %v3989 = vsel %vm3988, %v3987, %v3985
        %v3990 = vadd.s32 %v3057, 4294967224
        %v3991 = vperm.slane %v3592, %v3990
        %vm3992 = vcmask 654912
        %v3993 = vsel %vm3992, %v3991, %v3989
        %v3994 = vadd.s32 %v3057, 4294967216
        %v3995 = vperm.slane %v3594, %v3994
        %vm3996 = vcmask 720512
        %v3997 = vsel %vm3996, %v3995, %v3993
        %v3998 = vadd.s32 %v3057, 4294967208
        %v3999 = vperm.slane %v3596, %v3998
        %vm4000 = vcmask 786112
        %v4001 = vsel %vm4000, %v3999, %v3997
        %v4002 = vadd.s32 %v3057, 4294967200
        %v4003 = vperm.slane %v3598, %v4002
        %vm4004 = vcmask 851712
        %v4005 = vsel %vm4004, %v4003, %v4001
        %v4006 = vadd.s32 %v3057, 4294967192
        %v4007 = vperm.slane %v3600, %v4006
        %vm4008 = vcmask 917312
        %v4009 = vsel %vm4008, %v4007, %v4005
        %v4010 = vadd.s32 %v3057, 4294967184
        %v4011 = vperm.slane %v3602, %v4010
        %vm4012 = vcmask 982912
        %v4013 = vsel %vm4012, %v4011, %v4009
        %v4014 = vadd.s32 %v3057, 4294967176
        %v4015 = vperm.slane %v3604, %v4014
        %vm4016 = vcmask 1048512
        %v4017 = vsel %vm4016, %v4015, %v4013
        %v4018 = vperm.slane %v3606, %v3057
        %v4019 = vperm.slane %v3608, %v3958
        %v4020 = vsel %vm3960, %v4019, %v4018
        %v4021 = vperm.slane %v3610, %v3962
        %v4022 = vsel %vm3964, %v4021, %v4020
        %v4023 = vperm.slane %v3612, %v3966
        %v4024 = vsel %vm3968, %v4023, %v4022
        %v4025 = vperm.slane %v3614, %v3970
        %v4026 = vsel %vm3972, %v4025, %v4024
        %v4027 = vperm.slane %v3616, %v3974
        %v4028 = vsel %vm3976, %v4027, %v4026
        %v4029 = vperm.slane %v3618, %v3978
        %v4030 = vsel %vm3980, %v4029, %v4028
        %v4031 = vperm.slane %v3620, %v3982
        %v4032 = vsel %vm3984, %v4031, %v4030
        %v4033 = vperm.slane %v3622, %v3986
        %v4034 = vsel %vm3988, %v4033, %v4032
        %v4035 = vperm.slane %v3624, %v3990
        %v4036 = vsel %vm3992, %v4035, %v4034
        %v4037 = vperm.slane %v3626, %v3994
        %v4038 = vsel %vm3996, %v4037, %v4036
        %v4039 = vperm.slane %v3628, %v3998
        %v4040 = vsel %vm4000, %v4039, %v4038
        %v4041 = vperm.slane %v3630, %v4002
        %v4042 = vsel %vm4004, %v4041, %v4040
        %v4043 = vperm.slane %v3632, %v4006
        %v4044 = vsel %vm4008, %v4043, %v4042
        %v4045 = vperm.slane %v3634, %v4010
        %v4046 = vsel %vm4012, %v4045, %v4044
        %v4047 = vperm.slane %v3636, %v4014
        %v4048 = vsel %vm4016, %v4047, %v4046
        %v4049 = vperm.slane %v3638, %v3057
        %v4050 = vperm.slane %v3640, %v3958
        %v4051 = vsel %vm3960, %v4050, %v4049
        %v4052 = vperm.slane %v3642, %v3962
        %v4053 = vsel %vm3964, %v4052, %v4051
        %v4054 = vperm.slane %v3644, %v3966
        %v4055 = vsel %vm3968, %v4054, %v4053
        %v4056 = vperm.slane %v3646, %v3970
        %v4057 = vsel %vm3972, %v4056, %v4055
        %v4058 = vperm.slane %v3648, %v3974
        %v4059 = vsel %vm3976, %v4058, %v4057
        %v4060 = vperm.slane %v3650, %v3978
        %v4061 = vsel %vm3980, %v4060, %v4059
        %v4062 = vperm.slane %v3652, %v3982
        %v4063 = vsel %vm3984, %v4062, %v4061
        %v4064 = vperm.slane %v3654, %v3986
        %v4065 = vsel %vm3988, %v4064, %v4063
        %v4066 = vperm.slane %v3656, %v3990
        %v4067 = vsel %vm3992, %v4066, %v4065
        %v4068 = vperm.slane %v3658, %v3994
        %v4069 = vsel %vm3996, %v4068, %v4067
        %v4070 = vperm.slane %v3660, %v3998
        %v4071 = vsel %vm4000, %v4070, %v4069
        %v4072 = vperm.slane %v3662, %v4002
        %v4073 = vsel %vm4004, %v4072, %v4071
        %v4074 = vperm.slane %v3664, %v4006
        %v4075 = vsel %vm4008, %v4074, %v4073
        %v4076 = vperm.slane %v3666, %v4010
        %v4077 = vsel %vm4012, %v4076, %v4075
        %v4078 = vperm.slane %v3668, %v4014
        %v4079 = vsel %vm4016, %v4078, %v4077
        %v4080 = vperm.slane %v3670, %v3057
        %v4081 = vperm.slane %v3672, %v3958
        %v4082 = vsel %vm3960, %v4081, %v4080
        %v4083 = vperm.slane %v3674, %v3962
        %v4084 = vsel %vm3964, %v4083, %v4082
        %v4085 = vperm.slane %v3676, %v3966
        %v4086 = vsel %vm3968, %v4085, %v4084
        %v4087 = vperm.slane %v3678, %v3970
        %v4088 = vsel %vm3972, %v4087, %v4086
        %v4089 = vperm.slane %v3680, %v3974
        %v4090 = vsel %vm3976, %v4089, %v4088
        %v4091 = vperm.slane %v3682, %v3978
        %v4092 = vsel %vm3980, %v4091, %v4090
        %v4093 = vperm.slane %v3684, %v3982
        %v4094 = vsel %vm3984, %v4093, %v4092
        %v4095 = vperm.slane %v3686, %v3986
        %v4096 = vsel %vm3988, %v4095, %v4094
        %v4097 = vperm.slane %v3688, %v3990
        %v4098 = vsel %vm3992, %v4097, %v4096
        %v4099 = vperm.slane %v3690, %v3994
        %v4100 = vsel %vm3996, %v4099, %v4098
        %v4101 = vperm.slane %v3692, %v3998
        %v4102 = vsel %vm4000, %v4101, %v4100
        %v4103 = vperm.slane %v3694, %v4002
        %v4104 = vsel %vm4004, %v4103, %v4102
        %v4105 = vperm.slane %v3696, %v4006
        %v4106 = vsel %vm4008, %v4105, %v4104
        %v4107 = vperm.slane %v3698, %v4010
        %v4108 = vsel %vm4012, %v4107, %v4106
        %v4109 = vperm.slane %v3700, %v4014
        %v4110 = vsel %vm4016, %v4109, %v4108
        %v4111 = vperm.slane %v3702, %v3057
        %v4112 = vperm.slane %v3704, %v3958
        %v4113 = vsel %vm3960, %v4112, %v4111
        %v4114 = vperm.slane %v3706, %v3962
        %v4115 = vsel %vm3964, %v4114, %v4113
        %v4116 = vperm.slane %v3708, %v3966
        %v4117 = vsel %vm3968, %v4116, %v4115
        %v4118 = vperm.slane %v3710, %v3970
        %v4119 = vsel %vm3972, %v4118, %v4117
        %v4120 = vperm.slane %v3712, %v3974
        %v4121 = vsel %vm3976, %v4120, %v4119
        %v4122 = vperm.slane %v3714, %v3978
        %v4123 = vsel %vm3980, %v4122, %v4121
        %v4124 = vperm.slane %v3716, %v3982
        %v4125 = vsel %vm3984, %v4124, %v4123
        %v4126 = vperm.slane %v3718, %v3986
        %v4127 = vsel %vm3988, %v4126, %v4125
        %v4128 = vperm.slane %v3720, %v3990
        %v4129 = vsel %vm3992, %v4128, %v4127
        %v4130 = vperm.slane %v3722, %v3994
        %v4131 = vsel %vm3996, %v4130, %v4129
        %v4132 = vperm.slane %v3724, %v3998
        %v4133 = vsel %vm4000, %v4132, %v4131
        %v4134 = vperm.slane %v3726, %v4002
        %v4135 = vsel %vm4004, %v4134, %v4133
        %v4136 = vperm.slane %v3728, %v4006
        %v4137 = vsel %vm4008, %v4136, %v4135
        %v4138 = vperm.slane %v3730, %v4010
        %v4139 = vsel %vm4012, %v4138, %v4137
        %v4140 = vperm.slane %v3732, %v4014
        %v4141 = vsel %vm4016, %v4140, %v4139
        %v4142 = vperm.slane %v3734, %v3057
        %v4143 = vperm.slane %v3736, %v3958
        %v4144 = vsel %vm3960, %v4143, %v4142
        %v4145 = vperm.slane %v3738, %v3962
        %v4146 = vsel %vm3964, %v4145, %v4144
        %v4147 = vperm.slane %v3740, %v3966
        %v4148 = vsel %vm3968, %v4147, %v4146
        %v4149 = vperm.slane %v3742, %v3970
        %v4150 = vsel %vm3972, %v4149, %v4148
        %v4151 = vperm.slane %v3744, %v3974
        %v4152 = vsel %vm3976, %v4151, %v4150
        %v4153 = vperm.slane %v3746, %v3978
        %v4154 = vsel %vm3980, %v4153, %v4152
        %v4155 = vperm.slane %v3748, %v3982
        %v4156 = vsel %vm3984, %v4155, %v4154
        %v4157 = vperm.slane %v3750, %v3986
        %v4158 = vsel %vm3988, %v4157, %v4156
        %v4159 = vperm.slane %v3752, %v3990
        %v4160 = vsel %vm3992, %v4159, %v4158
        %v4161 = vperm.slane %v3754, %v3994
        %v4162 = vsel %vm3996, %v4161, %v4160
        %v4163 = vperm.slane %v3756, %v3998
        %v4164 = vsel %vm4000, %v4163, %v4162
        %v4165 = vperm.slane %v3758, %v4002
        %v4166 = vsel %vm4004, %v4165, %v4164
        %v4167 = vperm.slane %v3760, %v4006
        %v4168 = vsel %vm4008, %v4167, %v4166
        %v4169 = vperm.slane %v3762, %v4010
        %v4170 = vsel %vm4012, %v4169, %v4168
        %v4171 = vperm.slane %v3764, %v4014
        %v4172 = vsel %vm4016, %v4171, %v4170
        %v4173 = vperm.slane %v3766, %v3057
        %v4174 = vperm.slane %v3768, %v3958
        %v4175 = vsel %vm3960, %v4174, %v4173
        %v4176 = vperm.slane %v3770, %v3962
        %v4177 = vsel %vm3964, %v4176, %v4175
        %v4178 = vperm.slane %v3772, %v3966
        %v4179 = vsel %vm3968, %v4178, %v4177
        %v4180 = vperm.slane %v3774, %v3970
        %v4181 = vsel %vm3972, %v4180, %v4179
        %v4182 = vperm.slane %v3776, %v3974
        %v4183 = vsel %vm3976, %v4182, %v4181
        %v4184 = vperm.slane %v3778, %v3978
        %v4185 = vsel %vm3980, %v4184, %v4183
        %v4186 = vperm.slane %v3780, %v3982
        %v4187 = vsel %vm3984, %v4186, %v4185
        %v4188 = vperm.slane %v3782, %v3986
        %v4189 = vsel %vm3988, %v4188, %v4187
        %v4190 = vperm.slane %v3784, %v3990
        %v4191 = vsel %vm3992, %v4190, %v4189
        %v4192 = vperm.slane %v3786, %v3994
        %v4193 = vsel %vm3996, %v4192, %v4191
        %v4194 = vperm.slane %v3788, %v3998
        %v4195 = vsel %vm4000, %v4194, %v4193
        %v4196 = vperm.slane %v3790, %v4002
        %v4197 = vsel %vm4004, %v4196, %v4195
        %v4198 = vperm.slane %v3792, %v4006
        %v4199 = vsel %vm4008, %v4198, %v4197
        %v4200 = vperm.slane %v3794, %v4010
        %v4201 = vsel %vm4012, %v4200, %v4199
        %v4202 = vperm.slane %v3796, %v4014
        %v4203 = vsel %vm4016, %v4202, %v4201
        %v4204 = vperm.slane %v3798, %v3057
        %v4205 = vperm.slane %v3800, %v3958
        %v4206 = vsel %vm3960, %v4205, %v4204
        %v4207 = vperm.slane %v3802, %v3962
        %v4208 = vsel %vm3964, %v4207, %v4206
        %v4209 = vperm.slane %v3804, %v3966
        %v4210 = vsel %vm3968, %v4209, %v4208
        %v4211 = vperm.slane %v3806, %v3970
        %v4212 = vsel %vm3972, %v4211, %v4210
        %v4213 = vperm.slane %v3808, %v3974
        %v4214 = vsel %vm3976, %v4213, %v4212
        %v4215 = vperm.slane %v3810, %v3978
        %v4216 = vsel %vm3980, %v4215, %v4214
        %v4217 = vperm.slane %v3812, %v3982
        %v4218 = vsel %vm3984, %v4217, %v4216
        %v4219 = vperm.slane %v3814, %v3986
        %v4220 = vsel %vm3988, %v4219, %v4218
        %v4221 = vperm.slane %v3816, %v3990
        %v4222 = vsel %vm3992, %v4221, %v4220
        %v4223 = vperm.slane %v3818, %v3994
        %v4224 = vsel %vm3996, %v4223, %v4222
        %v4225 = vperm.slane %v3820, %v3998
        %v4226 = vsel %vm4000, %v4225, %v4224
        %v4227 = vperm.slane %v3822, %v4002
        %v4228 = vsel %vm4004, %v4227, %v4226
        %v4229 = vperm.slane %v3824, %v4006
        %v4230 = vsel %vm4008, %v4229, %v4228
        %v4231 = vperm.slane %v3826, %v4010
        %v4232 = vsel %vm4012, %v4231, %v4230
        %v4233 = vperm.slane %v3828, %v4014
        %v4234 = vsel %vm4016, %v4233, %v4232
        %vm4235 = vcmask 1041409
        %v4236 = vsel %vm4235, %v4048, %v4017
        %vm4237 = vcmask 1042434
        %v4238 = vsel %vm4237, %v4079, %v4236
        %vm4239 = vcmask 1043459
        %v4240 = vsel %vm4239, %v4110, %v4238
        %vm4241 = vcmask 1044484
        %v4242 = vsel %vm4241, %v4141, %v4240
        %vm4243 = vcmask 1045509
        %v4244 = vsel %vm4243, %v4172, %v4242
        %vm4245 = vcmask 1046534
        %v4246 = vsel %vm4245, %v4203, %v4244
        %vm4247 = vcmask 1047559
        %v4248 = vsel %vm4247, %v4234, %v4246
        %4250 = vst [vmem:[%s319] sm:$0xff] %v4248
      $region60: #{pointnetfeat_forward.3} parent=47 // pred_fallthru
        _
      %p4251 = scmp.lt.s32.totalorder %s22, 1
      %s4252 = scalar_select %p4251, %s22, 1
      %s4253 = smul.addr %s4252, 8
      %s4254 = scalar_lea.vmem %s7, %s4253
      // Predicated region
      $region61: #{pointnetfeat_forward.3} parent=47 // pred_check
        %p4255 = pneg %p207
      $region62: #{pointnetfeat_forward.3} parent=47 // pred_check_branch
        %4257 = sbr.rel (%p4255) target = $region64
      $region63: #{pointnetfeat_forward.3} parent=47 // pred_region
        _
      $region64: #{pointnetfeat_forward.3} parent=47 // pred_fallthru
        _
    $region48: #{pointnetfeat_forward.3} parent=5 // pred_fallthru
      _
    %p4258 = scmp.le.s32.totalorder 2, %s13
    // Predicated region
    $region65: #{pointnetfeat_forward.3} parent=5 // pred_check
      %p4259 = pneg %p4258
    $region66: #{pointnetfeat_forward.3} parent=5 // pred_check_branch
      %4261 = sbr.rel (%p4259) target = $region68
    $region67: #{pointnetfeat_forward.3} parent=5 // pred_region
      %s4262 = ssub.s32 %s13, 2
      // Predicated region
      $region69: #{pointnetfeat_forward.3} parent=67 // pred_check
        %p4263 = pneg %p213
      $region70: #{pointnetfeat_forward.3} parent=67 // pred_check_branch
        %4265 = sbr.rel (%p4263) target = $region72
      $region71: #{pointnetfeat_forward.3} parent=67 // pred_region
        %p4266 = scmp.lt.s32.totalorder %s24, 1
        %s4267 = scalar_select %p4266, %s24, 1
        %s4268 = smul.addr %s4267, 8
        %s4269 = scalar_lea.vmem %s7, %s4268
      $region72: #{pointnetfeat_forward.3} parent=67 // pred_fallthru
        _
    $region68: #{pointnetfeat_forward.3} parent=5 // pred_fallthru
      _
  $region6: #{pointnetfeat_forward.3} parent=0 // loop_footer
    %s17 = sadd.s32 1, %s13
  $region7: #{pointnetfeat_forward.3} parent=0 // loop_footer_branch
    %12 = sbr.rel target = $region3
  $region8: #{pointnetfeat_forward.3} parent=0 // loop_exit
    _

// kernel: pointnetfeat_forward.2
$region0: #{pointnetfeat_forward.2}
  #allocation0 [shape = 'u32[]', space=smem, size = 0x4, offset = 0x4, fixed_abs, tag = 'smem constant byte address 0x4 - core index']
  #allocation1 [shape = 'u32[72,128]{1,0:T(1,128)}', space=vmem, size = 0x9000, scoped, tag = 'internal scratch']
  #allocation2 [shape = 'f32[1024,128]{1,0:T(8,128)}', space=vmem, size = 0x80000, scoped, tag = 'scratch operand']
  %s0 = inlined_call_operand.vmem [shape: f32[2,3,320], index: 0, kind: input, shape index: {}]
  %s1 = inlined_call_operand.vmem [shape: f32[1,64,3], index: 1, kind: input, shape index: {}]
  %s2 = inlined_call_operand.vmem [shape: f32[64,1], index: 2, kind: input, shape index: {}]
  %s3 = inlined_call_operand.vmem [shape: bf16[128,64], index: 3, kind: input, shape index: {}]
  %s4 = inlined_call_operand.vmem [shape: f32[128,1], index: 4, kind: input, shape index: {}]
  %s5 = inlined_call_operand.hbm [shape: bf16[1024,128], index: 5, kind: input, shape index: {}]
  %s6 = inlined_call_operand.vmem [shape: f32[1024,1], index: 6, kind: input, shape index: {}]
  %s7 = inlined_call_operand.vmem [shape: f32[2,8,128], index: 7, kind: output, shape index: {}]
  %s8 = sld [smem:[#allocation0]]
  $region77: #{pointnetfeat_forward.2} parent=0
    _
  %s10 = ssub.s32 1, %s8
  %s11 = scalar_select 0, %s10, %s8
  $region1: #{pointnetfeat_forward.2} parent=0
    #allocation3 [shape = 'u8[262144]{0}', space=vmem, size = 0x40000, scoped, tag = 'input window, operand 5, single buffered']
    #allocation4 [shape = 's32[2]{0}', space=sflag, size = 0x8, scoped, tag = 'scoped memory for pointnetfeat_forward.2']
    %12 = vsyncpa [#allocation4], 0
    loop: start=0, step=1, limit=8
    $region2: #{pointnetfeat_forward.2} parent=1 // loop_pre_header
      _
    $region3: #{pointnetfeat_forward.2} parent=1 // loop_header
      %s14 = sphi 0, %s18
      %p15 = scmp.ge.s32.totalorder %s14, 8
      %s21 = sphi 0, %s33
      %s22 = sphi 0, %s29
      %s23 = sphi 0, %s21
      %s24 = sphi 0, %s22
      %s25 = sphi 0, %s23
      %s26 = sphi 0, %s24
      %s38 = sphi 0, %s40
      %s41 = sphi 0, %s38
      %s42 = sphi 0, %s41
      %s58 = sphi 0, %s42
      %s62 = sphi 0, %s62
      %s64 = sphi 0, %s62
      %s65 = sphi 0, %s64
      %s79 = sphi 0, %s65
      %s83 = sphi 0, %s83
      %s85 = sphi 0, %s83
      %s86 = sphi 0, %s85
      %s100 = sphi 0, %s86
      %s104 = sphi 0, %s104
      %s106 = sphi 0, %s104
      %s107 = sphi 0, %s106
      %s121 = sphi 0, %s107
      %s125 = sphi 0, %s125
      %s127 = sphi 0, %s125
      %s128 = sphi 0, %s127
      %s142 = sphi 0, %s128
      %s146 = sphi 0, %s146
      %s148 = sphi 0, %s146
      %s149 = sphi 0, %s148
      %s163 = sphi 0, %s149
      %s167 = sphi 0, %s167
      %s169 = sphi 0, %s167
      %s170 = sphi 0, %s169
      %s184 = sphi 0, %s170
      %s190 = sphi 0, %s192
      %s193 = sphi 0, %s190
      %s194 = sphi 0, %s193
      %s210 = sphi 0, %s194
    $region4: #{pointnetfeat_forward.2} parent=1 // loop_header_branch
      %17 = sbr.rel (%p15) target = $region8
    $region5: #{pointnetfeat_forward.2} parent=1 // loop_body
      %s19 = ssub.s32 %s14, 1
      %s20 = ssub.s32 %s14, 2
      %s27 = sadd.s32 1, %s22
      %p28 = scmp.ge.s32.totalorder %s27, 3
      %s29 = scalar_select %p28, 0, %s27
      %s30 = sadd.s32 1, %s21
      %s31 = scalar_select %p28, %s30, %s21
      %p32 = scmp.ge.s32.totalorder %s31, 2
      %s33 = scalar_select %p32, 0, %s31
      %s34 = ssub.s32 %s21, %s33
      %s35 = ssub.s32 %s22, %s29
      %s36 = sor.u32 %s34, %s35
      %p37 = scmp.eq.s32.totalorder %s36, 0
      %s39 = sadd.s32 %s38, 1
      %s40 = scalar_select %p37, %s38, %s39
      %p43 = pneg %p37
      %p44 = scmp.eq.s32.totalorder %s14, 5
      %p45 = por %p43, %p44
      %p46 = scmp.ne.s32.totalorder %s38, %s41
      %p47 = scmp.eq.s32.totalorder %s14, 0
      %p48 = por %p46, %p47
      %p49 = scmp.ne.s32.totalorder %s38, %s41
      %p50 = scmp.eq.s32.totalorder %s19, 5
      %p51 = por %p49, %p50
      %p52 = scmp.ne.s32.totalorder %s41, %s42
      %p53 = scmp.eq.s32.totalorder %s19, 0
      %p54 = por %p52, %p53
      %p55 = scmp.ne.s32.totalorder %s41, %s42
      %p56 = scmp.eq.s32.totalorder %s20, 5
      %p57 = por %p55, %p56
      %p59 = scmp.ne.s32.totalorder %s42, %s58
      %p60 = scmp.eq.s32.totalorder %s20, 0
      %p61 = por %p59, %p60
      %s63 = sadd.s32 %s62, 1
      %p66 = scmp.eq.s32.totalorder %s14, 5
      %p67 = scmp.ne.s32.totalorder %s62, %s64
      %p68 = scmp.eq.s32.totalorder %s14, 0
      %p69 = por %p67, %p68
      %p70 = scmp.ne.s32.totalorder %s62, %s64
      %p71 = scmp.eq.s32.totalorder %s19, 5
      %p72 = por %p70, %p71
      %p73 = scmp.ne.s32.totalorder %s64, %s65
      %p74 = scmp.eq.s32.totalorder %s19, 0
      %p75 = por %p73, %p74
      %p76 = scmp.ne.s32.totalorder %s64, %s65
      %p77 = scmp.eq.s32.totalorder %s20, 5
      %p78 = por %p76, %p77
      %p80 = scmp.ne.s32.totalorder %s65, %s79
      %p81 = scmp.eq.s32.totalorder %s20, 0
      %p82 = por %p80, %p81
      %s84 = sadd.s32 %s83, 1
      %p87 = scmp.eq.s32.totalorder %s14, 5
      %p88 = scmp.ne.s32.totalorder %s83, %s85
      %p89 = scmp.eq.s32.totalorder %s14, 0
      %p90 = por %p88, %p89
      %p91 = scmp.ne.s32.totalorder %s83, %s85
      %p92 = scmp.eq.s32.totalorder %s19, 5
      %p93 = por %p91, %p92
      %p94 = scmp.ne.s32.totalorder %s85, %s86
      %p95 = scmp.eq.s32.totalorder %s19, 0
      %p96 = por %p94, %p95
      %p97 = scmp.ne.s32.totalorder %s85, %s86
      %p98 = scmp.eq.s32.totalorder %s20, 5
      %p99 = por %p97, %p98
      %p101 = scmp.ne.s32.totalorder %s86, %s100
      %p102 = scmp.eq.s32.totalorder %s20, 0
      %p103 = por %p101, %p102
      %s105 = sadd.s32 %s104, 1
      %p108 = scmp.eq.s32.totalorder %s14, 5
      %p109 = scmp.ne.s32.totalorder %s104, %s106
      %p110 = scmp.eq.s32.totalorder %s14, 0
      %p111 = por %p109, %p110
      %p112 = scmp.ne.s32.totalorder %s104, %s106
      %p113 = scmp.eq.s32.totalorder %s19, 5
      %p114 = por %p112, %p113
      %p115 = scmp.ne.s32.totalorder %s106, %s107
      %p116 = scmp.eq.s32.totalorder %s19, 0
      %p117 = por %p115, %p116
      %p118 = scmp.ne.s32.totalorder %s106, %s107
      %p119 = scmp.eq.s32.totalorder %s20, 5
      %p120 = por %p118, %p119
      %p122 = scmp.ne.s32.totalorder %s107, %s121
      %p123 = scmp.eq.s32.totalorder %s20, 0
      %p124 = por %p122, %p123
      %s126 = sadd.s32 %s125, 1
      %p129 = scmp.eq.s32.totalorder %s14, 5
      %p130 = scmp.ne.s32.totalorder %s125, %s127
      %p131 = scmp.eq.s32.totalorder %s14, 0
      %p132 = por %p130, %p131
      %p133 = scmp.ne.s32.totalorder %s125, %s127
      %p134 = scmp.eq.s32.totalorder %s19, 5
      %p135 = por %p133, %p134
      %p136 = scmp.ne.s32.totalorder %s127, %s128
      %p137 = scmp.eq.s32.totalorder %s19, 0
      %p138 = por %p136, %p137
      %p139 = scmp.ne.s32.totalorder %s127, %s128
      %p140 = scmp.eq.s32.totalorder %s20, 5
      %p141 = por %p139, %p140
      %p143 = scmp.ne.s32.totalorder %s128, %s142
      %p144 = scmp.eq.s32.totalorder %s20, 0
      %p145 = por %p143, %p144
      %s147 = sadd.s32 %s146, 1
      %p150 = scmp.eq.s32.totalorder %s14, 5
      %p151 = scmp.ne.s32.totalorder %s146, %s148
      %p152 = scmp.eq.s32.totalorder %s14, 0
      %p153 = por %p151, %p152
      %p154 = scmp.ne.s32.totalorder %s146, %s148
      %p155 = scmp.eq.s32.totalorder %s19, 5
      %p156 = por %p154, %p155
      %p157 = scmp.ne.s32.totalorder %s148, %s149
      %p158 = scmp.eq.s32.totalorder %s19, 0
      %p159 = por %p157, %p158
      %p160 = scmp.ne.s32.totalorder %s148, %s149
      %p161 = scmp.eq.s32.totalorder %s20, 5
      %p162 = por %p160, %p161
      %p164 = scmp.ne.s32.totalorder %s149, %s163
      %p165 = scmp.eq.s32.totalorder %s20, 0
      %p166 = por %p164, %p165
      %s168 = sadd.s32 %s167, 1
      %p171 = scmp.eq.s32.totalorder %s14, 5
      %p172 = scmp.ne.s32.totalorder %s167, %s169
      %p173 = scmp.eq.s32.totalorder %s14, 0
      %p174 = por %p172, %p173
      %p175 = scmp.ne.s32.totalorder %s167, %s169
      %p176 = scmp.eq.s32.totalorder %s19, 5
      %p177 = por %p175, %p176
      %p178 = scmp.ne.s32.totalorder %s169, %s170
      %p179 = scmp.eq.s32.totalorder %s19, 0
      %p180 = por %p178, %p179
      %p181 = scmp.ne.s32.totalorder %s169, %s170
      %p182 = scmp.eq.s32.totalorder %s20, 5
      %p183 = por %p181, %p182
      %p185 = scmp.ne.s32.totalorder %s170, %s184
      %p186 = scmp.eq.s32.totalorder %s20, 0
      %p187 = por %p185, %p186
      %s188 = ssub.s32 %s21, %s33
      %p189 = scmp.eq.s32.totalorder %s188, 0
      %s191 = sadd.s32 %s190, 1
      %s192 = scalar_select %p189, %s190, %s191
      %p195 = pneg %p189
      %p196 = scmp.eq.s32.totalorder %s14, 5
      %p197 = por %p195, %p196
      %p198 = scmp.ne.s32.totalorder %s190, %s193
      %p199 = scmp.eq.s32.totalorder %s14, 0
      %p200 = por %p198, %p199
      %p201 = scmp.ne.s32.totalorder %s190, %s193
      %p202 = scmp.eq.s32.totalorder %s19, 5
      %p203 = por %p201, %p202
      %p204 = scmp.ne.s32.totalorder %s193, %s194
      %p205 = scmp.eq.s32.totalorder %s19, 0
      %p206 = por %p204, %p205
      %p207 = scmp.ne.s32.totalorder %s193, %s194
      %p208 = scmp.eq.s32.totalorder %s20, 5
      %p209 = por %p207, %p208
      %p211 = scmp.ne.s32.totalorder %s194, %s210
      %p212 = scmp.eq.s32.totalorder %s20, 0
      %p213 = por %p211, %p212
      %p214 = scmp.le.s32.totalorder 1, %s14
      %p215 = scmp.lt.s32.totalorder %s14, 7
      %p216 = pnand %p214, %p215
      %p217 = pneg %p216
      // Predicated region
      $region9: #{pointnetfeat_forward.2} parent=5 // pred_check
        _
      $region10: #{pointnetfeat_forward.2} parent=5 // pred_check_branch
        %219 = sbr.rel (%p216) target = $region12
      $region11: #{pointnetfeat_forward.2} parent=5 // pred_region
        %s220 = ssub.s32 %s14, 1
        // Predicated region
        $region13: #{pointnetfeat_forward.2} parent=11 // pred_check
          %p221 = pneg %p75
        $region14: #{pointnetfeat_forward.2} parent=11 // pred_check_branch
          %223 = sbr.rel (%p221) target = $region16
        $region15: #{pointnetfeat_forward.2} parent=11 // pred_region
          _
        $region16: #{pointnetfeat_forward.2} parent=11 // pred_fallthru
          _
        // Predicated region
        $region17: #{pointnetfeat_forward.2} parent=11 // pred_check
          %p224 = pneg %p96
        $region18: #{pointnetfeat_forward.2} parent=11 // pred_check_branch
          %226 = sbr.rel (%p224) target = $region20
        $region19: #{pointnetfeat_forward.2} parent=11 // pred_region
          _
        $region20: #{pointnetfeat_forward.2} parent=11 // pred_fallthru
          _
        // Predicated region
        $region21: #{pointnetfeat_forward.2} parent=11 // pred_check
          %p227 = pneg %p117
        $region22: #{pointnetfeat_forward.2} parent=11 // pred_check_branch
          %229 = sbr.rel (%p227) target = $region24
        $region23: #{pointnetfeat_forward.2} parent=11 // pred_region
          _
        $region24: #{pointnetfeat_forward.2} parent=11 // pred_fallthru
          _
        // Predicated region
        $region25: #{pointnetfeat_forward.2} parent=11 // pred_check
          %p230 = pneg %p138
        $region26: #{pointnetfeat_forward.2} parent=11 // pred_check_branch
          %232 = sbr.rel (%p230) target = $region28
        $region27: #{pointnetfeat_forward.2} parent=11 // pred_region
          _
        $region28: #{pointnetfeat_forward.2} parent=11 // pred_fallthru
          _
        // Predicated region
        $region29: #{pointnetfeat_forward.2} parent=11 // pred_check
          %p233 = pneg %p159
        $region30: #{pointnetfeat_forward.2} parent=11 // pred_check_branch
          %235 = sbr.rel (%p233) target = $region32
        $region31: #{pointnetfeat_forward.2} parent=11 // pred_region
          %237 = vsyncadd [#allocation4], 0
          %s238 = sshll.u32 %s5, 4
          %s239 = int_to_ptr.hbm [resolvable:$true] %s238
          %s240 = sshll.u32 [#allocation3], 4
          %s241 = int_to_ptr.vmem [resolvable:$true] %s240
          %246 = dma.hbm_to_vmem [thread:$0]  %s239, 8192, %s241, [#allocation4], 64, 64, 4
        $region32: #{pointnetfeat_forward.2} parent=11 // pred_fallthru
          _
        // Predicated region
        $region33: #{pointnetfeat_forward.2} parent=11 // pred_check
          %p247 = pneg %p180
        $region34: #{pointnetfeat_forward.2} parent=11 // pred_check_branch
          %249 = sbr.rel (%p247) target = $region36
        $region35: #{pointnetfeat_forward.2} parent=11 // pred_region
          _
        $region36: #{pointnetfeat_forward.2} parent=11 // pred_fallthru
          _
      $region12: #{pointnetfeat_forward.2} parent=5 // pred_fallthru
        _
      %p250 = scmp.lt.s32.totalorder %s14, 6
      // Predicated region
      $region37: #{pointnetfeat_forward.2} parent=5 // pred_check
        %p251 = pneg %p250
      $region38: #{pointnetfeat_forward.2} parent=5 // pred_check_branch
        %253 = sbr.rel (%p251) target = $region40
      $region39: #{pointnetfeat_forward.2} parent=5 // pred_region
        // Predicated region
        $region41: #{pointnetfeat_forward.2} parent=39 // pred_check
          %p254 = pneg %p48
        $region42: #{pointnetfeat_forward.2} parent=39 // pred_check_branch
          %256 = sbr.rel (%p254) target = $region44
        $region43: #{pointnetfeat_forward.2} parent=39 // pred_region
          %p257 = scmp.lt.s32.totalorder %s21, 1
          %s258 = scalar_select %p257, %s21, 1
          %p259 = scmp.lt.s32.totalorder %s22, 2
          %s260 = scalar_select %p259, %s22, 2
          %s261 = smul.addr %s258, 3
          %s262 = sadd.s32 %s260, %s261
          %s263 = smul.addr %s262, 4
          %s264 = scalar_lea.vmem %s0, %s263
        $region44: #{pointnetfeat_forward.2} parent=39 // pred_fallthru
          _
      $region40: #{pointnetfeat_forward.2} parent=5 // pred_fallthru
        _
      %p265 = scmp.le.s32.totalorder 1, %s14
      %p266 = scmp.lt.s32.totalorder %s14, 7
      %p267 = pnand %p265, %p266
      %p268 = pneg %p267
      // Predicated region
      $region45: #{pointnetfeat_forward.2} parent=5 // pred_check
        _
      $region46: #{pointnetfeat_forward.2} parent=5 // pred_check_branch
        %270 = sbr.rel (%p267) target = $region48
      $region47: #{pointnetfeat_forward.2} parent=5 // pred_region
        %s271 = ssub.s32 %s14, 1
        // Predicated region
        $region49: #{pointnetfeat_forward.2} parent=47 // pred_check
          %p272 = pneg %p159
        $region50: #{pointnetfeat_forward.2} parent=47 // pred_check_branch
          %274 = sbr.rel (%p272) target = $region52
        $region51: #{pointnetfeat_forward.2} parent=47 // pred_region
          %276 = dma.done [#allocation4], 8192
        $region52: #{pointnetfeat_forward.2} parent=47 // pred_fallthru
          _
        %p277 = scmp.lt.s32.totalorder %s23, 1
        %s278 = scalar_select %p277, %s23, 1
        %p279 = scmp.lt.s32.totalorder %s24, 2
        %s280 = scalar_select %p279, %s24, 2
        %s281 = smul.addr %s278, 3
        %s282 = sadd.s32 %s280, %s281
        %s283 = smul.addr %s282, 4
        %s284 = scalar_lea.vmem %s0, %s283
        %p285 = pneg %p54
        %p286 = pneg %p51
        %p287 = pneg %p75
        %p288 = pneg %p72
        %p289 = pneg %p96
        %p290 = pneg %p93
        %p291 = pneg %p117
        %p292 = pneg %p114
        %p293 = pneg %p138
        %p294 = pneg %p135
        %p295 = pneg %p159
        %p296 = pneg %p156
        %p297 = pneg %p180
        %p298 = pneg %p177
        %p299 = pneg %p206
        %p300 = pneg %p203
        %p301 = scmp.lt.s32.totalorder %s23, 1
        %s302 = scalar_select %p301, %s23, 1
        %s303 = smul.addr %s302, 8
        %s304 = scalar_lea.vmem %s7, %s303
        %p305 = scmp.lt.s32.totalorder %s23, 1
        %s306 = scalar_select %p305, %s23, 1
        %p307 = scmp.lt.s32.totalorder %s24, 2
        %s308 = scalar_select %p307, %s24, 2
        %s309 = smul.addr %s306, 3
        %s310 = sadd.s32 %s308, %s309
        %s311 = smul.addr %s310, 4
        %s312 = scalar_lea.vmem %s0, %s311
        %p313 = scmp.lt.s32.totalorder %s23, 1
        %s314 = scalar_select %p313, %s23, 1
        %s315 = smul.addr %s314, 8
        %s316 = scalar_lea.vmem %s7, %s315
        %v318 = vld [vmem:[%s312] sm:$0x7]
        %v319 = vld [vmem:[%s1] sm:$0xff]
        %v320 = vld [vmem:[%s1 + $0x8] sm:$0xff]
        %v321 = vld [vmem:[%s1 + $0x10] sm:$0xff]
        %v322 = vld [vmem:[%s1 + $0x18] sm:$0xff]
        %v323 = vld [vmem:[%s1 + $0x20] sm:$0xff]
        %v324 = vld [vmem:[%s1 + $0x28] sm:$0xff]
        %v325 = vld [vmem:[%s1 + $0x30] sm:$0xff]
        %v326 = vld [vmem:[%s1 + $0x38] sm:$0xff]
        %328 = vset.pattern.permute.xlu0 0
        %329 = vperm.xlu0 %328, %v319
        %v330 = vpop.permute.xlu0 %329
        %333 = vset.pattern.permute.xlu0 0
        %334 = vperm.xlu0 %333, %v320
        %v335 = vpop.permute.xlu0 %334
        %338 = vset.pattern.permute.xlu0 0
        %339 = vperm.xlu0 %338, %v321
        %v340 = vpop.permute.xlu0 %339
        %343 = vset.pattern.permute.xlu0 0
        %344 = vperm.xlu0 %343, %v322
        %v345 = vpop.permute.xlu0 %344
        %348 = vset.pattern.permute.xlu0 0
        %349 = vperm.xlu0 %348, %v323
        %v350 = vpop.permute.xlu0 %349
        %353 = vset.pattern.permute.xlu0 0
        %354 = vperm.xlu0 %353, %v324
        %v355 = vpop.permute.xlu0 %354
        %358 = vset.pattern.permute.xlu0 0
        %359 = vperm.xlu0 %358, %v325
        %v360 = vpop.permute.xlu0 %359
        %363 = vset.pattern.permute.xlu0 0
        %364 = vperm.xlu0 %363, %v326
        %v365 = vpop.permute.xlu0 %364
        %v367 = vperm.slane %v318, 0
        %v368 = vmul.f32 %v330, %v367
        %v369 = vmul.f32 %v335, %v367
        %v370 = vmul.f32 %v340, %v367
        %v371 = vmul.f32 %v345, %v367
        %v372 = vmul.f32 %v350, %v367
        %v373 = vmul.f32 %v355, %v367
        %v374 = vmul.f32 %v360, %v367
        %v375 = vmul.f32 %v365, %v367
        %376 = vset.pattern.permute.xlu0 1
        %377 = vperm.xlu0 %376, %v319
        %v378 = vpop.permute.xlu0 %377
        %380 = vset.pattern.permute.xlu0 1
        %381 = vperm.xlu0 %380, %v320
        %v382 = vpop.permute.xlu0 %381
        %384 = vset.pattern.permute.xlu0 1
        %385 = vperm.xlu0 %384, %v321
        %v386 = vpop.permute.xlu0 %385
        %388 = vset.pattern.permute.xlu0 1
        %389 = vperm.xlu0 %388, %v322
        %v390 = vpop.permute.xlu0 %389
        %392 = vset.pattern.permute.xlu0 1
        %393 = vperm.xlu0 %392, %v323
        %v394 = vpop.permute.xlu0 %393
        %396 = vset.pattern.permute.xlu0 1
        %397 = vperm.xlu0 %396, %v324
        %v398 = vpop.permute.xlu0 %397
        %400 = vset.pattern.permute.xlu0 1
        %401 = vperm.xlu0 %400, %v325
        %v402 = vpop.permute.xlu0 %401
        %404 = vset.pattern.permute.xlu0 1
        %405 = vperm.xlu0 %404, %v326
        %v406 = vpop.permute.xlu0 %405
        %v408 = vperm.slane %v318, 1
        %v409 = vmul.f32 %v378, %v408
        %v410 = vmul.f32 %v382, %v408
        %v411 = vmul.f32 %v386, %v408
        %v412 = vmul.f32 %v390, %v408
        %v413 = vmul.f32 %v394, %v408
        %v414 = vmul.f32 %v398, %v408
        %v415 = vmul.f32 %v402, %v408
        %v416 = vmul.f32 %v406, %v408
        %v417 = vadd.f32 %v368, %v409
        %v418 = vadd.f32 %v369, %v410
        %v419 = vadd.f32 %v370, %v411
        %v420 = vadd.f32 %v371, %v412
        %v421 = vadd.f32 %v372, %v413
        %v422 = vadd.f32 %v373, %v414
        %v423 = vadd.f32 %v374, %v415
        %v424 = vadd.f32 %v375, %v416
        %425 = vset.pattern.permute.xlu0 2
        %426 = vperm.xlu0 %425, %v319
        %v427 = vpop.permute.xlu0 %426
        %429 = vset.pattern.permute.xlu0 2
        %430 = vperm.xlu0 %429, %v320
        %v431 = vpop.permute.xlu0 %430
        %433 = vset.pattern.permute.xlu0 2
        %434 = vperm.xlu0 %433, %v321
        %v435 = vpop.permute.xlu0 %434
        %437 = vset.pattern.permute.xlu0 2
        %438 = vperm.xlu0 %437, %v322
        %v439 = vpop.permute.xlu0 %438
        %441 = vset.pattern.permute.xlu0 2
        %442 = vperm.xlu0 %441, %v323
        %v443 = vpop.permute.xlu0 %442
        %445 = vset.pattern.permute.xlu0 2
        %446 = vperm.xlu0 %445, %v324
        %v447 = vpop.permute.xlu0 %446
        %449 = vset.pattern.permute.xlu0 2
        %450 = vperm.xlu0 %449, %v325
        %v451 = vpop.permute.xlu0 %450
        %453 = vset.pattern.permute.xlu0 2
        %454 = vperm.xlu0 %453, %v326
        %v455 = vpop.permute.xlu0 %454
        %v457 = vperm.slane %v318, 2
        %v458 = vmul.f32 %v427, %v457
        %v459 = vmul.f32 %v431, %v457
        %v460 = vmul.f32 %v435, %v457
        %v461 = vmul.f32 %v439, %v457
        %v462 = vmul.f32 %v443, %v457
        %v463 = vmul.f32 %v447, %v457
        %v464 = vmul.f32 %v451, %v457
        %v465 = vmul.f32 %v455, %v457
        %v466 = vadd.f32 %v417, %v458
        %v467 = vadd.f32 %v418, %v459
        %v468 = vadd.f32 %v419, %v460
        %v469 = vadd.f32 %v420, %v461
        %v470 = vadd.f32 %v421, %v462
        %v471 = vadd.f32 %v422, %v463
        %v472 = vadd.f32 %v423, %v464
        %v473 = vadd.f32 %v424, %v465
        %v474 = vld [vmem:[%s2] sm:$0xff]
        %v475 = vld [vmem:[%s2 + $0x8] sm:$0xff]
        %v476 = vld [vmem:[%s2 + $0x10] sm:$0xff]
        %v477 = vld [vmem:[%s2 + $0x18] sm:$0xff]
        %v478 = vld [vmem:[%s2 + $0x20] sm:$0xff]
        %v479 = vld [vmem:[%s2 + $0x28] sm:$0xff]
        %v480 = vld [vmem:[%s2 + $0x30] sm:$0xff]
        %v481 = vld [vmem:[%s2 + $0x38] sm:$0xff]
        %483 = vset.pattern.permute.xlu0 0
        %484 = vperm.xlu0 %483, %v474
        %v485 = vpop.permute.xlu0 %484
        %488 = vset.pattern.permute.xlu0 0
        %489 = vperm.xlu0 %488, %v475
        %v490 = vpop.permute.xlu0 %489
        %493 = vset.pattern.permute.xlu0 0
        %494 = vperm.xlu0 %493, %v476
        %v495 = vpop.permute.xlu0 %494
        %498 = vset.pattern.permute.xlu0 0
        %499 = vperm.xlu0 %498, %v477
        %v500 = vpop.permute.xlu0 %499
        %503 = vset.pattern.permute.xlu0 0
        %504 = vperm.xlu0 %503, %v478
        %v505 = vpop.permute.xlu0 %504
        %508 = vset.pattern.permute.xlu0 0
        %509 = vperm.xlu0 %508, %v479
        %v510 = vpop.permute.xlu0 %509
        %513 = vset.pattern.permute.xlu0 0
        %514 = vperm.xlu0 %513, %v480
        %v515 = vpop.permute.xlu0 %514
        %518 = vset.pattern.permute.xlu0 0
        %519 = vperm.xlu0 %518, %v481
        %v520 = vpop.permute.xlu0 %519
        %v522 = vadd.f32 %v466, %v485
        %v523 = vadd.f32 %v467, %v490
        %v524 = vadd.f32 %v468, %v495
        %v525 = vadd.f32 %v469, %v500
        %v526 = vadd.f32 %v470, %v505
        %v527 = vadd.f32 %v471, %v510
        %v528 = vadd.f32 %v472, %v515
        %v529 = vadd.f32 %v473, %v520
        %v530 = vmax.f32 %v522, 0.0
        %v531 = vmax.f32 %v523, 0.0
        %v532 = vmax.f32 %v524, 0.0
        %v533 = vmax.f32 %v525, 0.0
        %v534 = vmax.f32 %v526, 0.0
        %v535 = vmax.f32 %v527, 0.0
        %v536 = vmax.f32 %v528, 0.0
        %v537 = vmax.f32 %v529, 0.0
        %v538 = vld [vmem:[%s3] sm:$0xf]
        %v539 = vld [vmem:[%s3 + $0x4] sm:$0xf]
        %v540 = vld [vmem:[%s3 + $0x8] sm:$0xf]
        %v541 = vld [vmem:[%s3 + $0xc] sm:$0xf]
        %v542 = vld [vmem:[%s3 + $0x10] sm:$0xf]
        %v543 = vld [vmem:[%s3 + $0x14] sm:$0xf]
        %v544 = vld [vmem:[%s3 + $0x18] sm:$0xf]
        %v545 = vld [vmem:[%s3 + $0x1c] sm:$0xf]
        %v546 = vld [vmem:[%s3 + $0x20] sm:$0xf]
        %v547 = vld [vmem:[%s3 + $0x24] sm:$0xf]
        %v548 = vld [vmem:[%s3 + $0x28] sm:$0xf]
        %v549 = vld [vmem:[%s3 + $0x2c] sm:$0xf]
        %v550 = vld [vmem:[%s3 + $0x30] sm:$0xf]
        %v551 = vld [vmem:[%s3 + $0x34] sm:$0xf]
        %v552 = vld [vmem:[%s3 + $0x38] sm:$0xf]
        %v553 = vld [vmem:[%s3 + $0x3c] sm:$0xf]
        %v554 = vpack.c.bf16 %v531, %v530
        %v555 = vpack.c.bf16 %v533, %v532
        %v556 = vpack.c.bf16 %v535, %v534
        %v557 = vpack.c.bf16 %v537, %v536
        %v558 = vld [vmem:[%s4] sm:$0xff]
        %v559 = vld [vmem:[%s4 + $0x8] sm:$0xff]
        %v560 = vld [vmem:[%s4 + $0x10] sm:$0xff]
        %v561 = vld [vmem:[%s4 + $0x18] sm:$0xff]
        %v562 = vld [vmem:[%s4 + $0x20] sm:$0xff]
        %v563 = vld [vmem:[%s4 + $0x28] sm:$0xff]
        %v564 = vld [vmem:[%s4 + $0x30] sm:$0xff]
        %v565 = vld [vmem:[%s4 + $0x38] sm:$0xff]
        %v566 = vld [vmem:[%s4 + $0x40] sm:$0xff]
        %v567 = vld [vmem:[%s4 + $0x48] sm:$0xff]
        %v568 = vld [vmem:[%s4 + $0x50] sm:$0xff]
        %v569 = vld [vmem:[%s4 + $0x58] sm:$0xff]
        %v570 = vld [vmem:[%s4 + $0x60] sm:$0xff]
        %v571 = vld [vmem:[%s4 + $0x68] sm:$0xff]
        %v572 = vld [vmem:[%s4 + $0x70] sm:$0xff]
        %v573 = vld [vmem:[%s4 + $0x78] sm:$0xff]
        %575 = vset.pattern.permute.xlu0 0
        %576 = vperm.xlu0 %575, %v558
        %v577 = vpop.permute.xlu0 %576
        %580 = vset.pattern.permute.xlu0 0
        %581 = vperm.xlu0 %580, %v559
        %v582 = vpop.permute.xlu0 %581
        %585 = vset.pattern.permute.xlu0 0
        %586 = vperm.xlu0 %585, %v560
        %v587 = vpop.permute.xlu0 %586
        %590 = vset.pattern.permute.xlu0 0
        %591 = vperm.xlu0 %590, %v561
        %v592 = vpop.permute.xlu0 %591
        %595 = vset.pattern.permute.xlu0 0
        %596 = vperm.xlu0 %595, %v562
        %v597 = vpop.permute.xlu0 %596
        %600 = vset.pattern.permute.xlu0 0
        %601 = vperm.xlu0 %600, %v563
        %v602 = vpop.permute.xlu0 %601
        %605 = vset.pattern.permute.xlu0 0
        %606 = vperm.xlu0 %605, %v564
        %v607 = vpop.permute.xlu0 %606
        %610 = vset.pattern.permute.xlu0 0
        %611 = vperm.xlu0 %610, %v565
        %v612 = vpop.permute.xlu0 %611
        %615 = vset.pattern.permute.xlu0 0
        %616 = vperm.xlu0 %615, %v566
        %v617 = vpop.permute.xlu0 %616
        %620 = vset.pattern.permute.xlu0 0
        %621 = vperm.xlu0 %620, %v567
        %v622 = vpop.permute.xlu0 %621
        %625 = vset.pattern.permute.xlu0 0
        %626 = vperm.xlu0 %625, %v568
        %v627 = vpop.permute.xlu0 %626
        %630 = vset.pattern.permute.xlu0 0
        %631 = vperm.xlu0 %630, %v569
        %v632 = vpop.permute.xlu0 %631
        %635 = vset.pattern.permute.xlu0 0
        %636 = vperm.xlu0 %635, %v570
        %v637 = vpop.permute.xlu0 %636
        %640 = vset.pattern.permute.xlu0 0
        %641 = vperm.xlu0 %640, %v571
        %v642 = vpop.permute.xlu0 %641
        %645 = vset.pattern.permute.xlu0 0
        %646 = vperm.xlu0 %645, %v572
        %v647 = vpop.permute.xlu0 %646
        %650 = vset.pattern.permute.xlu0 0
        %651 = vperm.xlu0 %650, %v573
        %v652 = vpop.permute.xlu0 %651
        %v670 = vunpack.c.l.b16 %v538
        %v671 = vunpack.c.l.b16 %v539
        %v672 = vunpack.c.l.b16 %v540
        %v673 = vunpack.c.l.b16 %v541
        %v674 = vunpack.c.l.b16 %v542
        %v675 = vunpack.c.l.b16 %v543
        %v676 = vunpack.c.l.b16 %v544
        %v677 = vunpack.c.l.b16 %v545
        %v678 = vunpack.c.l.b16 %v546
        %v679 = vunpack.c.l.b16 %v547
        %v680 = vunpack.c.l.b16 %v548
        %v681 = vunpack.c.l.b16 %v549
        %v682 = vunpack.c.l.b16 %v550
        %v683 = vunpack.c.l.b16 %v551
        %v684 = vunpack.c.l.b16 %v552
        %v685 = vunpack.c.l.b16 %v553
        %v686 = vpack.c.b16 %v671, %v670
        %v687 = vpack.c.b16 %v673, %v672
        %v688 = vpack.c.b16 %v675, %v674
        %v689 = vpack.c.b16 %v677, %v676
        %v690 = vpack.c.b16 %v679, %v678
        %v691 = vpack.c.b16 %v681, %v680
        %v692 = vpack.c.b16 %v683, %v682
        %v693 = vpack.c.b16 %v685, %v684
        %vm694 = vcmask 523264
        %v696 = vsel %vm694, %v686, 0
        %v699 = vsel %vm694, %v687, 0
        %v702 = vsel %vm694, %v688, 0
        %v705 = vsel %vm694, %v689, 0
        %v708 = vsel %vm694, %v690, 0
        %v711 = vsel %vm694, %v691, 0
        %v714 = vsel %vm694, %v692, 0
        %v717 = vsel %vm694, %v693, 0
        %719 = vmatpush.bf16.msra.mxu0 0
        %720 = vmatpush.bf16.msra.mxu0 0
        %721 = vmatpush.bf16.msra.mxu0 0
        %722 = vmatpush.bf16.msra.mxu0 0
        %723 = vmatpush.bf16.msra.mxu0 %v557
        %724 = vmatpush.bf16.msra.mxu0 %v556
        %725 = vmatpush.bf16.msra.mxu0 %v555
        %726 = vmatpush.bf16.msra.mxu0 %v554
        %727 = vmatmul.bf16.gmra.mxu0 %v696
        %v728 = vpop.f32.mrf.mxu0
        %v729 = vadd.f32 %v577, %v728
        %v730 = vpop.f32.mrf.mxu0
        %v731 = vadd.f32 %v582, %v730
        %732 = vmatmul.bf16.gmra.mxu0 %v699
        %v733 = vpop.f32.mrf.mxu0
        %v734 = vadd.f32 %v587, %v733
        %v735 = vpop.f32.mrf.mxu0
        %v736 = vadd.f32 %v592, %v735
        %737 = vmatmul.bf16.gmra.mxu0 %v702
        %v738 = vpop.f32.mrf.mxu0
        %v739 = vadd.f32 %v597, %v738
        %v740 = vpop.f32.mrf.mxu0
        %v741 = vadd.f32 %v602, %v740
        %742 = vmatmul.bf16.gmra.mxu0 %v705
        %v743 = vpop.f32.mrf.mxu0
        %v744 = vadd.f32 %v607, %v743
        %v745 = vpop.f32.mrf.mxu0
        %v746 = vadd.f32 %v612, %v745
        %747 = vmatmul.bf16.gmra.mxu0 %v708
        %v748 = vpop.f32.mrf.mxu0
        %v749 = vadd.f32 %v617, %v748
        %v750 = vpop.f32.mrf.mxu0
        %v751 = vadd.f32 %v622, %v750
        %752 = vmatmul.bf16.gmra.mxu0 %v711
        %v753 = vpop.f32.mrf.mxu0
        %v754 = vadd.f32 %v627, %v753
        %v755 = vpop.f32.mrf.mxu0
        %v756 = vadd.f32 %v632, %v755
        %757 = vmatmul.bf16.gmra.mxu0 %v714
        %v758 = vpop.f32.mrf.mxu0
        %v759 = vadd.f32 %v637, %v758
        %v760 = vpop.f32.mrf.mxu0
        %v761 = vadd.f32 %v642, %v760
        %762 = vmatmul.bf16.gmra.mxu0 %v717
        %v763 = vpop.f32.mrf.mxu0
        %v764 = vadd.f32 %v647, %v763
        %v765 = vpop.f32.mrf.mxu0
        %v766 = vadd.f32 %v652, %v765
        %767 = vdwg.mxu0
        %v768 = vmax.f32 %v729, 0.0
        %v769 = vmax.f32 %v731, 0.0
        %v770 = vmax.f32 %v734, 0.0
        %v771 = vmax.f32 %v736, 0.0
        %v772 = vmax.f32 %v739, 0.0
        %v773 = vmax.f32 %v741, 0.0
        %v774 = vmax.f32 %v744, 0.0
        %v775 = vmax.f32 %v746, 0.0
        %v776 = vmax.f32 %v749, 0.0
        %v777 = vmax.f32 %v751, 0.0
        %v778 = vmax.f32 %v754, 0.0
        %v779 = vmax.f32 %v756, 0.0
        %v780 = vmax.f32 %v759, 0.0
        %v781 = vmax.f32 %v761, 0.0
        %v782 = vmax.f32 %v764, 0.0
        %v783 = vmax.f32 %v766, 0.0
        %v784 = vld [vmem:[#allocation3] sm:$0xf]
        %v785 = vld [vmem:[#allocation3 + $0x4] sm:$0xf]
        %v786 = vld [vmem:[#allocation3 + $0x8] sm:$0xf]
        %v787 = vld [vmem:[#allocation3 + $0xc] sm:$0xf]
        %v788 = vld [vmem:[#allocation3 + $0x10] sm:$0xf]
        %v789 = vld [vmem:[#allocation3 + $0x14] sm:$0xf]
        %v790 = vld [vmem:[#allocation3 + $0x18] sm:$0xf]
        %v791 = vld [vmem:[#allocation3 + $0x1c] sm:$0xf]
        %v792 = vld [vmem:[#allocation3 + $0x20] sm:$0xf]
        %v793 = vld [vmem:[#allocation3 + $0x24] sm:$0xf]
        %v794 = vld [vmem:[#allocation3 + $0x28] sm:$0xf]
        %v795 = vld [vmem:[#allocation3 + $0x2c] sm:$0xf]
        %v796 = vld [vmem:[#allocation3 + $0x30] sm:$0xf]
        %v797 = vld [vmem:[#allocation3 + $0x34] sm:$0xf]
        %v798 = vld [vmem:[#allocation3 + $0x38] sm:$0xf]
        %v799 = vld [vmem:[#allocation3 + $0x3c] sm:$0xf]
        %v800 = vld [vmem:[#allocation3 + $0x40] sm:$0xf]
        %v801 = vld [vmem:[#allocation3 + $0x44] sm:$0xf]
        %v802 = vld [vmem:[#allocation3 + $0x48] sm:$0xf]
        %v803 = vld [vmem:[#allocation3 + $0x4c] sm:$0xf]
        %v804 = vld [vmem:[#allocation3 + $0x50] sm:$0xf]
        %v805 = vld [vmem:[#allocation3 + $0x54] sm:$0xf]
        %v806 = vld [vmem:[#allocation3 + $0x58] sm:$0xf]
        %v807 = vld [vmem:[#allocation3 + $0x5c] sm:$0xf]
        %v808 = vld [vmem:[#allocation3 + $0x60] sm:$0xf]
        %v809 = vld [vmem:[#allocation3 + $0x64] sm:$0xf]
        %v810 = vld [vmem:[#allocation3 + $0x68] sm:$0xf]
        %v811 = vld [vmem:[#allocation3 + $0x6c] sm:$0xf]
        %v812 = vld [vmem:[#allocation3 + $0x70] sm:$0xf]
        %v813 = vld [vmem:[#allocation3 + $0x74] sm:$0xf]
        %v814 = vld [vmem:[#allocation3 + $0x78] sm:$0xf]
        %v815 = vld [vmem:[#allocation3 + $0x7c] sm:$0xf]
        %v816 = vld [vmem:[#allocation3 + $0x80] sm:$0xf]
        %v817 = vld [vmem:[#allocation3 + $0x84] sm:$0xf]
        %v818 = vld [vmem:[#allocation3 + $0x88] sm:$0xf]
        %v819 = vld [vmem:[#allocation3 + $0x8c] sm:$0xf]
        %v820 = vld [vmem:[#allocation3 + $0x90] sm:$0xf]
        %v821 = vld [vmem:[#allocation3 + $0x94] sm:$0xf]
        %v822 = vld [vmem:[#allocation3 + $0x98] sm:$0xf]
        %v823 = vld [vmem:[#allocation3 + $0x9c] sm:$0xf]
        %v824 = vld [vmem:[#allocation3 + $0xa0] sm:$0xf]
        %v825 = vld [vmem:[#allocation3 + $0xa4] sm:$0xf]
        %v826 = vld [vmem:[#allocation3 + $0xa8] sm:$0xf]
        %v827 = vld [vmem:[#allocation3 + $0xac] sm:$0xf]
        %v828 = vld [vmem:[#allocation3 + $0xb0] sm:$0xf]
        %v829 = vld [vmem:[#allocation3 + $0xb4] sm:$0xf]
        %v830 = vld [vmem:[#allocation3 + $0xb8] sm:$0xf]
        %v831 = vld [vmem:[#allocation3 + $0xbc] sm:$0xf]
        %v832 = vld [vmem:[#allocation3 + $0xc0] sm:$0xf]
        %v833 = vld [vmem:[#allocation3 + $0xc4] sm:$0xf]
        %v834 = vld [vmem:[#allocation3 + $0xc8] sm:$0xf]
        %v835 = vld [vmem:[#allocation3 + $0xcc] sm:$0xf]
        %v836 = vld [vmem:[#allocation3 + $0xd0] sm:$0xf]
        %v837 = vld [vmem:[#allocation3 + $0xd4] sm:$0xf]
        %v838 = vld [vmem:[#allocation3 + $0xd8] sm:$0xf]
        %v839 = vld [vmem:[#allocation3 + $0xdc] sm:$0xf]
        %v840 = vld [vmem:[#allocation3 + $0xe0] sm:$0xf]
        %v841 = vld [vmem:[#allocation3 + $0xe4] sm:$0xf]
        %v842 = vld [vmem:[#allocation3 + $0xe8] sm:$0xf]
        %v843 = vld [vmem:[#allocation3 + $0xec] sm:$0xf]
        %v844 = vld [vmem:[#allocation3 + $0xf0] sm:$0xf]
        %v845 = vld [vmem:[#allocation3 + $0xf4] sm:$0xf]
        %v846 = vld [vmem:[#allocation3 + $0xf8] sm:$0xf]
        %v847 = vld [vmem:[#allocation3 + $0xfc] sm:$0xf]
        %v848 = vld [vmem:[#allocation3 + $0x100] sm:$0xf]
        %v849 = vld [vmem:[#allocation3 + $0x104] sm:$0xf]
        %v850 = vld [vmem:[#allocation3 + $0x108] sm:$0xf]
        %v851 = vld [vmem:[#allocation3 + $0x10c] sm:$0xf]
        %v852 = vld [vmem:[#allocation3 + $0x110] sm:$0xf]
        %v853 = vld [vmem:[#allocation3 + $0x114] sm:$0xf]
        %v854 = vld [vmem:[#allocation3 + $0x118] sm:$0xf]
        %v855 = vld [vmem:[#allocation3 + $0x11c] sm:$0xf]
        %v856 = vld [vmem:[#allocation3 + $0x120] sm:$0xf]
        %v857 = vld [vmem:[#allocation3 + $0x124] sm:$0xf]
        %v858 = vld [vmem:[#allocation3 + $0x128] sm:$0xf]
        %v859 = vld [vmem:[#allocation3 + $0x12c] sm:$0xf]
        %v860 = vld [vmem:[#allocation3 + $0x130] sm:$0xf]
        %v861 = vld [vmem:[#allocation3 + $0x134] sm:$0xf]
        %v862 = vld [vmem:[#allocation3 + $0x138] sm:$0xf]
        %v863 = vld [vmem:[#allocation3 + $0x13c] sm:$0xf]
        %v864 = vld [vmem:[#allocation3 + $0x140] sm:$0xf]
        %v865 = vld [vmem:[#allocation3 + $0x144] sm:$0xf]
        %v866 = vld [vmem:[#allocation3 + $0x148] sm:$0xf]
        %v867 = vld [vmem:[#allocation3 + $0x14c] sm:$0xf]
        %v868 = vld [vmem:[#allocation3 + $0x150] sm:$0xf]
        %v869 = vld [vmem:[#allocation3 + $0x154] sm:$0xf]
        %v870 = vld [vmem:[#allocation3 + $0x158] sm:$0xf]
        %v871 = vld [vmem:[#allocation3 + $0x15c] sm:$0xf]
        %v872 = vld [vmem:[#allocation3 + $0x160] sm:$0xf]
        %v873 = vld [vmem:[#allocation3 + $0x164] sm:$0xf]
        %v874 = vld [vmem:[#allocation3 + $0x168] sm:$0xf]
        %v875 = vld [vmem:[#allocation3 + $0x16c] sm:$0xf]
        %v876 = vld [vmem:[#allocation3 + $0x170] sm:$0xf]
        %v877 = vld [vmem:[#allocation3 + $0x174] sm:$0xf]
        %v878 = vld [vmem:[#allocation3 + $0x178] sm:$0xf]
        %v879 = vld [vmem:[#allocation3 + $0x17c] sm:$0xf]
        %v880 = vld [vmem:[#allocation3 + $0x180] sm:$0xf]
        %v881 = vld [vmem:[#allocation3 + $0x184] sm:$0xf]
        %v882 = vld [vmem:[#allocation3 + $0x188] sm:$0xf]
        %v883 = vld [vmem:[#allocation3 + $0x18c] sm:$0xf]
        %v884 = vld [vmem:[#allocation3 + $0x190] sm:$0xf]
        %v885 = vld [vmem:[#allocation3 + $0x194] sm:$0xf]
        %v886 = vld [vmem:[#allocation3 + $0x198] sm:$0xf]
        %v887 = vld [vmem:[#allocation3 + $0x19c] sm:$0xf]
        %v888 = vld [vmem:[#allocation3 + $0x1a0] sm:$0xf]
        %v889 = vld [vmem:[#allocation3 + $0x1a4] sm:$0xf]
        %v890 = vld [vmem:[#allocation3 + $0x1a8] sm:$0xf]
        %v891 = vld [vmem:[#allocation3 + $0x1ac] sm:$0xf]
        %v892 = vld [vmem:[#allocation3 + $0x1b0] sm:$0xf]
        %v893 = vld [vmem:[#allocation3 + $0x1b4] sm:$0xf]
        %v894 = vld [vmem:[#allocation3 + $0x1b8] sm:$0xf]
        %v895 = vld [vmem:[#allocation3 + $0x1bc] sm:$0xf]
        %v896 = vld [vmem:[#allocation3 + $0x1c0] sm:$0xf]
        %v897 = vld [vmem:[#allocation3 + $0x1c4] sm:$0xf]
        %v898 = vld [vmem:[#allocation3 + $0x1c8] sm:$0xf]
        %v899 = vld [vmem:[#allocation3 + $0x1cc] sm:$0xf]
        %v900 = vld [vmem:[#allocation3 + $0x1d0] sm:$0xf]
        %v901 = vld [vmem:[#allocation3 + $0x1d4] sm:$0xf]
        %v902 = vld [vmem:[#allocation3 + $0x1d8] sm:$0xf]
        %v903 = vld [vmem:[#allocation3 + $0x1dc] sm:$0xf]
        %v904 = vld [vmem:[#allocation3 + $0x1e0] sm:$0xf]
        %v905 = vld [vmem:[#allocation3 + $0x1e4] sm:$0xf]
        %v906 = vld [vmem:[#allocation3 + $0x1e8] sm:$0xf]
        %v907 = vld [vmem:[#allocation3 + $0x1ec] sm:$0xf]
        %v908 = vld [vmem:[#allocation3 + $0x1f0] sm:$0xf]
        %v909 = vld [vmem:[#allocation3 + $0x1f4] sm:$0xf]
        %v910 = vld [vmem:[#allocation3 + $0x1f8] sm:$0xf]
        %v911 = vld [vmem:[#allocation3 + $0x1fc] sm:$0xf]
        %v912 = vpack.c.bf16 %v769, %v768
        %v913 = vpack.c.bf16 %v771, %v770
        %v914 = vpack.c.bf16 %v773, %v772
        %v915 = vpack.c.bf16 %v775, %v774
        %v916 = vpack.c.bf16 %v777, %v776
        %v917 = vpack.c.bf16 %v779, %v778
        %v918 = vpack.c.bf16 %v781, %v780
        %v919 = vpack.c.bf16 %v783, %v782
        %v920 = vld [vmem:[%s6] sm:$0xff]
        %v921 = vld [vmem:[%s6 + $0x8] sm:$0xff]
        %v922 = vld [vmem:[%s6 + $0x10] sm:$0xff]
        %v923 = vld [vmem:[%s6 + $0x18] sm:$0xff]
        %v924 = vld [vmem:[%s6 + $0x20] sm:$0xff]
        %v925 = vld [vmem:[%s6 + $0x28] sm:$0xff]
        %v926 = vld [vmem:[%s6 + $0x30] sm:$0xff]
        %v927 = vld [vmem:[%s6 + $0x38] sm:$0xff]
        %v928 = vld [vmem:[%s6 + $0x40] sm:$0xff]
        %v929 = vld [vmem:[%s6 + $0x48] sm:$0xff]
        %v930 = vld [vmem:[%s6 + $0x50] sm:$0xff]
        %v931 = vld [vmem:[%s6 + $0x58] sm:$0xff]
        %v932 = vld [vmem:[%s6 + $0x60] sm:$0xff]
        %v933 = vld [vmem:[%s6 + $0x68] sm:$0xff]
        %v934 = vld [vmem:[%s6 + $0x70] sm:$0xff]
        %v935 = vld [vmem:[%s6 + $0x78] sm:$0xff]
        %v936 = vld [vmem:[%s6 + $0x80] sm:$0xff]
        %v937 = vld [vmem:[%s6 + $0x88] sm:$0xff]
        %v938 = vld [vmem:[%s6 + $0x90] sm:$0xff]
        %v939 = vld [vmem:[%s6 + $0x98] sm:$0xff]
        %v940 = vld [vmem:[%s6 + $0xa0] sm:$0xff]
        %v941 = vld [vmem:[%s6 + $0xa8] sm:$0xff]
        %v942 = vld [vmem:[%s6 + $0xb0] sm:$0xff]
        %v943 = vld [vmem:[%s6 + $0xb8] sm:$0xff]
        %v944 = vld [vmem:[%s6 + $0xc0] sm:$0xff]
        %v945 = vld [vmem:[%s6 + $0xc8] sm:$0xff]
        %v946 = vld [vmem:[%s6 + $0xd0] sm:$0xff]
        %v947 = vld [vmem:[%s6 + $0xd8] sm:$0xff]
        %v948 = vld [vmem:[%s6 + $0xe0] sm:$0xff]
        %v949 = vld [vmem:[%s6 + $0xe8] sm:$0xff]
        %v950 = vld [vmem:[%s6 + $0xf0] sm:$0xff]
        %v951 = vld [vmem:[%s6 + $0xf8] sm:$0xff]
        %v952 = vld [vmem:[%s6 + $0x100] sm:$0xff]
        %v953 = vld [vmem:[%s6 + $0x108] sm:$0xff]
        %v954 = vld [vmem:[%s6 + $0x110] sm:$0xff]
        %v955 = vld [vmem:[%s6 + $0x118] sm:$0xff]
        %v956 = vld [vmem:[%s6 + $0x120] sm:$0xff]
        %v957 = vld [vmem:[%s6 + $0x128] sm:$0xff]
        %v958 = vld [vmem:[%s6 + $0x130] sm:$0xff]
        %v959 = vld [vmem:[%s6 + $0x138] sm:$0xff]
        %v960 = vld [vmem:[%s6 + $0x140] sm:$0xff]
        %v961 = vld [vmem:[%s6 + $0x148] sm:$0xff]
        %v962 = vld [vmem:[%s6 + $0x150] sm:$0xff]
        %v963 = vld [vmem:[%s6 + $0x158] sm:$0xff]
        %v964 = vld [vmem:[%s6 + $0x160] sm:$0xff]
        %v965 = vld [vmem:[%s6 + $0x168] sm:$0xff]
        %v966 = vld [vmem:[%s6 + $0x170] sm:$0xff]
        %v967 = vld [vmem:[%s6 + $0x178] sm:$0xff]
        %v968 = vld [vmem:[%s6 + $0x180] sm:$0xff]
        %v969 = vld [vmem:[%s6 + $0x188] sm:$0xff]
        %v970 = vld [vmem:[%s6 + $0x190] sm:$0xff]
        %v971 = vld [vmem:[%s6 + $0x198] sm:$0xff]
        %v972 = vld [vmem:[%s6 + $0x1a0] sm:$0xff]
        %v973 = vld [vmem:[%s6 + $0x1a8] sm:$0xff]
        %v974 = vld [vmem:[%s6 + $0x1b0] sm:$0xff]
        %v975 = vld [vmem:[%s6 + $0x1b8] sm:$0xff]
        %v976 = vld [vmem:[%s6 + $0x1c0] sm:$0xff]
        %v977 = vld [vmem:[%s6 + $0x1c8] sm:$0xff]
        %v978 = vld [vmem:[%s6 + $0x1d0] sm:$0xff]
        %v979 = vld [vmem:[%s6 + $0x1d8] sm:$0xff]
        %v980 = vld [vmem:[%s6 + $0x1e0] sm:$0xff]
        %v981 = vld [vmem:[%s6 + $0x1e8] sm:$0xff]
        %v982 = vld [vmem:[%s6 + $0x1f0] sm:$0xff]
        %v983 = vld [vmem:[%s6 + $0x1f8] sm:$0xff]
        %v984 = vld [vmem:[%s6 + $0x200] sm:$0xff]
        %v985 = vld [vmem:[%s6 + $0x208] sm:$0xff]
        %v986 = vld [vmem:[%s6 + $0x210] sm:$0xff]
        %v987 = vld [vmem:[%s6 + $0x218] sm:$0xff]
        %v988 = vld [vmem:[%s6 + $0x220] sm:$0xff]
        %v989 = vld [vmem:[%s6 + $0x228] sm:$0xff]
        %v990 = vld [vmem:[%s6 + $0x230] sm:$0xff]
        %v991 = vld [vmem:[%s6 + $0x238] sm:$0xff]
        %v992 = vld [vmem:[%s6 + $0x240] sm:$0xff]
        %v993 = vld [vmem:[%s6 + $0x248] sm:$0xff]
        %v994 = vld [vmem:[%s6 + $0x250] sm:$0xff]
        %v995 = vld [vmem:[%s6 + $0x258] sm:$0xff]
        %v996 = vld [vmem:[%s6 + $0x260] sm:$0xff]
        %v997 = vld [vmem:[%s6 + $0x268] sm:$0xff]
        %v998 = vld [vmem:[%s6 + $0x270] sm:$0xff]
        %v999 = vld [vmem:[%s6 + $0x278] sm:$0xff]
        %v1000 = vld [vmem:[%s6 + $0x280] sm:$0xff]
        %v1001 = vld [vmem:[%s6 + $0x288] sm:$0xff]
        %v1002 = vld [vmem:[%s6 + $0x290] sm:$0xff]
        %v1003 = vld [vmem:[%s6 + $0x298] sm:$0xff]
        %v1004 = vld [vmem:[%s6 + $0x2a0] sm:$0xff]
        %v1005 = vld [vmem:[%s6 + $0x2a8] sm:$0xff]
        %v1006 = vld [vmem:[%s6 + $0x2b0] sm:$0xff]
        %v1007 = vld [vmem:[%s6 + $0x2b8] sm:$0xff]
        %v1008 = vld [vmem:[%s6 + $0x2c0] sm:$0xff]
        %v1009 = vld [vmem:[%s6 + $0x2c8] sm:$0xff]
        %v1010 = vld [vmem:[%s6 + $0x2d0] sm:$0xff]
        %v1011 = vld [vmem:[%s6 + $0x2d8] sm:$0xff]
        %v1012 = vld [vmem:[%s6 + $0x2e0] sm:$0xff]
        %v1013 = vld [vmem:[%s6 + $0x2e8] sm:$0xff]
        %v1014 = vld [vmem:[%s6 + $0x2f0] sm:$0xff]
        %v1015 = vld [vmem:[%s6 + $0x2f8] sm:$0xff]
        %v1016 = vld [vmem:[%s6 + $0x300] sm:$0xff]
        %v1017 = vld [vmem:[%s6 + $0x308] sm:$0xff]
        %v1018 = vld [vmem:[%s6 + $0x310] sm:$0xff]
        %v1019 = vld [vmem:[%s6 + $0x318] sm:$0xff]
        %v1020 = vld [vmem:[%s6 + $0x320] sm:$0xff]
        %v1021 = vld [vmem:[%s6 + $0x328] sm:$0xff]
        %v1022 = vld [vmem:[%s6 + $0x330] sm:$0xff]
        %v1023 = vld [vmem:[%s6 + $0x338] sm:$0xff]
        %v1024 = vld [vmem:[%s6 + $0x340] sm:$0xff]
        %v1025 = vld [vmem:[%s6 + $0x348] sm:$0xff]
        %v1026 = vld [vmem:[%s6 + $0x350] sm:$0xff]
        %v1027 = vld [vmem:[%s6 + $0x358] sm:$0xff]
        %v1028 = vld [vmem:[%s6 + $0x360] sm:$0xff]
        %v1029 = vld [vmem:[%s6 + $0x368] sm:$0xff]
        %v1030 = vld [vmem:[%s6 + $0x370] sm:$0xff]
        %v1031 = vld [vmem:[%s6 + $0x378] sm:$0xff]
        %v1032 = vld [vmem:[%s6 + $0x380] sm:$0xff]
        %v1033 = vld [vmem:[%s6 + $0x388] sm:$0xff]
        %v1034 = vld [vmem:[%s6 + $0x390] sm:$0xff]
        %v1035 = vld [vmem:[%s6 + $0x398] sm:$0xff]
        %v1036 = vld [vmem:[%s6 + $0x3a0] sm:$0xff]
        %v1037 = vld [vmem:[%s6 + $0x3a8] sm:$0xff]
        %v1038 = vld [vmem:[%s6 + $0x3b0] sm:$0xff]
        %v1039 = vld [vmem:[%s6 + $0x3b8] sm:$0xff]
        %v1040 = vld [vmem:[%s6 + $0x3c0] sm:$0xff]
        %v1041 = vld [vmem:[%s6 + $0x3c8] sm:$0xff]
        %v1042 = vld [vmem:[%s6 + $0x3d0] sm:$0xff]
        %v1043 = vld [vmem:[%s6 + $0x3d8] sm:$0xff]
        %v1044 = vld [vmem:[%s6 + $0x3e0] sm:$0xff]
        %v1045 = vld [vmem:[%s6 + $0x3e8] sm:$0xff]
        %v1046 = vld [vmem:[%s6 + $0x3f0] sm:$0xff]
        %v1047 = vld [vmem:[%s6 + $0x3f8] sm:$0xff]
        %1049 = vset.pattern.permute.xlu0 0
        %1050 = vperm.xlu0 %1049, %v920
        %v1051 = vpop.permute.xlu0 %1050
        %1054 = vset.pattern.permute.xlu0 0
        %1055 = vperm.xlu0 %1054, %v921
        %v1056 = vpop.permute.xlu0 %1055
        %1059 = vset.pattern.permute.xlu0 0
        %1060 = vperm.xlu0 %1059, %v922
        %v1061 = vpop.permute.xlu0 %1060
        %1064 = vset.pattern.permute.xlu0 0
        %1065 = vperm.xlu0 %1064, %v923
        %v1066 = vpop.permute.xlu0 %1065
        %1069 = vset.pattern.permute.xlu0 0
        %1070 = vperm.xlu0 %1069, %v924
        %v1071 = vpop.permute.xlu0 %1070
        %1074 = vset.pattern.permute.xlu0 0
        %1075 = vperm.xlu0 %1074, %v925
        %v1076 = vpop.permute.xlu0 %1075
        %1079 = vset.pattern.permute.xlu0 0
        %1080 = vperm.xlu0 %1079, %v926
        %v1081 = vpop.permute.xlu0 %1080
        %1084 = vset.pattern.permute.xlu0 0
        %1085 = vperm.xlu0 %1084, %v927
        %v1086 = vpop.permute.xlu0 %1085
        %1089 = vset.pattern.permute.xlu0 0
        %1090 = vperm.xlu0 %1089, %v928
        %v1091 = vpop.permute.xlu0 %1090
        %1094 = vset.pattern.permute.xlu0 0
        %1095 = vperm.xlu0 %1094, %v929
        %v1096 = vpop.permute.xlu0 %1095
        %1099 = vset.pattern.permute.xlu0 0
        %1100 = vperm.xlu0 %1099, %v930
        %v1101 = vpop.permute.xlu0 %1100
        %1104 = vset.pattern.permute.xlu0 0
        %1105 = vperm.xlu0 %1104, %v931
        %v1106 = vpop.permute.xlu0 %1105
        %1109 = vset.pattern.permute.xlu0 0
        %1110 = vperm.xlu0 %1109, %v932
        %v1111 = vpop.permute.xlu0 %1110
        %1114 = vset.pattern.permute.xlu0 0
        %1115 = vperm.xlu0 %1114, %v933
        %v1116 = vpop.permute.xlu0 %1115
        %1119 = vset.pattern.permute.xlu0 0
        %1120 = vperm.xlu0 %1119, %v934
        %v1121 = vpop.permute.xlu0 %1120
        %1124 = vset.pattern.permute.xlu0 0
        %1125 = vperm.xlu0 %1124, %v935
        %v1126 = vpop.permute.xlu0 %1125
        %1129 = vset.pattern.permute.xlu0 0
        %1130 = vperm.xlu0 %1129, %v936
        %v1131 = vpop.permute.xlu0 %1130
        %1134 = vset.pattern.permute.xlu0 0
        %1135 = vperm.xlu0 %1134, %v937
        %v1136 = vpop.permute.xlu0 %1135
        %1139 = vset.pattern.permute.xlu0 0
        %1140 = vperm.xlu0 %1139, %v938
        %v1141 = vpop.permute.xlu0 %1140
        %1144 = vset.pattern.permute.xlu0 0
        %1145 = vperm.xlu0 %1144, %v939
        %v1146 = vpop.permute.xlu0 %1145
        %1149 = vset.pattern.permute.xlu0 0
        %1150 = vperm.xlu0 %1149, %v940
        %v1151 = vpop.permute.xlu0 %1150
        %1154 = vset.pattern.permute.xlu0 0
        %1155 = vperm.xlu0 %1154, %v941
        %v1156 = vpop.permute.xlu0 %1155
        %1159 = vset.pattern.permute.xlu0 0
        %1160 = vperm.xlu0 %1159, %v942
        %v1161 = vpop.permute.xlu0 %1160
        %1164 = vset.pattern.permute.xlu0 0
        %1165 = vperm.xlu0 %1164, %v943
        %v1166 = vpop.permute.xlu0 %1165
        %1169 = vset.pattern.permute.xlu0 0
        %1170 = vperm.xlu0 %1169, %v944
        %v1171 = vpop.permute.xlu0 %1170
        %1174 = vset.pattern.permute.xlu0 0
        %1175 = vperm.xlu0 %1174, %v945
        %v1176 = vpop.permute.xlu0 %1175
        %1179 = vset.pattern.permute.xlu0 0
        %1180 = vperm.xlu0 %1179, %v946
        %v1181 = vpop.permute.xlu0 %1180
        %1184 = vset.pattern.permute.xlu0 0
        %1185 = vperm.xlu0 %1184, %v947
        %v1186 = vpop.permute.xlu0 %1185
        %1189 = vset.pattern.permute.xlu0 0
        %1190 = vperm.xlu0 %1189, %v948
        %v1191 = vpop.permute.xlu0 %1190
        %1194 = vset.pattern.permute.xlu0 0
        %1195 = vperm.xlu0 %1194, %v949
        %v1196 = vpop.permute.xlu0 %1195
        %1199 = vset.pattern.permute.xlu0 0
        %1200 = vperm.xlu0 %1199, %v950
        %v1201 = vpop.permute.xlu0 %1200
        %1204 = vset.pattern.permute.xlu0 0
        %1205 = vperm.xlu0 %1204, %v951
        %v1206 = vpop.permute.xlu0 %1205
        %1209 = vset.pattern.permute.xlu0 0
        %1210 = vperm.xlu0 %1209, %v952
        %v1211 = vpop.permute.xlu0 %1210
        %1214 = vset.pattern.permute.xlu0 0
        %1215 = vperm.xlu0 %1214, %v953
        %v1216 = vpop.permute.xlu0 %1215
        %1219 = vset.pattern.permute.xlu0 0
        %1220 = vperm.xlu0 %1219, %v954
        %v1221 = vpop.permute.xlu0 %1220
        %1224 = vset.pattern.permute.xlu0 0
        %1225 = vperm.xlu0 %1224, %v955
        %v1226 = vpop.permute.xlu0 %1225
        %1229 = vset.pattern.permute.xlu0 0
        %1230 = vperm.xlu0 %1229, %v956
        %v1231 = vpop.permute.xlu0 %1230
        %1234 = vset.pattern.permute.xlu0 0
        %1235 = vperm.xlu0 %1234, %v957
        %v1236 = vpop.permute.xlu0 %1235
        %1239 = vset.pattern.permute.xlu0 0
        %1240 = vperm.xlu0 %1239, %v958
        %v1241 = vpop.permute.xlu0 %1240
        %1244 = vset.pattern.permute.xlu0 0
        %1245 = vperm.xlu0 %1244, %v959
        %v1246 = vpop.permute.xlu0 %1245
        %1249 = vset.pattern.permute.xlu0 0
        %1250 = vperm.xlu0 %1249, %v960
        %v1251 = vpop.permute.xlu0 %1250
        %1254 = vset.pattern.permute.xlu0 0
        %1255 = vperm.xlu0 %1254, %v961
        %v1256 = vpop.permute.xlu0 %1255
        %1259 = vset.pattern.permute.xlu0 0
        %1260 = vperm.xlu0 %1259, %v962
        %v1261 = vpop.permute.xlu0 %1260
        %1264 = vset.pattern.permute.xlu0 0
        %1265 = vperm.xlu0 %1264, %v963
        %v1266 = vpop.permute.xlu0 %1265
        %1269 = vset.pattern.permute.xlu0 0
        %1270 = vperm.xlu0 %1269, %v964
        %v1271 = vpop.permute.xlu0 %1270
        %1274 = vset.pattern.permute.xlu0 0
        %1275 = vperm.xlu0 %1274, %v965
        %v1276 = vpop.permute.xlu0 %1275
        %1279 = vset.pattern.permute.xlu0 0
        %1280 = vperm.xlu0 %1279, %v966
        %v1281 = vpop.permute.xlu0 %1280
        %1284 = vset.pattern.permute.xlu0 0
        %1285 = vperm.xlu0 %1284, %v967
        %v1286 = vpop.permute.xlu0 %1285
        %1289 = vset.pattern.permute.xlu0 0
        %1290 = vperm.xlu0 %1289, %v968
        %v1291 = vpop.permute.xlu0 %1290
        %1294 = vset.pattern.permute.xlu0 0
        %1295 = vperm.xlu0 %1294, %v969
        %v1296 = vpop.permute.xlu0 %1295
        %1299 = vset.pattern.permute.xlu0 0
        %1300 = vperm.xlu0 %1299, %v970
        %v1301 = vpop.permute.xlu0 %1300
        %1304 = vset.pattern.permute.xlu0 0
        %1305 = vperm.xlu0 %1304, %v971
        %v1306 = vpop.permute.xlu0 %1305
        %1309 = vset.pattern.permute.xlu0 0
        %1310 = vperm.xlu0 %1309, %v972
        %v1311 = vpop.permute.xlu0 %1310
        %1314 = vset.pattern.permute.xlu0 0
        %1315 = vperm.xlu0 %1314, %v973
        %v1316 = vpop.permute.xlu0 %1315
        %1319 = vset.pattern.permute.xlu0 0
        %1320 = vperm.xlu0 %1319, %v974
        %v1321 = vpop.permute.xlu0 %1320
        %1324 = vset.pattern.permute.xlu0 0
        %1325 = vperm.xlu0 %1324, %v975
        %v1326 = vpop.permute.xlu0 %1325
        %1329 = vset.pattern.permute.xlu0 0
        %1330 = vperm.xlu0 %1329, %v976
        %v1331 = vpop.permute.xlu0 %1330
        %1334 = vset.pattern.permute.xlu0 0
        %1335 = vperm.xlu0 %1334, %v977
        %v1336 = vpop.permute.xlu0 %1335
        %1339 = vset.pattern.permute.xlu0 0
        %1340 = vperm.xlu0 %1339, %v978
        %v1341 = vpop.permute.xlu0 %1340
        %1344 = vset.pattern.permute.xlu0 0
        %1345 = vperm.xlu0 %1344, %v979
        %v1346 = vpop.permute.xlu0 %1345
        %1349 = vset.pattern.permute.xlu0 0
        %1350 = vperm.xlu0 %1349, %v980
        %v1351 = vpop.permute.xlu0 %1350
        %1354 = vset.pattern.permute.xlu0 0
        %1355 = vperm.xlu0 %1354, %v981
        %v1356 = vpop.permute.xlu0 %1355
        %1359 = vset.pattern.permute.xlu0 0
        %1360 = vperm.xlu0 %1359, %v982
        %v1361 = vpop.permute.xlu0 %1360
        %1364 = vset.pattern.permute.xlu0 0
        %1365 = vperm.xlu0 %1364, %v983
        %v1366 = vpop.permute.xlu0 %1365
        %1369 = vset.pattern.permute.xlu0 0
        %1370 = vperm.xlu0 %1369, %v984
        %v1371 = vpop.permute.xlu0 %1370
        %1374 = vset.pattern.permute.xlu0 0
        %1375 = vperm.xlu0 %1374, %v985
        %v1376 = vpop.permute.xlu0 %1375
        %1379 = vset.pattern.permute.xlu0 0
        %1380 = vperm.xlu0 %1379, %v986
        %v1381 = vpop.permute.xlu0 %1380
        %1384 = vset.pattern.permute.xlu0 0
        %1385 = vperm.xlu0 %1384, %v987
        %v1386 = vpop.permute.xlu0 %1385
        %1389 = vset.pattern.permute.xlu0 0
        %1390 = vperm.xlu0 %1389, %v988
        %v1391 = vpop.permute.xlu0 %1390
        %1394 = vset.pattern.permute.xlu0 0
        %1395 = vperm.xlu0 %1394, %v989
        %v1396 = vpop.permute.xlu0 %1395
        %1399 = vset.pattern.permute.xlu0 0
        %1400 = vperm.xlu0 %1399, %v990
        %v1401 = vpop.permute.xlu0 %1400
        %1404 = vset.pattern.permute.xlu0 0
        %1405 = vperm.xlu0 %1404, %v991
        %v1406 = vpop.permute.xlu0 %1405
        %1409 = vset.pattern.permute.xlu0 0
        %1410 = vperm.xlu0 %1409, %v992
        %v1411 = vpop.permute.xlu0 %1410
        %1414 = vset.pattern.permute.xlu0 0
        %1415 = vperm.xlu0 %1414, %v993
        %v1416 = vpop.permute.xlu0 %1415
        %1419 = vset.pattern.permute.xlu0 0
        %1420 = vperm.xlu0 %1419, %v994
        %v1421 = vpop.permute.xlu0 %1420
        %1424 = vset.pattern.permute.xlu0 0
        %1425 = vperm.xlu0 %1424, %v995
        %v1426 = vpop.permute.xlu0 %1425
        %1429 = vset.pattern.permute.xlu0 0
        %1430 = vperm.xlu0 %1429, %v996
        %v1431 = vpop.permute.xlu0 %1430
        %1434 = vset.pattern.permute.xlu0 0
        %1435 = vperm.xlu0 %1434, %v997
        %v1436 = vpop.permute.xlu0 %1435
        %1439 = vset.pattern.permute.xlu0 0
        %1440 = vperm.xlu0 %1439, %v998
        %v1441 = vpop.permute.xlu0 %1440
        %1444 = vset.pattern.permute.xlu0 0
        %1445 = vperm.xlu0 %1444, %v999
        %v1446 = vpop.permute.xlu0 %1445
        %1449 = vset.pattern.permute.xlu0 0
        %1450 = vperm.xlu0 %1449, %v1000
        %v1451 = vpop.permute.xlu0 %1450
        %1454 = vset.pattern.permute.xlu0 0
        %1455 = vperm.xlu0 %1454, %v1001
        %v1456 = vpop.permute.xlu0 %1455
        %1459 = vset.pattern.permute.xlu0 0
        %1460 = vperm.xlu0 %1459, %v1002
        %v1461 = vpop.permute.xlu0 %1460
        %1464 = vset.pattern.permute.xlu0 0
        %1465 = vperm.xlu0 %1464, %v1003
        %v1466 = vpop.permute.xlu0 %1465
        %1469 = vset.pattern.permute.xlu0 0
        %1470 = vperm.xlu0 %1469, %v1004
        %v1471 = vpop.permute.xlu0 %1470
        %1474 = vset.pattern.permute.xlu0 0
        %1475 = vperm.xlu0 %1474, %v1005
        %v1476 = vpop.permute.xlu0 %1475
        %1479 = vset.pattern.permute.xlu0 0
        %1480 = vperm.xlu0 %1479, %v1006
        %v1481 = vpop.permute.xlu0 %1480
        %1484 = vset.pattern.permute.xlu0 0
        %1485 = vperm.xlu0 %1484, %v1007
        %v1486 = vpop.permute.xlu0 %1485
        %1489 = vset.pattern.permute.xlu0 0
        %1490 = vperm.xlu0 %1489, %v1008
        %v1491 = vpop.permute.xlu0 %1490
        %1494 = vset.pattern.permute.xlu0 0
        %1495 = vperm.xlu0 %1494, %v1009
        %v1496 = vpop.permute.xlu0 %1495
        %1499 = vset.pattern.permute.xlu0 0
        %1500 = vperm.xlu0 %1499, %v1010
        %v1501 = vpop.permute.xlu0 %1500
        %1504 = vset.pattern.permute.xlu0 0
        %1505 = vperm.xlu0 %1504, %v1011
        %v1506 = vpop.permute.xlu0 %1505
        %1509 = vset.pattern.permute.xlu0 0
        %1510 = vperm.xlu0 %1509, %v1012
        %v1511 = vpop.permute.xlu0 %1510
        %1514 = vset.pattern.permute.xlu0 0
        %1515 = vperm.xlu0 %1514, %v1013
        %v1516 = vpop.permute.xlu0 %1515
        %1519 = vset.pattern.permute.xlu0 0
        %1520 = vperm.xlu0 %1519, %v1014
        %v1521 = vpop.permute.xlu0 %1520
        %1524 = vset.pattern.permute.xlu0 0
        %1525 = vperm.xlu0 %1524, %v1015
        %v1526 = vpop.permute.xlu0 %1525
        %1529 = vset.pattern.permute.xlu0 0
        %1530 = vperm.xlu0 %1529, %v1016
        %v1531 = vpop.permute.xlu0 %1530
        %1534 = vset.pattern.permute.xlu0 0
        %1535 = vperm.xlu0 %1534, %v1017
        %v1536 = vpop.permute.xlu0 %1535
        %1539 = vset.pattern.permute.xlu0 0
        %1540 = vperm.xlu0 %1539, %v1018
        %v1541 = vpop.permute.xlu0 %1540
        %1544 = vset.pattern.permute.xlu0 0
        %1545 = vperm.xlu0 %1544, %v1019
        %v1546 = vpop.permute.xlu0 %1545
        %1549 = vset.pattern.permute.xlu0 0
        %1550 = vperm.xlu0 %1549, %v1020
        %v1551 = vpop.permute.xlu0 %1550
        %1554 = vset.pattern.permute.xlu0 0
        %1555 = vperm.xlu0 %1554, %v1021
        %v1556 = vpop.permute.xlu0 %1555
        %1559 = vset.pattern.permute.xlu0 0
        %1560 = vperm.xlu0 %1559, %v1022
        %v1561 = vpop.permute.xlu0 %1560
        %1564 = vset.pattern.permute.xlu0 0
        %1565 = vperm.xlu0 %1564, %v1023
        %v1566 = vpop.permute.xlu0 %1565
        %1569 = vset.pattern.permute.xlu0 0
        %1570 = vperm.xlu0 %1569, %v1024
        %v1571 = vpop.permute.xlu0 %1570
        %1574 = vset.pattern.permute.xlu0 0
        %1575 = vperm.xlu0 %1574, %v1025
        %v1576 = vpop.permute.xlu0 %1575
        %1579 = vset.pattern.permute.xlu0 0
        %1580 = vperm.xlu0 %1579, %v1026
        %v1581 = vpop.permute.xlu0 %1580
        %1584 = vset.pattern.permute.xlu0 0
        %1585 = vperm.xlu0 %1584, %v1027
        %v1586 = vpop.permute.xlu0 %1585
        %1589 = vset.pattern.permute.xlu0 0
        %1590 = vperm.xlu0 %1589, %v1028
        %v1591 = vpop.permute.xlu0 %1590
        %1594 = vset.pattern.permute.xlu0 0
        %1595 = vperm.xlu0 %1594, %v1029
        %v1596 = vpop.permute.xlu0 %1595
        %1599 = vset.pattern.permute.xlu0 0
        %1600 = vperm.xlu0 %1599, %v1030
        %v1601 = vpop.permute.xlu0 %1600
        %1604 = vset.pattern.permute.xlu0 0
        %1605 = vperm.xlu0 %1604, %v1031
        %v1606 = vpop.permute.xlu0 %1605
        %1609 = vset.pattern.permute.xlu0 0
        %1610 = vperm.xlu0 %1609, %v1032
        %v1611 = vpop.permute.xlu0 %1610
        %1614 = vset.pattern.permute.xlu0 0
        %1615 = vperm.xlu0 %1614, %v1033
        %v1616 = vpop.permute.xlu0 %1615
        %1619 = vset.pattern.permute.xlu0 0
        %1620 = vperm.xlu0 %1619, %v1034
        %v1621 = vpop.permute.xlu0 %1620
        %1624 = vset.pattern.permute.xlu0 0
        %1625 = vperm.xlu0 %1624, %v1035
        %v1626 = vpop.permute.xlu0 %1625
        %1629 = vset.pattern.permute.xlu0 0
        %1630 = vperm.xlu0 %1629, %v1036
        %v1631 = vpop.permute.xlu0 %1630
        %1634 = vset.pattern.permute.xlu0 0
        %1635 = vperm.xlu0 %1634, %v1037
        %v1636 = vpop.permute.xlu0 %1635
        %1639 = vset.pattern.permute.xlu0 0
        %1640 = vperm.xlu0 %1639, %v1038
        %v1641 = vpop.permute.xlu0 %1640
        %1644 = vset.pattern.permute.xlu0 0
        %1645 = vperm.xlu0 %1644, %v1039
        %v1646 = vpop.permute.xlu0 %1645
        %1649 = vset.pattern.permute.xlu0 0
        %1650 = vperm.xlu0 %1649, %v1040
        %v1651 = vpop.permute.xlu0 %1650
        %1654 = vset.pattern.permute.xlu0 0
        %1655 = vperm.xlu0 %1654, %v1041
        %v1656 = vpop.permute.xlu0 %1655
        %1659 = vset.pattern.permute.xlu0 0
        %1660 = vperm.xlu0 %1659, %v1042
        %v1661 = vpop.permute.xlu0 %1660
        %1664 = vset.pattern.permute.xlu0 0
        %1665 = vperm.xlu0 %1664, %v1043
        %v1666 = vpop.permute.xlu0 %1665
        %1669 = vset.pattern.permute.xlu0 0
        %1670 = vperm.xlu0 %1669, %v1044
        %v1671 = vpop.permute.xlu0 %1670
        %1674 = vset.pattern.permute.xlu0 0
        %1675 = vperm.xlu0 %1674, %v1045
        %v1676 = vpop.permute.xlu0 %1675
        %1679 = vset.pattern.permute.xlu0 0
        %1680 = vperm.xlu0 %1679, %v1046
        %v1681 = vpop.permute.xlu0 %1680
        %1684 = vset.pattern.permute.xlu0 0
        %1685 = vperm.xlu0 %1684, %v1047
        %v1686 = vpop.permute.xlu0 %1685
        %v1816 = vunpack.c.l.b16 %v784
        %v1817 = vunpack.c.l.b16 %v785
        %v1818 = vunpack.c.l.b16 %v786
        %v1819 = vunpack.c.l.b16 %v787
        %v1820 = vunpack.c.l.b16 %v788
        %v1821 = vunpack.c.l.b16 %v789
        %v1822 = vunpack.c.l.b16 %v790
        %v1823 = vunpack.c.l.b16 %v791
        %v1824 = vunpack.c.l.b16 %v792
        %v1825 = vunpack.c.l.b16 %v793
        %v1826 = vunpack.c.l.b16 %v794
        %v1827 = vunpack.c.l.b16 %v795
        %v1828 = vunpack.c.l.b16 %v796
        %v1829 = vunpack.c.l.b16 %v797
        %v1830 = vunpack.c.l.b16 %v798
        %v1831 = vunpack.c.l.b16 %v799
        %v1832 = vunpack.c.l.b16 %v800
        %v1833 = vunpack.c.l.b16 %v801
        %v1834 = vunpack.c.l.b16 %v802
        %v1835 = vunpack.c.l.b16 %v803
        %v1836 = vunpack.c.l.b16 %v804
        %v1837 = vunpack.c.l.b16 %v805
        %v1838 = vunpack.c.l.b16 %v806
        %v1839 = vunpack.c.l.b16 %v807
        %v1840 = vunpack.c.l.b16 %v808
        %v1841 = vunpack.c.l.b16 %v809
        %v1842 = vunpack.c.l.b16 %v810
        %v1843 = vunpack.c.l.b16 %v811
        %v1844 = vunpack.c.l.b16 %v812
        %v1845 = vunpack.c.l.b16 %v813
        %v1846 = vunpack.c.l.b16 %v814
        %v1847 = vunpack.c.l.b16 %v815
        %v1848 = vunpack.c.l.b16 %v816
        %v1849 = vunpack.c.l.b16 %v817
        %v1850 = vunpack.c.l.b16 %v818
        %v1851 = vunpack.c.l.b16 %v819
        %v1852 = vunpack.c.l.b16 %v820
        %v1853 = vunpack.c.l.b16 %v821
        %v1854 = vunpack.c.l.b16 %v822
        %v1855 = vunpack.c.l.b16 %v823
        %v1856 = vunpack.c.l.b16 %v824
        %v1857 = vunpack.c.l.b16 %v825
        %v1858 = vunpack.c.l.b16 %v826
        %v1859 = vunpack.c.l.b16 %v827
        %v1860 = vunpack.c.l.b16 %v828
        %v1861 = vunpack.c.l.b16 %v829
        %v1862 = vunpack.c.l.b16 %v830
        %v1863 = vunpack.c.l.b16 %v831
        %v1864 = vunpack.c.l.b16 %v832
        %v1865 = vunpack.c.l.b16 %v833
        %v1866 = vunpack.c.l.b16 %v834
        %v1867 = vunpack.c.l.b16 %v835
        %v1868 = vunpack.c.l.b16 %v836
        %v1869 = vunpack.c.l.b16 %v837
        %v1870 = vunpack.c.l.b16 %v838
        %v1871 = vunpack.c.l.b16 %v839
        %v1872 = vunpack.c.l.b16 %v840
        %v1873 = vunpack.c.l.b16 %v841
        %v1874 = vunpack.c.l.b16 %v842
        %v1875 = vunpack.c.l.b16 %v843
        %v1876 = vunpack.c.l.b16 %v844
        %v1877 = vunpack.c.l.b16 %v845
        %v1878 = vunpack.c.l.b16 %v846
        %v1879 = vunpack.c.l.b16 %v847
        %v1880 = vunpack.c.l.b16 %v848
        %v1881 = vunpack.c.l.b16 %v849
        %v1882 = vunpack.c.l.b16 %v850
        %v1883 = vunpack.c.l.b16 %v851
        %v1884 = vunpack.c.l.b16 %v852
        %v1885 = vunpack.c.l.b16 %v853
        %v1886 = vunpack.c.l.b16 %v854
        %v1887 = vunpack.c.l.b16 %v855
        %v1888 = vunpack.c.l.b16 %v856
        %v1889 = vunpack.c.l.b16 %v857
        %v1890 = vunpack.c.l.b16 %v858
        %v1891 = vunpack.c.l.b16 %v859
        %v1892 = vunpack.c.l.b16 %v860
        %v1893 = vunpack.c.l.b16 %v861
        %v1894 = vunpack.c.l.b16 %v862
        %v1895 = vunpack.c.l.b16 %v863
        %v1896 = vunpack.c.l.b16 %v864
        %v1897 = vunpack.c.l.b16 %v865
        %v1898 = vunpack.c.l.b16 %v866
        %v1899 = vunpack.c.l.b16 %v867
        %v1900 = vunpack.c.l.b16 %v868
        %v1901 = vunpack.c.l.b16 %v869
        %v1902 = vunpack.c.l.b16 %v870
        %v1903 = vunpack.c.l.b16 %v871
        %v1904 = vunpack.c.l.b16 %v872
        %v1905 = vunpack.c.l.b16 %v873
        %v1906 = vunpack.c.l.b16 %v874
        %v1907 = vunpack.c.l.b16 %v875
        %v1908 = vunpack.c.l.b16 %v876
        %v1909 = vunpack.c.l.b16 %v877
        %v1910 = vunpack.c.l.b16 %v878
        %v1911 = vunpack.c.l.b16 %v879
        %v1912 = vunpack.c.l.b16 %v880
        %v1913 = vunpack.c.l.b16 %v881
        %v1914 = vunpack.c.l.b16 %v882
        %v1915 = vunpack.c.l.b16 %v883
        %v1916 = vunpack.c.l.b16 %v884
        %v1917 = vunpack.c.l.b16 %v885
        %v1918 = vunpack.c.l.b16 %v886
        %v1919 = vunpack.c.l.b16 %v887
        %v1920 = vunpack.c.l.b16 %v888
        %v1921 = vunpack.c.l.b16 %v889
        %v1922 = vunpack.c.l.b16 %v890
        %v1923 = vunpack.c.l.b16 %v891
        %v1924 = vunpack.c.l.b16 %v892
        %v1925 = vunpack.c.l.b16 %v893
        %v1926 = vunpack.c.l.b16 %v894
        %v1927 = vunpack.c.l.b16 %v895
        %v1928 = vunpack.c.l.b16 %v896
        %v1929 = vunpack.c.l.b16 %v897
        %v1930 = vunpack.c.l.b16 %v898
        %v1931 = vunpack.c.l.b16 %v899
        %v1932 = vunpack.c.l.b16 %v900
        %v1933 = vunpack.c.l.b16 %v901
        %v1934 = vunpack.c.l.b16 %v902
        %v1935 = vunpack.c.l.b16 %v903
        %v1936 = vunpack.c.l.b16 %v904
        %v1937 = vunpack.c.l.b16 %v905
        %v1938 = vunpack.c.l.b16 %v906
        %v1939 = vunpack.c.l.b16 %v907
        %v1940 = vunpack.c.l.b16 %v908
        %v1941 = vunpack.c.l.b16 %v909
        %v1942 = vunpack.c.l.b16 %v910
        %v1943 = vunpack.c.l.b16 %v911
        %v1944 = vpack.c.b16 %v1817, %v1816
        %v1945 = vpack.c.b16 %v1819, %v1818
        %v1946 = vpack.c.b16 %v1821, %v1820
        %v1947 = vpack.c.b16 %v1823, %v1822
        %v1948 = vpack.c.b16 %v1825, %v1824
        %v1949 = vpack.c.b16 %v1827, %v1826
        %v1950 = vpack.c.b16 %v1829, %v1828
        %v1951 = vpack.c.b16 %v1831, %v1830
        %v1952 = vpack.c.b16 %v1833, %v1832
        %v1953 = vpack.c.b16 %v1835, %v1834
        %v1954 = vpack.c.b16 %v1837, %v1836
        %v1955 = vpack.c.b16 %v1839, %v1838
        %v1956 = vpack.c.b16 %v1841, %v1840
        %v1957 = vpack.c.b16 %v1843, %v1842
        %v1958 = vpack.c.b16 %v1845, %v1844
        %v1959 = vpack.c.b16 %v1847, %v1846
        %v1960 = vpack.c.b16 %v1849, %v1848
        %v1961 = vpack.c.b16 %v1851, %v1850
        %v1962 = vpack.c.b16 %v1853, %v1852
        %v1963 = vpack.c.b16 %v1855, %v1854
        %v1964 = vpack.c.b16 %v1857, %v1856
        %v1965 = vpack.c.b16 %v1859, %v1858
        %v1966 = vpack.c.b16 %v1861, %v1860
        %v1967 = vpack.c.b16 %v1863, %v1862
        %v1968 = vpack.c.b16 %v1865, %v1864
        %v1969 = vpack.c.b16 %v1867, %v1866
        %v1970 = vpack.c.b16 %v1869, %v1868
        %v1971 = vpack.c.b16 %v1871, %v1870
        %v1972 = vpack.c.b16 %v1873, %v1872
        %v1973 = vpack.c.b16 %v1875, %v1874
        %v1974 = vpack.c.b16 %v1877, %v1876
        %v1975 = vpack.c.b16 %v1879, %v1878
        %v1976 = vpack.c.b16 %v1881, %v1880
        %v1977 = vpack.c.b16 %v1883, %v1882
        %v1978 = vpack.c.b16 %v1885, %v1884
        %v1979 = vpack.c.b16 %v1887, %v1886
        %v1980 = vpack.c.b16 %v1889, %v1888
        %v1981 = vpack.c.b16 %v1891, %v1890
        %v1982 = vpack.c.b16 %v1893, %v1892
        %v1983 = vpack.c.b16 %v1895, %v1894
        %v1984 = vpack.c.b16 %v1897, %v1896
        %v1985 = vpack.c.b16 %v1899, %v1898
        %v1986 = vpack.c.b16 %v1901, %v1900
        %v1987 = vpack.c.b16 %v1903, %v1902
        %v1988 = vpack.c.b16 %v1905, %v1904
        %v1989 = vpack.c.b16 %v1907, %v1906
        %v1990 = vpack.c.b16 %v1909, %v1908
        %v1991 = vpack.c.b16 %v1911, %v1910
        %v1992 = vpack.c.b16 %v1913, %v1912
        %v1993 = vpack.c.b16 %v1915, %v1914
        %v1994 = vpack.c.b16 %v1917, %v1916
        %v1995 = vpack.c.b16 %v1919, %v1918
        %v1996 = vpack.c.b16 %v1921, %v1920
        %v1997 = vpack.c.b16 %v1923, %v1922
        %v1998 = vpack.c.b16 %v1925, %v1924
        %v1999 = vpack.c.b16 %v1927, %v1926
        %v2000 = vpack.c.b16 %v1929, %v1928
        %v2001 = vpack.c.b16 %v1931, %v1930
        %v2002 = vpack.c.b16 %v1933, %v1932
        %v2003 = vpack.c.b16 %v1935, %v1934
        %v2004 = vpack.c.b16 %v1937, %v1936
        %v2005 = vpack.c.b16 %v1939, %v1938
        %v2006 = vpack.c.b16 %v1941, %v1940
        %v2007 = vpack.c.b16 %v1943, %v1942
        %2072 = vmatpush.bf16.msra.mxu0 %v919
        %2073 = vmatpush.bf16.msra.mxu0 %v918
        %2074 = vmatpush.bf16.msra.mxu0 %v917
        %2075 = vmatpush.bf16.msra.mxu0 %v916
        %2076 = vmatpush.bf16.msra.mxu0 %v915
        %2077 = vmatpush.bf16.msra.mxu0 %v914
        %2078 = vmatpush.bf16.msra.mxu0 %v913
        %2079 = vmatpush.bf16.msra.mxu0 %v912
        %2080 = vmatmul.bf16.gmra.mxu0 %v1944
        %v2081 = vpop.f32.mrf.mxu0
        %v2082 = vadd.f32 %v1051, %v2081
        %v2083 = vpop.f32.mrf.mxu0
        %v2084 = vadd.f32 %v1056, %v2083
        %2085 = vmatmul.bf16.gmra.mxu0 %v1945
        %v2086 = vpop.f32.mrf.mxu0
        %v2087 = vadd.f32 %v1061, %v2086
        %v2088 = vpop.f32.mrf.mxu0
        %v2089 = vadd.f32 %v1066, %v2088
        %2090 = vmatmul.bf16.gmra.mxu0 %v1946
        %v2091 = vpop.f32.mrf.mxu0
        %v2092 = vadd.f32 %v1071, %v2091
        %v2093 = vpop.f32.mrf.mxu0
        %v2094 = vadd.f32 %v1076, %v2093
        %2095 = vmatmul.bf16.gmra.mxu0 %v1947
        %v2096 = vpop.f32.mrf.mxu0
        %v2097 = vadd.f32 %v1081, %v2096
        %v2098 = vpop.f32.mrf.mxu0
        %v2099 = vadd.f32 %v1086, %v2098
        %2100 = vmatmul.bf16.gmra.mxu0 %v1948
        %v2101 = vpop.f32.mrf.mxu0
        %v2102 = vadd.f32 %v1091, %v2101
        %v2103 = vpop.f32.mrf.mxu0
        %v2104 = vadd.f32 %v1096, %v2103
        %2105 = vmatmul.bf16.gmra.mxu0 %v1949
        %v2106 = vpop.f32.mrf.mxu0
        %v2107 = vadd.f32 %v1101, %v2106
        %v2108 = vpop.f32.mrf.mxu0
        %v2109 = vadd.f32 %v1106, %v2108
        %2110 = vmatmul.bf16.gmra.mxu0 %v1950
        %v2111 = vpop.f32.mrf.mxu0
        %v2112 = vadd.f32 %v1111, %v2111
        %v2113 = vpop.f32.mrf.mxu0
        %v2114 = vadd.f32 %v1116, %v2113
        %2115 = vmatmul.bf16.gmra.mxu0 %v1951
        %v2116 = vpop.f32.mrf.mxu0
        %v2117 = vadd.f32 %v1121, %v2116
        %v2118 = vpop.f32.mrf.mxu0
        %v2119 = vadd.f32 %v1126, %v2118
        %2120 = vmatmul.bf16.gmra.mxu0 %v1952
        %v2121 = vpop.f32.mrf.mxu0
        %v2122 = vadd.f32 %v1131, %v2121
        %v2123 = vpop.f32.mrf.mxu0
        %v2124 = vadd.f32 %v1136, %v2123
        %2125 = vmatmul.bf16.gmra.mxu0 %v1953
        %v2126 = vpop.f32.mrf.mxu0
        %v2127 = vadd.f32 %v1141, %v2126
        %v2128 = vpop.f32.mrf.mxu0
        %v2129 = vadd.f32 %v1146, %v2128
        %2130 = vmatmul.bf16.gmra.mxu0 %v1954
        %v2131 = vpop.f32.mrf.mxu0
        %v2132 = vadd.f32 %v1151, %v2131
        %v2133 = vpop.f32.mrf.mxu0
        %v2134 = vadd.f32 %v1156, %v2133
        %2135 = vmatmul.bf16.gmra.mxu0 %v1955
        %v2136 = vpop.f32.mrf.mxu0
        %v2137 = vadd.f32 %v1161, %v2136
        %v2138 = vpop.f32.mrf.mxu0
        %v2139 = vadd.f32 %v1166, %v2138
        %2140 = vmatmul.bf16.gmra.mxu0 %v1956
        %v2141 = vpop.f32.mrf.mxu0
        %v2142 = vadd.f32 %v1171, %v2141
        %v2143 = vpop.f32.mrf.mxu0
        %v2144 = vadd.f32 %v1176, %v2143
        %2145 = vmatmul.bf16.gmra.mxu0 %v1957
        %v2146 = vpop.f32.mrf.mxu0
        %v2147 = vadd.f32 %v1181, %v2146
        %v2148 = vpop.f32.mrf.mxu0
        %v2149 = vadd.f32 %v1186, %v2148
        %2150 = vmatmul.bf16.gmra.mxu0 %v1958
        %v2151 = vpop.f32.mrf.mxu0
        %v2152 = vadd.f32 %v1191, %v2151
        %v2153 = vpop.f32.mrf.mxu0
        %v2154 = vadd.f32 %v1196, %v2153
        %2155 = vmatmul.bf16.gmra.mxu0 %v1959
        %v2156 = vpop.f32.mrf.mxu0
        %v2157 = vadd.f32 %v1201, %v2156
        %v2158 = vpop.f32.mrf.mxu0
        %v2159 = vadd.f32 %v1206, %v2158
        %2160 = vmatmul.bf16.gmra.mxu0 %v1960
        %v2161 = vpop.f32.mrf.mxu0
        %v2162 = vadd.f32 %v1211, %v2161
        %v2163 = vpop.f32.mrf.mxu0
        %v2164 = vadd.f32 %v1216, %v2163
        %2165 = vmatmul.bf16.gmra.mxu0 %v1961
        %v2166 = vpop.f32.mrf.mxu0
        %v2167 = vadd.f32 %v1221, %v2166
        %v2168 = vpop.f32.mrf.mxu0
        %v2169 = vadd.f32 %v1226, %v2168
        %2170 = vmatmul.bf16.gmra.mxu0 %v1962
        %v2171 = vpop.f32.mrf.mxu0
        %v2172 = vadd.f32 %v1231, %v2171
        %v2173 = vpop.f32.mrf.mxu0
        %v2174 = vadd.f32 %v1236, %v2173
        %2175 = vmatmul.bf16.gmra.mxu0 %v1963
        %v2176 = vpop.f32.mrf.mxu0
        %v2177 = vadd.f32 %v1241, %v2176
        %v2178 = vpop.f32.mrf.mxu0
        %v2179 = vadd.f32 %v1246, %v2178
        %2180 = vmatmul.bf16.gmra.mxu0 %v1964
        %v2181 = vpop.f32.mrf.mxu0
        %v2182 = vadd.f32 %v1251, %v2181
        %v2183 = vpop.f32.mrf.mxu0
        %v2184 = vadd.f32 %v1256, %v2183
        %2185 = vmatmul.bf16.gmra.mxu0 %v1965
        %v2186 = vpop.f32.mrf.mxu0
        %v2187 = vadd.f32 %v1261, %v2186
        %v2188 = vpop.f32.mrf.mxu0
        %v2189 = vadd.f32 %v1266, %v2188
        %2190 = vmatmul.bf16.gmra.mxu0 %v1966
        %v2191 = vpop.f32.mrf.mxu0
        %v2192 = vadd.f32 %v1271, %v2191
        %v2193 = vpop.f32.mrf.mxu0
        %v2194 = vadd.f32 %v1276, %v2193
        %2195 = vmatmul.bf16.gmra.mxu0 %v1967
        %v2196 = vpop.f32.mrf.mxu0
        %v2197 = vadd.f32 %v1281, %v2196
        %v2198 = vpop.f32.mrf.mxu0
        %v2199 = vadd.f32 %v1286, %v2198
        %2200 = vmatmul.bf16.gmra.mxu0 %v1968
        %v2201 = vpop.f32.mrf.mxu0
        %v2202 = vadd.f32 %v1291, %v2201
        %v2203 = vpop.f32.mrf.mxu0
        %v2204 = vadd.f32 %v1296, %v2203
        %2205 = vmatmul.bf16.gmra.mxu0 %v1969
        %v2206 = vpop.f32.mrf.mxu0
        %v2207 = vadd.f32 %v1301, %v2206
        %v2208 = vpop.f32.mrf.mxu0
        %v2209 = vadd.f32 %v1306, %v2208
        %2210 = vmatmul.bf16.gmra.mxu0 %v1970
        %v2211 = vpop.f32.mrf.mxu0
        %v2212 = vadd.f32 %v1311, %v2211
        %v2213 = vpop.f32.mrf.mxu0
        %v2214 = vadd.f32 %v1316, %v2213
        %2215 = vmatmul.bf16.gmra.mxu0 %v1971
        %v2216 = vpop.f32.mrf.mxu0
        %v2217 = vadd.f32 %v1321, %v2216
        %v2218 = vpop.f32.mrf.mxu0
        %v2219 = vadd.f32 %v1326, %v2218
        %2220 = vmatmul.bf16.gmra.mxu0 %v1972
        %v2221 = vpop.f32.mrf.mxu0
        %v2222 = vadd.f32 %v1331, %v2221
        %v2223 = vpop.f32.mrf.mxu0
        %v2224 = vadd.f32 %v1336, %v2223
        %2225 = vmatmul.bf16.gmra.mxu0 %v1973
        %v2226 = vpop.f32.mrf.mxu0
        %v2227 = vadd.f32 %v1341, %v2226
        %v2228 = vpop.f32.mrf.mxu0
        %v2229 = vadd.f32 %v1346, %v2228
        %2230 = vmatmul.bf16.gmra.mxu0 %v1974
        %v2231 = vpop.f32.mrf.mxu0
        %v2232 = vadd.f32 %v1351, %v2231
        %v2233 = vpop.f32.mrf.mxu0
        %v2234 = vadd.f32 %v1356, %v2233
        %2235 = vmatmul.bf16.gmra.mxu0 %v1975
        %v2236 = vpop.f32.mrf.mxu0
        %v2237 = vadd.f32 %v1361, %v2236
        %v2238 = vpop.f32.mrf.mxu0
        %v2239 = vadd.f32 %v1366, %v2238
        %2240 = vmatmul.bf16.gmra.mxu0 %v1976
        %v2241 = vpop.f32.mrf.mxu0
        %v2242 = vadd.f32 %v1371, %v2241
        %v2243 = vpop.f32.mrf.mxu0
        %v2244 = vadd.f32 %v1376, %v2243
        %2245 = vmatmul.bf16.gmra.mxu0 %v1977
        %v2246 = vpop.f32.mrf.mxu0
        %v2247 = vadd.f32 %v1381, %v2246
        %v2248 = vpop.f32.mrf.mxu0
        %v2249 = vadd.f32 %v1386, %v2248
        %2250 = vmatmul.bf16.gmra.mxu0 %v1978
        %v2251 = vpop.f32.mrf.mxu0
        %v2252 = vadd.f32 %v1391, %v2251
        %v2253 = vpop.f32.mrf.mxu0
        %v2254 = vadd.f32 %v1396, %v2253
        %2255 = vmatmul.bf16.gmra.mxu0 %v1979
        %v2256 = vpop.f32.mrf.mxu0
        %v2257 = vadd.f32 %v1401, %v2256
        %v2258 = vpop.f32.mrf.mxu0
        %v2259 = vadd.f32 %v1406, %v2258
        %2260 = vmatmul.bf16.gmra.mxu0 %v1980
        %v2261 = vpop.f32.mrf.mxu0
        %v2262 = vadd.f32 %v1411, %v2261
        %v2263 = vpop.f32.mrf.mxu0
        %v2264 = vadd.f32 %v1416, %v2263
        %2265 = vmatmul.bf16.gmra.mxu0 %v1981
        %v2266 = vpop.f32.mrf.mxu0
        %v2267 = vadd.f32 %v1421, %v2266
        %v2268 = vpop.f32.mrf.mxu0
        %v2269 = vadd.f32 %v1426, %v2268
        %2270 = vmatmul.bf16.gmra.mxu0 %v1982
        %v2271 = vpop.f32.mrf.mxu0
        %v2272 = vadd.f32 %v1431, %v2271
        %v2273 = vpop.f32.mrf.mxu0
        %v2274 = vadd.f32 %v1436, %v2273
        %2275 = vmatmul.bf16.gmra.mxu0 %v1983
        %v2276 = vpop.f32.mrf.mxu0
        %v2277 = vadd.f32 %v1441, %v2276
        %v2278 = vpop.f32.mrf.mxu0
        %v2279 = vadd.f32 %v1446, %v2278
        %2280 = vmatmul.bf16.gmra.mxu0 %v1984
        %v2281 = vpop.f32.mrf.mxu0
        %v2282 = vadd.f32 %v1451, %v2281
        %v2283 = vpop.f32.mrf.mxu0
        %v2284 = vadd.f32 %v1456, %v2283
        %2285 = vmatmul.bf16.gmra.mxu0 %v1985
        %v2286 = vpop.f32.mrf.mxu0
        %v2287 = vadd.f32 %v1461, %v2286
        %v2288 = vpop.f32.mrf.mxu0
        %v2289 = vadd.f32 %v1466, %v2288
        %2290 = vmatmul.bf16.gmra.mxu0 %v1986
        %v2291 = vpop.f32.mrf.mxu0
        %v2292 = vadd.f32 %v1471, %v2291
        %v2293 = vpop.f32.mrf.mxu0
        %v2294 = vadd.f32 %v1476, %v2293
        %2295 = vmatmul.bf16.gmra.mxu0 %v1987
        %v2296 = vpop.f32.mrf.mxu0
        %v2297 = vadd.f32 %v1481, %v2296
        %v2298 = vpop.f32.mrf.mxu0
        %v2299 = vadd.f32 %v1486, %v2298
        %2300 = vmatmul.bf16.gmra.mxu0 %v1988
        %v2301 = vpop.f32.mrf.mxu0
        %v2302 = vadd.f32 %v1491, %v2301
        %v2303 = vpop.f32.mrf.mxu0
        %v2304 = vadd.f32 %v1496, %v2303
        %2305 = vmatmul.bf16.gmra.mxu0 %v1989
        %v2306 = vpop.f32.mrf.mxu0
        %v2307 = vadd.f32 %v1501, %v2306
        %v2308 = vpop.f32.mrf.mxu0
        %v2309 = vadd.f32 %v1506, %v2308
        %2310 = vmatmul.bf16.gmra.mxu0 %v1990
        %v2311 = vpop.f32.mrf.mxu0
        %v2312 = vadd.f32 %v1511, %v2311
        %v2313 = vpop.f32.mrf.mxu0
        %v2314 = vadd.f32 %v1516, %v2313
        %2315 = vmatmul.bf16.gmra.mxu0 %v1991
        %v2316 = vpop.f32.mrf.mxu0
        %v2317 = vadd.f32 %v1521, %v2316
        %v2318 = vpop.f32.mrf.mxu0
        %v2319 = vadd.f32 %v1526, %v2318
        %2320 = vmatmul.bf16.gmra.mxu0 %v1992
        %v2321 = vpop.f32.mrf.mxu0
        %v2322 = vadd.f32 %v1531, %v2321
        %v2323 = vpop.f32.mrf.mxu0
        %v2324 = vadd.f32 %v1536, %v2323
        %2325 = vmatmul.bf16.gmra.mxu0 %v1993
        %v2326 = vpop.f32.mrf.mxu0
        %v2327 = vadd.f32 %v1541, %v2326
        %v2328 = vpop.f32.mrf.mxu0
        %v2329 = vadd.f32 %v1546, %v2328
        %2330 = vmatmul.bf16.gmra.mxu0 %v1994
        %v2331 = vpop.f32.mrf.mxu0
        %v2332 = vadd.f32 %v1551, %v2331
        %v2333 = vpop.f32.mrf.mxu0
        %v2334 = vadd.f32 %v1556, %v2333
        %2335 = vmatmul.bf16.gmra.mxu0 %v1995
        %v2336 = vpop.f32.mrf.mxu0
        %v2337 = vadd.f32 %v1561, %v2336
        %v2338 = vpop.f32.mrf.mxu0
        %v2339 = vadd.f32 %v1566, %v2338
        %2340 = vmatmul.bf16.gmra.mxu0 %v1996
        %v2341 = vpop.f32.mrf.mxu0
        %v2342 = vadd.f32 %v1571, %v2341
        %v2343 = vpop.f32.mrf.mxu0
        %v2344 = vadd.f32 %v1576, %v2343
        %2345 = vmatmul.bf16.gmra.mxu0 %v1997
        %v2346 = vpop.f32.mrf.mxu0
        %v2347 = vadd.f32 %v1581, %v2346
        %v2348 = vpop.f32.mrf.mxu0
        %v2349 = vadd.f32 %v1586, %v2348
        %2350 = vmatmul.bf16.gmra.mxu0 %v1998
        %v2351 = vpop.f32.mrf.mxu0
        %v2352 = vadd.f32 %v1591, %v2351
        %v2353 = vpop.f32.mrf.mxu0
        %v2354 = vadd.f32 %v1596, %v2353
        %2355 = vmatmul.bf16.gmra.mxu0 %v1999
        %v2356 = vpop.f32.mrf.mxu0
        %v2357 = vadd.f32 %v1601, %v2356
        %v2358 = vpop.f32.mrf.mxu0
        %v2359 = vadd.f32 %v1606, %v2358
        %2360 = vmatmul.bf16.gmra.mxu0 %v2000
        %v2361 = vpop.f32.mrf.mxu0
        %v2362 = vadd.f32 %v1611, %v2361
        %v2363 = vpop.f32.mrf.mxu0
        %v2364 = vadd.f32 %v1616, %v2363
        %2365 = vmatmul.bf16.gmra.mxu0 %v2001
        %v2366 = vpop.f32.mrf.mxu0
        %v2367 = vadd.f32 %v1621, %v2366
        %v2368 = vpop.f32.mrf.mxu0
        %v2369 = vadd.f32 %v1626, %v2368
        %2370 = vmatmul.bf16.gmra.mxu0 %v2002
        %v2371 = vpop.f32.mrf.mxu0
        %v2372 = vadd.f32 %v1631, %v2371
        %v2373 = vpop.f32.mrf.mxu0
        %v2374 = vadd.f32 %v1636, %v2373
        %2375 = vmatmul.bf16.gmra.mxu0 %v2003
        %v2376 = vpop.f32.mrf.mxu0
        %v2377 = vadd.f32 %v1641, %v2376
        %v2378 = vpop.f32.mrf.mxu0
        %v2379 = vadd.f32 %v1646, %v2378
        %2380 = vmatmul.bf16.gmra.mxu0 %v2004
        %v2381 = vpop.f32.mrf.mxu0
        %v2382 = vadd.f32 %v1651, %v2381
        %v2383 = vpop.f32.mrf.mxu0
        %v2384 = vadd.f32 %v1656, %v2383
        %2385 = vmatmul.bf16.gmra.mxu0 %v2005
        %v2386 = vpop.f32.mrf.mxu0
        %v2387 = vadd.f32 %v1661, %v2386
        %v2388 = vpop.f32.mrf.mxu0
        %v2389 = vadd.f32 %v1666, %v2388
        %2390 = vmatmul.bf16.gmra.mxu0 %v2006
        %v2391 = vpop.f32.mrf.mxu0
        %v2392 = vadd.f32 %v1671, %v2391
        %v2393 = vpop.f32.mrf.mxu0
        %v2394 = vadd.f32 %v1676, %v2393
        %2395 = vmatmul.bf16.gmra.mxu0 %v2007
        %v2396 = vpop.f32.mrf.mxu0
        %v2397 = vadd.f32 %v1681, %v2396
        %v2398 = vpop.f32.mrf.mxu0
        %v2399 = vadd.f32 %v1686, %v2398
        %2400 = vdwg.mxu0
        %v2401 = vmax.f32 %v2082, 0.0
        %v2402 = vmax.f32 %v2084, 0.0
        %v2403 = vmax.f32 %v2087, 0.0
        %v2404 = vmax.f32 %v2089, 0.0
        %v2405 = vmax.f32 %v2092, 0.0
        %v2406 = vmax.f32 %v2094, 0.0
        %v2407 = vmax.f32 %v2097, 0.0
        %v2408 = vmax.f32 %v2099, 0.0
        %v2409 = vmax.f32 %v2102, 0.0
        %v2410 = vmax.f32 %v2104, 0.0
        %v2411 = vmax.f32 %v2107, 0.0
        %v2412 = vmax.f32 %v2109, 0.0
        %v2413 = vmax.f32 %v2112, 0.0
        %v2414 = vmax.f32 %v2114, 0.0
        %v2415 = vmax.f32 %v2117, 0.0
        %v2416 = vmax.f32 %v2119, 0.0
        %v2417 = vmax.f32 %v2122, 0.0
        %v2418 = vmax.f32 %v2124, 0.0
        %v2419 = vmax.f32 %v2127, 0.0
        %v2420 = vmax.f32 %v2129, 0.0
        %v2421 = vmax.f32 %v2132, 0.0
        %v2422 = vmax.f32 %v2134, 0.0
        %v2423 = vmax.f32 %v2137, 0.0
        %v2424 = vmax.f32 %v2139, 0.0
        %v2425 = vmax.f32 %v2142, 0.0
        %v2426 = vmax.f32 %v2144, 0.0
        %v2427 = vmax.f32 %v2147, 0.0
        %v2428 = vmax.f32 %v2149, 0.0
        %v2429 = vmax.f32 %v2152, 0.0
        %v2430 = vmax.f32 %v2154, 0.0
        %v2431 = vmax.f32 %v2157, 0.0
        %v2432 = vmax.f32 %v2159, 0.0
        %v2433 = vmax.f32 %v2162, 0.0
        %v2434 = vmax.f32 %v2164, 0.0
        %v2435 = vmax.f32 %v2167, 0.0
        %v2436 = vmax.f32 %v2169, 0.0
        %v2437 = vmax.f32 %v2172, 0.0
        %v2438 = vmax.f32 %v2174, 0.0
        %v2439 = vmax.f32 %v2177, 0.0
        %v2440 = vmax.f32 %v2179, 0.0
        %v2441 = vmax.f32 %v2182, 0.0
        %v2442 = vmax.f32 %v2184, 0.0
        %v2443 = vmax.f32 %v2187, 0.0
        %v2444 = vmax.f32 %v2189, 0.0
        %v2445 = vmax.f32 %v2192, 0.0
        %v2446 = vmax.f32 %v2194, 0.0
        %v2447 = vmax.f32 %v2197, 0.0
        %v2448 = vmax.f32 %v2199, 0.0
        %v2449 = vmax.f32 %v2202, 0.0
        %v2450 = vmax.f32 %v2204, 0.0
        %v2451 = vmax.f32 %v2207, 0.0
        %v2452 = vmax.f32 %v2209, 0.0
        %v2453 = vmax.f32 %v2212, 0.0
        %v2454 = vmax.f32 %v2214, 0.0
        %v2455 = vmax.f32 %v2217, 0.0
        %v2456 = vmax.f32 %v2219, 0.0
        %v2457 = vmax.f32 %v2222, 0.0
        %v2458 = vmax.f32 %v2224, 0.0
        %v2459 = vmax.f32 %v2227, 0.0
        %v2460 = vmax.f32 %v2229, 0.0
        %v2461 = vmax.f32 %v2232, 0.0
        %v2462 = vmax.f32 %v2234, 0.0
        %v2463 = vmax.f32 %v2237, 0.0
        %v2464 = vmax.f32 %v2239, 0.0
        %v2465 = vmax.f32 %v2242, 0.0
        %v2466 = vmax.f32 %v2244, 0.0
        %v2467 = vmax.f32 %v2247, 0.0
        %v2468 = vmax.f32 %v2249, 0.0
        %v2469 = vmax.f32 %v2252, 0.0
        %v2470 = vmax.f32 %v2254, 0.0
        %v2471 = vmax.f32 %v2257, 0.0
        %v2472 = vmax.f32 %v2259, 0.0
        %v2473 = vmax.f32 %v2262, 0.0
        %v2474 = vmax.f32 %v2264, 0.0
        %v2475 = vmax.f32 %v2267, 0.0
        %v2476 = vmax.f32 %v2269, 0.0
        %v2477 = vmax.f32 %v2272, 0.0
        %v2478 = vmax.f32 %v2274, 0.0
        %v2479 = vmax.f32 %v2277, 0.0
        %v2480 = vmax.f32 %v2279, 0.0
        %v2481 = vmax.f32 %v2282, 0.0
        %v2482 = vmax.f32 %v2284, 0.0
        %v2483 = vmax.f32 %v2287, 0.0
        %v2484 = vmax.f32 %v2289, 0.0
        %v2485 = vmax.f32 %v2292, 0.0
        %v2486 = vmax.f32 %v2294, 0.0
        %v2487 = vmax.f32 %v2297, 0.0
        %v2488 = vmax.f32 %v2299, 0.0
        %v2489 = vmax.f32 %v2302, 0.0
        %v2490 = vmax.f32 %v2304, 0.0
        %v2491 = vmax.f32 %v2307, 0.0
        %v2492 = vmax.f32 %v2309, 0.0
        %v2493 = vmax.f32 %v2312, 0.0
        %v2494 = vmax.f32 %v2314, 0.0
        %v2495 = vmax.f32 %v2317, 0.0
        %v2496 = vmax.f32 %v2319, 0.0
        %v2497 = vmax.f32 %v2322, 0.0
        %v2498 = vmax.f32 %v2324, 0.0
        %v2499 = vmax.f32 %v2327, 0.0
        %v2500 = vmax.f32 %v2329, 0.0
        %v2501 = vmax.f32 %v2332, 0.0
        %v2502 = vmax.f32 %v2334, 0.0
        %v2503 = vmax.f32 %v2337, 0.0
        %v2504 = vmax.f32 %v2339, 0.0
        %v2505 = vmax.f32 %v2342, 0.0
        %v2506 = vmax.f32 %v2344, 0.0
        %v2507 = vmax.f32 %v2347, 0.0
        %v2508 = vmax.f32 %v2349, 0.0
        %v2509 = vmax.f32 %v2352, 0.0
        %v2510 = vmax.f32 %v2354, 0.0
        %v2511 = vmax.f32 %v2357, 0.0
        %v2512 = vmax.f32 %v2359, 0.0
        %v2513 = vmax.f32 %v2362, 0.0
        %v2514 = vmax.f32 %v2364, 0.0
        %v2515 = vmax.f32 %v2367, 0.0
        %v2516 = vmax.f32 %v2369, 0.0
        %v2517 = vmax.f32 %v2372, 0.0
        %v2518 = vmax.f32 %v2374, 0.0
        %v2519 = vmax.f32 %v2377, 0.0
        %v2520 = vmax.f32 %v2379, 0.0
        %v2521 = vmax.f32 %v2382, 0.0
        %v2522 = vmax.f32 %v2384, 0.0
        %v2523 = vmax.f32 %v2387, 0.0
        %v2524 = vmax.f32 %v2389, 0.0
        %v2525 = vmax.f32 %v2392, 0.0
        %v2526 = vmax.f32 %v2394, 0.0
        %v2527 = vmax.f32 %v2397, 0.0
        %v2528 = vmax.f32 %v2399, 0.0
        %p2529 = scmp.eq.s32.totalorder %s24, 0
        // Predicated region
        $region53: #{pointnetfeat_forward.2} parent=47 // pred_check
          %p2530 = pneg %p2529
        $region54: #{pointnetfeat_forward.2} parent=47 // pred_check_branch
          %2532 = sbr.rel (%p2530) target = $region56
        $region55: #{pointnetfeat_forward.2} parent=47 // pred_region
          %2533 = vst [vmem:[#allocation2] sm:$0xff] -inf
          %2534 = vst [vmem:[#allocation2 + $0x8] sm:$0xff] -inf
          %2535 = vst [vmem:[#allocation2 + $0x10] sm:$0xff] -inf
          %2536 = vst [vmem:[#allocation2 + $0x18] sm:$0xff] -inf
          %2537 = vst [vmem:[#allocation2 + $0x20] sm:$0xff] -inf
          %2538 = vst [vmem:[#allocation2 + $0x28] sm:$0xff] -inf
          %2539 = vst [vmem:[#allocation2 + $0x30] sm:$0xff] -inf
          %2540 = vst [vmem:[#allocation2 + $0x38] sm:$0xff] -inf
          %2541 = vst [vmem:[#allocation2 + $0x40] sm:$0xff] -inf
          %2542 = vst [vmem:[#allocation2 + $0x48] sm:$0xff] -inf
          %2543 = vst [vmem:[#allocation2 + $0x50] sm:$0xff] -inf
          %2544 = vst [vmem:[#allocation2 + $0x58] sm:$0xff] -inf
          %2545 = vst [vmem:[#allocation2 + $0x60] sm:$0xff] -inf
          %2546 = vst [vmem:[#allocation2 + $0x68] sm:$0xff] -inf
          %2547 = vst [vmem:[#allocation2 + $0x70] sm:$0xff] -inf
          %2548 = vst [vmem:[#allocation2 + $0x78] sm:$0xff] -inf
          %2549 = vst [vmem:[#allocation2 + $0x80] sm:$0xff] -inf
          %2550 = vst [vmem:[#allocation2 + $0x88] sm:$0xff] -inf
          %2551 = vst [vmem:[#allocation2 + $0x90] sm:$0xff] -inf
          %2552 = vst [vmem:[#allocation2 + $0x98] sm:$0xff] -inf
          %2553 = vst [vmem:[#allocation2 + $0xa0] sm:$0xff] -inf
          %2554 = vst [vmem:[#allocation2 + $0xa8] sm:$0xff] -inf
          %2555 = vst [vmem:[#allocation2 + $0xb0] sm:$0xff] -inf
          %2556 = vst [vmem:[#allocation2 + $0xb8] sm:$0xff] -inf
          %2557 = vst [vmem:[#allocation2 + $0xc0] sm:$0xff] -inf
          %2558 = vst [vmem:[#allocation2 + $0xc8] sm:$0xff] -inf
          %2559 = vst [vmem:[#allocation2 + $0xd0] sm:$0xff] -inf
          %2560 = vst [vmem:[#allocation2 + $0xd8] sm:$0xff] -inf
          %2561 = vst [vmem:[#allocation2 + $0xe0] sm:$0xff] -inf
          %2562 = vst [vmem:[#allocation2 + $0xe8] sm:$0xff] -inf
          %2563 = vst [vmem:[#allocation2 + $0xf0] sm:$0xff] -inf
          %2564 = vst [vmem:[#allocation2 + $0xf8] sm:$0xff] -inf
          %2565 = vst [vmem:[#allocation2 + $0x100] sm:$0xff] -inf
          %2566 = vst [vmem:[#allocation2 + $0x108] sm:$0xff] -inf
          %2567 = vst [vmem:[#allocation2 + $0x110] sm:$0xff] -inf
          %2568 = vst [vmem:[#allocation2 + $0x118] sm:$0xff] -inf
          %2569 = vst [vmem:[#allocation2 + $0x120] sm:$0xff] -inf
          %2570 = vst [vmem:[#allocation2 + $0x128] sm:$0xff] -inf
          %2571 = vst [vmem:[#allocation2 + $0x130] sm:$0xff] -inf
          %2572 = vst [vmem:[#allocation2 + $0x138] sm:$0xff] -inf
          %2573 = vst [vmem:[#allocation2 + $0x140] sm:$0xff] -inf
          %2574 = vst [vmem:[#allocation2 + $0x148] sm:$0xff] -inf
          %2575 = vst [vmem:[#allocation2 + $0x150] sm:$0xff] -inf
          %2576 = vst [vmem:[#allocation2 + $0x158] sm:$0xff] -inf
          %2577 = vst [vmem:[#allocation2 + $0x160] sm:$0xff] -inf
          %2578 = vst [vmem:[#allocation2 + $0x168] sm:$0xff] -inf
          %2579 = vst [vmem:[#allocation2 + $0x170] sm:$0xff] -inf
          %2580 = vst [vmem:[#allocation2 + $0x178] sm:$0xff] -inf
          %2581 = vst [vmem:[#allocation2 + $0x180] sm:$0xff] -inf
          %2582 = vst [vmem:[#allocation2 + $0x188] sm:$0xff] -inf
          %2583 = vst [vmem:[#allocation2 + $0x190] sm:$0xff] -inf
          %2584 = vst [vmem:[#allocation2 + $0x198] sm:$0xff] -inf
          %2585 = vst [vmem:[#allocation2 + $0x1a0] sm:$0xff] -inf
          %2586 = vst [vmem:[#allocation2 + $0x1a8] sm:$0xff] -inf
          %2587 = vst [vmem:[#allocation2 + $0x1b0] sm:$0xff] -inf
          %2588 = vst [vmem:[#allocation2 + $0x1b8] sm:$0xff] -inf
          %2589 = vst [vmem:[#allocation2 + $0x1c0] sm:$0xff] -inf
          %2590 = vst [vmem:[#allocation2 + $0x1c8] sm:$0xff] -inf
          %2591 = vst [vmem:[#allocation2 + $0x1d0] sm:$0xff] -inf
          %2592 = vst [vmem:[#allocation2 + $0x1d8] sm:$0xff] -inf
          %2593 = vst [vmem:[#allocation2 + $0x1e0] sm:$0xff] -inf
          %2594 = vst [vmem:[#allocation2 + $0x1e8] sm:$0xff] -inf
          %2595 = vst [vmem:[#allocation2 + $0x1f0] sm:$0xff] -inf
          %2596 = vst [vmem:[#allocation2 + $0x1f8] sm:$0xff] -inf
          %2597 = vst [vmem:[#allocation2 + $0x200] sm:$0xff] -inf
          %2598 = vst [vmem:[#allocation2 + $0x208] sm:$0xff] -inf
          %2599 = vst [vmem:[#allocation2 + $0x210] sm:$0xff] -inf
          %2600 = vst [vmem:[#allocation2 + $0x218] sm:$0xff] -inf
          %2601 = vst [vmem:[#allocation2 + $0x220] sm:$0xff] -inf
          %2602 = vst [vmem:[#allocation2 + $0x228] sm:$0xff] -inf
          %2603 = vst [vmem:[#allocation2 + $0x230] sm:$0xff] -inf
          %2604 = vst [vmem:[#allocation2 + $0x238] sm:$0xff] -inf
          %2605 = vst [vmem:[#allocation2 + $0x240] sm:$0xff] -inf
          %2606 = vst [vmem:[#allocation2 + $0x248] sm:$0xff] -inf
          %2607 = vst [vmem:[#allocation2 + $0x250] sm:$0xff] -inf
          %2608 = vst [vmem:[#allocation2 + $0x258] sm:$0xff] -inf
          %2609 = vst [vmem:[#allocation2 + $0x260] sm:$0xff] -inf
          %2610 = vst [vmem:[#allocation2 + $0x268] sm:$0xff] -inf
          %2611 = vst [vmem:[#allocation2 + $0x270] sm:$0xff] -inf
          %2612 = vst [vmem:[#allocation2 + $0x278] sm:$0xff] -inf
          %2613 = vst [vmem:[#allocation2 + $0x280] sm:$0xff] -inf
          %2614 = vst [vmem:[#allocation2 + $0x288] sm:$0xff] -inf
          %2615 = vst [vmem:[#allocation2 + $0x290] sm:$0xff] -inf
          %2616 = vst [vmem:[#allocation2 + $0x298] sm:$0xff] -inf
          %2617 = vst [vmem:[#allocation2 + $0x2a0] sm:$0xff] -inf
          %2618 = vst [vmem:[#allocation2 + $0x2a8] sm:$0xff] -inf
          %2619 = vst [vmem:[#allocation2 + $0x2b0] sm:$0xff] -inf
          %2620 = vst [vmem:[#allocation2 + $0x2b8] sm:$0xff] -inf
          %2621 = vst [vmem:[#allocation2 + $0x2c0] sm:$0xff] -inf
          %2622 = vst [vmem:[#allocation2 + $0x2c8] sm:$0xff] -inf
          %2623 = vst [vmem:[#allocation2 + $0x2d0] sm:$0xff] -inf
          %2624 = vst [vmem:[#allocation2 + $0x2d8] sm:$0xff] -inf
          %2625 = vst [vmem:[#allocation2 + $0x2e0] sm:$0xff] -inf
          %2626 = vst [vmem:[#allocation2 + $0x2e8] sm:$0xff] -inf
          %2627 = vst [vmem:[#allocation2 + $0x2f0] sm:$0xff] -inf
          %2628 = vst [vmem:[#allocation2 + $0x2f8] sm:$0xff] -inf
          %2629 = vst [vmem:[#allocation2 + $0x300] sm:$0xff] -inf
          %2630 = vst [vmem:[#allocation2 + $0x308] sm:$0xff] -inf
          %2631 = vst [vmem:[#allocation2 + $0x310] sm:$0xff] -inf
          %2632 = vst [vmem:[#allocation2 + $0x318] sm:$0xff] -inf
          %2633 = vst [vmem:[#allocation2 + $0x320] sm:$0xff] -inf
          %2634 = vst [vmem:[#allocation2 + $0x328] sm:$0xff] -inf
          %2635 = vst [vmem:[#allocation2 + $0x330] sm:$0xff] -inf
          %2636 = vst [vmem:[#allocation2 + $0x338] sm:$0xff] -inf
          %2637 = vst [vmem:[#allocation2 + $0x340] sm:$0xff] -inf
          %2638 = vst [vmem:[#allocation2 + $0x348] sm:$0xff] -inf
          %2639 = vst [vmem:[#allocation2 + $0x350] sm:$0xff] -inf
          %2640 = vst [vmem:[#allocation2 + $0x358] sm:$0xff] -inf
          %2641 = vst [vmem:[#allocation2 + $0x360] sm:$0xff] -inf
          %2642 = vst [vmem:[#allocation2 + $0x368] sm:$0xff] -inf
          %2643 = vst [vmem:[#allocation2 + $0x370] sm:$0xff] -inf
          %2644 = vst [vmem:[#allocation2 + $0x378] sm:$0xff] -inf
          %2645 = vst [vmem:[#allocation2 + $0x380] sm:$0xff] -inf
          %2646 = vst [vmem:[#allocation2 + $0x388] sm:$0xff] -inf
          %2647 = vst [vmem:[#allocation2 + $0x390] sm:$0xff] -inf
          %2648 = vst [vmem:[#allocation2 + $0x398] sm:$0xff] -inf
          %2649 = vst [vmem:[#allocation2 + $0x3a0] sm:$0xff] -inf
          %2650 = vst [vmem:[#allocation2 + $0x3a8] sm:$0xff] -inf
          %2651 = vst [vmem:[#allocation2 + $0x3b0] sm:$0xff] -inf
          %2652 = vst [vmem:[#allocation2 + $0x3b8] sm:$0xff] -inf
          %2653 = vst [vmem:[#allocation2 + $0x3c0] sm:$0xff] -inf
          %2654 = vst [vmem:[#allocation2 + $0x3c8] sm:$0xff] -inf
          %2655 = vst [vmem:[#allocation2 + $0x3d0] sm:$0xff] -inf
          %2656 = vst [vmem:[#allocation2 + $0x3d8] sm:$0xff] -inf
          %2657 = vst [vmem:[#allocation2 + $0x3e0] sm:$0xff] -inf
          %2658 = vst [vmem:[#allocation2 + $0x3e8] sm:$0xff] -inf
          %2659 = vst [vmem:[#allocation2 + $0x3f0] sm:$0xff] -inf
          %2660 = vst [vmem:[#allocation2 + $0x3f8] sm:$0xff] -inf
        $region56: #{pointnetfeat_forward.2} parent=47 // pred_fallthru
          _
        %p2661 = scmp.lt.s32.totalorder %s24, 2
        // Predicated region
        $region57: #{pointnetfeat_forward.2} parent=47 // pred_check
          %p2662 = pneg %p2661
        $region58: #{pointnetfeat_forward.2} parent=47 // pred_check_branch
          %2664 = sbr.rel (%p2662) target = $region60
        $region59: #{pointnetfeat_forward.2} parent=47 // pred_region
          %v2665 = vld [vmem:[#allocation2] sm:$0xff]
          %v2666 = vld [vmem:[#allocation2 + $0x8] sm:$0xff]
          %v2667 = vld [vmem:[#allocation2 + $0x10] sm:$0xff]
          %v2668 = vld [vmem:[#allocation2 + $0x18] sm:$0xff]
          %v2669 = vld [vmem:[#allocation2 + $0x20] sm:$0xff]
          %v2670 = vld [vmem:[#allocation2 + $0x28] sm:$0xff]
          %v2671 = vld [vmem:[#allocation2 + $0x30] sm:$0xff]
          %v2672 = vld [vmem:[#allocation2 + $0x38] sm:$0xff]
          %v2673 = vld [vmem:[#allocation2 + $0x40] sm:$0xff]
          %v2674 = vld [vmem:[#allocation2 + $0x48] sm:$0xff]
          %v2675 = vld [vmem:[#allocation2 + $0x50] sm:$0xff]
          %v2676 = vld [vmem:[#allocation2 + $0x58] sm:$0xff]
          %v2677 = vld [vmem:[#allocation2 + $0x60] sm:$0xff]
          %v2678 = vld [vmem:[#allocation2 + $0x68] sm:$0xff]
          %v2679 = vld [vmem:[#allocation2 + $0x70] sm:$0xff]
          %v2680 = vld [vmem:[#allocation2 + $0x78] sm:$0xff]
          %v2681 = vld [vmem:[#allocation2 + $0x80] sm:$0xff]
          %v2682 = vld [vmem:[#allocation2 + $0x88] sm:$0xff]
          %v2683 = vld [vmem:[#allocation2 + $0x90] sm:$0xff]
          %v2684 = vld [vmem:[#allocation2 + $0x98] sm:$0xff]
          %v2685 = vld [vmem:[#allocation2 + $0xa0] sm:$0xff]
          %v2686 = vld [vmem:[#allocation2 + $0xa8] sm:$0xff]
          %v2687 = vld [vmem:[#allocation2 + $0xb0] sm:$0xff]
          %v2688 = vld [vmem:[#allocation2 + $0xb8] sm:$0xff]
          %v2689 = vld [vmem:[#allocation2 + $0xc0] sm:$0xff]
          %v2690 = vld [vmem:[#allocation2 + $0xc8] sm:$0xff]
          %v2691 = vld [vmem:[#allocation2 + $0xd0] sm:$0xff]
          %v2692 = vld [vmem:[#allocation2 + $0xd8] sm:$0xff]
          %v2693 = vld [vmem:[#allocation2 + $0xe0] sm:$0xff]
          %v2694 = vld [vmem:[#allocation2 + $0xe8] sm:$0xff]
          %v2695 = vld [vmem:[#allocation2 + $0xf0] sm:$0xff]
          %v2696 = vld [vmem:[#allocation2 + $0xf8] sm:$0xff]
          %v2697 = vld [vmem:[#allocation2 + $0x100] sm:$0xff]
          %v2698 = vld [vmem:[#allocation2 + $0x108] sm:$0xff]
          %v2699 = vld [vmem:[#allocation2 + $0x110] sm:$0xff]
          %v2700 = vld [vmem:[#allocation2 + $0x118] sm:$0xff]
          %v2701 = vld [vmem:[#allocation2 + $0x120] sm:$0xff]
          %v2702 = vld [vmem:[#allocation2 + $0x128] sm:$0xff]
          %v2703 = vld [vmem:[#allocation2 + $0x130] sm:$0xff]
          %v2704 = vld [vmem:[#allocation2 + $0x138] sm:$0xff]
          %v2705 = vld [vmem:[#allocation2 + $0x140] sm:$0xff]
          %v2706 = vld [vmem:[#allocation2 + $0x148] sm:$0xff]
          %v2707 = vld [vmem:[#allocation2 + $0x150] sm:$0xff]
          %v2708 = vld [vmem:[#allocation2 + $0x158] sm:$0xff]
          %v2709 = vld [vmem:[#allocation2 + $0x160] sm:$0xff]
          %v2710 = vld [vmem:[#allocation2 + $0x168] sm:$0xff]
          %v2711 = vld [vmem:[#allocation2 + $0x170] sm:$0xff]
          %v2712 = vld [vmem:[#allocation2 + $0x178] sm:$0xff]
          %v2713 = vld [vmem:[#allocation2 + $0x180] sm:$0xff]
          %v2714 = vld [vmem:[#allocation2 + $0x188] sm:$0xff]
          %v2715 = vld [vmem:[#allocation2 + $0x190] sm:$0xff]
          %v2716 = vld [vmem:[#allocation2 + $0x198] sm:$0xff]
          %v2717 = vld [vmem:[#allocation2 + $0x1a0] sm:$0xff]
          %v2718 = vld [vmem:[#allocation2 + $0x1a8] sm:$0xff]
          %v2719 = vld [vmem:[#allocation2 + $0x1b0] sm:$0xff]
          %v2720 = vld [vmem:[#allocation2 + $0x1b8] sm:$0xff]
          %v2721 = vld [vmem:[#allocation2 + $0x1c0] sm:$0xff]
          %v2722 = vld [vmem:[#allocation2 + $0x1c8] sm:$0xff]
          %v2723 = vld [vmem:[#allocation2 + $0x1d0] sm:$0xff]
          %v2724 = vld [vmem:[#allocation2 + $0x1d8] sm:$0xff]
          %v2725 = vld [vmem:[#allocation2 + $0x1e0] sm:$0xff]
          %v2726 = vld [vmem:[#allocation2 + $0x1e8] sm:$0xff]
          %v2727 = vld [vmem:[#allocation2 + $0x1f0] sm:$0xff]
          %v2728 = vld [vmem:[#allocation2 + $0x1f8] sm:$0xff]
          %v2729 = vld [vmem:[#allocation2 + $0x200] sm:$0xff]
          %v2730 = vld [vmem:[#allocation2 + $0x208] sm:$0xff]
          %v2731 = vld [vmem:[#allocation2 + $0x210] sm:$0xff]
          %v2732 = vld [vmem:[#allocation2 + $0x218] sm:$0xff]
          %v2733 = vld [vmem:[#allocation2 + $0x220] sm:$0xff]
          %v2734 = vld [vmem:[#allocation2 + $0x228] sm:$0xff]
          %v2735 = vld [vmem:[#allocation2 + $0x230] sm:$0xff]
          %v2736 = vld [vmem:[#allocation2 + $0x238] sm:$0xff]
          %v2737 = vld [vmem:[#allocation2 + $0x240] sm:$0xff]
          %v2738 = vld [vmem:[#allocation2 + $0x248] sm:$0xff]
          %v2739 = vld [vmem:[#allocation2 + $0x250] sm:$0xff]
          %v2740 = vld [vmem:[#allocation2 + $0x258] sm:$0xff]
          %v2741 = vld [vmem:[#allocation2 + $0x260] sm:$0xff]
          %v2742 = vld [vmem:[#allocation2 + $0x268] sm:$0xff]
          %v2743 = vld [vmem:[#allocation2 + $0x270] sm:$0xff]
          %v2744 = vld [vmem:[#allocation2 + $0x278] sm:$0xff]
          %v2745 = vld [vmem:[#allocation2 + $0x280] sm:$0xff]
          %v2746 = vld [vmem:[#allocation2 + $0x288] sm:$0xff]
          %v2747 = vld [vmem:[#allocation2 + $0x290] sm:$0xff]
          %v2748 = vld [vmem:[#allocation2 + $0x298] sm:$0xff]
          %v2749 = vld [vmem:[#allocation2 + $0x2a0] sm:$0xff]
          %v2750 = vld [vmem:[#allocation2 + $0x2a8] sm:$0xff]
          %v2751 = vld [vmem:[#allocation2 + $0x2b0] sm:$0xff]
          %v2752 = vld [vmem:[#allocation2 + $0x2b8] sm:$0xff]
          %v2753 = vld [vmem:[#allocation2 + $0x2c0] sm:$0xff]
          %v2754 = vld [vmem:[#allocation2 + $0x2c8] sm:$0xff]
          %v2755 = vld [vmem:[#allocation2 + $0x2d0] sm:$0xff]
          %v2756 = vld [vmem:[#allocation2 + $0x2d8] sm:$0xff]
          %v2757 = vld [vmem:[#allocation2 + $0x2e0] sm:$0xff]
          %v2758 = vld [vmem:[#allocation2 + $0x2e8] sm:$0xff]
          %v2759 = vld [vmem:[#allocation2 + $0x2f0] sm:$0xff]
          %v2760 = vld [vmem:[#allocation2 + $0x2f8] sm:$0xff]
          %v2761 = vld [vmem:[#allocation2 + $0x300] sm:$0xff]
          %v2762 = vld [vmem:[#allocation2 + $0x308] sm:$0xff]
          %v2763 = vld [vmem:[#allocation2 + $0x310] sm:$0xff]
          %v2764 = vld [vmem:[#allocation2 + $0x318] sm:$0xff]
          %v2765 = vld [vmem:[#allocation2 + $0x320] sm:$0xff]
          %v2766 = vld [vmem:[#allocation2 + $0x328] sm:$0xff]
          %v2767 = vld [vmem:[#allocation2 + $0x330] sm:$0xff]
          %v2768 = vld [vmem:[#allocation2 + $0x338] sm:$0xff]
          %v2769 = vld [vmem:[#allocation2 + $0x340] sm:$0xff]
          %v2770 = vld [vmem:[#allocation2 + $0x348] sm:$0xff]
          %v2771 = vld [vmem:[#allocation2 + $0x350] sm:$0xff]
          %v2772 = vld [vmem:[#allocation2 + $0x358] sm:$0xff]
          %v2773 = vld [vmem:[#allocation2 + $0x360] sm:$0xff]
          %v2774 = vld [vmem:[#allocation2 + $0x368] sm:$0xff]
          %v2775 = vld [vmem:[#allocation2 + $0x370] sm:$0xff]
          %v2776 = vld [vmem:[#allocation2 + $0x378] sm:$0xff]
          %v2777 = vld [vmem:[#allocation2 + $0x380] sm:$0xff]
          %v2778 = vld [vmem:[#allocation2 + $0x388] sm:$0xff]
          %v2779 = vld [vmem:[#allocation2 + $0x390] sm:$0xff]
          %v2780 = vld [vmem:[#allocation2 + $0x398] sm:$0xff]
          %v2781 = vld [vmem:[#allocation2 + $0x3a0] sm:$0xff]
          %v2782 = vld [vmem:[#allocation2 + $0x3a8] sm:$0xff]
          %v2783 = vld [vmem:[#allocation2 + $0x3b0] sm:$0xff]
          %v2784 = vld [vmem:[#allocation2 + $0x3b8] sm:$0xff]
          %v2785 = vld [vmem:[#allocation2 + $0x3c0] sm:$0xff]
          %v2786 = vld [vmem:[#allocation2 + $0x3c8] sm:$0xff]
          %v2787 = vld [vmem:[#allocation2 + $0x3d0] sm:$0xff]
          %v2788 = vld [vmem:[#allocation2 + $0x3d8] sm:$0xff]
          %v2789 = vld [vmem:[#allocation2 + $0x3e0] sm:$0xff]
          %v2790 = vld [vmem:[#allocation2 + $0x3e8] sm:$0xff]
          %v2791 = vld [vmem:[#allocation2 + $0x3f0] sm:$0xff]
          %v2792 = vld [vmem:[#allocation2 + $0x3f8] sm:$0xff]
          %v2793 = vmax.f32 %v2665, %v2401
          %v2794 = vmax.f32 %v2666, %v2402
          %v2795 = vmax.f32 %v2667, %v2403
          %v2796 = vmax.f32 %v2668, %v2404
          %v2797 = vmax.f32 %v2669, %v2405
          %v2798 = vmax.f32 %v2670, %v2406
          %v2799 = vmax.f32 %v2671, %v2407
          %v2800 = vmax.f32 %v2672, %v2408
          %v2801 = vmax.f32 %v2673, %v2409
          %v2802 = vmax.f32 %v2674, %v2410
          %v2803 = vmax.f32 %v2675, %v2411
          %v2804 = vmax.f32 %v2676, %v2412
          %v2805 = vmax.f32 %v2677, %v2413
          %v2806 = vmax.f32 %v2678, %v2414
          %v2807 = vmax.f32 %v2679, %v2415
          %v2808 = vmax.f32 %v2680, %v2416
          %v2809 = vmax.f32 %v2681, %v2417
          %v2810 = vmax.f32 %v2682, %v2418
          %v2811 = vmax.f32 %v2683, %v2419
          %v2812 = vmax.f32 %v2684, %v2420
          %v2813 = vmax.f32 %v2685, %v2421
          %v2814 = vmax.f32 %v2686, %v2422
          %v2815 = vmax.f32 %v2687, %v2423
          %v2816 = vmax.f32 %v2688, %v2424
          %v2817 = vmax.f32 %v2689, %v2425
          %v2818 = vmax.f32 %v2690, %v2426
          %v2819 = vmax.f32 %v2691, %v2427
          %v2820 = vmax.f32 %v2692, %v2428
          %v2821 = vmax.f32 %v2693, %v2429
          %v2822 = vmax.f32 %v2694, %v2430
          %v2823 = vmax.f32 %v2695, %v2431
          %v2824 = vmax.f32 %v2696, %v2432
          %v2825 = vmax.f32 %v2697, %v2433
          %v2826 = vmax.f32 %v2698, %v2434
          %v2827 = vmax.f32 %v2699, %v2435
          %v2828 = vmax.f32 %v2700, %v2436
          %v2829 = vmax.f32 %v2701, %v2437
          %v2830 = vmax.f32 %v2702, %v2438
          %v2831 = vmax.f32 %v2703, %v2439
          %v2832 = vmax.f32 %v2704, %v2440
          %v2833 = vmax.f32 %v2705, %v2441
          %v2834 = vmax.f32 %v2706, %v2442
          %v2835 = vmax.f32 %v2707, %v2443
          %v2836 = vmax.f32 %v2708, %v2444
          %v2837 = vmax.f32 %v2709, %v2445
          %v2838 = vmax.f32 %v2710, %v2446
          %v2839 = vmax.f32 %v2711, %v2447
          %v2840 = vmax.f32 %v2712, %v2448
          %v2841 = vmax.f32 %v2713, %v2449
          %v2842 = vmax.f32 %v2714, %v2450
          %v2843 = vmax.f32 %v2715, %v2451
          %v2844 = vmax.f32 %v2716, %v2452
          %v2845 = vmax.f32 %v2717, %v2453
          %v2846 = vmax.f32 %v2718, %v2454
          %v2847 = vmax.f32 %v2719, %v2455
          %v2848 = vmax.f32 %v2720, %v2456
          %v2849 = vmax.f32 %v2721, %v2457
          %v2850 = vmax.f32 %v2722, %v2458
          %v2851 = vmax.f32 %v2723, %v2459
          %v2852 = vmax.f32 %v2724, %v2460
          %v2853 = vmax.f32 %v2725, %v2461
          %v2854 = vmax.f32 %v2726, %v2462
          %v2855 = vmax.f32 %v2727, %v2463
          %v2856 = vmax.f32 %v2728, %v2464
          %v2857 = vmax.f32 %v2729, %v2465
          %v2858 = vmax.f32 %v2730, %v2466
          %v2859 = vmax.f32 %v2731, %v2467
          %v2860 = vmax.f32 %v2732, %v2468
          %v2861 = vmax.f32 %v2733, %v2469
          %v2862 = vmax.f32 %v2734, %v2470
          %v2863 = vmax.f32 %v2735, %v2471
          %v2864 = vmax.f32 %v2736, %v2472
          %v2865 = vmax.f32 %v2737, %v2473
          %v2866 = vmax.f32 %v2738, %v2474
          %v2867 = vmax.f32 %v2739, %v2475
          %v2868 = vmax.f32 %v2740, %v2476
          %v2869 = vmax.f32 %v2741, %v2477
          %v2870 = vmax.f32 %v2742, %v2478
          %v2871 = vmax.f32 %v2743, %v2479
          %v2872 = vmax.f32 %v2744, %v2480
          %v2873 = vmax.f32 %v2745, %v2481
          %v2874 = vmax.f32 %v2746, %v2482
          %v2875 = vmax.f32 %v2747, %v2483
          %v2876 = vmax.f32 %v2748, %v2484
          %v2877 = vmax.f32 %v2749, %v2485
          %v2878 = vmax.f32 %v2750, %v2486
          %v2879 = vmax.f32 %v2751, %v2487
          %v2880 = vmax.f32 %v2752, %v2488
          %v2881 = vmax.f32 %v2753, %v2489
          %v2882 = vmax.f32 %v2754, %v2490
          %v2883 = vmax.f32 %v2755, %v2491
          %v2884 = vmax.f32 %v2756, %v2492
          %v2885 = vmax.f32 %v2757, %v2493
          %v2886 = vmax.f32 %v2758, %v2494
          %v2887 = vmax.f32 %v2759, %v2495
          %v2888 = vmax.f32 %v2760, %v2496
          %v2889 = vmax.f32 %v2761, %v2497
          %v2890 = vmax.f32 %v2762, %v2498
          %v2891 = vmax.f32 %v2763, %v2499
          %v2892 = vmax.f32 %v2764, %v2500
          %v2893 = vmax.f32 %v2765, %v2501
          %v2894 = vmax.f32 %v2766, %v2502
          %v2895 = vmax.f32 %v2767, %v2503
          %v2896 = vmax.f32 %v2768, %v2504
          %v2897 = vmax.f32 %v2769, %v2505
          %v2898 = vmax.f32 %v2770, %v2506
          %v2899 = vmax.f32 %v2771, %v2507
          %v2900 = vmax.f32 %v2772, %v2508
          %v2901 = vmax.f32 %v2773, %v2509
          %v2902 = vmax.f32 %v2774, %v2510
          %v2903 = vmax.f32 %v2775, %v2511
          %v2904 = vmax.f32 %v2776, %v2512
          %v2905 = vmax.f32 %v2777, %v2513
          %v2906 = vmax.f32 %v2778, %v2514
          %v2907 = vmax.f32 %v2779, %v2515
          %v2908 = vmax.f32 %v2780, %v2516
          %v2909 = vmax.f32 %v2781, %v2517
          %v2910 = vmax.f32 %v2782, %v2518
          %v2911 = vmax.f32 %v2783, %v2519
          %v2912 = vmax.f32 %v2784, %v2520
          %v2913 = vmax.f32 %v2785, %v2521
          %v2914 = vmax.f32 %v2786, %v2522
          %v2915 = vmax.f32 %v2787, %v2523
          %v2916 = vmax.f32 %v2788, %v2524
          %v2917 = vmax.f32 %v2789, %v2525
          %v2918 = vmax.f32 %v2790, %v2526
          %v2919 = vmax.f32 %v2791, %v2527
          %v2920 = vmax.f32 %v2792, %v2528
          %2921 = vst [vmem:[#allocation2] sm:$0xff] %v2793
          %2922 = vst [vmem:[#allocation2 + $0x8] sm:$0xff] %v2794
          %2923 = vst [vmem:[#allocation2 + $0x10] sm:$0xff] %v2795
          %2924 = vst [vmem:[#allocation2 + $0x18] sm:$0xff] %v2796
          %2925 = vst [vmem:[#allocation2 + $0x20] sm:$0xff] %v2797
          %2926 = vst [vmem:[#allocation2 + $0x28] sm:$0xff] %v2798
          %2927 = vst [vmem:[#allocation2 + $0x30] sm:$0xff] %v2799
          %2928 = vst [vmem:[#allocation2 + $0x38] sm:$0xff] %v2800
          %2929 = vst [vmem:[#allocation2 + $0x40] sm:$0xff] %v2801
          %2930 = vst [vmem:[#allocation2 + $0x48] sm:$0xff] %v2802
          %2931 = vst [vmem:[#allocation2 + $0x50] sm:$0xff] %v2803
          %2932 = vst [vmem:[#allocation2 + $0x58] sm:$0xff] %v2804
          %2933 = vst [vmem:[#allocation2 + $0x60] sm:$0xff] %v2805
          %2934 = vst [vmem:[#allocation2 + $0x68] sm:$0xff] %v2806
          %2935 = vst [vmem:[#allocation2 + $0x70] sm:$0xff] %v2807
          %2936 = vst [vmem:[#allocation2 + $0x78] sm:$0xff] %v2808
          %2937 = vst [vmem:[#allocation2 + $0x80] sm:$0xff] %v2809
          %2938 = vst [vmem:[#allocation2 + $0x88] sm:$0xff] %v2810
          %2939 = vst [vmem:[#allocation2 + $0x90] sm:$0xff] %v2811
          %2940 = vst [vmem:[#allocation2 + $0x98] sm:$0xff] %v2812
          %2941 = vst [vmem:[#allocation2 + $0xa0] sm:$0xff] %v2813
          %2942 = vst [vmem:[#allocation2 + $0xa8] sm:$0xff] %v2814
          %2943 = vst [vmem:[#allocation2 + $0xb0] sm:$0xff] %v2815
          %2944 = vst [vmem:[#allocation2 + $0xb8] sm:$0xff] %v2816
          %2945 = vst [vmem:[#allocation2 + $0xc0] sm:$0xff] %v2817
          %2946 = vst [vmem:[#allocation2 + $0xc8] sm:$0xff] %v2818
          %2947 = vst [vmem:[#allocation2 + $0xd0] sm:$0xff] %v2819
          %2948 = vst [vmem:[#allocation2 + $0xd8] sm:$0xff] %v2820
          %2949 = vst [vmem:[#allocation2 + $0xe0] sm:$0xff] %v2821
          %2950 = vst [vmem:[#allocation2 + $0xe8] sm:$0xff] %v2822
          %2951 = vst [vmem:[#allocation2 + $0xf0] sm:$0xff] %v2823
          %2952 = vst [vmem:[#allocation2 + $0xf8] sm:$0xff] %v2824
          %2953 = vst [vmem:[#allocation2 + $0x100] sm:$0xff] %v2825
          %2954 = vst [vmem:[#allocation2 + $0x108] sm:$0xff] %v2826
          %2955 = vst [vmem:[#allocation2 + $0x110] sm:$0xff] %v2827
          %2956 = vst [vmem:[#allocation2 + $0x118] sm:$0xff] %v2828
          %2957 = vst [vmem:[#allocation2 + $0x120] sm:$0xff] %v2829
          %2958 = vst [vmem:[#allocation2 + $0x128] sm:$0xff] %v2830
          %2959 = vst [vmem:[#allocation2 + $0x130] sm:$0xff] %v2831
          %2960 = vst [vmem:[#allocation2 + $0x138] sm:$0xff] %v2832
          %2961 = vst [vmem:[#allocation2 + $0x140] sm:$0xff] %v2833
          %2962 = vst [vmem:[#allocation2 + $0x148] sm:$0xff] %v2834
          %2963 = vst [vmem:[#allocation2 + $0x150] sm:$0xff] %v2835
          %2964 = vst [vmem:[#allocation2 + $0x158] sm:$0xff] %v2836
          %2965 = vst [vmem:[#allocation2 + $0x160] sm:$0xff] %v2837
          %2966 = vst [vmem:[#allocation2 + $0x168] sm:$0xff] %v2838
          %2967 = vst [vmem:[#allocation2 + $0x170] sm:$0xff] %v2839
          %2968 = vst [vmem:[#allocation2 + $0x178] sm:$0xff] %v2840
          %2969 = vst [vmem:[#allocation2 + $0x180] sm:$0xff] %v2841
          %2970 = vst [vmem:[#allocation2 + $0x188] sm:$0xff] %v2842
          %2971 = vst [vmem:[#allocation2 + $0x190] sm:$0xff] %v2843
          %2972 = vst [vmem:[#allocation2 + $0x198] sm:$0xff] %v2844
          %2973 = vst [vmem:[#allocation2 + $0x1a0] sm:$0xff] %v2845
          %2974 = vst [vmem:[#allocation2 + $0x1a8] sm:$0xff] %v2846
          %2975 = vst [vmem:[#allocation2 + $0x1b0] sm:$0xff] %v2847
          %2976 = vst [vmem:[#allocation2 + $0x1b8] sm:$0xff] %v2848
          %2977 = vst [vmem:[#allocation2 + $0x1c0] sm:$0xff] %v2849
          %2978 = vst [vmem:[#allocation2 + $0x1c8] sm:$0xff] %v2850
          %2979 = vst [vmem:[#allocation2 + $0x1d0] sm:$0xff] %v2851
          %2980 = vst [vmem:[#allocation2 + $0x1d8] sm:$0xff] %v2852
          %2981 = vst [vmem:[#allocation2 + $0x1e0] sm:$0xff] %v2853
          %2982 = vst [vmem:[#allocation2 + $0x1e8] sm:$0xff] %v2854
          %2983 = vst [vmem:[#allocation2 + $0x1f0] sm:$0xff] %v2855
          %2984 = vst [vmem:[#allocation2 + $0x1f8] sm:$0xff] %v2856
          %2985 = vst [vmem:[#allocation2 + $0x200] sm:$0xff] %v2857
          %2986 = vst [vmem:[#allocation2 + $0x208] sm:$0xff] %v2858
          %2987 = vst [vmem:[#allocation2 + $0x210] sm:$0xff] %v2859
          %2988 = vst [vmem:[#allocation2 + $0x218] sm:$0xff] %v2860
          %2989 = vst [vmem:[#allocation2 + $0x220] sm:$0xff] %v2861
          %2990 = vst [vmem:[#allocation2 + $0x228] sm:$0xff] %v2862
          %2991 = vst [vmem:[#allocation2 + $0x230] sm:$0xff] %v2863
          %2992 = vst [vmem:[#allocation2 + $0x238] sm:$0xff] %v2864
          %2993 = vst [vmem:[#allocation2 + $0x240] sm:$0xff] %v2865
          %2994 = vst [vmem:[#allocation2 + $0x248] sm:$0xff] %v2866
          %2995 = vst [vmem:[#allocation2 + $0x250] sm:$0xff] %v2867
          %2996 = vst [vmem:[#allocation2 + $0x258] sm:$0xff] %v2868
          %2997 = vst [vmem:[#allocation2 + $0x260] sm:$0xff] %v2869
          %2998 = vst [vmem:[#allocation2 + $0x268] sm:$0xff] %v2870
          %2999 = vst [vmem:[#allocation2 + $0x270] sm:$0xff] %v2871
          %3000 = vst [vmem:[#allocation2 + $0x278] sm:$0xff] %v2872
          %3001 = vst [vmem:[#allocation2 + $0x280] sm:$0xff] %v2873
          %3002 = vst [vmem:[#allocation2 + $0x288] sm:$0xff] %v2874
          %3003 = vst [vmem:[#allocation2 + $0x290] sm:$0xff] %v2875
          %3004 = vst [vmem:[#allocation2 + $0x298] sm:$0xff] %v2876
          %3005 = vst [vmem:[#allocation2 + $0x2a0] sm:$0xff] %v2877
          %3006 = vst [vmem:[#allocation2 + $0x2a8] sm:$0xff] %v2878
          %3007 = vst [vmem:[#allocation2 + $0x2b0] sm:$0xff] %v2879
          %3008 = vst [vmem:[#allocation2 + $0x2b8] sm:$0xff] %v2880
          %3009 = vst [vmem:[#allocation2 + $0x2c0] sm:$0xff] %v2881
          %3010 = vst [vmem:[#allocation2 + $0x2c8] sm:$0xff] %v2882
          %3011 = vst [vmem:[#allocation2 + $0x2d0] sm:$0xff] %v2883
          %3012 = vst [vmem:[#allocation2 + $0x2d8] sm:$0xff] %v2884
          %3013 = vst [vmem:[#allocation2 + $0x2e0] sm:$0xff] %v2885
          %3014 = vst [vmem:[#allocation2 + $0x2e8] sm:$0xff] %v2886
          %3015 = vst [vmem:[#allocation2 + $0x2f0] sm:$0xff] %v2887
          %3016 = vst [vmem:[#allocation2 + $0x2f8] sm:$0xff] %v2888
          %3017 = vst [vmem:[#allocation2 + $0x300] sm:$0xff] %v2889
          %3018 = vst [vmem:[#allocation2 + $0x308] sm:$0xff] %v2890
          %3019 = vst [vmem:[#allocation2 + $0x310] sm:$0xff] %v2891
          %3020 = vst [vmem:[#allocation2 + $0x318] sm:$0xff] %v2892
          %3021 = vst [vmem:[#allocation2 + $0x320] sm:$0xff] %v2893
          %3022 = vst [vmem:[#allocation2 + $0x328] sm:$0xff] %v2894
          %3023 = vst [vmem:[#allocation2 + $0x330] sm:$0xff] %v2895
          %3024 = vst [vmem:[#allocation2 + $0x338] sm:$0xff] %v2896
          %3025 = vst [vmem:[#allocation2 + $0x340] sm:$0xff] %v2897
          %3026 = vst [vmem:[#allocation2 + $0x348] sm:$0xff] %v2898
          %3027 = vst [vmem:[#allocation2 + $0x350] sm:$0xff] %v2899
          %3028 = vst [vmem:[#allocation2 + $0x358] sm:$0xff] %v2900
          %3029 = vst [vmem:[#allocation2 + $0x360] sm:$0xff] %v2901
          %3030 = vst [vmem:[#allocation2 + $0x368] sm:$0xff] %v2902
          %3031 = vst [vmem:[#allocation2 + $0x370] sm:$0xff] %v2903
          %3032 = vst [vmem:[#allocation2 + $0x378] sm:$0xff] %v2904
          %3033 = vst [vmem:[#allocation2 + $0x380] sm:$0xff] %v2905
          %3034 = vst [vmem:[#allocation2 + $0x388] sm:$0xff] %v2906
          %3035 = vst [vmem:[#allocation2 + $0x390] sm:$0xff] %v2907
          %3036 = vst [vmem:[#allocation2 + $0x398] sm:$0xff] %v2908
          %3037 = vst [vmem:[#allocation2 + $0x3a0] sm:$0xff] %v2909
          %3038 = vst [vmem:[#allocation2 + $0x3a8] sm:$0xff] %v2910
          %3039 = vst [vmem:[#allocation2 + $0x3b0] sm:$0xff] %v2911
          %3040 = vst [vmem:[#allocation2 + $0x3b8] sm:$0xff] %v2912
          %3041 = vst [vmem:[#allocation2 + $0x3c0] sm:$0xff] %v2913
          %3042 = vst [vmem:[#allocation2 + $0x3c8] sm:$0xff] %v2914
          %3043 = vst [vmem:[#allocation2 + $0x3d0] sm:$0xff] %v2915
          %3044 = vst [vmem:[#allocation2 + $0x3d8] sm:$0xff] %v2916
          %3045 = vst [vmem:[#allocation2 + $0x3e0] sm:$0xff] %v2917
          %3046 = vst [vmem:[#allocation2 + $0x3e8] sm:$0xff] %v2918
          %3047 = vst [vmem:[#allocation2 + $0x3f0] sm:$0xff] %v2919
          %3048 = vst [vmem:[#allocation2 + $0x3f8] sm:$0xff] %v2920
        $region60: #{pointnetfeat_forward.2} parent=47 // pred_fallthru
          _
        %p3049 = scmp.eq.s32.totalorder %s24, 2
        // Predicated region
        $region61: #{pointnetfeat_forward.2} parent=47 // pred_check
          %p3050 = pneg %p3049
        $region62: #{pointnetfeat_forward.2} parent=47 // pred_check_branch
          %3052 = sbr.rel (%p3050) target = $region64
        $region63: #{pointnetfeat_forward.2} parent=47 // pred_region
          %v3053 = vld [vmem:[#allocation2] sm:$0xff]
          %v3054 = vld [vmem:[#allocation2 + $0x8] sm:$0xff]
          %v3055 = vld [vmem:[#allocation2 + $0x10] sm:$0xff]
          %v3056 = vld [vmem:[#allocation2 + $0x18] sm:$0xff]
          %v3057 = vld [vmem:[#allocation2 + $0x20] sm:$0xff]
          %v3058 = vld [vmem:[#allocation2 + $0x28] sm:$0xff]
          %v3059 = vld [vmem:[#allocation2 + $0x30] sm:$0xff]
          %v3060 = vld [vmem:[#allocation2 + $0x38] sm:$0xff]
          %v3061 = vld [vmem:[#allocation2 + $0x40] sm:$0xff]
          %v3062 = vld [vmem:[#allocation2 + $0x48] sm:$0xff]
          %v3063 = vld [vmem:[#allocation2 + $0x50] sm:$0xff]
          %v3064 = vld [vmem:[#allocation2 + $0x58] sm:$0xff]
          %v3065 = vld [vmem:[#allocation2 + $0x60] sm:$0xff]
          %v3066 = vld [vmem:[#allocation2 + $0x68] sm:$0xff]
          %v3067 = vld [vmem:[#allocation2 + $0x70] sm:$0xff]
          %v3068 = vld [vmem:[#allocation2 + $0x78] sm:$0xff]
          %v3069 = vld [vmem:[#allocation2 + $0x80] sm:$0xff]
          %v3070 = vld [vmem:[#allocation2 + $0x88] sm:$0xff]
          %v3071 = vld [vmem:[#allocation2 + $0x90] sm:$0xff]
          %v3072 = vld [vmem:[#allocation2 + $0x98] sm:$0xff]
          %v3073 = vld [vmem:[#allocation2 + $0xa0] sm:$0xff]
          %v3074 = vld [vmem:[#allocation2 + $0xa8] sm:$0xff]
          %v3075 = vld [vmem:[#allocation2 + $0xb0] sm:$0xff]
          %v3076 = vld [vmem:[#allocation2 + $0xb8] sm:$0xff]
          %v3077 = vld [vmem:[#allocation2 + $0xc0] sm:$0xff]
          %v3078 = vld [vmem:[#allocation2 + $0xc8] sm:$0xff]
          %v3079 = vld [vmem:[#allocation2 + $0xd0] sm:$0xff]
          %v3080 = vld [vmem:[#allocation2 + $0xd8] sm:$0xff]
          %v3081 = vld [vmem:[#allocation2 + $0xe0] sm:$0xff]
          %v3082 = vld [vmem:[#allocation2 + $0xe8] sm:$0xff]
          %v3083 = vld [vmem:[#allocation2 + $0xf0] sm:$0xff]
          %v3084 = vld [vmem:[#allocation2 + $0xf8] sm:$0xff]
          %v3085 = vld [vmem:[#allocation2 + $0x100] sm:$0xff]
          %v3086 = vld [vmem:[#allocation2 + $0x108] sm:$0xff]
          %v3087 = vld [vmem:[#allocation2 + $0x110] sm:$0xff]
          %v3088 = vld [vmem:[#allocation2 + $0x118] sm:$0xff]
          %v3089 = vld [vmem:[#allocation2 + $0x120] sm:$0xff]
          %v3090 = vld [vmem:[#allocation2 + $0x128] sm:$0xff]
          %v3091 = vld [vmem:[#allocation2 + $0x130] sm:$0xff]
          %v3092 = vld [vmem:[#allocation2 + $0x138] sm:$0xff]
          %v3093 = vld [vmem:[#allocation2 + $0x140] sm:$0xff]
          %v3094 = vld [vmem:[#allocation2 + $0x148] sm:$0xff]
          %v3095 = vld [vmem:[#allocation2 + $0x150] sm:$0xff]
          %v3096 = vld [vmem:[#allocation2 + $0x158] sm:$0xff]
          %v3097 = vld [vmem:[#allocation2 + $0x160] sm:$0xff]
          %v3098 = vld [vmem:[#allocation2 + $0x168] sm:$0xff]
          %v3099 = vld [vmem:[#allocation2 + $0x170] sm:$0xff]
          %v3100 = vld [vmem:[#allocation2 + $0x178] sm:$0xff]
          %v3101 = vld [vmem:[#allocation2 + $0x180] sm:$0xff]
          %v3102 = vld [vmem:[#allocation2 + $0x188] sm:$0xff]
          %v3103 = vld [vmem:[#allocation2 + $0x190] sm:$0xff]
          %v3104 = vld [vmem:[#allocation2 + $0x198] sm:$0xff]
          %v3105 = vld [vmem:[#allocation2 + $0x1a0] sm:$0xff]
          %v3106 = vld [vmem:[#allocation2 + $0x1a8] sm:$0xff]
          %v3107 = vld [vmem:[#allocation2 + $0x1b0] sm:$0xff]
          %v3108 = vld [vmem:[#allocation2 + $0x1b8] sm:$0xff]
          %v3109 = vld [vmem:[#allocation2 + $0x1c0] sm:$0xff]
          %v3110 = vld [vmem:[#allocation2 + $0x1c8] sm:$0xff]
          %v3111 = vld [vmem:[#allocation2 + $0x1d0] sm:$0xff]
          %v3112 = vld [vmem:[#allocation2 + $0x1d8] sm:$0xff]
          %v3113 = vld [vmem:[#allocation2 + $0x1e0] sm:$0xff]
          %v3114 = vld [vmem:[#allocation2 + $0x1e8] sm:$0xff]
          %v3115 = vld [vmem:[#allocation2 + $0x1f0] sm:$0xff]
          %v3116 = vld [vmem:[#allocation2 + $0x1f8] sm:$0xff]
          %v3117 = vld [vmem:[#allocation2 + $0x200] sm:$0xff]
          %v3118 = vld [vmem:[#allocation2 + $0x208] sm:$0xff]
          %v3119 = vld [vmem:[#allocation2 + $0x210] sm:$0xff]
          %v3120 = vld [vmem:[#allocation2 + $0x218] sm:$0xff]
          %v3121 = vld [vmem:[#allocation2 + $0x220] sm:$0xff]
          %v3122 = vld [vmem:[#allocation2 + $0x228] sm:$0xff]
          %v3123 = vld [vmem:[#allocation2 + $0x230] sm:$0xff]
          %v3124 = vld [vmem:[#allocation2 + $0x238] sm:$0xff]
          %v3125 = vld [vmem:[#allocation2 + $0x240] sm:$0xff]
          %v3126 = vld [vmem:[#allocation2 + $0x248] sm:$0xff]
          %v3127 = vld [vmem:[#allocation2 + $0x250] sm:$0xff]
          %v3128 = vld [vmem:[#allocation2 + $0x258] sm:$0xff]
          %v3129 = vld [vmem:[#allocation2 + $0x260] sm:$0xff]
          %v3130 = vld [vmem:[#allocation2 + $0x268] sm:$0xff]
          %v3131 = vld [vmem:[#allocation2 + $0x270] sm:$0xff]
          %v3132 = vld [vmem:[#allocation2 + $0x278] sm:$0xff]
          %v3133 = vld [vmem:[#allocation2 + $0x280] sm:$0xff]
          %v3134 = vld [vmem:[#allocation2 + $0x288] sm:$0xff]
          %v3135 = vld [vmem:[#allocation2 + $0x290] sm:$0xff]
          %v3136 = vld [vmem:[#allocation2 + $0x298] sm:$0xff]
          %v3137 = vld [vmem:[#allocation2 + $0x2a0] sm:$0xff]
          %v3138 = vld [vmem:[#allocation2 + $0x2a8] sm:$0xff]
          %v3139 = vld [vmem:[#allocation2 + $0x2b0] sm:$0xff]
          %v3140 = vld [vmem:[#allocation2 + $0x2b8] sm:$0xff]
          %v3141 = vld [vmem:[#allocation2 + $0x2c0] sm:$0xff]
          %v3142 = vld [vmem:[#allocation2 + $0x2c8] sm:$0xff]
          %v3143 = vld [vmem:[#allocation2 + $0x2d0] sm:$0xff]
          %v3144 = vld [vmem:[#allocation2 + $0x2d8] sm:$0xff]
          %v3145 = vld [vmem:[#allocation2 + $0x2e0] sm:$0xff]
          %v3146 = vld [vmem:[#allocation2 + $0x2e8] sm:$0xff]
          %v3147 = vld [vmem:[#allocation2 + $0x2f0] sm:$0xff]
          %v3148 = vld [vmem:[#allocation2 + $0x2f8] sm:$0xff]
          %v3149 = vld [vmem:[#allocation2 + $0x300] sm:$0xff]
          %v3150 = vld [vmem:[#allocation2 + $0x308] sm:$0xff]
          %v3151 = vld [vmem:[#allocation2 + $0x310] sm:$0xff]
          %v3152 = vld [vmem:[#allocation2 + $0x318] sm:$0xff]
          %v3153 = vld [vmem:[#allocation2 + $0x320] sm:$0xff]
          %v3154 = vld [vmem:[#allocation2 + $0x328] sm:$0xff]
          %v3155 = vld [vmem:[#allocation2 + $0x330] sm:$0xff]
          %v3156 = vld [vmem:[#allocation2 + $0x338] sm:$0xff]
          %v3157 = vld [vmem:[#allocation2 + $0x340] sm:$0xff]
          %v3158 = vld [vmem:[#allocation2 + $0x348] sm:$0xff]
          %v3159 = vld [vmem:[#allocation2 + $0x350] sm:$0xff]
          %v3160 = vld [vmem:[#allocation2 + $0x358] sm:$0xff]
          %v3161 = vld [vmem:[#allocation2 + $0x360] sm:$0xff]
          %v3162 = vld [vmem:[#allocation2 + $0x368] sm:$0xff]
          %v3163 = vld [vmem:[#allocation2 + $0x370] sm:$0xff]
          %v3164 = vld [vmem:[#allocation2 + $0x378] sm:$0xff]
          %v3165 = vld [vmem:[#allocation2 + $0x380] sm:$0xff]
          %v3166 = vld [vmem:[#allocation2 + $0x388] sm:$0xff]
          %v3167 = vld [vmem:[#allocation2 + $0x390] sm:$0xff]
          %v3168 = vld [vmem:[#allocation2 + $0x398] sm:$0xff]
          %v3169 = vld [vmem:[#allocation2 + $0x3a0] sm:$0xff]
          %v3170 = vld [vmem:[#allocation2 + $0x3a8] sm:$0xff]
          %v3171 = vld [vmem:[#allocation2 + $0x3b0] sm:$0xff]
          %v3172 = vld [vmem:[#allocation2 + $0x3b8] sm:$0xff]
          %v3173 = vld [vmem:[#allocation2 + $0x3c0] sm:$0xff]
          %v3174 = vld [vmem:[#allocation2 + $0x3c8] sm:$0xff]
          %v3175 = vld [vmem:[#allocation2 + $0x3d0] sm:$0xff]
          %v3176 = vld [vmem:[#allocation2 + $0x3d8] sm:$0xff]
          %v3177 = vld [vmem:[#allocation2 + $0x3e0] sm:$0xff]
          %v3178 = vld [vmem:[#allocation2 + $0x3e8] sm:$0xff]
          %v3179 = vld [vmem:[#allocation2 + $0x3f0] sm:$0xff]
          %v3180 = vld [vmem:[#allocation2 + $0x3f8] sm:$0xff]
          %v3181 = vlaneseq
          %v3182 = vand.u32 %v3181, 127
          %vm3183 = vcmp.lt.s32.totalorder %v3182, 64
          %v3184 = vsel %vm3183, 1, 0
          %vm3185 = vcmp.eq.s32.totalorder %v3184, 1
          %v3186 = vsel %vm3185, %v2401, -inf
          %v3187 = vsel %vm3185, %v2402, -inf
          %v3188 = vsel %vm3185, %v2403, -inf
          %v3189 = vsel %vm3185, %v2404, -inf
          %v3190 = vsel %vm3185, %v2405, -inf
          %v3191 = vsel %vm3185, %v2406, -inf
          %v3192 = vsel %vm3185, %v2407, -inf
          %v3193 = vsel %vm3185, %v2408, -inf
          %v3194 = vsel %vm3185, %v2409, -inf
          %v3195 = vsel %vm3185, %v2410, -inf
          %v3196 = vsel %vm3185, %v2411, -inf
          %v3197 = vsel %vm3185, %v2412, -inf
          %v3198 = vsel %vm3185, %v2413, -inf
          %v3199 = vsel %vm3185, %v2414, -inf
          %v3200 = vsel %vm3185, %v2415, -inf
          %v3201 = vsel %vm3185, %v2416, -inf
          %v3202 = vsel %vm3185, %v2417, -inf
          %v3203 = vsel %vm3185, %v2418, -inf
          %v3204 = vsel %vm3185, %v2419, -inf
          %v3205 = vsel %vm3185, %v2420, -inf
          %v3206 = vsel %vm3185, %v2421, -inf
          %v3207 = vsel %vm3185, %v2422, -inf
          %v3208 = vsel %vm3185, %v2423, -inf
          %v3209 = vsel %vm3185, %v2424, -inf
          %v3210 = vsel %vm3185, %v2425, -inf
          %v3211 = vsel %vm3185, %v2426, -inf
          %v3212 = vsel %vm3185, %v2427, -inf
          %v3213 = vsel %vm3185, %v2428, -inf
          %v3214 = vsel %vm3185, %v2429, -inf
          %v3215 = vsel %vm3185, %v2430, -inf
          %v3216 = vsel %vm3185, %v2431, -inf
          %v3217 = vsel %vm3185, %v2432, -inf
          %v3218 = vsel %vm3185, %v2433, -inf
          %v3219 = vsel %vm3185, %v2434, -inf
          %v3220 = vsel %vm3185, %v2435, -inf
          %v3221 = vsel %vm3185, %v2436, -inf
          %v3222 = vsel %vm3185, %v2437, -inf
          %v3223 = vsel %vm3185, %v2438, -inf
          %v3224 = vsel %vm3185, %v2439, -inf
          %v3225 = vsel %vm3185, %v2440, -inf
          %v3226 = vsel %vm3185, %v2441, -inf
          %v3227 = vsel %vm3185, %v2442, -inf
          %v3228 = vsel %vm3185, %v2443, -inf
          %v3229 = vsel %vm3185, %v2444, -inf
          %v3230 = vsel %vm3185, %v2445, -inf
          %v3231 = vsel %vm3185, %v2446, -inf
          %v3232 = vsel %vm3185, %v2447, -inf
          %v3233 = vsel %vm3185, %v2448, -inf
          %v3234 = vsel %vm3185, %v2449, -inf
          %v3235 = vsel %vm3185, %v2450, -inf
          %v3236 = vsel %vm3185, %v2451, -inf
          %v3237 = vsel %vm3185, %v2452, -inf
          %v3238 = vsel %vm3185, %v2453, -inf
          %v3239 = vsel %vm3185, %v2454, -inf
          %v3240 = vsel %vm3185, %v2455, -inf
          %v3241 = vsel %vm3185, %v2456, -inf
          %v3242 = vsel %vm3185, %v2457, -inf
          %v3243 = vsel %vm3185, %v2458, -inf
          %v3244 = vsel %vm3185, %v2459, -inf
          %v3245 = vsel %vm3185, %v2460, -inf
          %v3246 = vsel %vm3185, %v2461, -inf
          %v3247 = vsel %vm3185, %v2462, -inf
          %v3248 = vsel %vm3185, %v2463, -inf
          %v3249 = vsel %vm3185, %v2464, -inf
          %v3250 = vsel %vm3185, %v2465, -inf
          %v3251 = vsel %vm3185, %v2466, -inf
          %v3252 = vsel %vm3185, %v2467, -inf
          %v3253 = vsel %vm3185, %v2468, -inf
          %v3254 = vsel %vm3185, %v2469, -inf
          %v3255 = vsel %vm3185, %v2470, -inf
          %v3256 = vsel %vm3185, %v2471, -inf
          %v3257 = vsel %vm3185, %v2472, -inf
          %v3258 = vsel %vm3185, %v2473, -inf
          %v3259 = vsel %vm3185, %v2474, -inf
          %v3260 = vsel %vm3185, %v2475, -inf
          %v3261 = vsel %vm3185, %v2476, -inf
          %v3262 = vsel %vm3185, %v2477, -inf
          %v3263 = vsel %vm3185, %v2478, -inf
          %v3264 = vsel %vm3185, %v2479, -inf
          %v3265 = vsel %vm3185, %v2480, -inf
          %v3266 = vsel %vm3185, %v2481, -inf
          %v3267 = vsel %vm3185, %v2482, -inf
          %v3268 = vsel %vm3185, %v2483, -inf
          %v3269 = vsel %vm3185, %v2484, -inf
          %v3270 = vsel %vm3185, %v2485, -inf
          %v3271 = vsel %vm3185, %v2486, -inf
          %v3272 = vsel %vm3185, %v2487, -inf
          %v3273 = vsel %vm3185, %v2488, -inf
          %v3274 = vsel %vm3185, %v2489, -inf
          %v3275 = vsel %vm3185, %v2490, -inf
          %v3276 = vsel %vm3185, %v2491, -inf
          %v3277 = vsel %vm3185, %v2492, -inf
          %v3278 = vsel %vm3185, %v2493, -inf
          %v3279 = vsel %vm3185, %v2494, -inf
          %v3280 = vsel %vm3185, %v2495, -inf
          %v3281 = vsel %vm3185, %v2496, -inf
          %v3282 = vsel %vm3185, %v2497, -inf
          %v3283 = vsel %vm3185, %v2498, -inf
          %v3284 = vsel %vm3185, %v2499, -inf
          %v3285 = vsel %vm3185, %v2500, -inf
          %v3286 = vsel %vm3185, %v2501, -inf
          %v3287 = vsel %vm3185, %v2502, -inf
          %v3288 = vsel %vm3185, %v2503, -inf
          %v3289 = vsel %vm3185, %v2504, -inf
          %v3290 = vsel %vm3185, %v2505, -inf
          %v3291 = vsel %vm3185, %v2506, -inf
          %v3292 = vsel %vm3185, %v2507, -inf
          %v3293 = vsel %vm3185, %v2508, -inf
          %v3294 = vsel %vm3185, %v2509, -inf
          %v3295 = vsel %vm3185, %v2510, -inf
          %v3296 = vsel %vm3185, %v2511, -inf
          %v3297 = vsel %vm3185, %v2512, -inf
          %v3298 = vsel %vm3185, %v2513, -inf
          %v3299 = vsel %vm3185, %v2514, -inf
          %v3300 = vsel %vm3185, %v2515, -inf
          %v3301 = vsel %vm3185, %v2516, -inf
          %v3302 = vsel %vm3185, %v2517, -inf
          %v3303 = vsel %vm3185, %v2518, -inf
          %v3304 = vsel %vm3185, %v2519, -inf
          %v3305 = vsel %vm3185, %v2520, -inf
          %v3306 = vsel %vm3185, %v2521, -inf
          %v3307 = vsel %vm3185, %v2522, -inf
          %v3308 = vsel %vm3185, %v2523, -inf
          %v3309 = vsel %vm3185, %v2524, -inf
          %v3310 = vsel %vm3185, %v2525, -inf
          %v3311 = vsel %vm3185, %v2526, -inf
          %v3312 = vsel %vm3185, %v2527, -inf
          %v3313 = vsel %vm3185, %v2528, -inf
          %v3314 = vmax.f32 %v3053, %v3186
          %v3315 = vmax.f32 %v3054, %v3187
          %v3316 = vmax.f32 %v3055, %v3188
          %v3317 = vmax.f32 %v3056, %v3189
          %v3318 = vmax.f32 %v3057, %v3190
          %v3319 = vmax.f32 %v3058, %v3191
          %v3320 = vmax.f32 %v3059, %v3192
          %v3321 = vmax.f32 %v3060, %v3193
          %v3322 = vmax.f32 %v3061, %v3194
          %v3323 = vmax.f32 %v3062, %v3195
          %v3324 = vmax.f32 %v3063, %v3196
          %v3325 = vmax.f32 %v3064, %v3197
          %v3326 = vmax.f32 %v3065, %v3198
          %v3327 = vmax.f32 %v3066, %v3199
          %v3328 = vmax.f32 %v3067, %v3200
          %v3329 = vmax.f32 %v3068, %v3201
          %v3330 = vmax.f32 %v3069, %v3202
          %v3331 = vmax.f32 %v3070, %v3203
          %v3332 = vmax.f32 %v3071, %v3204
          %v3333 = vmax.f32 %v3072, %v3205
          %v3334 = vmax.f32 %v3073, %v3206
          %v3335 = vmax.f32 %v3074, %v3207
          %v3336 = vmax.f32 %v3075, %v3208
          %v3337 = vmax.f32 %v3076, %v3209
          %v3338 = vmax.f32 %v3077, %v3210
          %v3339 = vmax.f32 %v3078, %v3211
          %v3340 = vmax.f32 %v3079, %v3212
          %v3341 = vmax.f32 %v3080, %v3213
          %v3342 = vmax.f32 %v3081, %v3214
          %v3343 = vmax.f32 %v3082, %v3215
          %v3344 = vmax.f32 %v3083, %v3216
          %v3345 = vmax.f32 %v3084, %v3217
          %v3346 = vmax.f32 %v3085, %v3218
          %v3347 = vmax.f32 %v3086, %v3219
          %v3348 = vmax.f32 %v3087, %v3220
          %v3349 = vmax.f32 %v3088, %v3221
          %v3350 = vmax.f32 %v3089, %v3222
          %v3351 = vmax.f32 %v3090, %v3223
          %v3352 = vmax.f32 %v3091, %v3224
          %v3353 = vmax.f32 %v3092, %v3225
          %v3354 = vmax.f32 %v3093, %v3226
          %v3355 = vmax.f32 %v3094, %v3227
          %v3356 = vmax.f32 %v3095, %v3228
          %v3357 = vmax.f32 %v3096, %v3229
          %v3358 = vmax.f32 %v3097, %v3230
          %v3359 = vmax.f32 %v3098, %v3231
          %v3360 = vmax.f32 %v3099, %v3232
          %v3361 = vmax.f32 %v3100, %v3233
          %v3362 = vmax.f32 %v3101, %v3234
          %v3363 = vmax.f32 %v3102, %v3235
          %v3364 = vmax.f32 %v3103, %v3236
          %v3365 = vmax.f32 %v3104, %v3237
          %v3366 = vmax.f32 %v3105, %v3238
          %v3367 = vmax.f32 %v3106, %v3239
          %v3368 = vmax.f32 %v3107, %v3240
          %v3369 = vmax.f32 %v3108, %v3241
          %v3370 = vmax.f32 %v3109, %v3242
          %v3371 = vmax.f32 %v3110, %v3243
          %v3372 = vmax.f32 %v3111, %v3244
          %v3373 = vmax.f32 %v3112, %v3245
          %v3374 = vmax.f32 %v3113, %v3246
          %v3375 = vmax.f32 %v3114, %v3247
          %v3376 = vmax.f32 %v3115, %v3248
          %v3377 = vmax.f32 %v3116, %v3249
          %v3378 = vmax.f32 %v3117, %v3250
          %v3379 = vmax.f32 %v3118, %v3251
          %v3380 = vmax.f32 %v3119, %v3252
          %v3381 = vmax.f32 %v3120, %v3253
          %v3382 = vmax.f32 %v3121, %v3254
          %v3383 = vmax.f32 %v3122, %v3255
          %v3384 = vmax.f32 %v3123, %v3256
          %v3385 = vmax.f32 %v3124, %v3257
          %v3386 = vmax.f32 %v3125, %v3258
          %v3387 = vmax.f32 %v3126, %v3259
          %v3388 = vmax.f32 %v3127, %v3260
          %v3389 = vmax.f32 %v3128, %v3261
          %v3390 = vmax.f32 %v3129, %v3262
          %v3391 = vmax.f32 %v3130, %v3263
          %v3392 = vmax.f32 %v3131, %v3264
          %v3393 = vmax.f32 %v3132, %v3265
          %v3394 = vmax.f32 %v3133, %v3266
          %v3395 = vmax.f32 %v3134, %v3267
          %v3396 = vmax.f32 %v3135, %v3268
          %v3397 = vmax.f32 %v3136, %v3269
          %v3398 = vmax.f32 %v3137, %v3270
          %v3399 = vmax.f32 %v3138, %v3271
          %v3400 = vmax.f32 %v3139, %v3272
          %v3401 = vmax.f32 %v3140, %v3273
          %v3402 = vmax.f32 %v3141, %v3274
          %v3403 = vmax.f32 %v3142, %v3275
          %v3404 = vmax.f32 %v3143, %v3276
          %v3405 = vmax.f32 %v3144, %v3277
          %v3406 = vmax.f32 %v3145, %v3278
          %v3407 = vmax.f32 %v3146, %v3279
          %v3408 = vmax.f32 %v3147, %v3280
          %v3409 = vmax.f32 %v3148, %v3281
          %v3410 = vmax.f32 %v3149, %v3282
          %v3411 = vmax.f32 %v3150, %v3283
          %v3412 = vmax.f32 %v3151, %v3284
          %v3413 = vmax.f32 %v3152, %v3285
          %v3414 = vmax.f32 %v3153, %v3286
          %v3415 = vmax.f32 %v3154, %v3287
          %v3416 = vmax.f32 %v3155, %v3288
          %v3417 = vmax.f32 %v3156, %v3289
          %v3418 = vmax.f32 %v3157, %v3290
          %v3419 = vmax.f32 %v3158, %v3291
          %v3420 = vmax.f32 %v3159, %v3292
          %v3421 = vmax.f32 %v3160, %v3293
          %v3422 = vmax.f32 %v3161, %v3294
          %v3423 = vmax.f32 %v3162, %v3295
          %v3424 = vmax.f32 %v3163, %v3296
          %v3425 = vmax.f32 %v3164, %v3297
          %v3426 = vmax.f32 %v3165, %v3298
          %v3427 = vmax.f32 %v3166, %v3299
          %v3428 = vmax.f32 %v3167, %v3300
          %v3429 = vmax.f32 %v3168, %v3301
          %v3430 = vmax.f32 %v3169, %v3302
          %v3431 = vmax.f32 %v3170, %v3303
          %v3432 = vmax.f32 %v3171, %v3304
          %v3433 = vmax.f32 %v3172, %v3305
          %v3434 = vmax.f32 %v3173, %v3306
          %v3435 = vmax.f32 %v3174, %v3307
          %v3436 = vmax.f32 %v3175, %v3308
          %v3437 = vmax.f32 %v3176, %v3309
          %v3438 = vmax.f32 %v3177, %v3310
          %v3439 = vmax.f32 %v3178, %v3311
          %v3440 = vmax.f32 %v3179, %v3312
          %v3441 = vmax.f32 %v3180, %v3313
          %3442 = vst [vmem:[#allocation2] sm:$0xff] %v3314
          %3443 = vst [vmem:[#allocation2 + $0x8] sm:$0xff] %v3315
          %3444 = vst [vmem:[#allocation2 + $0x10] sm:$0xff] %v3316
          %3445 = vst [vmem:[#allocation2 + $0x18] sm:$0xff] %v3317
          %3446 = vst [vmem:[#allocation2 + $0x20] sm:$0xff] %v3318
          %3447 = vst [vmem:[#allocation2 + $0x28] sm:$0xff] %v3319
          %3448 = vst [vmem:[#allocation2 + $0x30] sm:$0xff] %v3320
          %3449 = vst [vmem:[#allocation2 + $0x38] sm:$0xff] %v3321
          %3450 = vst [vmem:[#allocation2 + $0x40] sm:$0xff] %v3322
          %3451 = vst [vmem:[#allocation2 + $0x48] sm:$0xff] %v3323
          %3452 = vst [vmem:[#allocation2 + $0x50] sm:$0xff] %v3324
          %3453 = vst [vmem:[#allocation2 + $0x58] sm:$0xff] %v3325
          %3454 = vst [vmem:[#allocation2 + $0x60] sm:$0xff] %v3326
          %3455 = vst [vmem:[#allocation2 + $0x68] sm:$0xff] %v3327
          %3456 = vst [vmem:[#allocation2 + $0x70] sm:$0xff] %v3328
          %3457 = vst [vmem:[#allocation2 + $0x78] sm:$0xff] %v3329
          %3458 = vst [vmem:[#allocation2 + $0x80] sm:$0xff] %v3330
          %3459 = vst [vmem:[#allocation2 + $0x88] sm:$0xff] %v3331
          %3460 = vst [vmem:[#allocation2 + $0x90] sm:$0xff] %v3332
          %3461 = vst [vmem:[#allocation2 + $0x98] sm:$0xff] %v3333
          %3462 = vst [vmem:[#allocation2 + $0xa0] sm:$0xff] %v3334
          %3463 = vst [vmem:[#allocation2 + $0xa8] sm:$0xff] %v3335
          %3464 = vst [vmem:[#allocation2 + $0xb0] sm:$0xff] %v3336
          %3465 = vst [vmem:[#allocation2 + $0xb8] sm:$0xff] %v3337
          %3466 = vst [vmem:[#allocation2 + $0xc0] sm:$0xff] %v3338
          %3467 = vst [vmem:[#allocation2 + $0xc8] sm:$0xff] %v3339
          %3468 = vst [vmem:[#allocation2 + $0xd0] sm:$0xff] %v3340
          %3469 = vst [vmem:[#allocation2 + $0xd8] sm:$0xff] %v3341
          %3470 = vst [vmem:[#allocation2 + $0xe0] sm:$0xff] %v3342
          %3471 = vst [vmem:[#allocation2 + $0xe8] sm:$0xff] %v3343
          %3472 = vst [vmem:[#allocation2 + $0xf0] sm:$0xff] %v3344
          %3473 = vst [vmem:[#allocation2 + $0xf8] sm:$0xff] %v3345
          %3474 = vst [vmem:[#allocation2 + $0x100] sm:$0xff] %v3346
          %3475 = vst [vmem:[#allocation2 + $0x108] sm:$0xff] %v3347
          %3476 = vst [vmem:[#allocation2 + $0x110] sm:$0xff] %v3348
          %3477 = vst [vmem:[#allocation2 + $0x118] sm:$0xff] %v3349
          %3478 = vst [vmem:[#allocation2 + $0x120] sm:$0xff] %v3350
          %3479 = vst [vmem:[#allocation2 + $0x128] sm:$0xff] %v3351
          %3480 = vst [vmem:[#allocation2 + $0x130] sm:$0xff] %v3352
          %3481 = vst [vmem:[#allocation2 + $0x138] sm:$0xff] %v3353
          %3482 = vst [vmem:[#allocation2 + $0x140] sm:$0xff] %v3354
          %3483 = vst [vmem:[#allocation2 + $0x148] sm:$0xff] %v3355
          %3484 = vst [vmem:[#allocation2 + $0x150] sm:$0xff] %v3356
          %3485 = vst [vmem:[#allocation2 + $0x158] sm:$0xff] %v3357
          %3486 = vst [vmem:[#allocation2 + $0x160] sm:$0xff] %v3358
          %3487 = vst [vmem:[#allocation2 + $0x168] sm:$0xff] %v3359
          %3488 = vst [vmem:[#allocation2 + $0x170] sm:$0xff] %v3360
          %3489 = vst [vmem:[#allocation2 + $0x178] sm:$0xff] %v3361
          %3490 = vst [vmem:[#allocation2 + $0x180] sm:$0xff] %v3362
          %3491 = vst [vmem:[#allocation2 + $0x188] sm:$0xff] %v3363
          %3492 = vst [vmem:[#allocation2 + $0x190] sm:$0xff] %v3364
          %3493 = vst [vmem:[#allocation2 + $0x198] sm:$0xff] %v3365
          %3494 = vst [vmem:[#allocation2 + $0x1a0] sm:$0xff] %v3366
          %3495 = vst [vmem:[#allocation2 + $0x1a8] sm:$0xff] %v3367
          %3496 = vst [vmem:[#allocation2 + $0x1b0] sm:$0xff] %v3368
          %3497 = vst [vmem:[#allocation2 + $0x1b8] sm:$0xff] %v3369
          %3498 = vst [vmem:[#allocation2 + $0x1c0] sm:$0xff] %v3370
          %3499 = vst [vmem:[#allocation2 + $0x1c8] sm:$0xff] %v3371
          %3500 = vst [vmem:[#allocation2 + $0x1d0] sm:$0xff] %v3372
          %3501 = vst [vmem:[#allocation2 + $0x1d8] sm:$0xff] %v3373
          %3502 = vst [vmem:[#allocation2 + $0x1e0] sm:$0xff] %v3374
          %3503 = vst [vmem:[#allocation2 + $0x1e8] sm:$0xff] %v3375
          %3504 = vst [vmem:[#allocation2 + $0x1f0] sm:$0xff] %v3376
          %3505 = vst [vmem:[#allocation2 + $0x1f8] sm:$0xff] %v3377
          %3506 = vst [vmem:[#allocation2 + $0x200] sm:$0xff] %v3378
          %3507 = vst [vmem:[#allocation2 + $0x208] sm:$0xff] %v3379
          %3508 = vst [vmem:[#allocation2 + $0x210] sm:$0xff] %v3380
          %3509 = vst [vmem:[#allocation2 + $0x218] sm:$0xff] %v3381
          %3510 = vst [vmem:[#allocation2 + $0x220] sm:$0xff] %v3382
          %3511 = vst [vmem:[#allocation2 + $0x228] sm:$0xff] %v3383
          %3512 = vst [vmem:[#allocation2 + $0x230] sm:$0xff] %v3384
          %3513 = vst [vmem:[#allocation2 + $0x238] sm:$0xff] %v3385
          %3514 = vst [vmem:[#allocation2 + $0x240] sm:$0xff] %v3386
          %3515 = vst [vmem:[#allocation2 + $0x248] sm:$0xff] %v3387
          %3516 = vst [vmem:[#allocation2 + $0x250] sm:$0xff] %v3388
          %3517 = vst [vmem:[#allocation2 + $0x258] sm:$0xff] %v3389
          %3518 = vst [vmem:[#allocation2 + $0x260] sm:$0xff] %v3390
          %3519 = vst [vmem:[#allocation2 + $0x268] sm:$0xff] %v3391
          %3520 = vst [vmem:[#allocation2 + $0x270] sm:$0xff] %v3392
          %3521 = vst [vmem:[#allocation2 + $0x278] sm:$0xff] %v3393
          %3522 = vst [vmem:[#allocation2 + $0x280] sm:$0xff] %v3394
          %3523 = vst [vmem:[#allocation2 + $0x288] sm:$0xff] %v3395
          %3524 = vst [vmem:[#allocation2 + $0x290] sm:$0xff] %v3396
          %3525 = vst [vmem:[#allocation2 + $0x298] sm:$0xff] %v3397
          %3526 = vst [vmem:[#allocation2 + $0x2a0] sm:$0xff] %v3398
          %3527 = vst [vmem:[#allocation2 + $0x2a8] sm:$0xff] %v3399
          %3528 = vst [vmem:[#allocation2 + $0x2b0] sm:$0xff] %v3400
          %3529 = vst [vmem:[#allocation2 + $0x2b8] sm:$0xff] %v3401
          %3530 = vst [vmem:[#allocation2 + $0x2c0] sm:$0xff] %v3402
          %3531 = vst [vmem:[#allocation2 + $0x2c8] sm:$0xff] %v3403
          %3532 = vst [vmem:[#allocation2 + $0x2d0] sm:$0xff] %v3404
          %3533 = vst [vmem:[#allocation2 + $0x2d8] sm:$0xff] %v3405
          %3534 = vst [vmem:[#allocation2 + $0x2e0] sm:$0xff] %v3406
          %3535 = vst [vmem:[#allocation2 + $0x2e8] sm:$0xff] %v3407
          %3536 = vst [vmem:[#allocation2 + $0x2f0] sm:$0xff] %v3408
          %3537 = vst [vmem:[#allocation2 + $0x2f8] sm:$0xff] %v3409
          %3538 = vst [vmem:[#allocation2 + $0x300] sm:$0xff] %v3410
          %3539 = vst [vmem:[#allocation2 + $0x308] sm:$0xff] %v3411
          %3540 = vst [vmem:[#allocation2 + $0x310] sm:$0xff] %v3412
          %3541 = vst [vmem:[#allocation2 + $0x318] sm:$0xff] %v3413
          %3542 = vst [vmem:[#allocation2 + $0x320] sm:$0xff] %v3414
          %3543 = vst [vmem:[#allocation2 + $0x328] sm:$0xff] %v3415
          %3544 = vst [vmem:[#allocation2 + $0x330] sm:$0xff] %v3416
          %3545 = vst [vmem:[#allocation2 + $0x338] sm:$0xff] %v3417
          %3546 = vst [vmem:[#allocation2 + $0x340] sm:$0xff] %v3418
          %3547 = vst [vmem:[#allocation2 + $0x348] sm:$0xff] %v3419
          %3548 = vst [vmem:[#allocation2 + $0x350] sm:$0xff] %v3420
          %3549 = vst [vmem:[#allocation2 + $0x358] sm:$0xff] %v3421
          %3550 = vst [vmem:[#allocation2 + $0x360] sm:$0xff] %v3422
          %3551 = vst [vmem:[#allocation2 + $0x368] sm:$0xff] %v3423
          %3552 = vst [vmem:[#allocation2 + $0x370] sm:$0xff] %v3424
          %3553 = vst [vmem:[#allocation2 + $0x378] sm:$0xff] %v3425
          %3554 = vst [vmem:[#allocation2 + $0x380] sm:$0xff] %v3426
          %3555 = vst [vmem:[#allocation2 + $0x388] sm:$0xff] %v3427
          %3556 = vst [vmem:[#allocation2 + $0x390] sm:$0xff] %v3428
          %3557 = vst [vmem:[#allocation2 + $0x398] sm:$0xff] %v3429
          %3558 = vst [vmem:[#allocation2 + $0x3a0] sm:$0xff] %v3430
          %3559 = vst [vmem:[#allocation2 + $0x3a8] sm:$0xff] %v3431
          %3560 = vst [vmem:[#allocation2 + $0x3b0] sm:$0xff] %v3432
          %3561 = vst [vmem:[#allocation2 + $0x3b8] sm:$0xff] %v3433
          %3562 = vst [vmem:[#allocation2 + $0x3c0] sm:$0xff] %v3434
          %3563 = vst [vmem:[#allocation2 + $0x3c8] sm:$0xff] %v3435
          %3564 = vst [vmem:[#allocation2 + $0x3d0] sm:$0xff] %v3436
          %3565 = vst [vmem:[#allocation2 + $0x3d8] sm:$0xff] %v3437
          %3566 = vst [vmem:[#allocation2 + $0x3e0] sm:$0xff] %v3438
          %3567 = vst [vmem:[#allocation2 + $0x3e8] sm:$0xff] %v3439
          %3568 = vst [vmem:[#allocation2 + $0x3f0] sm:$0xff] %v3440
          %3569 = vst [vmem:[#allocation2 + $0x3f8] sm:$0xff] %v3441
          %v3570 = vld [vmem:[#allocation2] sm:$0xff]
          %v3571 = vld [vmem:[#allocation2 + $0x8] sm:$0xff]
          %v3572 = vld [vmem:[#allocation2 + $0x10] sm:$0xff]
          %v3573 = vld [vmem:[#allocation2 + $0x18] sm:$0xff]
          %v3574 = vld [vmem:[#allocation2 + $0x20] sm:$0xff]
          %v3575 = vld [vmem:[#allocation2 + $0x28] sm:$0xff]
          %v3576 = vld [vmem:[#allocation2 + $0x30] sm:$0xff]
          %v3577 = vld [vmem:[#allocation2 + $0x38] sm:$0xff]
          %v3578 = vld [vmem:[#allocation2 + $0x40] sm:$0xff]
          %v3579 = vld [vmem:[#allocation2 + $0x48] sm:$0xff]
          %v3580 = vld [vmem:[#allocation2 + $0x50] sm:$0xff]
          %v3581 = vld [vmem:[#allocation2 + $0x58] sm:$0xff]
          %v3582 = vld [vmem:[#allocation2 + $0x60] sm:$0xff]
          %v3583 = vld [vmem:[#allocation2 + $0x68] sm:$0xff]
          %v3584 = vld [vmem:[#allocation2 + $0x70] sm:$0xff]
          %v3585 = vld [vmem:[#allocation2 + $0x78] sm:$0xff]
          %v3586 = vld [vmem:[#allocation2 + $0x80] sm:$0xff]
          %v3587 = vld [vmem:[#allocation2 + $0x88] sm:$0xff]
          %v3588 = vld [vmem:[#allocation2 + $0x90] sm:$0xff]
          %v3589 = vld [vmem:[#allocation2 + $0x98] sm:$0xff]
          %v3590 = vld [vmem:[#allocation2 + $0xa0] sm:$0xff]
          %v3591 = vld [vmem:[#allocation2 + $0xa8] sm:$0xff]
          %v3592 = vld [vmem:[#allocation2 + $0xb0] sm:$0xff]
          %v3593 = vld [vmem:[#allocation2 + $0xb8] sm:$0xff]
          %v3594 = vld [vmem:[#allocation2 + $0xc0] sm:$0xff]
          %v3595 = vld [vmem:[#allocation2 + $0xc8] sm:$0xff]
          %v3596 = vld [vmem:[#allocation2 + $0xd0] sm:$0xff]
          %v3597 = vld [vmem:[#allocation2 + $0xd8] sm:$0xff]
          %v3598 = vld [vmem:[#allocation2 + $0xe0] sm:$0xff]
          %v3599 = vld [vmem:[#allocation2 + $0xe8] sm:$0xff]
          %v3600 = vld [vmem:[#allocation2 + $0xf0] sm:$0xff]
          %v3601 = vld [vmem:[#allocation2 + $0xf8] sm:$0xff]
          %v3602 = vld [vmem:[#allocation2 + $0x100] sm:$0xff]
          %v3603 = vld [vmem:[#allocation2 + $0x108] sm:$0xff]
          %v3604 = vld [vmem:[#allocation2 + $0x110] sm:$0xff]
          %v3605 = vld [vmem:[#allocation2 + $0x118] sm:$0xff]
          %v3606 = vld [vmem:[#allocation2 + $0x120] sm:$0xff]
          %v3607 = vld [vmem:[#allocation2 + $0x128] sm:$0xff]
          %v3608 = vld [vmem:[#allocation2 + $0x130] sm:$0xff]
          %v3609 = vld [vmem:[#allocation2 + $0x138] sm:$0xff]
          %v3610 = vld [vmem:[#allocation2 + $0x140] sm:$0xff]
          %v3611 = vld [vmem:[#allocation2 + $0x148] sm:$0xff]
          %v3612 = vld [vmem:[#allocation2 + $0x150] sm:$0xff]
          %v3613 = vld [vmem:[#allocation2 + $0x158] sm:$0xff]
          %v3614 = vld [vmem:[#allocation2 + $0x160] sm:$0xff]
          %v3615 = vld [vmem:[#allocation2 + $0x168] sm:$0xff]
          %v3616 = vld [vmem:[#allocation2 + $0x170] sm:$0xff]
          %v3617 = vld [vmem:[#allocation2 + $0x178] sm:$0xff]
          %v3618 = vld [vmem:[#allocation2 + $0x180] sm:$0xff]
          %v3619 = vld [vmem:[#allocation2 + $0x188] sm:$0xff]
          %v3620 = vld [vmem:[#allocation2 + $0x190] sm:$0xff]
          %v3621 = vld [vmem:[#allocation2 + $0x198] sm:$0xff]
          %v3622 = vld [vmem:[#allocation2 + $0x1a0] sm:$0xff]
          %v3623 = vld [vmem:[#allocation2 + $0x1a8] sm:$0xff]
          %v3624 = vld [vmem:[#allocation2 + $0x1b0] sm:$0xff]
          %v3625 = vld [vmem:[#allocation2 + $0x1b8] sm:$0xff]
          %v3626 = vld [vmem:[#allocation2 + $0x1c0] sm:$0xff]
          %v3627 = vld [vmem:[#allocation2 + $0x1c8] sm:$0xff]
          %v3628 = vld [vmem:[#allocation2 + $0x1d0] sm:$0xff]
          %v3629 = vld [vmem:[#allocation2 + $0x1d8] sm:$0xff]
          %v3630 = vld [vmem:[#allocation2 + $0x1e0] sm:$0xff]
          %v3631 = vld [vmem:[#allocation2 + $0x1e8] sm:$0xff]
          %v3632 = vld [vmem:[#allocation2 + $0x1f0] sm:$0xff]
          %v3633 = vld [vmem:[#allocation2 + $0x1f8] sm:$0xff]
          %v3634 = vld [vmem:[#allocation2 + $0x200] sm:$0xff]
          %v3635 = vld [vmem:[#allocation2 + $0x208] sm:$0xff]
          %v3636 = vld [vmem:[#allocation2 + $0x210] sm:$0xff]
          %v3637 = vld [vmem:[#allocation2 + $0x218] sm:$0xff]
          %v3638 = vld [vmem:[#allocation2 + $0x220] sm:$0xff]
          %v3639 = vld [vmem:[#allocation2 + $0x228] sm:$0xff]
          %v3640 = vld [vmem:[#allocation2 + $0x230] sm:$0xff]
          %v3641 = vld [vmem:[#allocation2 + $0x238] sm:$0xff]
          %v3642 = vld [vmem:[#allocation2 + $0x240] sm:$0xff]
          %v3643 = vld [vmem:[#allocation2 + $0x248] sm:$0xff]
          %v3644 = vld [vmem:[#allocation2 + $0x250] sm:$0xff]
          %v3645 = vld [vmem:[#allocation2 + $0x258] sm:$0xff]
          %v3646 = vld [vmem:[#allocation2 + $0x260] sm:$0xff]
          %v3647 = vld [vmem:[#allocation2 + $0x268] sm:$0xff]
          %v3648 = vld [vmem:[#allocation2 + $0x270] sm:$0xff]
          %v3649 = vld [vmem:[#allocation2 + $0x278] sm:$0xff]
          %v3650 = vld [vmem:[#allocation2 + $0x280] sm:$0xff]
          %v3651 = vld [vmem:[#allocation2 + $0x288] sm:$0xff]
          %v3652 = vld [vmem:[#allocation2 + $0x290] sm:$0xff]
          %v3653 = vld [vmem:[#allocation2 + $0x298] sm:$0xff]
          %v3654 = vld [vmem:[#allocation2 + $0x2a0] sm:$0xff]
          %v3655 = vld [vmem:[#allocation2 + $0x2a8] sm:$0xff]
          %v3656 = vld [vmem:[#allocation2 + $0x2b0] sm:$0xff]
          %v3657 = vld [vmem:[#allocation2 + $0x2b8] sm:$0xff]
          %v3658 = vld [vmem:[#allocation2 + $0x2c0] sm:$0xff]
          %v3659 = vld [vmem:[#allocation2 + $0x2c8] sm:$0xff]
          %v3660 = vld [vmem:[#allocation2 + $0x2d0] sm:$0xff]
          %v3661 = vld [vmem:[#allocation2 + $0x2d8] sm:$0xff]
          %v3662 = vld [vmem:[#allocation2 + $0x2e0] sm:$0xff]
          %v3663 = vld [vmem:[#allocation2 + $0x2e8] sm:$0xff]
          %v3664 = vld [vmem:[#allocation2 + $0x2f0] sm:$0xff]
          %v3665 = vld [vmem:[#allocation2 + $0x2f8] sm:$0xff]
          %v3666 = vld [vmem:[#allocation2 + $0x300] sm:$0xff]
          %v3667 = vld [vmem:[#allocation2 + $0x308] sm:$0xff]
          %v3668 = vld [vmem:[#allocation2 + $0x310] sm:$0xff]
          %v3669 = vld [vmem:[#allocation2 + $0x318] sm:$0xff]
          %v3670 = vld [vmem:[#allocation2 + $0x320] sm:$0xff]
          %v3671 = vld [vmem:[#allocation2 + $0x328] sm:$0xff]
          %v3672 = vld [vmem:[#allocation2 + $0x330] sm:$0xff]
          %v3673 = vld [vmem:[#allocation2 + $0x338] sm:$0xff]
          %v3674 = vld [vmem:[#allocation2 + $0x340] sm:$0xff]
          %v3675 = vld [vmem:[#allocation2 + $0x348] sm:$0xff]
          %v3676 = vld [vmem:[#allocation2 + $0x350] sm:$0xff]
          %v3677 = vld [vmem:[#allocation2 + $0x358] sm:$0xff]
          %v3678 = vld [vmem:[#allocation2 + $0x360] sm:$0xff]
          %v3679 = vld [vmem:[#allocation2 + $0x368] sm:$0xff]
          %v3680 = vld [vmem:[#allocation2 + $0x370] sm:$0xff]
          %v3681 = vld [vmem:[#allocation2 + $0x378] sm:$0xff]
          %v3682 = vld [vmem:[#allocation2 + $0x380] sm:$0xff]
          %v3683 = vld [vmem:[#allocation2 + $0x388] sm:$0xff]
          %v3684 = vld [vmem:[#allocation2 + $0x390] sm:$0xff]
          %v3685 = vld [vmem:[#allocation2 + $0x398] sm:$0xff]
          %v3686 = vld [vmem:[#allocation2 + $0x3a0] sm:$0xff]
          %v3687 = vld [vmem:[#allocation2 + $0x3a8] sm:$0xff]
          %v3688 = vld [vmem:[#allocation2 + $0x3b0] sm:$0xff]
          %v3689 = vld [vmem:[#allocation2 + $0x3b8] sm:$0xff]
          %v3690 = vld [vmem:[#allocation2 + $0x3c0] sm:$0xff]
          %v3691 = vld [vmem:[#allocation2 + $0x3c8] sm:$0xff]
          %v3692 = vld [vmem:[#allocation2 + $0x3d0] sm:$0xff]
          %v3693 = vld [vmem:[#allocation2 + $0x3d8] sm:$0xff]
          %v3694 = vld [vmem:[#allocation2 + $0x3e0] sm:$0xff]
          %v3695 = vld [vmem:[#allocation2 + $0x3e8] sm:$0xff]
          %v3696 = vld [vmem:[#allocation2 + $0x3f0] sm:$0xff]
          %v3697 = vld [vmem:[#allocation2 + $0x3f8] sm:$0xff]
          %3698 = vmax.xlane.f32.xlu0 %v3570
          %v3699 = vpop.xlane.xlu0 %3698
          %3700 = vmax.xlane.f32.xlu0 %v3571
          %v3701 = vpop.xlane.xlu0 %3700
          %3702 = vmax.xlane.f32.xlu0 %v3572
          %v3703 = vpop.xlane.xlu0 %3702
          %3704 = vmax.xlane.f32.xlu0 %v3573
          %v3705 = vpop.xlane.xlu0 %3704
          %3706 = vmax.xlane.f32.xlu0 %v3574
          %v3707 = vpop.xlane.xlu0 %3706
          %3708 = vmax.xlane.f32.xlu0 %v3575
          %v3709 = vpop.xlane.xlu0 %3708
          %3710 = vmax.xlane.f32.xlu0 %v3576
          %v3711 = vpop.xlane.xlu0 %3710
          %3712 = vmax.xlane.f32.xlu0 %v3577
          %v3713 = vpop.xlane.xlu0 %3712
          %3714 = vmax.xlane.f32.xlu0 %v3578
          %v3715 = vpop.xlane.xlu0 %3714
          %3716 = vmax.xlane.f32.xlu0 %v3579
          %v3717 = vpop.xlane.xlu0 %3716
          %3718 = vmax.xlane.f32.xlu0 %v3580
          %v3719 = vpop.xlane.xlu0 %3718
          %3720 = vmax.xlane.f32.xlu0 %v3581
          %v3721 = vpop.xlane.xlu0 %3720
          %3722 = vmax.xlane.f32.xlu0 %v3582
          %v3723 = vpop.xlane.xlu0 %3722
          %3724 = vmax.xlane.f32.xlu0 %v3583
          %v3725 = vpop.xlane.xlu0 %3724
          %3726 = vmax.xlane.f32.xlu0 %v3584
          %v3727 = vpop.xlane.xlu0 %3726
          %3728 = vmax.xlane.f32.xlu0 %v3585
          %v3729 = vpop.xlane.xlu0 %3728
          %3730 = vmax.xlane.f32.xlu0 %v3586
          %v3731 = vpop.xlane.xlu0 %3730
          %3732 = vmax.xlane.f32.xlu0 %v3587
          %v3733 = vpop.xlane.xlu0 %3732
          %3734 = vmax.xlane.f32.xlu0 %v3588
          %v3735 = vpop.xlane.xlu0 %3734
          %3736 = vmax.xlane.f32.xlu0 %v3589
          %v3737 = vpop.xlane.xlu0 %3736
          %3738 = vmax.xlane.f32.xlu0 %v3590
          %v3739 = vpop.xlane.xlu0 %3738
          %3740 = vmax.xlane.f32.xlu0 %v3591
          %v3741 = vpop.xlane.xlu0 %3740
          %3742 = vmax.xlane.f32.xlu0 %v3592
          %v3743 = vpop.xlane.xlu0 %3742
          %3744 = vmax.xlane.f32.xlu0 %v3593
          %v3745 = vpop.xlane.xlu0 %3744
          %3746 = vmax.xlane.f32.xlu0 %v3594
          %v3747 = vpop.xlane.xlu0 %3746
          %3748 = vmax.xlane.f32.xlu0 %v3595
          %v3749 = vpop.xlane.xlu0 %3748
          %3750 = vmax.xlane.f32.xlu0 %v3596
          %v3751 = vpop.xlane.xlu0 %3750
          %3752 = vmax.xlane.f32.xlu0 %v3597
          %v3753 = vpop.xlane.xlu0 %3752
          %3754 = vmax.xlane.f32.xlu0 %v3598
          %v3755 = vpop.xlane.xlu0 %3754
          %3756 = vmax.xlane.f32.xlu0 %v3599
          %v3757 = vpop.xlane.xlu0 %3756
          %3758 = vmax.xlane.f32.xlu0 %v3600
          %v3759 = vpop.xlane.xlu0 %3758
          %3760 = vmax.xlane.f32.xlu0 %v3601
          %v3761 = vpop.xlane.xlu0 %3760
          %3762 = vmax.xlane.f32.xlu0 %v3602
          %v3763 = vpop.xlane.xlu0 %3762
          %3764 = vmax.xlane.f32.xlu0 %v3603
          %v3765 = vpop.xlane.xlu0 %3764
          %3766 = vmax.xlane.f32.xlu0 %v3604
          %v3767 = vpop.xlane.xlu0 %3766
          %3768 = vmax.xlane.f32.xlu0 %v3605
          %v3769 = vpop.xlane.xlu0 %3768
          %3770 = vmax.xlane.f32.xlu0 %v3606
          %v3771 = vpop.xlane.xlu0 %3770
          %3772 = vmax.xlane.f32.xlu0 %v3607
          %v3773 = vpop.xlane.xlu0 %3772
          %3774 = vmax.xlane.f32.xlu0 %v3608
          %v3775 = vpop.xlane.xlu0 %3774
          %3776 = vmax.xlane.f32.xlu0 %v3609
          %v3777 = vpop.xlane.xlu0 %3776
          %3778 = vmax.xlane.f32.xlu0 %v3610
          %v3779 = vpop.xlane.xlu0 %3778
          %3780 = vmax.xlane.f32.xlu0 %v3611
          %v3781 = vpop.xlane.xlu0 %3780
          %3782 = vmax.xlane.f32.xlu0 %v3612
          %v3783 = vpop.xlane.xlu0 %3782
          %3784 = vmax.xlane.f32.xlu0 %v3613
          %v3785 = vpop.xlane.xlu0 %3784
          %3786 = vmax.xlane.f32.xlu0 %v3614
          %v3787 = vpop.xlane.xlu0 %3786
          %3788 = vmax.xlane.f32.xlu0 %v3615
          %v3789 = vpop.xlane.xlu0 %3788
          %3790 = vmax.xlane.f32.xlu0 %v3616
          %v3791 = vpop.xlane.xlu0 %3790
          %3792 = vmax.xlane.f32.xlu0 %v3617
          %v3793 = vpop.xlane.xlu0 %3792
          %3794 = vmax.xlane.f32.xlu0 %v3618
          %v3795 = vpop.xlane.xlu0 %3794
          %3796 = vmax.xlane.f32.xlu0 %v3619
          %v3797 = vpop.xlane.xlu0 %3796
          %3798 = vmax.xlane.f32.xlu0 %v3620
          %v3799 = vpop.xlane.xlu0 %3798
          %3800 = vmax.xlane.f32.xlu0 %v3621
          %v3801 = vpop.xlane.xlu0 %3800
          %3802 = vmax.xlane.f32.xlu0 %v3622
          %v3803 = vpop.xlane.xlu0 %3802
          %3804 = vmax.xlane.f32.xlu0 %v3623
          %v3805 = vpop.xlane.xlu0 %3804
          %3806 = vmax.xlane.f32.xlu0 %v3624
          %v3807 = vpop.xlane.xlu0 %3806
          %3808 = vmax.xlane.f32.xlu0 %v3625
          %v3809 = vpop.xlane.xlu0 %3808
          %3810 = vmax.xlane.f32.xlu0 %v3626
          %v3811 = vpop.xlane.xlu0 %3810
          %3812 = vmax.xlane.f32.xlu0 %v3627
          %v3813 = vpop.xlane.xlu0 %3812
          %3814 = vmax.xlane.f32.xlu0 %v3628
          %v3815 = vpop.xlane.xlu0 %3814
          %3816 = vmax.xlane.f32.xlu0 %v3629
          %v3817 = vpop.xlane.xlu0 %3816
          %3818 = vmax.xlane.f32.xlu0 %v3630
          %v3819 = vpop.xlane.xlu0 %3818
          %3820 = vmax.xlane.f32.xlu0 %v3631
          %v3821 = vpop.xlane.xlu0 %3820
          %3822 = vmax.xlane.f32.xlu0 %v3632
          %v3823 = vpop.xlane.xlu0 %3822
          %3824 = vmax.xlane.f32.xlu0 %v3633
          %v3825 = vpop.xlane.xlu0 %3824
          %3826 = vmax.xlane.f32.xlu0 %v3634
          %v3827 = vpop.xlane.xlu0 %3826
          %3828 = vmax.xlane.f32.xlu0 %v3635
          %v3829 = vpop.xlane.xlu0 %3828
          %3830 = vmax.xlane.f32.xlu0 %v3636
          %v3831 = vpop.xlane.xlu0 %3830
          %3832 = vmax.xlane.f32.xlu0 %v3637
          %v3833 = vpop.xlane.xlu0 %3832
          %3834 = vmax.xlane.f32.xlu0 %v3638
          %v3835 = vpop.xlane.xlu0 %3834
          %3836 = vmax.xlane.f32.xlu0 %v3639
          %v3837 = vpop.xlane.xlu0 %3836
          %3838 = vmax.xlane.f32.xlu0 %v3640
          %v3839 = vpop.xlane.xlu0 %3838
          %3840 = vmax.xlane.f32.xlu0 %v3641
          %v3841 = vpop.xlane.xlu0 %3840
          %3842 = vmax.xlane.f32.xlu0 %v3642
          %v3843 = vpop.xlane.xlu0 %3842
          %3844 = vmax.xlane.f32.xlu0 %v3643
          %v3845 = vpop.xlane.xlu0 %3844
          %3846 = vmax.xlane.f32.xlu0 %v3644
          %v3847 = vpop.xlane.xlu0 %3846
          %3848 = vmax.xlane.f32.xlu0 %v3645
          %v3849 = vpop.xlane.xlu0 %3848
          %3850 = vmax.xlane.f32.xlu0 %v3646
          %v3851 = vpop.xlane.xlu0 %3850
          %3852 = vmax.xlane.f32.xlu0 %v3647
          %v3853 = vpop.xlane.xlu0 %3852
          %3854 = vmax.xlane.f32.xlu0 %v3648
          %v3855 = vpop.xlane.xlu0 %3854
          %3856 = vmax.xlane.f32.xlu0 %v3649
          %v3857 = vpop.xlane.xlu0 %3856
          %3858 = vmax.xlane.f32.xlu0 %v3650
          %v3859 = vpop.xlane.xlu0 %3858
          %3860 = vmax.xlane.f32.xlu0 %v3651
          %v3861 = vpop.xlane.xlu0 %3860
          %3862 = vmax.xlane.f32.xlu0 %v3652
          %v3863 = vpop.xlane.xlu0 %3862
          %3864 = vmax.xlane.f32.xlu0 %v3653
          %v3865 = vpop.xlane.xlu0 %3864
          %3866 = vmax.xlane.f32.xlu0 %v3654
          %v3867 = vpop.xlane.xlu0 %3866
          %3868 = vmax.xlane.f32.xlu0 %v3655
          %v3869 = vpop.xlane.xlu0 %3868
          %3870 = vmax.xlane.f32.xlu0 %v3656
          %v3871 = vpop.xlane.xlu0 %3870
          %3872 = vmax.xlane.f32.xlu0 %v3657
          %v3873 = vpop.xlane.xlu0 %3872
          %3874 = vmax.xlane.f32.xlu0 %v3658
          %v3875 = vpop.xlane.xlu0 %3874
          %3876 = vmax.xlane.f32.xlu0 %v3659
          %v3877 = vpop.xlane.xlu0 %3876
          %3878 = vmax.xlane.f32.xlu0 %v3660
          %v3879 = vpop.xlane.xlu0 %3878
          %3880 = vmax.xlane.f32.xlu0 %v3661
          %v3881 = vpop.xlane.xlu0 %3880
          %3882 = vmax.xlane.f32.xlu0 %v3662
          %v3883 = vpop.xlane.xlu0 %3882
          %3884 = vmax.xlane.f32.xlu0 %v3663
          %v3885 = vpop.xlane.xlu0 %3884
          %3886 = vmax.xlane.f32.xlu0 %v3664
          %v3887 = vpop.xlane.xlu0 %3886
          %3888 = vmax.xlane.f32.xlu0 %v3665
          %v3889 = vpop.xlane.xlu0 %3888
          %3890 = vmax.xlane.f32.xlu0 %v3666
          %v3891 = vpop.xlane.xlu0 %3890
          %3892 = vmax.xlane.f32.xlu0 %v3667
          %v3893 = vpop.xlane.xlu0 %3892
          %3894 = vmax.xlane.f32.xlu0 %v3668
          %v3895 = vpop.xlane.xlu0 %3894
          %3896 = vmax.xlane.f32.xlu0 %v3669
          %v3897 = vpop.xlane.xlu0 %3896
          %3898 = vmax.xlane.f32.xlu0 %v3670
          %v3899 = vpop.xlane.xlu0 %3898
          %3900 = vmax.xlane.f32.xlu0 %v3671
          %v3901 = vpop.xlane.xlu0 %3900
          %3902 = vmax.xlane.f32.xlu0 %v3672
          %v3903 = vpop.xlane.xlu0 %3902
          %3904 = vmax.xlane.f32.xlu0 %v3673
          %v3905 = vpop.xlane.xlu0 %3904
          %3906 = vmax.xlane.f32.xlu0 %v3674
          %v3907 = vpop.xlane.xlu0 %3906
          %3908 = vmax.xlane.f32.xlu0 %v3675
          %v3909 = vpop.xlane.xlu0 %3908
          %3910 = vmax.xlane.f32.xlu0 %v3676
          %v3911 = vpop.xlane.xlu0 %3910
          %3912 = vmax.xlane.f32.xlu0 %v3677
          %v3913 = vpop.xlane.xlu0 %3912
          %3914 = vmax.xlane.f32.xlu0 %v3678
          %v3915 = vpop.xlane.xlu0 %3914
          %3916 = vmax.xlane.f32.xlu0 %v3679
          %v3917 = vpop.xlane.xlu0 %3916
          %3918 = vmax.xlane.f32.xlu0 %v3680
          %v3919 = vpop.xlane.xlu0 %3918
          %3920 = vmax.xlane.f32.xlu0 %v3681
          %v3921 = vpop.xlane.xlu0 %3920
          %3922 = vmax.xlane.f32.xlu0 %v3682
          %v3923 = vpop.xlane.xlu0 %3922
          %3924 = vmax.xlane.f32.xlu0 %v3683
          %v3925 = vpop.xlane.xlu0 %3924
          %3926 = vmax.xlane.f32.xlu0 %v3684
          %v3927 = vpop.xlane.xlu0 %3926
          %3928 = vmax.xlane.f32.xlu0 %v3685
          %v3929 = vpop.xlane.xlu0 %3928
          %3930 = vmax.xlane.f32.xlu0 %v3686
          %v3931 = vpop.xlane.xlu0 %3930
          %3932 = vmax.xlane.f32.xlu0 %v3687
          %v3933 = vpop.xlane.xlu0 %3932
          %3934 = vmax.xlane.f32.xlu0 %v3688
          %v3935 = vpop.xlane.xlu0 %3934
          %3936 = vmax.xlane.f32.xlu0 %v3689
          %v3937 = vpop.xlane.xlu0 %3936
          %3938 = vmax.xlane.f32.xlu0 %v3690
          %v3939 = vpop.xlane.xlu0 %3938
          %3940 = vmax.xlane.f32.xlu0 %v3691
          %v3941 = vpop.xlane.xlu0 %3940
          %3942 = vmax.xlane.f32.xlu0 %v3692
          %v3943 = vpop.xlane.xlu0 %3942
          %3944 = vmax.xlane.f32.xlu0 %v3693
          %v3945 = vpop.xlane.xlu0 %3944
          %3946 = vmax.xlane.f32.xlu0 %v3694
          %v3947 = vpop.xlane.xlu0 %3946
          %3948 = vmax.xlane.f32.xlu0 %v3695
          %v3949 = vpop.xlane.xlu0 %3948
          %3950 = vmax.xlane.f32.xlu0 %v3696
          %v3951 = vpop.xlane.xlu0 %3950
          %3952 = vmax.xlane.f32.xlu0 %v3697
          %v3953 = vpop.xlane.xlu0 %3952
          %v4082 = vperm.slane %v3699, %v3182
          %v4083 = vadd.s32 %v3182, 4294967288
          %v4084 = vperm.slane %v3701, %v4083
          %vm4085 = vcmask 130112
          %v4086 = vsel %vm4085, %v4084, %v4082
          %v4087 = vadd.s32 %v3182, 4294967280
          %v4088 = vperm.slane %v3703, %v4087
          %vm4089 = vcmask 195712
          %v4090 = vsel %vm4089, %v4088, %v4086
          %v4091 = vadd.s32 %v3182, 4294967272
          %v4092 = vperm.slane %v3705, %v4091
          %vm4093 = vcmask 261312
          %v4094 = vsel %vm4093, %v4092, %v4090
          %v4095 = vadd.s32 %v3182, 4294967264
          %v4096 = vperm.slane %v3707, %v4095
          %vm4097 = vcmask 326912
          %v4098 = vsel %vm4097, %v4096, %v4094
          %v4099 = vadd.s32 %v3182, 4294967256
          %v4100 = vperm.slane %v3709, %v4099
          %vm4101 = vcmask 392512
          %v4102 = vsel %vm4101, %v4100, %v4098
          %v4103 = vadd.s32 %v3182, 4294967248
          %v4104 = vperm.slane %v3711, %v4103
          %vm4105 = vcmask 458112
          %v4106 = vsel %vm4105, %v4104, %v4102
          %v4107 = vadd.s32 %v3182, 4294967240
          %v4108 = vperm.slane %v3713, %v4107
          %vm4109 = vcmask 523712
          %v4110 = vsel %vm4109, %v4108, %v4106
          %v4111 = vadd.s32 %v3182, 4294967232
          %v4112 = vperm.slane %v3715, %v4111
          %vm4113 = vcmask 589312
          %v4114 = vsel %vm4113, %v4112, %v4110
          %v4115 = vadd.s32 %v3182, 4294967224
          %v4116 = vperm.slane %v3717, %v4115
          %vm4117 = vcmask 654912
          %v4118 = vsel %vm4117, %v4116, %v4114
          %v4119 = vadd.s32 %v3182, 4294967216
          %v4120 = vperm.slane %v3719, %v4119
          %vm4121 = vcmask 720512
          %v4122 = vsel %vm4121, %v4120, %v4118
          %v4123 = vadd.s32 %v3182, 4294967208
          %v4124 = vperm.slane %v3721, %v4123
          %vm4125 = vcmask 786112
          %v4126 = vsel %vm4125, %v4124, %v4122
          %v4127 = vadd.s32 %v3182, 4294967200
          %v4128 = vperm.slane %v3723, %v4127
          %vm4129 = vcmask 851712
          %v4130 = vsel %vm4129, %v4128, %v4126
          %v4131 = vadd.s32 %v3182, 4294967192
          %v4132 = vperm.slane %v3725, %v4131
          %vm4133 = vcmask 917312
          %v4134 = vsel %vm4133, %v4132, %v4130
          %v4135 = vadd.s32 %v3182, 4294967184
          %v4136 = vperm.slane %v3727, %v4135
          %vm4137 = vcmask 982912
          %v4138 = vsel %vm4137, %v4136, %v4134
          %v4139 = vadd.s32 %v3182, 4294967176
          %v4140 = vperm.slane %v3729, %v4139
          %vm4141 = vcmask 1048512
          %v4142 = vsel %vm4141, %v4140, %v4138
          %v4143 = vperm.slane %v3731, %v3182
          %v4144 = vperm.slane %v3733, %v4083
          %v4145 = vsel %vm4085, %v4144, %v4143
          %v4146 = vperm.slane %v3735, %v4087
          %v4147 = vsel %vm4089, %v4146, %v4145
          %v4148 = vperm.slane %v3737, %v4091
          %v4149 = vsel %vm4093, %v4148, %v4147
          %v4150 = vperm.slane %v3739, %v4095
          %v4151 = vsel %vm4097, %v4150, %v4149
          %v4152 = vperm.slane %v3741, %v4099
          %v4153 = vsel %vm4101, %v4152, %v4151
          %v4154 = vperm.slane %v3743, %v4103
          %v4155 = vsel %vm4105, %v4154, %v4153
          %v4156 = vperm.slane %v3745, %v4107
          %v4157 = vsel %vm4109, %v4156, %v4155
          %v4158 = vperm.slane %v3747, %v4111
          %v4159 = vsel %vm4113, %v4158, %v4157
          %v4160 = vperm.slane %v3749, %v4115
          %v4161 = vsel %vm4117, %v4160, %v4159
          %v4162 = vperm.slane %v3751, %v4119
          %v4163 = vsel %vm4121, %v4162, %v4161
          %v4164 = vperm.slane %v3753, %v4123
          %v4165 = vsel %vm4125, %v4164, %v4163
          %v4166 = vperm.slane %v3755, %v4127
          %v4167 = vsel %vm4129, %v4166, %v4165
          %v4168 = vperm.slane %v3757, %v4131
          %v4169 = vsel %vm4133, %v4168, %v4167
          %v4170 = vperm.slane %v3759, %v4135
          %v4171 = vsel %vm4137, %v4170, %v4169
          %v4172 = vperm.slane %v3761, %v4139
          %v4173 = vsel %vm4141, %v4172, %v4171
          %v4174 = vperm.slane %v3763, %v3182
          %v4175 = vperm.slane %v3765, %v4083
          %v4176 = vsel %vm4085, %v4175, %v4174
          %v4177 = vperm.slane %v3767, %v4087
          %v4178 = vsel %vm4089, %v4177, %v4176
          %v4179 = vperm.slane %v3769, %v4091
          %v4180 = vsel %vm4093, %v4179, %v4178
          %v4181 = vperm.slane %v3771, %v4095
          %v4182 = vsel %vm4097, %v4181, %v4180
          %v4183 = vperm.slane %v3773, %v4099
          %v4184 = vsel %vm4101, %v4183, %v4182
          %v4185 = vperm.slane %v3775, %v4103
          %v4186 = vsel %vm4105, %v4185, %v4184
          %v4187 = vperm.slane %v3777, %v4107
          %v4188 = vsel %vm4109, %v4187, %v4186
          %v4189 = vperm.slane %v3779, %v4111
          %v4190 = vsel %vm4113, %v4189, %v4188
          %v4191 = vperm.slane %v3781, %v4115
          %v4192 = vsel %vm4117, %v4191, %v4190
          %v4193 = vperm.slane %v3783, %v4119
          %v4194 = vsel %vm4121, %v4193, %v4192
          %v4195 = vperm.slane %v3785, %v4123
          %v4196 = vsel %vm4125, %v4195, %v4194
          %v4197 = vperm.slane %v3787, %v4127
          %v4198 = vsel %vm4129, %v4197, %v4196
          %v4199 = vperm.slane %v3789, %v4131
          %v4200 = vsel %vm4133, %v4199, %v4198
          %v4201 = vperm.slane %v3791, %v4135
          %v4202 = vsel %vm4137, %v4201, %v4200
          %v4203 = vperm.slane %v3793, %v4139
          %v4204 = vsel %vm4141, %v4203, %v4202
          %v4205 = vperm.slane %v3795, %v3182
          %v4206 = vperm.slane %v3797, %v4083
          %v4207 = vsel %vm4085, %v4206, %v4205
          %v4208 = vperm.slane %v3799, %v4087
          %v4209 = vsel %vm4089, %v4208, %v4207
          %v4210 = vperm.slane %v3801, %v4091
          %v4211 = vsel %vm4093, %v4210, %v4209
          %v4212 = vperm.slane %v3803, %v4095
          %v4213 = vsel %vm4097, %v4212, %v4211
          %v4214 = vperm.slane %v3805, %v4099
          %v4215 = vsel %vm4101, %v4214, %v4213
          %v4216 = vperm.slane %v3807, %v4103
          %v4217 = vsel %vm4105, %v4216, %v4215
          %v4218 = vperm.slane %v3809, %v4107
          %v4219 = vsel %vm4109, %v4218, %v4217
          %v4220 = vperm.slane %v3811, %v4111
          %v4221 = vsel %vm4113, %v4220, %v4219
          %v4222 = vperm.slane %v3813, %v4115
          %v4223 = vsel %vm4117, %v4222, %v4221
          %v4224 = vperm.slane %v3815, %v4119
          %v4225 = vsel %vm4121, %v4224, %v4223
          %v4226 = vperm.slane %v3817, %v4123
          %v4227 = vsel %vm4125, %v4226, %v4225
          %v4228 = vperm.slane %v3819, %v4127
          %v4229 = vsel %vm4129, %v4228, %v4227
          %v4230 = vperm.slane %v3821, %v4131
          %v4231 = vsel %vm4133, %v4230, %v4229
          %v4232 = vperm.slane %v3823, %v4135
          %v4233 = vsel %vm4137, %v4232, %v4231
          %v4234 = vperm.slane %v3825, %v4139
          %v4235 = vsel %vm4141, %v4234, %v4233
          %v4236 = vperm.slane %v3827, %v3182
          %v4237 = vperm.slane %v3829, %v4083
          %v4238 = vsel %vm4085, %v4237, %v4236
          %v4239 = vperm.slane %v3831, %v4087
          %v4240 = vsel %vm4089, %v4239, %v4238
          %v4241 = vperm.slane %v3833, %v4091
          %v4242 = vsel %vm4093, %v4241, %v4240
          %v4243 = vperm.slane %v3835, %v4095
          %v4244 = vsel %vm4097, %v4243, %v4242
          %v4245 = vperm.slane %v3837, %v4099
          %v4246 = vsel %vm4101, %v4245, %v4244
          %v4247 = vperm.slane %v3839, %v4103
          %v4248 = vsel %vm4105, %v4247, %v4246
          %v4249 = vperm.slane %v3841, %v4107
          %v4250 = vsel %vm4109, %v4249, %v4248
          %v4251 = vperm.slane %v3843, %v4111
          %v4252 = vsel %vm4113, %v4251, %v4250
          %v4253 = vperm.slane %v3845, %v4115
          %v4254 = vsel %vm4117, %v4253, %v4252
          %v4255 = vperm.slane %v3847, %v4119
          %v4256 = vsel %vm4121, %v4255, %v4254
          %v4257 = vperm.slane %v3849, %v4123
          %v4258 = vsel %vm4125, %v4257, %v4256
          %v4259 = vperm.slane %v3851, %v4127
          %v4260 = vsel %vm4129, %v4259, %v4258
          %v4261 = vperm.slane %v3853, %v4131
          %v4262 = vsel %vm4133, %v4261, %v4260
          %v4263 = vperm.slane %v3855, %v4135
          %v4264 = vsel %vm4137, %v4263, %v4262
          %v4265 = vperm.slane %v3857, %v4139
          %v4266 = vsel %vm4141, %v4265, %v4264
          %v4267 = vperm.slane %v3859, %v3182
          %v4268 = vperm.slane %v3861, %v4083
          %v4269 = vsel %vm4085, %v4268, %v4267
          %v4270 = vperm.slane %v3863, %v4087
          %v4271 = vsel %vm4089, %v4270, %v4269
          %v4272 = vperm.slane %v3865, %v4091
          %v4273 = vsel %vm4093, %v4272, %v4271
          %v4274 = vperm.slane %v3867, %v4095
          %v4275 = vsel %vm4097, %v4274, %v4273
          %v4276 = vperm.slane %v3869, %v4099
          %v4277 = vsel %vm4101, %v4276, %v4275
          %v4278 = vperm.slane %v3871, %v4103
          %v4279 = vsel %vm4105, %v4278, %v4277
          %v4280 = vperm.slane %v3873, %v4107
          %v4281 = vsel %vm4109, %v4280, %v4279
          %v4282 = vperm.slane %v3875, %v4111
          %v4283 = vsel %vm4113, %v4282, %v4281
          %v4284 = vperm.slane %v3877, %v4115
          %v4285 = vsel %vm4117, %v4284, %v4283
          %v4286 = vperm.slane %v3879, %v4119
          %v4287 = vsel %vm4121, %v4286, %v4285
          %v4288 = vperm.slane %v3881, %v4123
          %v4289 = vsel %vm4125, %v4288, %v4287
          %v4290 = vperm.slane %v3883, %v4127
          %v4291 = vsel %vm4129, %v4290, %v4289
          %v4292 = vperm.slane %v3885, %v4131
          %v4293 = vsel %vm4133, %v4292, %v4291
          %v4294 = vperm.slane %v3887, %v4135
          %v4295 = vsel %vm4137, %v4294, %v4293
          %v4296 = vperm.slane %v3889, %v4139
          %v4297 = vsel %vm4141, %v4296, %v4295
          %v4298 = vperm.slane %v3891, %v3182
          %v4299 = vperm.slane %v3893, %v4083
          %v4300 = vsel %vm4085, %v4299, %v4298
          %v4301 = vperm.slane %v3895, %v4087
          %v4302 = vsel %vm4089, %v4301, %v4300
          %v4303 = vperm.slane %v3897, %v4091
          %v4304 = vsel %vm4093, %v4303, %v4302
          %v4305 = vperm.slane %v3899, %v4095
          %v4306 = vsel %vm4097, %v4305, %v4304
          %v4307 = vperm.slane %v3901, %v4099
          %v4308 = vsel %vm4101, %v4307, %v4306
          %v4309 = vperm.slane %v3903, %v4103
          %v4310 = vsel %vm4105, %v4309, %v4308
          %v4311 = vperm.slane %v3905, %v4107
          %v4312 = vsel %vm4109, %v4311, %v4310
          %v4313 = vperm.slane %v3907, %v4111
          %v4314 = vsel %vm4113, %v4313, %v4312
          %v4315 = vperm.slane %v3909, %v4115
          %v4316 = vsel %vm4117, %v4315, %v4314
          %v4317 = vperm.slane %v3911, %v4119
          %v4318 = vsel %vm4121, %v4317, %v4316
          %v4319 = vperm.slane %v3913, %v4123
          %v4320 = vsel %vm4125, %v4319, %v4318
          %v4321 = vperm.slane %v3915, %v4127
          %v4322 = vsel %vm4129, %v4321, %v4320
          %v4323 = vperm.slane %v3917, %v4131
          %v4324 = vsel %vm4133, %v4323, %v4322
          %v4325 = vperm.slane %v3919, %v4135
          %v4326 = vsel %vm4137, %v4325, %v4324
          %v4327 = vperm.slane %v3921, %v4139
          %v4328 = vsel %vm4141, %v4327, %v4326
          %v4329 = vperm.slane %v3923, %v3182
          %v4330 = vperm.slane %v3925, %v4083
          %v4331 = vsel %vm4085, %v4330, %v4329
          %v4332 = vperm.slane %v3927, %v4087
          %v4333 = vsel %vm4089, %v4332, %v4331
          %v4334 = vperm.slane %v3929, %v4091
          %v4335 = vsel %vm4093, %v4334, %v4333
          %v4336 = vperm.slane %v3931, %v4095
          %v4337 = vsel %vm4097, %v4336, %v4335
          %v4338 = vperm.slane %v3933, %v4099
          %v4339 = vsel %vm4101, %v4338, %v4337
          %v4340 = vperm.slane %v3935, %v4103
          %v4341 = vsel %vm4105, %v4340, %v4339
          %v4342 = vperm.slane %v3937, %v4107
          %v4343 = vsel %vm4109, %v4342, %v4341
          %v4344 = vperm.slane %v3939, %v4111
          %v4345 = vsel %vm4113, %v4344, %v4343
          %v4346 = vperm.slane %v3941, %v4115
          %v4347 = vsel %vm4117, %v4346, %v4345
          %v4348 = vperm.slane %v3943, %v4119
          %v4349 = vsel %vm4121, %v4348, %v4347
          %v4350 = vperm.slane %v3945, %v4123
          %v4351 = vsel %vm4125, %v4350, %v4349
          %v4352 = vperm.slane %v3947, %v4127
          %v4353 = vsel %vm4129, %v4352, %v4351
          %v4354 = vperm.slane %v3949, %v4131
          %v4355 = vsel %vm4133, %v4354, %v4353
          %v4356 = vperm.slane %v3951, %v4135
          %v4357 = vsel %vm4137, %v4356, %v4355
          %v4358 = vperm.slane %v3953, %v4139
          %v4359 = vsel %vm4141, %v4358, %v4357
          %vm4360 = vcmask 1041409
          %v4361 = vsel %vm4360, %v4173, %v4142
          %vm4362 = vcmask 1042434
          %v4363 = vsel %vm4362, %v4204, %v4361
          %vm4364 = vcmask 1043459
          %v4365 = vsel %vm4364, %v4235, %v4363
          %vm4366 = vcmask 1044484
          %v4367 = vsel %vm4366, %v4266, %v4365
          %vm4368 = vcmask 1045509
          %v4369 = vsel %vm4368, %v4297, %v4367
          %vm4370 = vcmask 1046534
          %v4371 = vsel %vm4370, %v4328, %v4369
          %vm4372 = vcmask 1047559
          %v4373 = vsel %vm4372, %v4359, %v4371
          %4375 = vst [vmem:[%s316] sm:$0xff] %v4373
        $region64: #{pointnetfeat_forward.2} parent=47 // pred_fallthru
          _
        %p4376 = scmp.lt.s32.totalorder %s23, 1
        %s4377 = scalar_select %p4376, %s23, 1
        %s4378 = smul.addr %s4377, 8
        %s4379 = scalar_lea.vmem %s7, %s4378
        // Predicated region
        $region65: #{pointnetfeat_forward.2} parent=47 // pred_check
          %p4380 = pneg %p203
        $region66: #{pointnetfeat_forward.2} parent=47 // pred_check_branch
          %4382 = sbr.rel (%p4380) target = $region68
        $region67: #{pointnetfeat_forward.2} parent=47 // pred_region
          _
        $region68: #{pointnetfeat_forward.2} parent=47 // pred_fallthru
          _
      $region48: #{pointnetfeat_forward.2} parent=5 // pred_fallthru
        _
      %p4383 = scmp.le.s32.totalorder 2, %s14
      // Predicated region
      $region69: #{pointnetfeat_forward.2} parent=5 // pred_check
        %p4384 = pneg %p4383
      $region70: #{pointnetfeat_forward.2} parent=5 // pred_check_branch
        %4386 = sbr.rel (%p4384) target = $region72
      $region71: #{pointnetfeat_forward.2} parent=5 // pred_region
        %s4387 = ssub.s32 %s14, 2
        // Predicated region
        $region73: #{pointnetfeat_forward.2} parent=71 // pred_check
          %p4388 = pneg %p209
        $region74: #{pointnetfeat_forward.2} parent=71 // pred_check_branch
          %4390 = sbr.rel (%p4388) target = $region76
        $region75: #{pointnetfeat_forward.2} parent=71 // pred_region
          %p4391 = scmp.lt.s32.totalorder %s25, 1
          %s4392 = scalar_select %p4391, %s25, 1
          %s4393 = smul.addr %s4392, 8
          %s4394 = scalar_lea.vmem %s7, %s4393
        $region76: #{pointnetfeat_forward.2} parent=71 // pred_fallthru
          _
      $region72: #{pointnetfeat_forward.2} parent=5 // pred_fallthru
        _
    $region6: #{pointnetfeat_forward.2} parent=1 // loop_footer
      %s18 = sadd.s32 1, %s14
    $region7: #{pointnetfeat_forward.2} parent=1 // loop_footer_branch
      %13 = sbr.rel target = $region3
    $region8: #{pointnetfeat_forward.2} parent=1 // loop_exit
      _
    %4395 = vsyncpa [#allocation4], 1
    %s4396 = scalar_lea.sflag [#allocation4], 1
    %4397 = vsyncpa %s4396, 1

</llo_original>
